<compile_context>
chip_gen: v6e
topology: v6e:2x2x1
jax: 0.10.0
libtpu: 0.0.40
codegen_flags: <defaults>
</compile_context>

<pallas_src>
import functools
import math

import jax
import jax.numpy as jnp
from jax import lax
from jax.experimental import pallas as pl
from jax.experimental.pallas import tpu as pltpu

TWO_PI = 2.0 * math.pi


def _mobius_spline_kernel(
    x_ref,        # (3, TN)        input points, batch-on-lanes
    spl_ref,      # (Ks_pad, 8)    per-interval table [x_k, y_k, 1/dx, dy, d_k, d_nk, cut, 0]
    cond1_ref,    # (64, 8)        cols [W1, b1, b2, 0, ...]
    w2_ref,       # (64, 64)       W2^T
    w3_ref,       # (3*Km_pad,64)  fused [W3_weights; W3_wx; W3_wy]^T, zero-padded rows
    b3_ref,       # (3*Km_pad, 1)  fused biases (weights-block pad rows = -1e30)
    out_ref,      # (4, TN)        rows 0..2 = tx, row 3 = ldj
):
    ks_pad = spl_ref.shape[0]
    km_pad = w3_ref.shape[0] // 3

    x = x_ref[...]                           # (3, TN)
    x0 = x[0:1, :]
    x1 = x[1:2, :]
    r = x[2:3, :]
    tn = x.shape[1]

    # z on the unit circle: cos/sin(arctan2(x1, x0)) == (x0, x1) / ||(x0, x1)|| exactly.
    inv_xy = lax.rsqrt(x0 * x0 + x1 * x1)
    zx = x0 * inv_xy
    zy = x1 * inv_xy

    # ---------------- circular spline on r (unconditional) ----------------
    spl = spl_ref[...]                       # (Ks_pad, 8)
    cuts = spl[:, 6:7]                       # (Ks_pad, 1)  interior knots, padded with 2.0

    # interval index k = #{interior knots < r}  (== clamp(searchsorted, 1, Ks) - 1)
    k = jnp.sum((cuts < r).astype(jnp.int32), axis=0, keepdims=True)      # (1, TN)
    sub_idx = lax.broadcasted_iota(jnp.int32, (ks_pad, tn), 0)
    oh = (sub_idx == k).astype(jnp.float32)                               # (Ks_pad, TN)

    def gather(col):                         # one-hot gather along sublanes -> (1, TN)
        return jnp.sum(spl[:, col:col + 1] * oh, axis=0, keepdims=True)

    x_k = gather(0)
    y_k = gather(1)
    inv_dx = gather(2)
    dy = gather(3)
    d_k = gather(4)
    d_nk = gather(5)

    s_k = dy * inv_dx
    eps = (r - x_k) * inv_dx
    one_m_eps = 1.0 - eps
    e1me = eps * one_m_eps
    inv_denom = 1.0 / (s_k + (d_nk + d_k - 2.0 * s_k) * e1me)             # narrow, exact
    tr = y_k + dy * (s_k * eps * eps + d_k * e1me) * inv_denom
    dtr = (s_k * s_k
           * (d_nk * eps * eps + 2.0 * s_k * e1me + d_k * one_m_eps * one_m_eps)
           * inv_denom * inv_denom)

    out_ref[2:3, :] = tr                     # retire the radial output early

    # ---------------- Mobius transform on the angle, conditioned on r ----------------
    c1 = cond1_ref[...]                      # (64, 8)
    w1 = c1[:, 0:1]
    b1 = c1[:, 1:2]
    b2 = c1[:, 2:3]

    # layer 1 is a (1 -> 64) linear: degenerate outer product, done on the VPU.
    h1 = jnp.maximum(w1 * r + b1, 0.0)                                    # (64, TN)
    h2 = jnp.maximum(
        jnp.dot(w2_ref[...], h1, preferred_element_type=jnp.float32) + b2,
        0.0)                                                              # (64, TN)
    # single fused MXU matmul for [weights | w_x | w_y]
    cond = (jnp.dot(w3_ref[...], h2, preferred_element_type=jnp.float32)
            + b3_ref[...])                                                # (3*Km_pad, TN)
    w_raw = cond[0:km_pad, :]                                             # sublane-aligned
    wx = cond[km_pad:2 * km_pad, :]
    wy = cond[2 * km_pad:3 * km_pad, :]

    # softmax over K (sublane axis); narrow exact reciprocal of the (1,TN) sum.
    w_raw = w_raw - jnp.max(w_raw, axis=0, keepdims=True)
    ew = jnp.exp(w_raw)                                                   # pad rows -> 0
    inv_sum = 1.0 / jnp.sum(ew, axis=0, keepdims=True)
    weights = ew * inv_sum                                                # (Km_pad, TN)

    def recip(d):                            # EUP approx reciprocal + one Newton step
        rr = pl.reciprocal(d, approx=True)
        return rr * (2.0 - d * rr)

    # shrink w inside the unit disc: w <- 0.99 / (1 + |w|) * w
    wnorm = jnp.sqrt(wx * wx + wy * wy)
    scale = 0.99 * recip(1.0 + wnorm)
    wx = scale * wx
    wy = scale * wy
    one_m_w2 = 1.0 - (wx * wx + wy * wy)

    # h(zero_radian=(1,0), w) first (shorter live ranges)
    d0x = 1.0 - wx
    d0y = -wy
    dn02 = d0x * d0x + d0y * d0y
    fac0 = one_m_w2 * recip(dn02)
    h0x = fac0 * d0x - wx
    h0y = fac0 * d0y - wy

    # h(z, w) = (1 - |w|^2) / |z - w|^2 * (z - w) - w
    dzx = zx - wx
    dzy = zy - wy
    dn2 = dzx * dzx + dzy * dzy
    fac = one_m_w2 * recip(dn2)              # refined: feeds the angle AND the log-det
    hzx = fac * dzx - wx
    hzy = fac * dzy - wy

    # fused angle difference: atan2(h_z) - atan2(h_0) == arg(h_z * conj(h_0)) (mod 2pi)
    # TODO(synk): if a bundle dump shows the single EUP slot binding (likely only on
    # v5e), replace this arctan2 with a VPU polynomial atan + quadrant fixup.
    txa = jnp.arctan2(hzy * h0x - hzx * h0y, hzx * h0x + hzy * h0y)
    txa = jnp.where(txa >= 0.0, txa, txa + TWO_PI)
    tz = jnp.sum(weights * txa, axis=0, keepdims=True)                    # (1, TN)

    # exact Jacobian of the Mobius map: ||dh/dtheta|| == (1-|w|^2)/|z-w|^2 == fac
    dtz = jnp.sum(fac * weights, axis=0, keepdims=True)                   # (1, TN)

    # ---------------- remaining output rows (direct row stores, no concat) ----------------
    sq = jnp.sqrt(jnp.maximum(1.0 - tr * tr, 0.0))
    out_ref[0:1, :] = jnp.cos(tz) * sq
    out_ref[1:2, :] = jnp.sin(tz) * sq
    out_ref[3:4, :] = jnp.log(dtr * dtz)


def mobius_spline_flow(x, params, *, Km, Ks, tile_n=2048):
    """x: (N, 3) float32 points on S^2. Returns (tx (N,3), ldj (N,))."""
    assert tile_n % 128 == 0, "tile_n must be a multiple of 128 (lane-dense)"
    N = x.shape[0]
    x_ks, y_ks, der, W1, b1, W2, b2, W3, b3 = params

    Km_pad = ((Km + 7) // 8) * 8
    Ks_pad = ((Ks + 7) // 8) * 8

    # ---- pad batch to a multiple of tile_n with a harmless point (1, 0, 0) ----
    n_pad = (-N) % tile_n
    if n_pad:
        pad_rows = jnp.broadcast_to(
            jnp.array([[1.0, 0.0, 0.0]], dtype=jnp.float32), (n_pad, 3))
        x = jnp.concatenate([x, pad_rows], axis=0)
    N_pad = N + n_pad
    xT = x.T                                               # (3, N_pad) batch-on-lanes

    # ---- spline per-interval table (Ks_pad, 8): [x_k, y_k, 1/dx, dy, d_k, d_nk, cut, 0] ----
    xk = x_ks[0].astype(jnp.float32)                       # (Ks+1,)
    yk = y_ks[0].astype(jnp.float32)
    dv = der[0].astype(jnp.float32)
    x_l, x_r = xk[:-1], xk[1:]
    y_l, y_r = yk[:-1], yk[1:]
    d_l, d_r = dv[:-1], dv[1:]
    inv_dx = 1.0 / (x_r - x_l)
    dyk = y_r - y_l
    cuts = jnp.concatenate([xk[1:Ks], jnp.full((1,), 2.0, jnp.float32)])   # interior knots + pad
    tab = jnp.stack([x_l, y_l, inv_dx, dyk, d_l, d_r, cuts,
                     jnp.zeros((Ks,), jnp.float32)], axis=1)               # (Ks, 8)
    if Ks_pad > Ks:
        pad_tab = jnp.zeros((Ks_pad - Ks, 8), jnp.float32).at[:, 6].set(2.0)
        tab = jnp.concatenate([tab, pad_tab], axis=0)

    # ---- conditioner packing ----
    cond1 = jnp.zeros((64, 8), jnp.float32)
    cond1 = cond1.at[:, 0].set(W1[0, :])                   # W1: (1, 64)
    cond1 = cond1.at[:, 1].set(b1[0, :])
    cond1 = cond1.at[:, 2].set(b2[0, :])
    W2T = W2.T                                             # (64, 64)

    NEG_BIG = -1e30

    def pack_block(Wc, bc, pad_bias):
        Wt = Wc.T                                          # (Km, 64)
        bt = bc[:, None]                                   # (Km, 1)
        if Km_pad > Km:
            Wt = jnp.concatenate(
                [Wt, jnp.zeros((Km_pad - Km, 64), jnp.float32)], axis=0)
            bt = jnp.concatenate(
                [bt, jnp.full((Km_pad - Km, 1), pad_bias, jnp.float32)], axis=0)
        return Wt, bt

    W3w, b3w = pack_block(W3[:, 0:Km], b3[0, 0:Km], NEG_BIG)   # softmax pad rows -> 0 weight
    W3x, b3x = pack_block(W3[:, Km:2 * Km], b3[0, Km:2 * Km], 0.0)
    W3y, b3y = pack_block(W3[:, 2 * Km:3 * Km], b3[0, 2 * Km:3 * Km], 0.0)
    W3p = jnp.concatenate([W3w, W3x, W3y], axis=0)         # (3*Km_pad, 64)
    b3p = jnp.concatenate([b3w, b3x, b3y], axis=0)         # (3*Km_pad, 1)

    def full(shape):
        return pl.BlockSpec(shape, lambda i: (0, 0))

    grid = (N_pad // tile_n,)   # keep >= 4 steps in the driver so both v7x TCs stay busy
    out = pl.pallas_call(
        _mobius_spline_kernel,
        grid_spec=pltpu.PrefetchScalarGridSpec(
            num_scalar_prefetch=0,
            grid=grid,
            in_specs=[
                pl.BlockSpec((3, tile_n), lambda i: (0, i)),
                full((Ks_pad, 8)),
                full((64, 8)),
                full((64, 64)),
                full((3 * Km_pad, 64)),
                full((3 * Km_pad, 1)),
            ],
            out_specs=pl.BlockSpec((4, tile_n), lambda i: (0, i)),
        ),
        out_shape=jax.ShapeDtypeStruct((4, N_pad), jnp.float32),
        compiler_params=pltpu.CompilerParams(dimension_semantics=("parallel",)),
    )(xT, tab, cond1, W2T, W3p, b3p)

    tx = out[0:3, :N].T                                    # (N, 3)
    ldj = out[3, :N]                                       # (N,)
    return tx, ldj


def init_params(key, Km, Ks):
    """Deterministic synthetic parameters matching the module's __init__ shapes."""
    keys = jax.random.split(key, 5)
    # Unconditional CircularSplineTransform parameters (hemi=False -> lb=-1, rt=1)
    theta_w = jax.random.normal(keys[0], (1, Ks), dtype=jnp.float32)
    theta_h = jax.random.normal(keys[1], (1, Ks), dtype=jnp.float32)
    theta_d = jnp.full((1, Ks - 1), math.log(math.e - 1.0), dtype=jnp.float32)  # softplus_inv(1)

    width = jax.nn.softmax(theta_w, axis=1) * 2.0
    height = jax.nn.softmax(theta_h, axis=1) * 2.0
    x_ks = jnp.pad(jnp.cumsum(width, axis=1), ((0, 0), (1, 0))) - 1.0
    y_ks = jnp.pad(jnp.cumsum(height, axis=1), ((0, 0), (1, 0))) - 1.0
    der = jnp.pad(jax.nn.softplus(theta_d) + 0.001, ((0, 0), (1, 1)),
                  constant_values=1.0)                      # boundary slope = 2/2 = 1

    # Conditional Mobius conditioner: Linear(1,64)->ReLU->Linear(64,64)->ReLU->Linear(64,3*Km)
    def linear_init(k, fan_in, fan_out):
        bound = 1.0 / math.sqrt(fan_in)
        kw, kb = jax.random.split(k)
        W = jax.random.uniform(kw, (fan_in, fan_out), minval=-bound, maxval=bound,
                               dtype=jnp.float32)
        b = jax.random.uniform(kb, (1, fan_out), minval=-bound, maxval=bound,
                               dtype=jnp.float32)
        return W, b

    W1, b1 = linear_init(keys[2], 1, 64)
    W2, b2 = linear_init(keys[3], 64, 64)
    # Final layer columns laid out as [weights | w_x | w_y]
    W3, b3 = linear_init(keys[4], 64, 3 * Km)
    return (x_ks, y_ks, der, W1, b1, W2, b2, W3, b3)


def reference_forward(x, params, Km, Ks):
    """Pure-JAX reference mirroring the PyTorch forward (ordering=0, hemi=False)."""
    x_ks, y_ks, der, W1, b1, W2, b2, W3, b3 = params
    P = jax.lax.Precision.HIGHEST   # keep the reference conditioner at full f32 accuracy
    r = x[:, 2:3]
    ang = jnp.arctan2(x[:, 1:2], x[:, 0:1])
    ang = jnp.where(ang >= 0.0, ang, ang + TWO_PI)

    # spline
    k = jnp.searchsorted(x_ks[0], r[:, 0])          # side='left' == torch default
    k = jnp.where(k == 0, 1, k) - 1
    nk = k + 1
    x_k, x_nk = x_ks[0, k][:, None], x_ks[0, nk][:, None]
    y_k, y_nk = y_ks[0, k][:, None], y_ks[0, nk][:, None]
    d_k, d_nk = der[0, k][:, None], der[0, nk][:, None]
    s_k = (y_nk - y_k) / (x_nk - x_k)
    eps = (r - x_k) / (x_nk - x_k)
    denom = s_k + (d_nk + d_k - 2 * s_k) * eps * (1 - eps)
    tr = y_k + (y_nk - y_k) * (s_k * eps ** 2 + d_k * eps * (1 - eps)) / denom
    dtr = s_k ** 2 * (d_nk * eps ** 2 + 2 * s_k * eps * (1 - eps)
                      + d_k * (1 - eps) ** 2) / denom ** 2

    # mobius conditioned on r
    h = jax.nn.relu(jnp.dot(r, W1, precision=P) + b1)
    h = jax.nn.relu(jnp.dot(h, W2, precision=P) + b2)
    cond = jnp.dot(h, W3, precision=P) + b3
    weights = jax.nn.softmax(cond[:, :Km], axis=1)
    w = jnp.stack([cond[:, Km:2 * Km], cond[:, 2 * Km:3 * Km]], axis=-1)   # (N,Km,2)
    w = 0.99 / (1 + jnp.linalg.norm(w, axis=-1, keepdims=True)) * w
    z = jnp.concatenate([jnp.cos(ang), jnp.sin(ang)], axis=1)

    def _h_fn(zz, w):
        wn = jnp.linalg.norm(w, axis=-1, keepdims=True)
        d = zz.reshape(-1, 1, 2) - w
        return (1 - wn ** 2) / jnp.sum(d * d, axis=-1, keepdims=True) * d - w

    h_z = _h_fn(z, w)
    h_0 = _h_fn(jnp.array([[1.0, 0.0]], dtype=jnp.float32), w)
    t = jnp.arctan2(h_z[..., 1], h_z[..., 0]) - jnp.arctan2(h_0[..., 1], h_0[..., 0])
    t = jnp.where(t >= 0.0, t, t + TWO_PI)
    tz = jnp.sum(weights * t, axis=1, keepdims=True)

    z_w = z[:, None, :] - w
    z_w_norm = jnp.linalg.norm(z_w, axis=-1)
    z_w_unit = z_w / z_w_norm[..., None]
    dz_dtheta = jnp.concatenate([-jnp.sin(ang), jnp.cos(ang)], axis=1)
    I2 = jnp.eye(2, dtype=jnp.float32)
    wn2 = jnp.sum(w * w, axis=-1)
    dh_dz = ((1 - wn2)[..., None, None]
             * (I2[None, None] - 2 * jnp.einsum('nki,nkj->nkij', z_w_unit, z_w_unit))
             / z_w_norm[..., None, None] ** 2)
    dh_dtheta = jnp.einsum('nkpq,nq->nkp', dh_dz, dz_dtheta)
    dtz = jnp.sum(jnp.linalg.norm(dh_dtheta, axis=-1) * weights, axis=1, keepdims=True)

    sq = jnp.sqrt(1 - tr ** 2)
    tx = jnp.concatenate([jnp.cos(tz) * sq, jnp.sin(tz) * sq, tr], axis=1)
    ldj = jnp.log(dtr) + jnp.log(dtz)
    return tx, ldj[:, 0]


if __name__ == "__main__":
    Km, Ks = 6, 8
    N, tile_n = 8192, 2048        # 4 lane-dense grid steps (>= 2 per v7x TensorCore)

    key = jax.random.PRNGKey(0)
    kp, kx = jax.random.split(key)
    params = init_params(kp, Km, Ks)

    pts = jax.random.normal(kx, (N, 3), dtype=jnp.float32)
    pts = pts / jnp.linalg.norm(pts, axis=1, keepdims=True)   # points on S^2

    tx, ldj = mobius_spline_flow(pts, params, Km=Km, Ks=Ks, tile_n=tile_n)
    jax.block_until_ready((tx, ldj))

    tx_ref, ldj_ref = reference_forward(pts, params, Km, Ks)
    # Newton-refined reciprocals + exact narrow divides -> tolerance tightened vs v2
    assert jnp.allclose(tx, tx_ref, atol=1e-3, rtol=1e-3), "tx mismatch"
    assert jnp.allclose(ldj, ldj_ref, atol=1e-3, rtol=1e-3), "ldj mismatch"

    print("KERNEL_OK")
</pallas_src>

<mosaic_0001>
module attributes {stable_mosaic.version = 11 : i64} {
  func.func @_mobius_spline_kernel(%arg0: i32, %arg1: memref<3x2048xf32, #tpu.memory_space<vmem>>, %arg2: memref<8x8xf32, #tpu.memory_space<vmem>>, %arg3: memref<64x8xf32, #tpu.memory_space<vmem>>, %arg4: memref<64x64xf32, #tpu.memory_space<vmem>>, %arg5: memref<24x64xf32, #tpu.memory_space<vmem>>, %arg6: memref<24x1xf32, #tpu.memory_space<vmem>>, %arg7: memref<4x2048xf32, #tpu.memory_space<vmem>>) attributes {dimension_semantics = [#tpu.dimension_semantics<parallel>], iteration_bounds = array<i64: 4>, scalar_prefetch = 0 : i64, scratch_operands = 0 : i64, tpu.core_type = #tpu.core_type<tc>, window_params = [{transform_indices = @transform_0, window_bounds = array<i64: 3, 2048>}, {pipeline_mode = #tpu.pipeline_mode<synchronous>, transform_indices = @transform_1, window_bounds = array<i64: 8, 8>}, {pipeline_mode = #tpu.pipeline_mode<synchronous>, transform_indices = @transform_2, window_bounds = array<i64: 64, 8>}, {pipeline_mode = #tpu.pipeline_mode<synchronous>, transform_indices = @transform_3, window_bounds = array<i64: 64, 64>}, {pipeline_mode = #tpu.pipeline_mode<synchronous>, transform_indices = @transform_4, window_bounds = array<i64: 24, 64>}, {pipeline_mode = #tpu.pipeline_mode<synchronous>, transform_indices = @transform_5, window_bounds = array<i64: 24, 1>}, {transform_indices = @transform_6, window_bounds = array<i64: 4, 2048>}]} {
    %c0 = arith.constant 0 : index
    %c0_0 = arith.constant 0 : index
    %0 = vector.load %arg1[%c0, %c0_0] : memref<3x2048xf32, #tpu.memory_space<vmem>>, vector<3x2048xf32>
    %1 = vector.extract_strided_slice %0 {offsets = [0, 0], sizes = [1, 2048], strides = [1, 1]} : vector<3x2048xf32> to vector<1x2048xf32>
    %2 = vector.extract_strided_slice %0 {offsets = [1, 0], sizes = [1, 2048], strides = [1, 1]} : vector<3x2048xf32> to vector<1x2048xf32>
    %3 = vector.extract_strided_slice %0 {offsets = [2, 0], sizes = [1, 2048], strides = [1, 1]} : vector<3x2048xf32> to vector<1x2048xf32>
    %4 = arith.mulf %1, %1 : vector<1x2048xf32>
    %5 = arith.mulf %2, %2 : vector<1x2048xf32>
    %6 = arith.addf %4, %5 : vector<1x2048xf32>
    %7 = math.rsqrt %6 : vector<1x2048xf32>
    %8 = arith.mulf %1, %7 : vector<1x2048xf32>
    %9 = arith.mulf %2, %7 : vector<1x2048xf32>
    %c0_1 = arith.constant 0 : index
    %c0_2 = arith.constant 0 : index
    %10 = vector.load %arg2[%c0_1, %c0_2] : memref<8x8xf32, #tpu.memory_space<vmem>>, vector<8x8xf32>
    %11 = vector.extract_strided_slice %10 {offsets = [0, 6], sizes = [8, 1], strides = [1, 1]} : vector<8x8xf32> to vector<8x1xf32>
    %12 = vector.broadcast %11 : vector<8x1xf32> to vector<8x2048xf32>
    %13 = vector.broadcast %3 : vector<1x2048xf32> to vector<8x2048xf32>
    %14 = arith.cmpf olt, %12, %13 : vector<8x2048xf32>
    %15 = arith.extui %14 : vector<8x2048xi1> to vector<8x2048xi32>
    %cst = arith.constant dense<0> : vector<2048xi32>
    %16 = vector.multi_reduction <add>, %15, %cst [0] : vector<8x2048xi32> to vector<2048xi32>
    %17 = vector.shape_cast %16 : vector<2048xi32> to vector<1x2048xi32>
    %18 = tpu.iota {dimensions = array<i32: 0>} : vector<8x2048xi32>
    %19 = vector.broadcast %17 : vector<1x2048xi32> to vector<8x2048xi32>
    %20 = arith.cmpi eq, %18, %19 : vector<8x2048xi32>
    %21 = arith.extui %20 : vector<8x2048xi1> to vector<8x2048xi32>
    %22 = arith.sitofp %21 : vector<8x2048xi32> to vector<8x2048xf32>
    %23 = vector.extract_strided_slice %10 {offsets = [0, 0], sizes = [8, 1], strides = [1, 1]} : vector<8x8xf32> to vector<8x1xf32>
    %24 = vector.broadcast %23 : vector<8x1xf32> to vector<8x2048xf32>
    %25 = arith.mulf %24, %22 : vector<8x2048xf32>
    %cst_3 = arith.constant dense<0.000000e+00> : vector<2048xf32>
    %26 = vector.multi_reduction <add>, %25, %cst_3 [0] : vector<8x2048xf32> to vector<2048xf32>
    %27 = vector.shape_cast %26 : vector<2048xf32> to vector<1x2048xf32>
    %28 = vector.extract_strided_slice %10 {offsets = [0, 1], sizes = [8, 1], strides = [1, 1]} : vector<8x8xf32> to vector<8x1xf32>
    %29 = vector.broadcast %28 : vector<8x1xf32> to vector<8x2048xf32>
    %30 = arith.mulf %29, %22 : vector<8x2048xf32>
    %cst_4 = arith.constant dense<0.000000e+00> : vector<2048xf32>
    %31 = vector.multi_reduction <add>, %30, %cst_4 [0] : vector<8x2048xf32> to vector<2048xf32>
    %32 = vector.shape_cast %31 : vector<2048xf32> to vector<1x2048xf32>
    %33 = vector.extract_strided_slice %10 {offsets = [0, 2], sizes = [8, 1], strides = [1, 1]} : vector<8x8xf32> to vector<8x1xf32>
    %34 = vector.broadcast %33 : vector<8x1xf32> to vector<8x2048xf32>
    %35 = arith.mulf %34, %22 : vector<8x2048xf32>
    %cst_5 = arith.constant dense<0.000000e+00> : vector<2048xf32>
    %36 = vector.multi_reduction <add>, %35, %cst_5 [0] : vector<8x2048xf32> to vector<2048xf32>
    %37 = vector.shape_cast %36 : vector<2048xf32> to vector<1x2048xf32>
    %38 = vector.extract_strided_slice %10 {offsets = [0, 3], sizes = [8, 1], strides = [1, 1]} : vector<8x8xf32> to vector<8x1xf32>
    %39 = vector.broadcast %38 : vector<8x1xf32> to vector<8x2048xf32>
    %40 = arith.mulf %39, %22 : vector<8x2048xf32>
    %cst_6 = arith.constant dense<0.000000e+00> : vector<2048xf32>
    %41 = vector.multi_reduction <add>, %40, %cst_6 [0] : vector<8x2048xf32> to vector<2048xf32>
    %42 = vector.shape_cast %41 : vector<2048xf32> to vector<1x2048xf32>
    %43 = vector.extract_strided_slice %10 {offsets = [0, 4], sizes = [8, 1], strides = [1, 1]} : vector<8x8xf32> to vector<8x1xf32>
    %44 = vector.broadcast %43 : vector<8x1xf32> to vector<8x2048xf32>
    %45 = arith.mulf %44, %22 : vector<8x2048xf32>
    %cst_7 = arith.constant dense<0.000000e+00> : vector<2048xf32>
    %46 = vector.multi_reduction <add>, %45, %cst_7 [0] : vector<8x2048xf32> to vector<2048xf32>
    %47 = vector.shape_cast %46 : vector<2048xf32> to vector<1x2048xf32>
    %48 = vector.extract_strided_slice %10 {offsets = [0, 5], sizes = [8, 1], strides = [1, 1]} : vector<8x8xf32> to vector<8x1xf32>
    %49 = vector.broadcast %48 : vector<8x1xf32> to vector<8x2048xf32>
    %50 = arith.mulf %49, %22 : vector<8x2048xf32>
    %cst_8 = arith.constant dense<0.000000e+00> : vector<2048xf32>
    %51 = vector.multi_reduction <add>, %50, %cst_8 [0] : vector<8x2048xf32> to vector<2048xf32>
    %52 = vector.shape_cast %51 : vector<2048xf32> to vector<1x2048xf32>
    %53 = arith.mulf %42, %37 : vector<1x2048xf32>
    %54 = arith.subf %3, %27 : vector<1x2048xf32>
    %55 = arith.mulf %54, %37 : vector<1x2048xf32>
    %cst_9 = arith.constant 1.000000e+00 : f32
    %56 = vector.broadcast %cst_9 : f32 to vector<1x2048xf32>
    %57 = arith.subf %56, %55 : vector<1x2048xf32>
    %58 = arith.mulf %55, %57 : vector<1x2048xf32>
    %59 = arith.addf %52, %47 : vector<1x2048xf32>
    %cst_10 = arith.constant 2.000000e+00 : f32
    %60 = vector.broadcast %cst_10 : f32 to vector<1x2048xf32>
    %61 = arith.mulf %60, %53 : vector<1x2048xf32>
    %62 = arith.subf %59, %61 : vector<1x2048xf32>
    %63 = arith.mulf %62, %58 : vector<1x2048xf32>
    %64 = arith.addf %53, %63 : vector<1x2048xf32>
    %cst_11 = arith.constant 1.000000e+00 : f32
    %65 = vector.broadcast %cst_11 : f32 to vector<1x2048xf32>
    %66 = arith.divf %65, %64 : vector<1x2048xf32>
    %67 = arith.mulf %53, %55 : vector<1x2048xf32>
    %68 = arith.mulf %67, %55 : vector<1x2048xf32>
    %69 = arith.mulf %47, %58 : vector<1x2048xf32>
    %70 = arith.addf %68, %69 : vector<1x2048xf32>
    %71 = arith.mulf %42, %70 : vector<1x2048xf32>
    %72 = arith.mulf %71, %66 : vector<1x2048xf32>
    %73 = arith.addf %32, %72 : vector<1x2048xf32>
    %74 = arith.mulf %53, %53 : vector<1x2048xf32>
    %75 = arith.mulf %52, %55 : vector<1x2048xf32>
    %76 = arith.mulf %75, %55 : vector<1x2048xf32>
    %cst_12 = arith.constant 2.000000e+00 : f32
    %77 = vector.broadcast %cst_12 : f32 to vector<1x2048xf32>
    %78 = arith.mulf %77, %53 : vector<1x2048xf32>
    %79 = arith.mulf %78, %58 : vector<1x2048xf32>
    %80 = arith.addf %76, %79 : vector<1x2048xf32>
    %81 = arith.mulf %47, %57 : vector<1x2048xf32>
    %82 = arith.mulf %81, %57 : vector<1x2048xf32>
    %83 = arith.addf %80, %82 : vector<1x2048xf32>
    %84 = arith.mulf %74, %83 : vector<1x2048xf32>
    %85 = arith.mulf %84, %66 : vector<1x2048xf32>
    %86 = arith.mulf %85, %66 : vector<1x2048xf32>
    %c2 = arith.constant 2 : index
    %c0_13 = arith.constant 0 : index
    %87 = vector.load %arg7[%c2, %c0_13] : memref<4x2048xf32, #tpu.memory_space<vmem>>, vector<1x2048xf32>
    tpu.vector_store %arg7[%c2, %c0_13], %73 {strides = array<i32>} : memref<4x2048xf32, #tpu.memory_space<vmem>>, vector<1x2048xf32>,
    %c0_14 = arith.constant 0 : index
    %c0_15 = arith.constant 0 : index
    %88 = vector.load %arg3[%c0_14, %c0_15] : memref<64x8xf32, #tpu.memory_space<vmem>>, vector<64x8xf32>
    %89 = vector.extract_strided_slice %88 {offsets = [0, 0], sizes = [64, 1], strides = [1, 1]} : vector<64x8xf32> to vector<64x1xf32>
    %90 = vector.extract_strided_slice %88 {offsets = [0, 1], sizes = [64, 1], strides = [1, 1]} : vector<64x8xf32> to vector<64x1xf32>
    %91 = vector.extract_strided_slice %88 {offsets = [0, 2], sizes = [64, 1], strides = [1, 1]} : vector<64x8xf32> to vector<64x1xf32>
    %92 = vector.broadcast %89 : vector<64x1xf32> to vector<64x2048xf32>
    %93 = vector.broadcast %3 : vector<1x2048xf32> to vector<64x2048xf32>
    %94 = arith.mulf %92, %93 : vector<64x2048xf32>
    %95 = vector.broadcast %90 : vector<64x1xf32> to vector<64x2048xf32>
    %96 = arith.addf %94, %95 : vector<64x2048xf32>
    %cst_16 = arith.constant 0.000000e+00 : f32
    %97 = vector.broadcast %cst_16 : f32 to vector<64x2048xf32>
    %98 = arith.maximumf %96, %97 : vector<64x2048xf32>
    %c0_17 = arith.constant 0 : index
    %c0_18 = arith.constant 0 : index
    %99 = vector.load %arg4[%c0_17, %c0_18] : memref<64x64xf32, #tpu.memory_space<vmem>>, vector<64x64xf32>
    %cst_19 = arith.constant dense<0.000000e+00> : vector<64x2048xf32>
    %100 = tpu.matmul %99, %98, %cst_19 {dimension_numbers = #tpu.dot_dimension_numbers<[1], [0], [0], [1], [0, 0, 1, 1], [], []>} : vector<64x64xf32>, vector<64x2048xf32>, vector<64x2048xf32> -> vector<64x2048xf32>
    %101 = vector.broadcast %91 : vector<64x1xf32> to vector<64x2048xf32>
    %102 = arith.addf %100, %101 : vector<64x2048xf32>
    %cst_20 = arith.constant 0.000000e+00 : f32
    %103 = vector.broadcast %cst_20 : f32 to vector<64x2048xf32>
    %104 = arith.maximumf %102, %103 : vector<64x2048xf32>
    %c0_21 = arith.constant 0 : index
    %c0_22 = arith.constant 0 : index
    %105 = vector.load %arg5[%c0_21, %c0_22] : memref<24x64xf32, #tpu.memory_space<vmem>>, vector<24x64xf32>
    %cst_23 = arith.constant dense<0.000000e+00> : vector<24x2048xf32>
    %106 = tpu.matmul %105, %104, %cst_23 {dimension_numbers = #tpu.dot_dimension_numbers<[1], [0], [0], [1], [0, 0, 1, 1], [], []>} : vector<24x64xf32>, vector<64x2048xf32>, vector<24x2048xf32> -> vector<24x2048xf32>
    %c0_24 = arith.constant 0 : index
    %c0_25 = arith.constant 0 : index
    %107 = vector.load %arg6[%c0_24, %c0_25] : memref<24x1xf32, #tpu.memory_space<vmem>>, vector<24x1xf32>
    %108 = vector.broadcast %107 : vector<24x1xf32> to vector<24x2048xf32>
    %109 = arith.addf %106, %108 : vector<24x2048xf32>
    %110 = vector.extract_strided_slice %109 {offsets = [0, 0], sizes = [8, 2048], strides = [1, 1]} : vector<24x2048xf32> to vector<8x2048xf32>
    %111 = vector.extract_strided_slice %109 {offsets = [8, 0], sizes = [8, 2048], strides = [1, 1]} : vector<24x2048xf32> to vector<8x2048xf32>
    %112 = vector.extract_strided_slice %109 {offsets = [16, 0], sizes = [8, 2048], strides = [1, 1]} : vector<24x2048xf32> to vector<8x2048xf32>
    %cst_26 = arith.constant dense<0xFF800000> : vector<2048xf32>
    %113 = vector.multi_reduction <maximumf>, %110, %cst_26 [0] : vector<8x2048xf32> to vector<2048xf32>
    %114 = vector.shape_cast %113 : vector<2048xf32> to vector<1x2048xf32>
    %115 = vector.broadcast %114 : vector<1x2048xf32> to vector<8x2048xf32>
    %116 = arith.subf %110, %115 : vector<8x2048xf32>
    %117 = math.exp %116 : vector<8x2048xf32>
    %cst_27 = arith.constant dense<0.000000e+00> : vector<2048xf32>
    %118 = vector.multi_reduction <add>, %117, %cst_27 [0] : vector<8x2048xf32> to vector<2048xf32>
    %119 = vector.shape_cast %118 : vector<2048xf32> to vector<1x2048xf32>
    %cst_28 = arith.constant 1.000000e+00 : f32
    %120 = vector.broadcast %cst_28 : f32 to vector<1x2048xf32>
    %121 = arith.divf %120, %119 : vector<1x2048xf32>
    %122 = vector.broadcast %121 : vector<1x2048xf32> to vector<8x2048xf32>
    %123 = arith.mulf %117, %122 : vector<8x2048xf32>
    %124 = arith.mulf %111, %111 : vector<8x2048xf32>
    %125 = arith.mulf %112, %112 : vector<8x2048xf32>
    %126 = arith.addf %124, %125 : vector<8x2048xf32>
    %127 = math.sqrt %126 : vector<8x2048xf32>
    %cst_29 = arith.constant 1.000000e+00 : f32
    %128 = vector.broadcast %cst_29 : f32 to vector<8x2048xf32>
    %129 = arith.addf %128, %127 : vector<8x2048xf32>
    %130 = tpu.reciprocal %129 {approx = true} : vector<8x2048xf32> -> vector<8x2048xf32>
    %131 = arith.mulf %129, %130 : vector<8x2048xf32>
    %cst_30 = arith.constant 2.000000e+00 : f32
    %132 = vector.broadcast %cst_30 : f32 to vector<8x2048xf32>
    %133 = arith.subf %132, %131 : vector<8x2048xf32>
    %134 = arith.mulf %130, %133 : vector<8x2048xf32>
    %cst_31 = arith.constant 9.900000e-01 : f32
    %135 = vector.broadcast %cst_31 : f32 to vector<8x2048xf32>
    %136 = arith.mulf %135, %134 : vector<8x2048xf32>
    %137 = arith.mulf %136, %111 : vector<8x2048xf32>
    %138 = arith.mulf %136, %112 : vector<8x2048xf32>
    %139 = arith.mulf %137, %137 : vector<8x2048xf32>
    %140 = arith.mulf %138, %138 : vector<8x2048xf32>
    %141 = arith.addf %139, %140 : vector<8x2048xf32>
    %cst_32 = arith.constant 1.000000e+00 : f32
    %142 = vector.broadcast %cst_32 : f32 to vector<8x2048xf32>
    %143 = arith.subf %142, %141 : vector<8x2048xf32>
    %cst_33 = arith.constant 1.000000e+00 : f32
    %144 = vector.broadcast %cst_33 : f32 to vector<8x2048xf32>
    %145 = arith.subf %144, %137 : vector<8x2048xf32>
    %cst_34 = arith.constant 0.000000e+00 : f32
    %146 = vector.broadcast %cst_34 : f32 to vector<8x2048xf32>
    %147 = arith.subf %146, %138 : vector<8x2048xf32>
    %148 = arith.mulf %145, %145 : vector<8x2048xf32>
    %149 = arith.mulf %147, %147 : vector<8x2048xf32>
    %150 = arith.addf %148, %149 : vector<8x2048xf32>
    %151 = tpu.reciprocal %150 {approx = true} : vector<8x2048xf32> -> vector<8x2048xf32>
    %152 = arith.mulf %150, %151 : vector<8x2048xf32>
    %cst_35 = arith.constant 2.000000e+00 : f32
    %153 = vector.broadcast %cst_35 : f32 to vector<8x2048xf32>
    %154 = arith.subf %153, %152 : vector<8x2048xf32>
    %155 = arith.mulf %151, %154 : vector<8x2048xf32>
    %156 = arith.mulf %143, %155 : vector<8x2048xf32>
    %157 = arith.mulf %156, %145 : vector<8x2048xf32>
    %158 = arith.subf %157, %137 : vector<8x2048xf32>
    %159 = arith.mulf %156, %147 : vector<8x2048xf32>
    %160 = arith.subf %159, %138 : vector<8x2048xf32>
    %161 = vector.broadcast %8 : vector<1x2048xf32> to vector<8x2048xf32>
    %162 = arith.subf %161, %137 : vector<8x2048xf32>
    %163 = vector.broadcast %9 : vector<1x2048xf32> to vector<8x2048xf32>
    %164 = arith.subf %163, %138 : vector<8x2048xf32>
    %165 = arith.mulf %162, %162 : vector<8x2048xf32>
    %166 = arith.mulf %164, %164 : vector<8x2048xf32>
    %167 = arith.addf %165, %166 : vector<8x2048xf32>
    %168 = tpu.reciprocal %167 {approx = true} : vector<8x2048xf32> -> vector<8x2048xf32>
    %169 = arith.mulf %167, %168 : vector<8x2048xf32>
    %cst_36 = arith.constant 2.000000e+00 : f32
    %170 = vector.broadcast %cst_36 : f32 to vector<8x2048xf32>
    %171 = arith.subf %170, %169 : vector<8x2048xf32>
    %172 = arith.mulf %168, %171 : vector<8x2048xf32>
    %173 = arith.mulf %143, %172 : vector<8x2048xf32>
    %174 = arith.mulf %173, %162 : vector<8x2048xf32>
    %175 = arith.subf %174, %137 : vector<8x2048xf32>
    %176 = arith.mulf %173, %164 : vector<8x2048xf32>
    %177 = arith.subf %176, %138 : vector<8x2048xf32>
    %178 = arith.mulf %177, %158 : vector<8x2048xf32>
    %179 = arith.mulf %175, %160 : vector<8x2048xf32>
    %180 = arith.subf %178, %179 : vector<8x2048xf32>
    %181 = arith.mulf %175, %158 : vector<8x2048xf32>
    %182 = arith.mulf %177, %160 : vector<8x2048xf32>
    %183 = arith.addf %181, %182 : vector<8x2048xf32>
    %184 = math.atan2 %180, %183 : vector<8x2048xf32>
    %cst_37 = arith.constant 0.000000e+00 : f32
    %185 = vector.broadcast %cst_37 : f32 to vector<8x2048xf32>
    %186 = arith.cmpf oge, %184, %185 : vector<8x2048xf32>
    %cst_38 = arith.constant 6.28318548 : f32
    %187 = vector.broadcast %cst_38 : f32 to vector<8x2048xf32>
    %188 = arith.addf %184, %187 : vector<8x2048xf32>
    %189 = arith.select %186, %184, %188 : vector<8x2048xi1>, vector<8x2048xf32>
    %190 = arith.mulf %123, %189 : vector<8x2048xf32>
    %cst_39 = arith.constant dense<0.000000e+00> : vector<2048xf32>
    %191 = vector.multi_reduction <add>, %190, %cst_39 [0] : vector<8x2048xf32> to vector<2048xf32>
    %192 = vector.shape_cast %191 : vector<2048xf32> to vector<1x2048xf32>
    %193 = arith.mulf %173, %123 : vector<8x2048xf32>
    %cst_40 = arith.constant dense<0.000000e+00> : vector<2048xf32>
    %194 = vector.multi_reduction <add>, %193, %cst_40 [0] : vector<8x2048xf32> to vector<2048xf32>
    %195 = vector.shape_cast %194 : vector<2048xf32> to vector<1x2048xf32>
    %196 = arith.mulf %73, %73 : vector<1x2048xf32>
    %cst_41 = arith.constant 1.000000e+00 : f32
    %197 = vector.broadcast %cst_41 : f32 to vector<1x2048xf32>
    %198 = arith.subf %197, %196 : vector<1x2048xf32>
    %cst_42 = arith.constant 0.000000e+00 : f32
    %199 = vector.broadcast %cst_42 : f32 to vector<1x2048xf32>
    %200 = arith.maximumf %198, %199 : vector<1x2048xf32>
    %201 = math.sqrt %200 : vector<1x2048xf32>
    %202 = math.cos %192 : vector<1x2048xf32>
    %203 = arith.mulf %202, %201 : vector<1x2048xf32>
    %c0_43 = arith.constant 0 : index
    %c0_44 = arith.constant 0 : index
    %204 = vector.load %arg7[%c0_43, %c0_44] : memref<4x2048xf32, #tpu.memory_space<vmem>>, vector<1x2048xf32>
    tpu.vector_store %arg7[%c0_43, %c0_44], %203 {strides = array<i32>} : memref<4x2048xf32, #tpu.memory_space<vmem>>, vector<1x2048xf32>,
    %205 = math.sin %192 : vector<1x2048xf32>
    %206 = arith.mulf %205, %201 : vector<1x2048xf32>
    %c1 = arith.constant 1 : index
    %c0_45 = arith.constant 0 : index
    %207 = vector.load %arg7[%c1, %c0_45] : memref<4x2048xf32, #tpu.memory_space<vmem>>, vector<1x2048xf32>
    tpu.vector_store %arg7[%c1, %c0_45], %206 {strides = array<i32>} : memref<4x2048xf32, #tpu.memory_space<vmem>>, vector<1x2048xf32>,
    %208 = arith.mulf %86, %195 : vector<1x2048xf32>
    %209 = math.log %208 : vector<1x2048xf32>
    %c3 = arith.constant 3 : index
    %c0_46 = arith.constant 0 : index
    %210 = vector.load %arg7[%c3, %c0_46] : memref<4x2048xf32, #tpu.memory_space<vmem>>, vector<1x2048xf32>
    tpu.vector_store %arg7[%c3, %c0_46], %209 {strides = array<i32>} : memref<4x2048xf32, #tpu.memory_space<vmem>>, vector<1x2048xf32>,
    return
  }
  func.func @transform_0(%arg0: i32) -> (i32, i32) {
    %c0_i32 = arith.constant 0 : i32
    %c0_i32_0 = arith.constant 0 : i32
    return %c0_i32, %arg0 : i32, i32
  }
  func.func @transform_1(%arg0: i32) -> (i32, i32) {
    %c0_i32 = arith.constant 0 : i32
    %c0_i32_0 = arith.constant 0 : i32
    %c0_i32_1 = arith.constant 0 : i32
    return %c0_i32, %c0_i32_0 : i32, i32
  }
  func.func @transform_2(%arg0: i32) -> (i32, i32) {
    %c0_i32 = arith.constant 0 : i32
    %c0_i32_0 = arith.constant 0 : i32
    %c0_i32_1 = arith.constant 0 : i32
    return %c0_i32, %c0_i32_0 : i32, i32
  }
  func.func @transform_3(%arg0: i32) -> (i32, i32) {
    %c0_i32 = arith.constant 0 : i32
    %c0_i32_0 = arith.constant 0 : i32
    %c0_i32_1 = arith.constant 0 : i32
    return %c0_i32, %c0_i32_0 : i32, i32
  }
  func.func @transform_4(%arg0: i32) -> (i32, i32) {
    %c0_i32 = arith.constant 0 : i32
    %c0_i32_0 = arith.constant 0 : i32
    %c0_i32_1 = arith.constant 0 : i32
    return %c0_i32, %c0_i32_0 : i32, i32
  }
  func.func @transform_5(%arg0: i32) -> (i32, i32) {
    %c0_i32 = arith.constant 0 : i32
    %c0_i32_0 = arith.constant 0 : i32
    %c0_i32_1 = arith.constant 0 : i32
    return %c0_i32, %c0_i32_0 : i32, i32
  }
  func.func @transform_6(%arg0: i32) -> (i32, i32) {
    %c0_i32 = arith.constant 0 : i32
    %c0_i32_0 = arith.constant 0 : i32
    return %c0_i32, %arg0 : i32, i32
  }
}

</mosaic_0001>

<llo_original>
// kernel: tpu_custom_call.1
$region0: #{tpu_custom_call.1}
  #allocation0 [shape = 'u32[]', space=smem, size = 0x4, offset = 0x4, fixed_abs, tag = 'smem constant byte address 0x4 - core index']
  #allocation1 [shape = 'u32[144,128]{1,0:T(1,128)}', space=vmem, size = 0x12000, scoped, tag = 'internal scratch']
  %s0 = inlined_call_operand.hbm [shape: f32[3,8192], index: 0, kind: input, shape index: {}]
  %s1 = inlined_call_operand.vmem [shape: f32[8,8], index: 1, kind: input, shape index: {}]
  %s2 = inlined_call_operand.vmem [shape: f32[64,8], index: 2, kind: input, shape index: {}]
  %s3 = inlined_call_operand.vmem [shape: f32[64,64], index: 3, kind: input, shape index: {}]
  %s4 = inlined_call_operand.vmem [shape: f32[24,64], index: 4, kind: input, shape index: {}]
  %s5 = inlined_call_operand.vmem [shape: f32[24,1], index: 5, kind: input, shape index: {}]
  %s6 = inlined_call_operand.hbm [shape: f32[4,8192], index: 6, kind: output, shape index: {}]
  %s7 = sld [smem:[#allocation0]]
  $region61: #{tpu_custom_call.1} parent=0
    _
  %s9 = ssub.s32 1, %s7
  %s10 = scalar_select 0, %s9, %s7
  $region1: #{tpu_custom_call.1} parent=0
    #allocation2 [shape = 'u8[65536]{0}', space=vmem, size = 0x10000, scoped, tag = 'input window, operand 0']
    #allocation3 [shape = 's32[2]{0}', space=sflag, size = 0x8, scoped, tag = 'scoped memory for tpu_custom_call.1']
    #allocation4 [shape = 's32[2]{0}', space=sflag, size = 0x8, scoped, tag = 'scoped memory for tpu_custom_call.1']
    #allocation5 [shape = 'u8[65536]{0}', space=vmem, size = 0x10000, scoped, tag = 'output window, operand 0']
    %11 = vsyncpa [#allocation3], 0
    %s12 = scalar_lea.sflag [#allocation3], 1
    %13 = vsyncpa %s12, 0
    %14 = vsyncpa [#allocation4], 0
    %s15 = scalar_lea.sflag [#allocation4], 1
    %16 = vsyncpa %s15, 0
    loop: start=0, step=1, limit=6
    $region2: #{tpu_custom_call.1} parent=1 // loop_pre_header
      _
    $region3: #{tpu_custom_call.1} parent=1 // loop_header
      %s18 = sphi 0, %s22
      %p19 = scmp.ge.s32.totalorder %s18, 6
      %s28 = sphi 0, %s30
      %s31 = sphi 0, %s28
      %s32 = sphi 0, %s31
      %s48 = sphi 0, %s32
      %s52 = sphi 0, %s52
      %s54 = sphi 0, %s52
      %s55 = sphi 0, %s54
      %s69 = sphi 0, %s55
      %s73 = sphi 0, %s73
      %s75 = sphi 0, %s73
      %s76 = sphi 0, %s75
      %s90 = sphi 0, %s76
      %s94 = sphi 0, %s94
      %s96 = sphi 0, %s94
      %s97 = sphi 0, %s96
      %s111 = sphi 0, %s97
      %s115 = sphi 0, %s115
      %s117 = sphi 0, %s115
      %s118 = sphi 0, %s117
      %s132 = sphi 0, %s118
      %s136 = sphi 0, %s136
      %s138 = sphi 0, %s136
      %s139 = sphi 0, %s138
      %s153 = sphi 0, %s139
      %s159 = sphi 0, %s161
      %s162 = sphi 0, %s159
      %s163 = sphi 0, %s162
      %s179 = sphi 0, %s163
    $region4: #{tpu_custom_call.1} parent=1 // loop_header_branch
      %21 = sbr.rel (%p19) target = $region8
    $region5: #{tpu_custom_call.1} parent=1 // loop_body
      %s23 = ssub.s32 %s18, 1
      %s24 = ssub.s32 %s18, 2
      %s25 = sadd.s32 %s18, 1
      %s26 = ssub.s32 %s18, %s25
      %p27 = scmp.eq.s32.totalorder %s26, 0
      %s29 = sadd.s32 %s28, 1
      %s30 = scalar_select %p27, %s28, %s29
      %p33 = pneg %p27
      %p34 = scmp.eq.s32.totalorder %s18, 3
      %p35 = por %p33, %p34
      %p36 = scmp.ne.s32.totalorder %s28, %s31
      %p37 = scmp.eq.s32.totalorder %s18, 0
      %p38 = por %p36, %p37
      %p39 = scmp.ne.s32.totalorder %s28, %s31
      %p40 = scmp.eq.s32.totalorder %s23, 3
      %p41 = por %p39, %p40
      %p42 = scmp.ne.s32.totalorder %s31, %s32
      %p43 = scmp.eq.s32.totalorder %s23, 0
      %p44 = por %p42, %p43
      %p45 = scmp.ne.s32.totalorder %s31, %s32
      %p46 = scmp.eq.s32.totalorder %s24, 3
      %p47 = por %p45, %p46
      %p49 = scmp.ne.s32.totalorder %s32, %s48
      %p50 = scmp.eq.s32.totalorder %s24, 0
      %p51 = por %p49, %p50
      %s53 = sadd.s32 %s52, 1
      %p56 = scmp.eq.s32.totalorder %s18, 3
      %p57 = scmp.ne.s32.totalorder %s52, %s54
      %p58 = scmp.eq.s32.totalorder %s18, 0
      %p59 = por %p57, %p58
      %p60 = scmp.ne.s32.totalorder %s52, %s54
      %p61 = scmp.eq.s32.totalorder %s23, 3
      %p62 = por %p60, %p61
      %p63 = scmp.ne.s32.totalorder %s54, %s55
      %p64 = scmp.eq.s32.totalorder %s23, 0
      %p65 = por %p63, %p64
      %p66 = scmp.ne.s32.totalorder %s54, %s55
      %p67 = scmp.eq.s32.totalorder %s24, 3
      %p68 = por %p66, %p67
      %p70 = scmp.ne.s32.totalorder %s55, %s69
      %p71 = scmp.eq.s32.totalorder %s24, 0
      %p72 = por %p70, %p71
      %s74 = sadd.s32 %s73, 1
      %p77 = scmp.eq.s32.totalorder %s18, 3
      %p78 = scmp.ne.s32.totalorder %s73, %s75
      %p79 = scmp.eq.s32.totalorder %s18, 0
      %p80 = por %p78, %p79
      %p81 = scmp.ne.s32.totalorder %s73, %s75
      %p82 = scmp.eq.s32.totalorder %s23, 3
      %p83 = por %p81, %p82
      %p84 = scmp.ne.s32.totalorder %s75, %s76
      %p85 = scmp.eq.s32.totalorder %s23, 0
      %p86 = por %p84, %p85
      %p87 = scmp.ne.s32.totalorder %s75, %s76
      %p88 = scmp.eq.s32.totalorder %s24, 3
      %p89 = por %p87, %p88
      %p91 = scmp.ne.s32.totalorder %s76, %s90
      %p92 = scmp.eq.s32.totalorder %s24, 0
      %p93 = por %p91, %p92
      %s95 = sadd.s32 %s94, 1
      %p98 = scmp.eq.s32.totalorder %s18, 3
      %p99 = scmp.ne.s32.totalorder %s94, %s96
      %p100 = scmp.eq.s32.totalorder %s18, 0
      %p101 = por %p99, %p100
      %p102 = scmp.ne.s32.totalorder %s94, %s96
      %p103 = scmp.eq.s32.totalorder %s23, 3
      %p104 = por %p102, %p103
      %p105 = scmp.ne.s32.totalorder %s96, %s97
      %p106 = scmp.eq.s32.totalorder %s23, 0
      %p107 = por %p105, %p106
      %p108 = scmp.ne.s32.totalorder %s96, %s97
      %p109 = scmp.eq.s32.totalorder %s24, 3
      %p110 = por %p108, %p109
      %p112 = scmp.ne.s32.totalorder %s97, %s111
      %p113 = scmp.eq.s32.totalorder %s24, 0
      %p114 = por %p112, %p113
      %s116 = sadd.s32 %s115, 1
      %p119 = scmp.eq.s32.totalorder %s18, 3
      %p120 = scmp.ne.s32.totalorder %s115, %s117
      %p121 = scmp.eq.s32.totalorder %s18, 0
      %p122 = por %p120, %p121
      %p123 = scmp.ne.s32.totalorder %s115, %s117
      %p124 = scmp.eq.s32.totalorder %s23, 3
      %p125 = por %p123, %p124
      %p126 = scmp.ne.s32.totalorder %s117, %s118
      %p127 = scmp.eq.s32.totalorder %s23, 0
      %p128 = por %p126, %p127
      %p129 = scmp.ne.s32.totalorder %s117, %s118
      %p130 = scmp.eq.s32.totalorder %s24, 3
      %p131 = por %p129, %p130
      %p133 = scmp.ne.s32.totalorder %s118, %s132
      %p134 = scmp.eq.s32.totalorder %s24, 0
      %p135 = por %p133, %p134
      %s137 = sadd.s32 %s136, 1
      %p140 = scmp.eq.s32.totalorder %s18, 3
      %p141 = scmp.ne.s32.totalorder %s136, %s138
      %p142 = scmp.eq.s32.totalorder %s18, 0
      %p143 = por %p141, %p142
      %p144 = scmp.ne.s32.totalorder %s136, %s138
      %p145 = scmp.eq.s32.totalorder %s23, 3
      %p146 = por %p144, %p145
      %p147 = scmp.ne.s32.totalorder %s138, %s139
      %p148 = scmp.eq.s32.totalorder %s23, 0
      %p149 = por %p147, %p148
      %p150 = scmp.ne.s32.totalorder %s138, %s139
      %p151 = scmp.eq.s32.totalorder %s24, 3
      %p152 = por %p150, %p151
      %p154 = scmp.ne.s32.totalorder %s139, %s153
      %p155 = scmp.eq.s32.totalorder %s24, 0
      %p156 = por %p154, %p155
      %s157 = ssub.s32 %s18, %s25
      %p158 = scmp.eq.s32.totalorder %s157, 0
      %s160 = sadd.s32 %s159, 1
      %s161 = scalar_select %p158, %s159, %s160
      %p164 = pneg %p158
      %p165 = scmp.eq.s32.totalorder %s18, 3
      %p166 = por %p164, %p165
      %p167 = scmp.ne.s32.totalorder %s159, %s162
      %p168 = scmp.eq.s32.totalorder %s18, 0
      %p169 = por %p167, %p168
      %p170 = scmp.ne.s32.totalorder %s159, %s162
      %p171 = scmp.eq.s32.totalorder %s23, 3
      %p172 = por %p170, %p171
      %p173 = scmp.ne.s32.totalorder %s162, %s163
      %p174 = scmp.eq.s32.totalorder %s23, 0
      %p175 = por %p173, %p174
      %p176 = scmp.ne.s32.totalorder %s162, %s163
      %p177 = scmp.eq.s32.totalorder %s24, 3
      %p178 = por %p176, %p177
      %p180 = scmp.ne.s32.totalorder %s163, %s179
      %p181 = scmp.eq.s32.totalorder %s24, 0
      %p182 = por %p180, %p181
      %p183 = scmp.le.s32.totalorder 1, %s18
      %p184 = scmp.lt.s32.totalorder %s18, 5
      %p185 = pnand %p183, %p184
      %p186 = pneg %p185
      // Predicated region
      $region9: #{tpu_custom_call.1} parent=5 // pred_check
        _
      $region10: #{tpu_custom_call.1} parent=5 // pred_check_branch
        %188 = sbr.rel (%p185) target = $region12
      $region11: #{tpu_custom_call.1} parent=5 // pred_region
        %s189 = ssub.s32 %s18, 1
        // Predicated region
        $region13: #{tpu_custom_call.1} parent=11 // pred_check
          %p190 = pneg %p65
        $region14: #{tpu_custom_call.1} parent=11 // pred_check_branch
          %192 = sbr.rel (%p190) target = $region16
        $region15: #{tpu_custom_call.1} parent=11 // pred_region
          _
        $region16: #{tpu_custom_call.1} parent=11 // pred_fallthru
          _
        // Predicated region
        $region17: #{tpu_custom_call.1} parent=11 // pred_check
          %p193 = pneg %p86
        $region18: #{tpu_custom_call.1} parent=11 // pred_check_branch
          %195 = sbr.rel (%p193) target = $region20
        $region19: #{tpu_custom_call.1} parent=11 // pred_region
          _
        $region20: #{tpu_custom_call.1} parent=11 // pred_fallthru
          _
        // Predicated region
        $region21: #{tpu_custom_call.1} parent=11 // pred_check
          %p196 = pneg %p107
        $region22: #{tpu_custom_call.1} parent=11 // pred_check_branch
          %198 = sbr.rel (%p196) target = $region24
        $region23: #{tpu_custom_call.1} parent=11 // pred_region
          _
        $region24: #{tpu_custom_call.1} parent=11 // pred_fallthru
          _
        // Predicated region
        $region25: #{tpu_custom_call.1} parent=11 // pred_check
          %p199 = pneg %p128
        $region26: #{tpu_custom_call.1} parent=11 // pred_check_branch
          %201 = sbr.rel (%p199) target = $region28
        $region27: #{tpu_custom_call.1} parent=11 // pred_region
          _
        $region28: #{tpu_custom_call.1} parent=11 // pred_fallthru
          _
        // Predicated region
        $region29: #{tpu_custom_call.1} parent=11 // pred_check
          %p202 = pneg %p149
        $region30: #{tpu_custom_call.1} parent=11 // pred_check_branch
          %204 = sbr.rel (%p202) target = $region32
        $region31: #{tpu_custom_call.1} parent=11 // pred_region
          _
        $region32: #{tpu_custom_call.1} parent=11 // pred_fallthru
          _
      $region12: #{tpu_custom_call.1} parent=5 // pred_fallthru
        _
      %p205 = scmp.lt.s32.totalorder %s18, 4
      // Predicated region
      $region33: #{tpu_custom_call.1} parent=5 // pred_check
        %p206 = pneg %p205
      $region34: #{tpu_custom_call.1} parent=5 // pred_check_branch
        %208 = sbr.rel (%p206) target = $region36
      $region35: #{tpu_custom_call.1} parent=5 // pred_region
        // Predicated region
        $region37: #{tpu_custom_call.1} parent=35 // pred_check
          %p209 = pneg %p38
        $region38: #{tpu_custom_call.1} parent=35 // pred_check_branch
          %211 = sbr.rel (%p209) target = $region40
        $region39: #{tpu_custom_call.1} parent=35 // pred_region
          %s212 = sand.u32 %s28, 1
          %s213 = scalar_lea.sflag [#allocation3], %s212
          %s214 = sand.u32 %s28, 1
          %s215 = smul.addr %s214, 64
          %s216 = scalar_lea.vmem [#allocation2], %s215
          %s217 = smul.u32 16, %s18
          %s219 = ssub.s32 1024, 1024
          %220 = vsyncadd %s213, %s219
          %s221 = smul.addr %s217, 64
          %s222 = scalar_lea.hbm %s0, %s221
          %s224 = sshll.u32 %s216, 4
          %s225 = int_to_ptr.vmem [resolvable:$true] %s224
          %227 = dma.hbm_to_vmem [thread:$0]  %s222, 1024, %s225, %s213
        $region40: #{tpu_custom_call.1} parent=35 // pred_fallthru
          _
      $region36: #{tpu_custom_call.1} parent=5 // pred_fallthru
        _
      %p228 = scmp.le.s32.totalorder 1, %s18
      %p229 = scmp.lt.s32.totalorder %s18, 5
      %p230 = pnand %p228, %p229
      %p231 = pneg %p230
      // Predicated region
      $region41: #{tpu_custom_call.1} parent=5 // pred_check
        _
      $region42: #{tpu_custom_call.1} parent=5 // pred_check_branch
        %233 = sbr.rel (%p230) target = $region44
      $region43: #{tpu_custom_call.1} parent=5 // pred_region
        %s234 = ssub.s32 %s18, 1
        %s235 = sand.u32 %s31, 1
        %s236 = scalar_lea.sflag [#allocation3], %s235
        %s237 = sand.u32 %s31, 1
        %s238 = smul.addr %s237, 64
        %s239 = scalar_lea.vmem [#allocation2], %s238
        // Predicated region
        $region45: #{tpu_custom_call.1} parent=43 // pred_check
          %p240 = pneg %p44
        $region46: #{tpu_custom_call.1} parent=43 // pred_check_branch
          %242 = sbr.rel (%p240) target = $region48
        $region47: #{tpu_custom_call.1} parent=43 // pred_region
          %243 = dma.done %s236, 1024
        $region48: #{tpu_custom_call.1} parent=43 // pred_fallthru
          _
        %s244 = sand.u32 %s31, 1
        %s245 = scalar_lea.sflag [#allocation3], %s244
        %s246 = sand.u32 %s31, 1
        %s247 = smul.addr %s246, 64
        %s248 = scalar_lea.vmem [#allocation2], %s247
        %p249 = pneg %p44
        %p250 = pneg %p41
        %p251 = pneg %p65
        %p252 = pneg %p62
        %p253 = pneg %p86
        %p254 = pneg %p83
        %p255 = pneg %p107
        %p256 = pneg %p104
        %p257 = pneg %p128
        %p258 = pneg %p125
        %p259 = pneg %p149
        %p260 = pneg %p146
        %p261 = pneg %p175
        %p262 = pneg %p172
        %s263 = sand.u32 %s162, 1
        %s264 = scalar_lea.sflag [#allocation4], %s263
        %s265 = sand.u32 %s162, 1
        %s266 = smul.addr %s265, 64
        %s267 = scalar_lea.vmem [#allocation5], %s266
        %s268 = smul.u32 16, %s23
        %s269 = smul.u32 16, %s23
        %v270 = vld [vmem:[%s239] sm:$0x77]
        %v271 = vld [vmem:[%s239 + $0x8] sm:$0x77]
        %v272 = vld [vmem:[%s239 + $0x10] sm:$0x77]
        %v273 = vld [vmem:[%s239 + $0x18] sm:$0x77]
        %v274 = vld [vmem:[%s239 + $0x20] sm:$0x77]
        %v275 = vld [vmem:[%s239 + $0x28] sm:$0x77]
        %v276 = vld [vmem:[%s239 + $0x30] sm:$0x77]
        %v277 = vld [vmem:[%s239 + $0x38] sm:$0x77]
        %v278 = vmul.f32 %v270, %v270
        %v279 = vmul.f32 %v271, %v271
        %v280 = vmul.f32 %v272, %v272
        %v281 = vmul.f32 %v273, %v273
        %v282 = vmul.f32 %v274, %v274
        %v283 = vmul.f32 %v275, %v275
        %v284 = vmul.f32 %v276, %v276
        %v285 = vmul.f32 %v277, %v277
        %v294 = vrot.slane %v278, 5
        %v295 = vrot.slane %v294, 4
        %v296 = vrot.slane %v279, 5
        %v297 = vrot.slane %v296, 4
        %v298 = vrot.slane %v280, 5
        %v299 = vrot.slane %v298, 4
        %v300 = vrot.slane %v281, 5
        %v301 = vrot.slane %v300, 4
        %v302 = vrot.slane %v282, 5
        %v303 = vrot.slane %v302, 4
        %v304 = vrot.slane %v283, 5
        %v305 = vrot.slane %v304, 4
        %v306 = vrot.slane %v284, 5
        %v307 = vrot.slane %v306, 4
        %v308 = vrot.slane %v285, 5
        %v309 = vrot.slane %v308, 4
        %v318 = vadd.f32 %v278, %v295
        %v319 = vadd.f32 %v279, %v297
        %v320 = vadd.f32 %v280, %v299
        %v321 = vadd.f32 %v281, %v301
        %v322 = vadd.f32 %v282, %v303
        %v323 = vadd.f32 %v283, %v305
        %v324 = vadd.f32 %v284, %v307
        %v325 = vadd.f32 %v285, %v309
        %v326 = vrsqrt.pop %v318
        %v327 = vrsqrt.pop %v319
        %v328 = vrsqrt.pop %v320
        %v329 = vrsqrt.pop %v321
        %v330 = vrsqrt.pop %v322
        %v331 = vrsqrt.pop %v323
        %v332 = vrsqrt.pop %v324
        %v333 = vrsqrt.pop %v325
        %v334 = vmul.f32 %v270, %v326
        %v335 = vmul.f32 %v271, %v327
        %v336 = vmul.f32 %v272, %v328
        %v337 = vmul.f32 %v273, %v329
        %v338 = vmul.f32 %v274, %v330
        %v339 = vmul.f32 %v275, %v331
        %v340 = vmul.f32 %v276, %v332
        %v341 = vmul.f32 %v277, %v333
        %v350 = vrot.slane %v326, 7
        %v351 = vrot.slane %v327, 7
        %v352 = vrot.slane %v328, 7
        %v353 = vrot.slane %v329, 7
        %v354 = vrot.slane %v330, 7
        %v355 = vrot.slane %v331, 7
        %v356 = vrot.slane %v332, 7
        %v357 = vrot.slane %v333, 7
        %v366 = vmul.f32 %v270, %v350
        %v367 = vmul.f32 %v271, %v351
        %v368 = vmul.f32 %v272, %v352
        %v369 = vmul.f32 %v273, %v353
        %v370 = vmul.f32 %v274, %v354
        %v371 = vmul.f32 %v275, %v355
        %v372 = vmul.f32 %v276, %v356
        %v373 = vmul.f32 %v277, %v357
        %v374 = vld [vmem:[%s1] sm:$0xff]
        %376 = vset.pattern.permute.xlu0 6
        %377 = vperm.xlu0 %376, %v374
        %v378 = vpop.permute.xlu0 %377
        %v388 = vlaneseq
        %v389 = vshrl.u32 %v388, 7
        %v390 = vsub.s32 2, %v389
        %v391 = vrot.slane %v270, %v390
        %v392 = vlaneseq
        %v393 = vshrl.u32 %v392, 7
        %v394 = vsub.s32 6, %v393
        %v395 = vrot.slane %v270, %v394
        %v396 = vlaneseq
        %v397 = vshrl.u32 %v396, 7
        %v398 = vsub.s32 2, %v397
        %v399 = vrot.slane %v271, %v398
        %v400 = vlaneseq
        %v401 = vshrl.u32 %v400, 7
        %v402 = vsub.s32 6, %v401
        %v403 = vrot.slane %v271, %v402
        %v404 = vlaneseq
        %v405 = vshrl.u32 %v404, 7
        %v406 = vsub.s32 2, %v405
        %v407 = vrot.slane %v272, %v406
        %v408 = vlaneseq
        %v409 = vshrl.u32 %v408, 7
        %v410 = vsub.s32 6, %v409
        %v411 = vrot.slane %v272, %v410
        %v412 = vlaneseq
        %v413 = vshrl.u32 %v412, 7
        %v414 = vsub.s32 2, %v413
        %v415 = vrot.slane %v273, %v414
        %v416 = vlaneseq
        %v417 = vshrl.u32 %v416, 7
        %v418 = vsub.s32 6, %v417
        %v419 = vrot.slane %v273, %v418
        %v420 = vlaneseq
        %v421 = vshrl.u32 %v420, 7
        %v422 = vsub.s32 2, %v421
        %v423 = vrot.slane %v274, %v422
        %v424 = vlaneseq
        %v425 = vshrl.u32 %v424, 7
        %v426 = vsub.s32 6, %v425
        %v427 = vrot.slane %v274, %v426
        %v428 = vlaneseq
        %v429 = vshrl.u32 %v428, 7
        %v430 = vsub.s32 2, %v429
        %v431 = vrot.slane %v275, %v430
        %v432 = vlaneseq
        %v433 = vshrl.u32 %v432, 7
        %v434 = vsub.s32 6, %v433
        %v435 = vrot.slane %v275, %v434
        %v436 = vlaneseq
        %v437 = vshrl.u32 %v436, 7
        %v438 = vsub.s32 2, %v437
        %v439 = vrot.slane %v276, %v438
        %v440 = vlaneseq
        %v441 = vshrl.u32 %v440, 7
        %v442 = vsub.s32 6, %v441
        %v443 = vrot.slane %v276, %v442
        %v444 = vlaneseq
        %v445 = vshrl.u32 %v444, 7
        %v446 = vsub.s32 2, %v445
        %v447 = vrot.slane %v277, %v446
        %v448 = vlaneseq
        %v449 = vshrl.u32 %v448, 7
        %v450 = vsub.s32 6, %v449
        %v451 = vrot.slane %v277, %v450
        %v468 = vlaneseq
        %v469 = vshrl.u32 %v468, 7
        %v470 = vsub.s32 2, %v469
        %v471 = vrot.slane %v391, %v470
        %v472 = vlaneseq
        %v473 = vshrl.u32 %v472, 7
        %v474 = vsub.s32 2, %v473
        %v475 = vrot.slane %v395, %v474
        %v476 = vlaneseq
        %v477 = vshrl.u32 %v476, 7
        %v478 = vsub.s32 2, %v477
        %v479 = vrot.slane %v399, %v478
        %v480 = vlaneseq
        %v481 = vshrl.u32 %v480, 7
        %v482 = vsub.s32 2, %v481
        %v483 = vrot.slane %v403, %v482
        %v484 = vlaneseq
        %v485 = vshrl.u32 %v484, 7
        %v486 = vsub.s32 2, %v485
        %v487 = vrot.slane %v407, %v486
        %v488 = vlaneseq
        %v489 = vshrl.u32 %v488, 7
        %v490 = vsub.s32 2, %v489
        %v491 = vrot.slane %v411, %v490
        %v492 = vlaneseq
        %v493 = vshrl.u32 %v492, 7
        %v494 = vsub.s32 2, %v493
        %v495 = vrot.slane %v415, %v494
        %v496 = vlaneseq
        %v497 = vshrl.u32 %v496, 7
        %v498 = vsub.s32 2, %v497
        %v499 = vrot.slane %v419, %v498
        %v500 = vlaneseq
        %v501 = vshrl.u32 %v500, 7
        %v502 = vsub.s32 2, %v501
        %v503 = vrot.slane %v423, %v502
        %v504 = vlaneseq
        %v505 = vshrl.u32 %v504, 7
        %v506 = vsub.s32 2, %v505
        %v507 = vrot.slane %v427, %v506
        %v508 = vlaneseq
        %v509 = vshrl.u32 %v508, 7
        %v510 = vsub.s32 2, %v509
        %v511 = vrot.slane %v431, %v510
        %v512 = vlaneseq
        %v513 = vshrl.u32 %v512, 7
        %v514 = vsub.s32 2, %v513
        %v515 = vrot.slane %v435, %v514
        %v516 = vlaneseq
        %v517 = vshrl.u32 %v516, 7
        %v518 = vsub.s32 2, %v517
        %v519 = vrot.slane %v439, %v518
        %v520 = vlaneseq
        %v521 = vshrl.u32 %v520, 7
        %v522 = vsub.s32 2, %v521
        %v523 = vrot.slane %v443, %v522
        %v524 = vlaneseq
        %v525 = vshrl.u32 %v524, 7
        %v526 = vsub.s32 2, %v525
        %v527 = vrot.slane %v447, %v526
        %v528 = vlaneseq
        %v529 = vshrl.u32 %v528, 7
        %v530 = vsub.s32 2, %v529
        %v531 = vrot.slane %v451, %v530
        %vm532 = vcmp.lt.f32.partialorder %v378, %v471
        %vm533 = vcmp.lt.f32.partialorder %v378, %v475
        %vm534 = vcmp.lt.f32.partialorder %v378, %v479
        %vm535 = vcmp.lt.f32.partialorder %v378, %v483
        %vm536 = vcmp.lt.f32.partialorder %v378, %v487
        %vm537 = vcmp.lt.f32.partialorder %v378, %v491
        %vm538 = vcmp.lt.f32.partialorder %v378, %v495
        %vm539 = vcmp.lt.f32.partialorder %v378, %v499
        %vm540 = vcmp.lt.f32.partialorder %v378, %v503
        %vm541 = vcmp.lt.f32.partialorder %v378, %v507
        %vm542 = vcmp.lt.f32.partialorder %v378, %v511
        %vm543 = vcmp.lt.f32.partialorder %v378, %v515
        %vm544 = vcmp.lt.f32.partialorder %v378, %v519
        %vm545 = vcmp.lt.f32.partialorder %v378, %v523
        %vm546 = vcmp.lt.f32.partialorder %v378, %v527
        %vm547 = vcmp.lt.f32.partialorder %v378, %v531
        %v548 = vsel %vm532, 1, 0
        %v549 = vsel %vm533, 1, 0
        %v550 = vsel %vm534, 1, 0
        %v551 = vsel %vm535, 1, 0
        %v552 = vsel %vm536, 1, 0
        %v553 = vsel %vm537, 1, 0
        %v554 = vsel %vm538, 1, 0
        %v555 = vsel %vm539, 1, 0
        %v556 = vsel %vm540, 1, 0
        %v557 = vsel %vm541, 1, 0
        %v558 = vsel %vm542, 1, 0
        %v559 = vsel %vm543, 1, 0
        %v560 = vsel %vm544, 1, 0
        %v561 = vsel %vm545, 1, 0
        %v562 = vsel %vm546, 1, 0
        %v563 = vsel %vm547, 1, 0
        %v564 = vrot.slane %v548, 4
        %v565 = vadd.s32 %v548, %v564
        %v566 = vrot.slane %v565, 2
        %v567 = vadd.s32 %v565, %v566
        %v568 = vrot.slane %v567, 1
        %v569 = vadd.s32 %v567, %v568
        %v570 = vrot.slane %v549, 4
        %v571 = vadd.s32 %v549, %v570
        %v572 = vrot.slane %v571, 2
        %v573 = vadd.s32 %v571, %v572
        %v574 = vrot.slane %v573, 1
        %v575 = vadd.s32 %v573, %v574
        %v576 = vrot.slane %v550, 4
        %v577 = vadd.s32 %v550, %v576
        %v578 = vrot.slane %v577, 2
        %v579 = vadd.s32 %v577, %v578
        %v580 = vrot.slane %v579, 1
        %v581 = vadd.s32 %v579, %v580
        %v582 = vrot.slane %v551, 4
        %v583 = vadd.s32 %v551, %v582
        %v584 = vrot.slane %v583, 2
        %v585 = vadd.s32 %v583, %v584
        %v586 = vrot.slane %v585, 1
        %v587 = vadd.s32 %v585, %v586
        %v588 = vrot.slane %v552, 4
        %v589 = vadd.s32 %v552, %v588
        %v590 = vrot.slane %v589, 2
        %v591 = vadd.s32 %v589, %v590
        %v592 = vrot.slane %v591, 1
        %v593 = vadd.s32 %v591, %v592
        %v594 = vrot.slane %v553, 4
        %v595 = vadd.s32 %v553, %v594
        %v596 = vrot.slane %v595, 2
        %v597 = vadd.s32 %v595, %v596
        %v598 = vrot.slane %v597, 1
        %v599 = vadd.s32 %v597, %v598
        %v600 = vrot.slane %v554, 4
        %v601 = vadd.s32 %v554, %v600
        %v602 = vrot.slane %v601, 2
        %v603 = vadd.s32 %v601, %v602
        %v604 = vrot.slane %v603, 1
        %v605 = vadd.s32 %v603, %v604
        %v606 = vrot.slane %v555, 4
        %v607 = vadd.s32 %v555, %v606
        %v608 = vrot.slane %v607, 2
        %v609 = vadd.s32 %v607, %v608
        %v610 = vrot.slane %v609, 1
        %v611 = vadd.s32 %v609, %v610
        %v612 = vrot.slane %v556, 4
        %v613 = vadd.s32 %v556, %v612
        %v614 = vrot.slane %v613, 2
        %v615 = vadd.s32 %v613, %v614
        %v616 = vrot.slane %v615, 1
        %v617 = vadd.s32 %v615, %v616
        %v618 = vrot.slane %v557, 4
        %v619 = vadd.s32 %v557, %v618
        %v620 = vrot.slane %v619, 2
        %v621 = vadd.s32 %v619, %v620
        %v622 = vrot.slane %v621, 1
        %v623 = vadd.s32 %v621, %v622
        %v624 = vrot.slane %v558, 4
        %v625 = vadd.s32 %v558, %v624
        %v626 = vrot.slane %v625, 2
        %v627 = vadd.s32 %v625, %v626
        %v628 = vrot.slane %v627, 1
        %v629 = vadd.s32 %v627, %v628
        %v630 = vrot.slane %v559, 4
        %v631 = vadd.s32 %v559, %v630
        %v632 = vrot.slane %v631, 2
        %v633 = vadd.s32 %v631, %v632
        %v634 = vrot.slane %v633, 1
        %v635 = vadd.s32 %v633, %v634
        %v636 = vrot.slane %v560, 4
        %v637 = vadd.s32 %v560, %v636
        %v638 = vrot.slane %v637, 2
        %v639 = vadd.s32 %v637, %v638
        %v640 = vrot.slane %v639, 1
        %v641 = vadd.s32 %v639, %v640
        %v642 = vrot.slane %v561, 4
        %v643 = vadd.s32 %v561, %v642
        %v644 = vrot.slane %v643, 2
        %v645 = vadd.s32 %v643, %v644
        %v646 = vrot.slane %v645, 1
        %v647 = vadd.s32 %v645, %v646
        %v648 = vrot.slane %v562, 4
        %v649 = vadd.s32 %v562, %v648
        %v650 = vrot.slane %v649, 2
        %v651 = vadd.s32 %v649, %v650
        %v652 = vrot.slane %v651, 1
        %v653 = vadd.s32 %v651, %v652
        %v654 = vrot.slane %v563, 4
        %v655 = vadd.s32 %v563, %v654
        %v656 = vrot.slane %v655, 2
        %v657 = vadd.s32 %v655, %v656
        %v658 = vrot.slane %v657, 1
        %v659 = vadd.s32 %v657, %v658
        %v660 = vlaneseq
        %v661 = vshrl.u32 %v660, 7
        %vm662 = vcmp.eq.s32.totalorder %v661, %v569
        %vm663 = vcmp.eq.s32.totalorder %v661, %v575
        %vm664 = vcmp.eq.s32.totalorder %v661, %v581
        %vm665 = vcmp.eq.s32.totalorder %v661, %v587
        %vm666 = vcmp.eq.s32.totalorder %v661, %v593
        %vm667 = vcmp.eq.s32.totalorder %v661, %v599
        %vm668 = vcmp.eq.s32.totalorder %v661, %v605
        %vm669 = vcmp.eq.s32.totalorder %v661, %v611
        %vm670 = vcmp.eq.s32.totalorder %v661, %v617
        %vm671 = vcmp.eq.s32.totalorder %v661, %v623
        %vm672 = vcmp.eq.s32.totalorder %v661, %v629
        %vm673 = vcmp.eq.s32.totalorder %v661, %v635
        %vm674 = vcmp.eq.s32.totalorder %v661, %v641
        %vm675 = vcmp.eq.s32.totalorder %v661, %v647
        %vm676 = vcmp.eq.s32.totalorder %v661, %v653
        %vm677 = vcmp.eq.s32.totalorder %v661, %v659
        %v678 = vsel %vm662, 1, 0
        %v679 = vsel %vm663, 1, 0
        %v680 = vsel %vm664, 1, 0
        %v681 = vsel %vm665, 1, 0
        %v682 = vsel %vm666, 1, 0
        %v683 = vsel %vm667, 1, 0
        %v684 = vsel %vm668, 1, 0
        %v685 = vsel %vm669, 1, 0
        %v686 = vsel %vm670, 1, 0
        %v687 = vsel %vm671, 1, 0
        %v688 = vsel %vm672, 1, 0
        %v689 = vsel %vm673, 1, 0
        %v690 = vsel %vm674, 1, 0
        %v691 = vsel %vm675, 1, 0
        %v692 = vsel %vm676, 1, 0
        %v693 = vsel %vm677, 1, 0
        %v694 = vcvt.s32.f32 %v678
        %v695 = vcvt.s32.f32 %v679
        %v696 = vcvt.s32.f32 %v680
        %v697 = vcvt.s32.f32 %v681
        %v698 = vcvt.s32.f32 %v682
        %v699 = vcvt.s32.f32 %v683
        %v700 = vcvt.s32.f32 %v684
        %v701 = vcvt.s32.f32 %v685
        %v702 = vcvt.s32.f32 %v686
        %v703 = vcvt.s32.f32 %v687
        %v704 = vcvt.s32.f32 %v688
        %v705 = vcvt.s32.f32 %v689
        %v706 = vcvt.s32.f32 %v690
        %v707 = vcvt.s32.f32 %v691
        %v708 = vcvt.s32.f32 %v692
        %v709 = vcvt.s32.f32 %v693
        %710 = vset.pattern.permute.xlu0 0
        %711 = vperm.xlu0 %710, %v374
        %v712 = vpop.permute.xlu0 %711
        %v714 = vmul.f32 %v712, %v694
        %v715 = vmul.f32 %v712, %v695
        %v716 = vmul.f32 %v712, %v696
        %v717 = vmul.f32 %v712, %v697
        %v718 = vmul.f32 %v712, %v698
        %v719 = vmul.f32 %v712, %v699
        %v720 = vmul.f32 %v712, %v700
        %v721 = vmul.f32 %v712, %v701
        %v722 = vmul.f32 %v712, %v702
        %v723 = vmul.f32 %v712, %v703
        %v724 = vmul.f32 %v712, %v704
        %v725 = vmul.f32 %v712, %v705
        %v726 = vmul.f32 %v712, %v706
        %v727 = vmul.f32 %v712, %v707
        %v728 = vmul.f32 %v712, %v708
        %v729 = vmul.f32 %v712, %v709
        %v730 = vrot.slane %v714, 4
        %v731 = vadd.f32 %v714, %v730
        %v732 = vrot.slane %v731, 2
        %v733 = vadd.f32 %v731, %v732
        %v734 = vrot.slane %v733, 1
        %v735 = vadd.f32 %v733, %v734
        %v736 = vrot.slane %v715, 4
        %v737 = vadd.f32 %v715, %v736
        %v738 = vrot.slane %v737, 2
        %v739 = vadd.f32 %v737, %v738
        %v740 = vrot.slane %v739, 1
        %v741 = vadd.f32 %v739, %v740
        %v742 = vrot.slane %v716, 4
        %v743 = vadd.f32 %v716, %v742
        %v744 = vrot.slane %v743, 2
        %v745 = vadd.f32 %v743, %v744
        %v746 = vrot.slane %v745, 1
        %v747 = vadd.f32 %v745, %v746
        %v748 = vrot.slane %v717, 4
        %v749 = vadd.f32 %v717, %v748
        %v750 = vrot.slane %v749, 2
        %v751 = vadd.f32 %v749, %v750
        %v752 = vrot.slane %v751, 1
        %v753 = vadd.f32 %v751, %v752
        %v754 = vrot.slane %v718, 4
        %v755 = vadd.f32 %v718, %v754
        %v756 = vrot.slane %v755, 2
        %v757 = vadd.f32 %v755, %v756
        %v758 = vrot.slane %v757, 1
        %v759 = vadd.f32 %v757, %v758
        %v760 = vrot.slane %v719, 4
        %v761 = vadd.f32 %v719, %v760
        %v762 = vrot.slane %v761, 2
        %v763 = vadd.f32 %v761, %v762
        %v764 = vrot.slane %v763, 1
        %v765 = vadd.f32 %v763, %v764
        %v766 = vrot.slane %v720, 4
        %v767 = vadd.f32 %v720, %v766
        %v768 = vrot.slane %v767, 2
        %v769 = vadd.f32 %v767, %v768
        %v770 = vrot.slane %v769, 1
        %v771 = vadd.f32 %v769, %v770
        %v772 = vrot.slane %v721, 4
        %v773 = vadd.f32 %v721, %v772
        %v774 = vrot.slane %v773, 2
        %v775 = vadd.f32 %v773, %v774
        %v776 = vrot.slane %v775, 1
        %v777 = vadd.f32 %v775, %v776
        %v778 = vrot.slane %v722, 4
        %v779 = vadd.f32 %v722, %v778
        %v780 = vrot.slane %v779, 2
        %v781 = vadd.f32 %v779, %v780
        %v782 = vrot.slane %v781, 1
        %v783 = vadd.f32 %v781, %v782
        %v784 = vrot.slane %v723, 4
        %v785 = vadd.f32 %v723, %v784
        %v786 = vrot.slane %v785, 2
        %v787 = vadd.f32 %v785, %v786
        %v788 = vrot.slane %v787, 1
        %v789 = vadd.f32 %v787, %v788
        %v790 = vrot.slane %v724, 4
        %v791 = vadd.f32 %v724, %v790
        %v792 = vrot.slane %v791, 2
        %v793 = vadd.f32 %v791, %v792
        %v794 = vrot.slane %v793, 1
        %v795 = vadd.f32 %v793, %v794
        %v796 = vrot.slane %v725, 4
        %v797 = vadd.f32 %v725, %v796
        %v798 = vrot.slane %v797, 2
        %v799 = vadd.f32 %v797, %v798
        %v800 = vrot.slane %v799, 1
        %v801 = vadd.f32 %v799, %v800
        %v802 = vrot.slane %v726, 4
        %v803 = vadd.f32 %v726, %v802
        %v804 = vrot.slane %v803, 2
        %v805 = vadd.f32 %v803, %v804
        %v806 = vrot.slane %v805, 1
        %v807 = vadd.f32 %v805, %v806
        %v808 = vrot.slane %v727, 4
        %v809 = vadd.f32 %v727, %v808
        %v810 = vrot.slane %v809, 2
        %v811 = vadd.f32 %v809, %v810
        %v812 = vrot.slane %v811, 1
        %v813 = vadd.f32 %v811, %v812
        %v814 = vrot.slane %v728, 4
        %v815 = vadd.f32 %v728, %v814
        %v816 = vrot.slane %v815, 2
        %v817 = vadd.f32 %v815, %v816
        %v818 = vrot.slane %v817, 1
        %v819 = vadd.f32 %v817, %v818
        %v820 = vrot.slane %v729, 4
        %v821 = vadd.f32 %v729, %v820
        %v822 = vrot.slane %v821, 2
        %v823 = vadd.f32 %v821, %v822
        %v824 = vrot.slane %v823, 1
        %v825 = vadd.f32 %v823, %v824
        %826 = vset.pattern.permute.xlu0 1
        %827 = vperm.xlu0 %826, %v374
        %v828 = vpop.permute.xlu0 %827
        %v830 = vmul.f32 %v828, %v694
        %v831 = vmul.f32 %v828, %v695
        %v832 = vmul.f32 %v828, %v696
        %v833 = vmul.f32 %v828, %v697
        %v834 = vmul.f32 %v828, %v698
        %v835 = vmul.f32 %v828, %v699
        %v836 = vmul.f32 %v828, %v700
        %v837 = vmul.f32 %v828, %v701
        %v838 = vmul.f32 %v828, %v702
        %v839 = vmul.f32 %v828, %v703
        %v840 = vmul.f32 %v828, %v704
        %v841 = vmul.f32 %v828, %v705
        %v842 = vmul.f32 %v828, %v706
        %v843 = vmul.f32 %v828, %v707
        %v844 = vmul.f32 %v828, %v708
        %v845 = vmul.f32 %v828, %v709
        %v846 = vrot.slane %v830, 4
        %v847 = vadd.f32 %v830, %v846
        %v848 = vrot.slane %v847, 2
        %v849 = vadd.f32 %v847, %v848
        %v850 = vrot.slane %v849, 1
        %v851 = vadd.f32 %v849, %v850
        %v852 = vrot.slane %v831, 4
        %v853 = vadd.f32 %v831, %v852
        %v854 = vrot.slane %v853, 2
        %v855 = vadd.f32 %v853, %v854
        %v856 = vrot.slane %v855, 1
        %v857 = vadd.f32 %v855, %v856
        %v858 = vrot.slane %v832, 4
        %v859 = vadd.f32 %v832, %v858
        %v860 = vrot.slane %v859, 2
        %v861 = vadd.f32 %v859, %v860
        %v862 = vrot.slane %v861, 1
        %v863 = vadd.f32 %v861, %v862
        %v864 = vrot.slane %v833, 4
        %v865 = vadd.f32 %v833, %v864
        %v866 = vrot.slane %v865, 2
        %v867 = vadd.f32 %v865, %v866
        %v868 = vrot.slane %v867, 1
        %v869 = vadd.f32 %v867, %v868
        %v870 = vrot.slane %v834, 4
        %v871 = vadd.f32 %v834, %v870
        %v872 = vrot.slane %v871, 2
        %v873 = vadd.f32 %v871, %v872
        %v874 = vrot.slane %v873, 1
        %v875 = vadd.f32 %v873, %v874
        %v876 = vrot.slane %v835, 4
        %v877 = vadd.f32 %v835, %v876
        %v878 = vrot.slane %v877, 2
        %v879 = vadd.f32 %v877, %v878
        %v880 = vrot.slane %v879, 1
        %v881 = vadd.f32 %v879, %v880
        %v882 = vrot.slane %v836, 4
        %v883 = vadd.f32 %v836, %v882
        %v884 = vrot.slane %v883, 2
        %v885 = vadd.f32 %v883, %v884
        %v886 = vrot.slane %v885, 1
        %v887 = vadd.f32 %v885, %v886
        %v888 = vrot.slane %v837, 4
        %v889 = vadd.f32 %v837, %v888
        %v890 = vrot.slane %v889, 2
        %v891 = vadd.f32 %v889, %v890
        %v892 = vrot.slane %v891, 1
        %v893 = vadd.f32 %v891, %v892
        %v894 = vrot.slane %v838, 4
        %v895 = vadd.f32 %v838, %v894
        %v896 = vrot.slane %v895, 2
        %v897 = vadd.f32 %v895, %v896
        %v898 = vrot.slane %v897, 1
        %v899 = vadd.f32 %v897, %v898
        %v900 = vrot.slane %v839, 4
        %v901 = vadd.f32 %v839, %v900
        %v902 = vrot.slane %v901, 2
        %v903 = vadd.f32 %v901, %v902
        %v904 = vrot.slane %v903, 1
        %v905 = vadd.f32 %v903, %v904
        %v906 = vrot.slane %v840, 4
        %v907 = vadd.f32 %v840, %v906
        %v908 = vrot.slane %v907, 2
        %v909 = vadd.f32 %v907, %v908
        %v910 = vrot.slane %v909, 1
        %v911 = vadd.f32 %v909, %v910
        %v912 = vrot.slane %v841, 4
        %v913 = vadd.f32 %v841, %v912
        %v914 = vrot.slane %v913, 2
        %v915 = vadd.f32 %v913, %v914
        %v916 = vrot.slane %v915, 1
        %v917 = vadd.f32 %v915, %v916
        %v918 = vrot.slane %v842, 4
        %v919 = vadd.f32 %v842, %v918
        %v920 = vrot.slane %v919, 2
        %v921 = vadd.f32 %v919, %v920
        %v922 = vrot.slane %v921, 1
        %v923 = vadd.f32 %v921, %v922
        %v924 = vrot.slane %v843, 4
        %v925 = vadd.f32 %v843, %v924
        %v926 = vrot.slane %v925, 2
        %v927 = vadd.f32 %v925, %v926
        %v928 = vrot.slane %v927, 1
        %v929 = vadd.f32 %v927, %v928
        %v930 = vrot.slane %v844, 4
        %v931 = vadd.f32 %v844, %v930
        %v932 = vrot.slane %v931, 2
        %v933 = vadd.f32 %v931, %v932
        %v934 = vrot.slane %v933, 1
        %v935 = vadd.f32 %v933, %v934
        %v936 = vrot.slane %v845, 4
        %v937 = vadd.f32 %v845, %v936
        %v938 = vrot.slane %v937, 2
        %v939 = vadd.f32 %v937, %v938
        %v940 = vrot.slane %v939, 1
        %v941 = vadd.f32 %v939, %v940
        %942 = vset.pattern.permute.xlu0 2
        %943 = vperm.xlu0 %942, %v374
        %v944 = vpop.permute.xlu0 %943
        %v946 = vmul.f32 %v944, %v694
        %v947 = vmul.f32 %v944, %v695
        %v948 = vmul.f32 %v944, %v696
        %v949 = vmul.f32 %v944, %v697
        %v950 = vmul.f32 %v944, %v698
        %v951 = vmul.f32 %v944, %v699
        %v952 = vmul.f32 %v944, %v700
        %v953 = vmul.f32 %v944, %v701
        %v954 = vmul.f32 %v944, %v702
        %v955 = vmul.f32 %v944, %v703
        %v956 = vmul.f32 %v944, %v704
        %v957 = vmul.f32 %v944, %v705
        %v958 = vmul.f32 %v944, %v706
        %v959 = vmul.f32 %v944, %v707
        %v960 = vmul.f32 %v944, %v708
        %v961 = vmul.f32 %v944, %v709
        %v962 = vrot.slane %v946, 4
        %v963 = vadd.f32 %v946, %v962
        %v964 = vrot.slane %v963, 2
        %v965 = vadd.f32 %v963, %v964
        %v966 = vrot.slane %v965, 1
        %v967 = vadd.f32 %v965, %v966
        %v968 = vrot.slane %v947, 4
        %v969 = vadd.f32 %v947, %v968
        %v970 = vrot.slane %v969, 2
        %v971 = vadd.f32 %v969, %v970
        %v972 = vrot.slane %v971, 1
        %v973 = vadd.f32 %v971, %v972
        %v974 = vrot.slane %v948, 4
        %v975 = vadd.f32 %v948, %v974
        %v976 = vrot.slane %v975, 2
        %v977 = vadd.f32 %v975, %v976
        %v978 = vrot.slane %v977, 1
        %v979 = vadd.f32 %v977, %v978
        %v980 = vrot.slane %v949, 4
        %v981 = vadd.f32 %v949, %v980
        %v982 = vrot.slane %v981, 2
        %v983 = vadd.f32 %v981, %v982
        %v984 = vrot.slane %v983, 1
        %v985 = vadd.f32 %v983, %v984
        %v986 = vrot.slane %v950, 4
        %v987 = vadd.f32 %v950, %v986
        %v988 = vrot.slane %v987, 2
        %v989 = vadd.f32 %v987, %v988
        %v990 = vrot.slane %v989, 1
        %v991 = vadd.f32 %v989, %v990
        %v992 = vrot.slane %v951, 4
        %v993 = vadd.f32 %v951, %v992
        %v994 = vrot.slane %v993, 2
        %v995 = vadd.f32 %v993, %v994
        %v996 = vrot.slane %v995, 1
        %v997 = vadd.f32 %v995, %v996
        %v998 = vrot.slane %v952, 4
        %v999 = vadd.f32 %v952, %v998
        %v1000 = vrot.slane %v999, 2
        %v1001 = vadd.f32 %v999, %v1000
        %v1002 = vrot.slane %v1001, 1
        %v1003 = vadd.f32 %v1001, %v1002
        %v1004 = vrot.slane %v953, 4
        %v1005 = vadd.f32 %v953, %v1004
        %v1006 = vrot.slane %v1005, 2
        %v1007 = vadd.f32 %v1005, %v1006
        %v1008 = vrot.slane %v1007, 1
        %v1009 = vadd.f32 %v1007, %v1008
        %v1010 = vrot.slane %v954, 4
        %v1011 = vadd.f32 %v954, %v1010
        %v1012 = vrot.slane %v1011, 2
        %v1013 = vadd.f32 %v1011, %v1012
        %v1014 = vrot.slane %v1013, 1
        %v1015 = vadd.f32 %v1013, %v1014
        %v1016 = vrot.slane %v955, 4
        %v1017 = vadd.f32 %v955, %v1016
        %v1018 = vrot.slane %v1017, 2
        %v1019 = vadd.f32 %v1017, %v1018
        %v1020 = vrot.slane %v1019, 1
        %v1021 = vadd.f32 %v1019, %v1020
        %v1022 = vrot.slane %v956, 4
        %v1023 = vadd.f32 %v956, %v1022
        %v1024 = vrot.slane %v1023, 2
        %v1025 = vadd.f32 %v1023, %v1024
        %v1026 = vrot.slane %v1025, 1
        %v1027 = vadd.f32 %v1025, %v1026
        %v1028 = vrot.slane %v957, 4
        %v1029 = vadd.f32 %v957, %v1028
        %v1030 = vrot.slane %v1029, 2
        %v1031 = vadd.f32 %v1029, %v1030
        %v1032 = vrot.slane %v1031, 1
        %v1033 = vadd.f32 %v1031, %v1032
        %v1034 = vrot.slane %v958, 4
        %v1035 = vadd.f32 %v958, %v1034
        %v1036 = vrot.slane %v1035, 2
        %v1037 = vadd.f32 %v1035, %v1036
        %v1038 = vrot.slane %v1037, 1
        %v1039 = vadd.f32 %v1037, %v1038
        %v1040 = vrot.slane %v959, 4
        %v1041 = vadd.f32 %v959, %v1040
        %v1042 = vrot.slane %v1041, 2
        %v1043 = vadd.f32 %v1041, %v1042
        %v1044 = vrot.slane %v1043, 1
        %v1045 = vadd.f32 %v1043, %v1044
        %v1046 = vrot.slane %v960, 4
        %v1047 = vadd.f32 %v960, %v1046
        %v1048 = vrot.slane %v1047, 2
        %v1049 = vadd.f32 %v1047, %v1048
        %v1050 = vrot.slane %v1049, 1
        %v1051 = vadd.f32 %v1049, %v1050
        %v1052 = vrot.slane %v961, 4
        %v1053 = vadd.f32 %v961, %v1052
        %v1054 = vrot.slane %v1053, 2
        %v1055 = vadd.f32 %v1053, %v1054
        %v1056 = vrot.slane %v1055, 1
        %v1057 = vadd.f32 %v1055, %v1056
        %1058 = vset.pattern.permute.xlu0 3
        %1059 = vperm.xlu0 %1058, %v374
        %v1060 = vpop.permute.xlu0 %1059
        %v1062 = vmul.f32 %v1060, %v694
        %v1063 = vmul.f32 %v1060, %v695
        %v1064 = vmul.f32 %v1060, %v696
        %v1065 = vmul.f32 %v1060, %v697
        %v1066 = vmul.f32 %v1060, %v698
        %v1067 = vmul.f32 %v1060, %v699
        %v1068 = vmul.f32 %v1060, %v700
        %v1069 = vmul.f32 %v1060, %v701
        %v1070 = vmul.f32 %v1060, %v702
        %v1071 = vmul.f32 %v1060, %v703
        %v1072 = vmul.f32 %v1060, %v704
        %v1073 = vmul.f32 %v1060, %v705
        %v1074 = vmul.f32 %v1060, %v706
        %v1075 = vmul.f32 %v1060, %v707
        %v1076 = vmul.f32 %v1060, %v708
        %v1077 = vmul.f32 %v1060, %v709
        %v1078 = vrot.slane %v1062, 4
        %v1079 = vadd.f32 %v1062, %v1078
        %v1080 = vrot.slane %v1079, 2
        %v1081 = vadd.f32 %v1079, %v1080
        %v1082 = vrot.slane %v1081, 1
        %v1083 = vadd.f32 %v1081, %v1082
        %v1084 = vrot.slane %v1063, 4
        %v1085 = vadd.f32 %v1063, %v1084
        %v1086 = vrot.slane %v1085, 2
        %v1087 = vadd.f32 %v1085, %v1086
        %v1088 = vrot.slane %v1087, 1
        %v1089 = vadd.f32 %v1087, %v1088
        %v1090 = vrot.slane %v1064, 4
        %v1091 = vadd.f32 %v1064, %v1090
        %v1092 = vrot.slane %v1091, 2
        %v1093 = vadd.f32 %v1091, %v1092
        %v1094 = vrot.slane %v1093, 1
        %v1095 = vadd.f32 %v1093, %v1094
        %v1096 = vrot.slane %v1065, 4
        %v1097 = vadd.f32 %v1065, %v1096
        %v1098 = vrot.slane %v1097, 2
        %v1099 = vadd.f32 %v1097, %v1098
        %v1100 = vrot.slane %v1099, 1
        %v1101 = vadd.f32 %v1099, %v1100
        %v1102 = vrot.slane %v1066, 4
        %v1103 = vadd.f32 %v1066, %v1102
        %v1104 = vrot.slane %v1103, 2
        %v1105 = vadd.f32 %v1103, %v1104
        %v1106 = vrot.slane %v1105, 1
        %v1107 = vadd.f32 %v1105, %v1106
        %v1108 = vrot.slane %v1067, 4
        %v1109 = vadd.f32 %v1067, %v1108
        %v1110 = vrot.slane %v1109, 2
        %v1111 = vadd.f32 %v1109, %v1110
        %v1112 = vrot.slane %v1111, 1
        %v1113 = vadd.f32 %v1111, %v1112
        %v1114 = vrot.slane %v1068, 4
        %v1115 = vadd.f32 %v1068, %v1114
        %v1116 = vrot.slane %v1115, 2
        %v1117 = vadd.f32 %v1115, %v1116
        %v1118 = vrot.slane %v1117, 1
        %v1119 = vadd.f32 %v1117, %v1118
        %v1120 = vrot.slane %v1069, 4
        %v1121 = vadd.f32 %v1069, %v1120
        %v1122 = vrot.slane %v1121, 2
        %v1123 = vadd.f32 %v1121, %v1122
        %v1124 = vrot.slane %v1123, 1
        %v1125 = vadd.f32 %v1123, %v1124
        %v1126 = vrot.slane %v1070, 4
        %v1127 = vadd.f32 %v1070, %v1126
        %v1128 = vrot.slane %v1127, 2
        %v1129 = vadd.f32 %v1127, %v1128
        %v1130 = vrot.slane %v1129, 1
        %v1131 = vadd.f32 %v1129, %v1130
        %v1132 = vrot.slane %v1071, 4
        %v1133 = vadd.f32 %v1071, %v1132
        %v1134 = vrot.slane %v1133, 2
        %v1135 = vadd.f32 %v1133, %v1134
        %v1136 = vrot.slane %v1135, 1
        %v1137 = vadd.f32 %v1135, %v1136
        %v1138 = vrot.slane %v1072, 4
        %v1139 = vadd.f32 %v1072, %v1138
        %v1140 = vrot.slane %v1139, 2
        %v1141 = vadd.f32 %v1139, %v1140
        %v1142 = vrot.slane %v1141, 1
        %v1143 = vadd.f32 %v1141, %v1142
        %v1144 = vrot.slane %v1073, 4
        %v1145 = vadd.f32 %v1073, %v1144
        %v1146 = vrot.slane %v1145, 2
        %v1147 = vadd.f32 %v1145, %v1146
        %v1148 = vrot.slane %v1147, 1
        %v1149 = vadd.f32 %v1147, %v1148
        %v1150 = vrot.slane %v1074, 4
        %v1151 = vadd.f32 %v1074, %v1150
        %v1152 = vrot.slane %v1151, 2
        %v1153 = vadd.f32 %v1151, %v1152
        %v1154 = vrot.slane %v1153, 1
        %v1155 = vadd.f32 %v1153, %v1154
        %v1156 = vrot.slane %v1075, 4
        %v1157 = vadd.f32 %v1075, %v1156
        %v1158 = vrot.slane %v1157, 2
        %v1159 = vadd.f32 %v1157, %v1158
        %v1160 = vrot.slane %v1159, 1
        %v1161 = vadd.f32 %v1159, %v1160
        %v1162 = vrot.slane %v1076, 4
        %v1163 = vadd.f32 %v1076, %v1162
        %v1164 = vrot.slane %v1163, 2
        %v1165 = vadd.f32 %v1163, %v1164
        %v1166 = vrot.slane %v1165, 1
        %v1167 = vadd.f32 %v1165, %v1166
        %v1168 = vrot.slane %v1077, 4
        %v1169 = vadd.f32 %v1077, %v1168
        %v1170 = vrot.slane %v1169, 2
        %v1171 = vadd.f32 %v1169, %v1170
        %v1172 = vrot.slane %v1171, 1
        %v1173 = vadd.f32 %v1171, %v1172
        %1174 = vset.pattern.permute.xlu0 4
        %1175 = vperm.xlu0 %1174, %v374
        %v1176 = vpop.permute.xlu0 %1175
        %v1178 = vmul.f32 %v1176, %v694
        %v1179 = vmul.f32 %v1176, %v695
        %v1180 = vmul.f32 %v1176, %v696
        %v1181 = vmul.f32 %v1176, %v697
        %v1182 = vmul.f32 %v1176, %v698
        %v1183 = vmul.f32 %v1176, %v699
        %v1184 = vmul.f32 %v1176, %v700
        %v1185 = vmul.f32 %v1176, %v701
        %v1186 = vmul.f32 %v1176, %v702
        %v1187 = vmul.f32 %v1176, %v703
        %v1188 = vmul.f32 %v1176, %v704
        %v1189 = vmul.f32 %v1176, %v705
        %v1190 = vmul.f32 %v1176, %v706
        %v1191 = vmul.f32 %v1176, %v707
        %v1192 = vmul.f32 %v1176, %v708
        %v1193 = vmul.f32 %v1176, %v709
        %v1194 = vrot.slane %v1178, 4
        %v1195 = vadd.f32 %v1178, %v1194
        %v1196 = vrot.slane %v1195, 2
        %v1197 = vadd.f32 %v1195, %v1196
        %v1198 = vrot.slane %v1197, 1
        %v1199 = vadd.f32 %v1197, %v1198
        %v1200 = vrot.slane %v1179, 4
        %v1201 = vadd.f32 %v1179, %v1200
        %v1202 = vrot.slane %v1201, 2
        %v1203 = vadd.f32 %v1201, %v1202
        %v1204 = vrot.slane %v1203, 1
        %v1205 = vadd.f32 %v1203, %v1204
        %v1206 = vrot.slane %v1180, 4
        %v1207 = vadd.f32 %v1180, %v1206
        %v1208 = vrot.slane %v1207, 2
        %v1209 = vadd.f32 %v1207, %v1208
        %v1210 = vrot.slane %v1209, 1
        %v1211 = vadd.f32 %v1209, %v1210
        %v1212 = vrot.slane %v1181, 4
        %v1213 = vadd.f32 %v1181, %v1212
        %v1214 = vrot.slane %v1213, 2
        %v1215 = vadd.f32 %v1213, %v1214
        %v1216 = vrot.slane %v1215, 1
        %v1217 = vadd.f32 %v1215, %v1216
        %v1218 = vrot.slane %v1182, 4
        %v1219 = vadd.f32 %v1182, %v1218
        %v1220 = vrot.slane %v1219, 2
        %v1221 = vadd.f32 %v1219, %v1220
        %v1222 = vrot.slane %v1221, 1
        %v1223 = vadd.f32 %v1221, %v1222
        %v1224 = vrot.slane %v1183, 4
        %v1225 = vadd.f32 %v1183, %v1224
        %v1226 = vrot.slane %v1225, 2
        %v1227 = vadd.f32 %v1225, %v1226
        %v1228 = vrot.slane %v1227, 1
        %v1229 = vadd.f32 %v1227, %v1228
        %v1230 = vrot.slane %v1184, 4
        %v1231 = vadd.f32 %v1184, %v1230
        %v1232 = vrot.slane %v1231, 2
        %v1233 = vadd.f32 %v1231, %v1232
        %v1234 = vrot.slane %v1233, 1
        %v1235 = vadd.f32 %v1233, %v1234
        %v1236 = vrot.slane %v1185, 4
        %v1237 = vadd.f32 %v1185, %v1236
        %v1238 = vrot.slane %v1237, 2
        %v1239 = vadd.f32 %v1237, %v1238
        %v1240 = vrot.slane %v1239, 1
        %v1241 = vadd.f32 %v1239, %v1240
        %v1242 = vrot.slane %v1186, 4
        %v1243 = vadd.f32 %v1186, %v1242
        %v1244 = vrot.slane %v1243, 2
        %v1245 = vadd.f32 %v1243, %v1244
        %v1246 = vrot.slane %v1245, 1
        %v1247 = vadd.f32 %v1245, %v1246
        %v1248 = vrot.slane %v1187, 4
        %v1249 = vadd.f32 %v1187, %v1248
        %v1250 = vrot.slane %v1249, 2
        %v1251 = vadd.f32 %v1249, %v1250
        %v1252 = vrot.slane %v1251, 1
        %v1253 = vadd.f32 %v1251, %v1252
        %v1254 = vrot.slane %v1188, 4
        %v1255 = vadd.f32 %v1188, %v1254
        %v1256 = vrot.slane %v1255, 2
        %v1257 = vadd.f32 %v1255, %v1256
        %v1258 = vrot.slane %v1257, 1
        %v1259 = vadd.f32 %v1257, %v1258
        %v1260 = vrot.slane %v1189, 4
        %v1261 = vadd.f32 %v1189, %v1260
        %v1262 = vrot.slane %v1261, 2
        %v1263 = vadd.f32 %v1261, %v1262
        %v1264 = vrot.slane %v1263, 1
        %v1265 = vadd.f32 %v1263, %v1264
        %v1266 = vrot.slane %v1190, 4
        %v1267 = vadd.f32 %v1190, %v1266
        %v1268 = vrot.slane %v1267, 2
        %v1269 = vadd.f32 %v1267, %v1268
        %v1270 = vrot.slane %v1269, 1
        %v1271 = vadd.f32 %v1269, %v1270
        %v1272 = vrot.slane %v1191, 4
        %v1273 = vadd.f32 %v1191, %v1272
        %v1274 = vrot.slane %v1273, 2
        %v1275 = vadd.f32 %v1273, %v1274
        %v1276 = vrot.slane %v1275, 1
        %v1277 = vadd.f32 %v1275, %v1276
        %v1278 = vrot.slane %v1192, 4
        %v1279 = vadd.f32 %v1192, %v1278
        %v1280 = vrot.slane %v1279, 2
        %v1281 = vadd.f32 %v1279, %v1280
        %v1282 = vrot.slane %v1281, 1
        %v1283 = vadd.f32 %v1281, %v1282
        %v1284 = vrot.slane %v1193, 4
        %v1285 = vadd.f32 %v1193, %v1284
        %v1286 = vrot.slane %v1285, 2
        %v1287 = vadd.f32 %v1285, %v1286
        %v1288 = vrot.slane %v1287, 1
        %v1289 = vadd.f32 %v1287, %v1288
        %1290 = vset.pattern.permute.xlu0 5
        %1291 = vperm.xlu0 %1290, %v374
        %v1292 = vpop.permute.xlu0 %1291
        %v1294 = vmul.f32 %v1292, %v694
        %v1295 = vmul.f32 %v1292, %v695
        %v1296 = vmul.f32 %v1292, %v696
        %v1297 = vmul.f32 %v1292, %v697
        %v1298 = vmul.f32 %v1292, %v698
        %v1299 = vmul.f32 %v1292, %v699
        %v1300 = vmul.f32 %v1292, %v700
        %v1301 = vmul.f32 %v1292, %v701
        %v1302 = vmul.f32 %v1292, %v702
        %v1303 = vmul.f32 %v1292, %v703
        %v1304 = vmul.f32 %v1292, %v704
        %v1305 = vmul.f32 %v1292, %v705
        %v1306 = vmul.f32 %v1292, %v706
        %v1307 = vmul.f32 %v1292, %v707
        %v1308 = vmul.f32 %v1292, %v708
        %v1309 = vmul.f32 %v1292, %v709
        %v1310 = vrot.slane %v1294, 4
        %v1311 = vadd.f32 %v1294, %v1310
        %v1312 = vrot.slane %v1311, 2
        %v1313 = vadd.f32 %v1311, %v1312
        %v1314 = vrot.slane %v1313, 1
        %v1315 = vadd.f32 %v1313, %v1314
        %v1316 = vrot.slane %v1295, 4
        %v1317 = vadd.f32 %v1295, %v1316
        %v1318 = vrot.slane %v1317, 2
        %v1319 = vadd.f32 %v1317, %v1318
        %v1320 = vrot.slane %v1319, 1
        %v1321 = vadd.f32 %v1319, %v1320
        %v1322 = vrot.slane %v1296, 4
        %v1323 = vadd.f32 %v1296, %v1322
        %v1324 = vrot.slane %v1323, 2
        %v1325 = vadd.f32 %v1323, %v1324
        %v1326 = vrot.slane %v1325, 1
        %v1327 = vadd.f32 %v1325, %v1326
        %v1328 = vrot.slane %v1297, 4
        %v1329 = vadd.f32 %v1297, %v1328
        %v1330 = vrot.slane %v1329, 2
        %v1331 = vadd.f32 %v1329, %v1330
        %v1332 = vrot.slane %v1331, 1
        %v1333 = vadd.f32 %v1331, %v1332
        %v1334 = vrot.slane %v1298, 4
        %v1335 = vadd.f32 %v1298, %v1334
        %v1336 = vrot.slane %v1335, 2
        %v1337 = vadd.f32 %v1335, %v1336
        %v1338 = vrot.slane %v1337, 1
        %v1339 = vadd.f32 %v1337, %v1338
        %v1340 = vrot.slane %v1299, 4
        %v1341 = vadd.f32 %v1299, %v1340
        %v1342 = vrot.slane %v1341, 2
        %v1343 = vadd.f32 %v1341, %v1342
        %v1344 = vrot.slane %v1343, 1
        %v1345 = vadd.f32 %v1343, %v1344
        %v1346 = vrot.slane %v1300, 4
        %v1347 = vadd.f32 %v1300, %v1346
        %v1348 = vrot.slane %v1347, 2
        %v1349 = vadd.f32 %v1347, %v1348
        %v1350 = vrot.slane %v1349, 1
        %v1351 = vadd.f32 %v1349, %v1350
        %v1352 = vrot.slane %v1301, 4
        %v1353 = vadd.f32 %v1301, %v1352
        %v1354 = vrot.slane %v1353, 2
        %v1355 = vadd.f32 %v1353, %v1354
        %v1356 = vrot.slane %v1355, 1
        %v1357 = vadd.f32 %v1355, %v1356
        %v1358 = vrot.slane %v1302, 4
        %v1359 = vadd.f32 %v1302, %v1358
        %v1360 = vrot.slane %v1359, 2
        %v1361 = vadd.f32 %v1359, %v1360
        %v1362 = vrot.slane %v1361, 1
        %v1363 = vadd.f32 %v1361, %v1362
        %v1364 = vrot.slane %v1303, 4
        %v1365 = vadd.f32 %v1303, %v1364
        %v1366 = vrot.slane %v1365, 2
        %v1367 = vadd.f32 %v1365, %v1366
        %v1368 = vrot.slane %v1367, 1
        %v1369 = vadd.f32 %v1367, %v1368
        %v1370 = vrot.slane %v1304, 4
        %v1371 = vadd.f32 %v1304, %v1370
        %v1372 = vrot.slane %v1371, 2
        %v1373 = vadd.f32 %v1371, %v1372
        %v1374 = vrot.slane %v1373, 1
        %v1375 = vadd.f32 %v1373, %v1374
        %v1376 = vrot.slane %v1305, 4
        %v1377 = vadd.f32 %v1305, %v1376
        %v1378 = vrot.slane %v1377, 2
        %v1379 = vadd.f32 %v1377, %v1378
        %v1380 = vrot.slane %v1379, 1
        %v1381 = vadd.f32 %v1379, %v1380
        %v1382 = vrot.slane %v1306, 4
        %v1383 = vadd.f32 %v1306, %v1382
        %v1384 = vrot.slane %v1383, 2
        %v1385 = vadd.f32 %v1383, %v1384
        %v1386 = vrot.slane %v1385, 1
        %v1387 = vadd.f32 %v1385, %v1386
        %v1388 = vrot.slane %v1307, 4
        %v1389 = vadd.f32 %v1307, %v1388
        %v1390 = vrot.slane %v1389, 2
        %v1391 = vadd.f32 %v1389, %v1390
        %v1392 = vrot.slane %v1391, 1
        %v1393 = vadd.f32 %v1391, %v1392
        %v1394 = vrot.slane %v1308, 4
        %v1395 = vadd.f32 %v1308, %v1394
        %v1396 = vrot.slane %v1395, 2
        %v1397 = vadd.f32 %v1395, %v1396
        %v1398 = vrot.slane %v1397, 1
        %v1399 = vadd.f32 %v1397, %v1398
        %v1400 = vrot.slane %v1309, 4
        %v1401 = vadd.f32 %v1309, %v1400
        %v1402 = vrot.slane %v1401, 2
        %v1403 = vadd.f32 %v1401, %v1402
        %v1404 = vrot.slane %v1403, 1
        %v1405 = vadd.f32 %v1403, %v1404
        %v1406 = vmul.f32 %v1083, %v967
        %v1407 = vmul.f32 %v1089, %v973
        %v1408 = vmul.f32 %v1095, %v979
        %v1409 = vmul.f32 %v1101, %v985
        %v1410 = vmul.f32 %v1107, %v991
        %v1411 = vmul.f32 %v1113, %v997
        %v1412 = vmul.f32 %v1119, %v1003
        %v1413 = vmul.f32 %v1125, %v1009
        %v1414 = vmul.f32 %v1131, %v1015
        %v1415 = vmul.f32 %v1137, %v1021
        %v1416 = vmul.f32 %v1143, %v1027
        %v1417 = vmul.f32 %v1149, %v1033
        %v1418 = vmul.f32 %v1155, %v1039
        %v1419 = vmul.f32 %v1161, %v1045
        %v1420 = vmul.f32 %v1167, %v1051
        %v1421 = vmul.f32 %v1173, %v1057
        %v1438 = vcombine.low %v735, %v741
        %v1439 = vcombine.low %v747, %v753
        %v1440 = vcombine.low %v759, %v765
        %v1441 = vcombine.low %v771, %v777
        %v1442 = vcombine.low %v783, %v789
        %v1443 = vcombine.low %v795, %v801
        %v1444 = vcombine.low %v807, %v813
        %v1445 = vcombine.low %v819, %v825
        %v1446 = vrot.slane %v1438, 6
        %v1447 = vrot.slane %v1439, 6
        %v1448 = vrot.slane %v1440, 6
        %v1449 = vrot.slane %v1441, 6
        %v1450 = vrot.slane %v1442, 6
        %v1451 = vrot.slane %v1443, 6
        %v1452 = vrot.slane %v1444, 6
        %v1453 = vrot.slane %v1445, 6
        %v1462 = vsub.f32 %v270, %v1446
        %v1463 = vsub.f32 %v271, %v1447
        %v1464 = vsub.f32 %v272, %v1448
        %v1465 = vsub.f32 %v273, %v1449
        %v1466 = vsub.f32 %v274, %v1450
        %v1467 = vsub.f32 %v275, %v1451
        %v1468 = vsub.f32 %v276, %v1452
        %v1469 = vsub.f32 %v277, %v1453
        %v1486 = vcombine.low %v967, %v973
        %v1487 = vcombine.low %v979, %v985
        %v1488 = vcombine.low %v991, %v997
        %v1489 = vcombine.low %v1003, %v1009
        %v1490 = vcombine.low %v1015, %v1021
        %v1491 = vcombine.low %v1027, %v1033
        %v1492 = vcombine.low %v1039, %v1045
        %v1493 = vcombine.low %v1051, %v1057
        %v1494 = vrot.slane %v1486, 6
        %v1495 = vrot.slane %v1487, 6
        %v1496 = vrot.slane %v1488, 6
        %v1497 = vrot.slane %v1489, 6
        %v1498 = vrot.slane %v1490, 6
        %v1499 = vrot.slane %v1491, 6
        %v1500 = vrot.slane %v1492, 6
        %v1501 = vrot.slane %v1493, 6
        %v1510 = vmul.f32 %v1462, %v1494
        %v1511 = vmul.f32 %v1463, %v1495
        %v1512 = vmul.f32 %v1464, %v1496
        %v1513 = vmul.f32 %v1465, %v1497
        %v1514 = vmul.f32 %v1466, %v1498
        %v1515 = vmul.f32 %v1467, %v1499
        %v1516 = vmul.f32 %v1468, %v1500
        %v1517 = vmul.f32 %v1469, %v1501
        %v1518 = vsub.f32 1.0, %v1510
        %v1519 = vsub.f32 1.0, %v1511
        %v1520 = vsub.f32 1.0, %v1512
        %v1521 = vsub.f32 1.0, %v1513
        %v1522 = vsub.f32 1.0, %v1514
        %v1523 = vsub.f32 1.0, %v1515
        %v1524 = vsub.f32 1.0, %v1516
        %v1525 = vsub.f32 1.0, %v1517
        %v1526 = vmul.f32 %v1510, %v1518
        %v1527 = vmul.f32 %v1511, %v1519
        %v1528 = vmul.f32 %v1512, %v1520
        %v1529 = vmul.f32 %v1513, %v1521
        %v1530 = vmul.f32 %v1514, %v1522
        %v1531 = vmul.f32 %v1515, %v1523
        %v1532 = vmul.f32 %v1516, %v1524
        %v1533 = vmul.f32 %v1517, %v1525
        %v1534 = vadd.f32 %v1315, %v1199
        %v1535 = vadd.f32 %v1321, %v1205
        %v1536 = vadd.f32 %v1327, %v1211
        %v1537 = vadd.f32 %v1333, %v1217
        %v1538 = vadd.f32 %v1339, %v1223
        %v1539 = vadd.f32 %v1345, %v1229
        %v1540 = vadd.f32 %v1351, %v1235
        %v1541 = vadd.f32 %v1357, %v1241
        %v1542 = vadd.f32 %v1363, %v1247
        %v1543 = vadd.f32 %v1369, %v1253
        %v1544 = vadd.f32 %v1375, %v1259
        %v1545 = vadd.f32 %v1381, %v1265
        %v1546 = vadd.f32 %v1387, %v1271
        %v1547 = vadd.f32 %v1393, %v1277
        %v1548 = vadd.f32 %v1399, %v1283
        %v1549 = vadd.f32 %v1405, %v1289
        %v1550 = vmul.f32 %v1406, 2.0
        %v1551 = vmul.f32 %v1407, 2.0
        %v1552 = vmul.f32 %v1408, 2.0
        %v1553 = vmul.f32 %v1409, 2.0
        %v1554 = vmul.f32 %v1410, 2.0
        %v1555 = vmul.f32 %v1411, 2.0
        %v1556 = vmul.f32 %v1412, 2.0
        %v1557 = vmul.f32 %v1413, 2.0
        %v1558 = vmul.f32 %v1414, 2.0
        %v1559 = vmul.f32 %v1415, 2.0
        %v1560 = vmul.f32 %v1416, 2.0
        %v1561 = vmul.f32 %v1417, 2.0
        %v1562 = vmul.f32 %v1418, 2.0
        %v1563 = vmul.f32 %v1419, 2.0
        %v1564 = vmul.f32 %v1420, 2.0
        %v1565 = vmul.f32 %v1421, 2.0
        %v1566 = vsub.f32 %v1534, %v1550
        %v1567 = vsub.f32 %v1535, %v1551
        %v1568 = vsub.f32 %v1536, %v1552
        %v1569 = vsub.f32 %v1537, %v1553
        %v1570 = vsub.f32 %v1538, %v1554
        %v1571 = vsub.f32 %v1539, %v1555
        %v1572 = vsub.f32 %v1540, %v1556
        %v1573 = vsub.f32 %v1541, %v1557
        %v1574 = vsub.f32 %v1542, %v1558
        %v1575 = vsub.f32 %v1543, %v1559
        %v1576 = vsub.f32 %v1544, %v1560
        %v1577 = vsub.f32 %v1545, %v1561
        %v1578 = vsub.f32 %v1546, %v1562
        %v1579 = vsub.f32 %v1547, %v1563
        %v1580 = vsub.f32 %v1548, %v1564
        %v1581 = vsub.f32 %v1549, %v1565
        %v1590 = vlaneseq
        %v1591 = vshrl.u32 %v1590, 7
        %v1592 = vsub.s32 2, %v1591
        %v1593 = vrot.slane %v1526, %v1592
        %v1594 = vlaneseq
        %v1595 = vshrl.u32 %v1594, 7
        %v1596 = vsub.s32 6, %v1595
        %v1597 = vrot.slane %v1526, %v1596
        %v1598 = vlaneseq
        %v1599 = vshrl.u32 %v1598, 7
        %v1600 = vsub.s32 2, %v1599
        %v1601 = vrot.slane %v1527, %v1600
        %v1602 = vlaneseq
        %v1603 = vshrl.u32 %v1602, 7
        %v1604 = vsub.s32 6, %v1603
        %v1605 = vrot.slane %v1527, %v1604
        %v1606 = vlaneseq
        %v1607 = vshrl.u32 %v1606, 7
        %v1608 = vsub.s32 2, %v1607
        %v1609 = vrot.slane %v1528, %v1608
        %v1610 = vlaneseq
        %v1611 = vshrl.u32 %v1610, 7
        %v1612 = vsub.s32 6, %v1611
        %v1613 = vrot.slane %v1528, %v1612
        %v1614 = vlaneseq
        %v1615 = vshrl.u32 %v1614, 7
        %v1616 = vsub.s32 2, %v1615
        %v1617 = vrot.slane %v1529, %v1616
        %v1618 = vlaneseq
        %v1619 = vshrl.u32 %v1618, 7
        %v1620 = vsub.s32 6, %v1619
        %v1621 = vrot.slane %v1529, %v1620
        %v1622 = vlaneseq
        %v1623 = vshrl.u32 %v1622, 7
        %v1624 = vsub.s32 2, %v1623
        %v1625 = vrot.slane %v1530, %v1624
        %v1626 = vlaneseq
        %v1627 = vshrl.u32 %v1626, 7
        %v1628 = vsub.s32 6, %v1627
        %v1629 = vrot.slane %v1530, %v1628
        %v1630 = vlaneseq
        %v1631 = vshrl.u32 %v1630, 7
        %v1632 = vsub.s32 2, %v1631
        %v1633 = vrot.slane %v1531, %v1632
        %v1634 = vlaneseq
        %v1635 = vshrl.u32 %v1634, 7
        %v1636 = vsub.s32 6, %v1635
        %v1637 = vrot.slane %v1531, %v1636
        %v1638 = vlaneseq
        %v1639 = vshrl.u32 %v1638, 7
        %v1640 = vsub.s32 2, %v1639
        %v1641 = vrot.slane %v1532, %v1640
        %v1642 = vlaneseq
        %v1643 = vshrl.u32 %v1642, 7
        %v1644 = vsub.s32 6, %v1643
        %v1645 = vrot.slane %v1532, %v1644
        %v1646 = vlaneseq
        %v1647 = vshrl.u32 %v1646, 7
        %v1648 = vsub.s32 2, %v1647
        %v1649 = vrot.slane %v1533, %v1648
        %v1650 = vlaneseq
        %v1651 = vshrl.u32 %v1650, 7
        %v1652 = vsub.s32 6, %v1651
        %v1653 = vrot.slane %v1533, %v1652
        %v1670 = vmul.f32 %v1566, %v1593
        %v1671 = vmul.f32 %v1567, %v1597
        %v1672 = vmul.f32 %v1568, %v1601
        %v1673 = vmul.f32 %v1569, %v1605
        %v1674 = vmul.f32 %v1570, %v1609
        %v1675 = vmul.f32 %v1571, %v1613
        %v1676 = vmul.f32 %v1572, %v1617
        %v1677 = vmul.f32 %v1573, %v1621
        %v1678 = vmul.f32 %v1574, %v1625
        %v1679 = vmul.f32 %v1575, %v1629
        %v1680 = vmul.f32 %v1576, %v1633
        %v1681 = vmul.f32 %v1577, %v1637
        %v1682 = vmul.f32 %v1578, %v1641
        %v1683 = vmul.f32 %v1579, %v1645
        %v1684 = vmul.f32 %v1580, %v1649
        %v1685 = vmul.f32 %v1581, %v1653
        %v1686 = vadd.f32 %v1406, %v1670
        %v1687 = vadd.f32 %v1407, %v1671
        %v1688 = vadd.f32 %v1408, %v1672
        %v1689 = vadd.f32 %v1409, %v1673
        %v1690 = vadd.f32 %v1410, %v1674
        %v1691 = vadd.f32 %v1411, %v1675
        %v1692 = vadd.f32 %v1412, %v1676
        %v1693 = vadd.f32 %v1413, %v1677
        %v1694 = vadd.f32 %v1414, %v1678
        %v1695 = vadd.f32 %v1415, %v1679
        %v1696 = vadd.f32 %v1416, %v1680
        %v1697 = vadd.f32 %v1417, %v1681
        %v1698 = vadd.f32 %v1418, %v1682
        %v1699 = vadd.f32 %v1419, %v1683
        %v1700 = vadd.f32 %v1420, %v1684
        %v1701 = vadd.f32 %v1421, %v1685
        %v1702 = vrcp.pop %v1686
        %v1703 = vmul.f32 1.0, %v1702
        %v1704 = vrcp.pop %v1687
        %v1705 = vmul.f32 1.0, %v1704
        %v1706 = vrcp.pop %v1688
        %v1707 = vmul.f32 1.0, %v1706
        %v1708 = vrcp.pop %v1689
        %v1709 = vmul.f32 1.0, %v1708
        %v1710 = vrcp.pop %v1690
        %v1711 = vmul.f32 1.0, %v1710
        %v1712 = vrcp.pop %v1691
        %v1713 = vmul.f32 1.0, %v1712
        %v1714 = vrcp.pop %v1692
        %v1715 = vmul.f32 1.0, %v1714
        %v1716 = vrcp.pop %v1693
        %v1717 = vmul.f32 1.0, %v1716
        %v1718 = vrcp.pop %v1694
        %v1719 = vmul.f32 1.0, %v1718
        %v1720 = vrcp.pop %v1695
        %v1721 = vmul.f32 1.0, %v1720
        %v1722 = vrcp.pop %v1696
        %v1723 = vmul.f32 1.0, %v1722
        %v1724 = vrcp.pop %v1697
        %v1725 = vmul.f32 1.0, %v1724
        %v1726 = vrcp.pop %v1698
        %v1727 = vmul.f32 1.0, %v1726
        %v1728 = vrcp.pop %v1699
        %v1729 = vmul.f32 1.0, %v1728
        %v1730 = vrcp.pop %v1700
        %v1731 = vmul.f32 1.0, %v1730
        %v1732 = vrcp.pop %v1701
        %v1733 = vmul.f32 1.0, %v1732
        %v1742 = vlaneseq
        %v1743 = vshrl.u32 %v1742, 7
        %v1744 = vsub.s32 2, %v1743
        %v1745 = vrot.slane %v1510, %v1744
        %v1746 = vlaneseq
        %v1747 = vshrl.u32 %v1746, 7
        %v1748 = vsub.s32 6, %v1747
        %v1749 = vrot.slane %v1510, %v1748
        %v1750 = vlaneseq
        %v1751 = vshrl.u32 %v1750, 7
        %v1752 = vsub.s32 2, %v1751
        %v1753 = vrot.slane %v1511, %v1752
        %v1754 = vlaneseq
        %v1755 = vshrl.u32 %v1754, 7
        %v1756 = vsub.s32 6, %v1755
        %v1757 = vrot.slane %v1511, %v1756
        %v1758 = vlaneseq
        %v1759 = vshrl.u32 %v1758, 7
        %v1760 = vsub.s32 2, %v1759
        %v1761 = vrot.slane %v1512, %v1760
        %v1762 = vlaneseq
        %v1763 = vshrl.u32 %v1762, 7
        %v1764 = vsub.s32 6, %v1763
        %v1765 = vrot.slane %v1512, %v1764
        %v1766 = vlaneseq
        %v1767 = vshrl.u32 %v1766, 7
        %v1768 = vsub.s32 2, %v1767
        %v1769 = vrot.slane %v1513, %v1768
        %v1770 = vlaneseq
        %v1771 = vshrl.u32 %v1770, 7
        %v1772 = vsub.s32 6, %v1771
        %v1773 = vrot.slane %v1513, %v1772
        %v1774 = vlaneseq
        %v1775 = vshrl.u32 %v1774, 7
        %v1776 = vsub.s32 2, %v1775
        %v1777 = vrot.slane %v1514, %v1776
        %v1778 = vlaneseq
        %v1779 = vshrl.u32 %v1778, 7
        %v1780 = vsub.s32 6, %v1779
        %v1781 = vrot.slane %v1514, %v1780
        %v1782 = vlaneseq
        %v1783 = vshrl.u32 %v1782, 7
        %v1784 = vsub.s32 2, %v1783
        %v1785 = vrot.slane %v1515, %v1784
        %v1786 = vlaneseq
        %v1787 = vshrl.u32 %v1786, 7
        %v1788 = vsub.s32 6, %v1787
        %v1789 = vrot.slane %v1515, %v1788
        %v1790 = vlaneseq
        %v1791 = vshrl.u32 %v1790, 7
        %v1792 = vsub.s32 2, %v1791
        %v1793 = vrot.slane %v1516, %v1792
        %v1794 = vlaneseq
        %v1795 = vshrl.u32 %v1794, 7
        %v1796 = vsub.s32 6, %v1795
        %v1797 = vrot.slane %v1516, %v1796
        %v1798 = vlaneseq
        %v1799 = vshrl.u32 %v1798, 7
        %v1800 = vsub.s32 2, %v1799
        %v1801 = vrot.slane %v1517, %v1800
        %v1802 = vlaneseq
        %v1803 = vshrl.u32 %v1802, 7
        %v1804 = vsub.s32 6, %v1803
        %v1805 = vrot.slane %v1517, %v1804
        %v1822 = vmul.f32 %v1406, %v1745
        %v1823 = vmul.f32 %v1407, %v1749
        %v1824 = vmul.f32 %v1408, %v1753
        %v1825 = vmul.f32 %v1409, %v1757
        %v1826 = vmul.f32 %v1410, %v1761
        %v1827 = vmul.f32 %v1411, %v1765
        %v1828 = vmul.f32 %v1412, %v1769
        %v1829 = vmul.f32 %v1413, %v1773
        %v1830 = vmul.f32 %v1414, %v1777
        %v1831 = vmul.f32 %v1415, %v1781
        %v1832 = vmul.f32 %v1416, %v1785
        %v1833 = vmul.f32 %v1417, %v1789
        %v1834 = vmul.f32 %v1418, %v1793
        %v1835 = vmul.f32 %v1419, %v1797
        %v1836 = vmul.f32 %v1420, %v1801
        %v1837 = vmul.f32 %v1421, %v1805
        %v1838 = vmul.f32 %v1822, %v1745
        %v1839 = vmul.f32 %v1823, %v1749
        %v1840 = vmul.f32 %v1824, %v1753
        %v1841 = vmul.f32 %v1825, %v1757
        %v1842 = vmul.f32 %v1826, %v1761
        %v1843 = vmul.f32 %v1827, %v1765
        %v1844 = vmul.f32 %v1828, %v1769
        %v1845 = vmul.f32 %v1829, %v1773
        %v1846 = vmul.f32 %v1830, %v1777
        %v1847 = vmul.f32 %v1831, %v1781
        %v1848 = vmul.f32 %v1832, %v1785
        %v1849 = vmul.f32 %v1833, %v1789
        %v1850 = vmul.f32 %v1834, %v1793
        %v1851 = vmul.f32 %v1835, %v1797
        %v1852 = vmul.f32 %v1836, %v1801
        %v1853 = vmul.f32 %v1837, %v1805
        %v1854 = vmul.f32 %v1199, %v1593
        %v1855 = vmul.f32 %v1205, %v1597
        %v1856 = vmul.f32 %v1211, %v1601
        %v1857 = vmul.f32 %v1217, %v1605
        %v1858 = vmul.f32 %v1223, %v1609
        %v1859 = vmul.f32 %v1229, %v1613
        %v1860 = vmul.f32 %v1235, %v1617
        %v1861 = vmul.f32 %v1241, %v1621
        %v1862 = vmul.f32 %v1247, %v1625
        %v1863 = vmul.f32 %v1253, %v1629
        %v1864 = vmul.f32 %v1259, %v1633
        %v1865 = vmul.f32 %v1265, %v1637
        %v1866 = vmul.f32 %v1271, %v1641
        %v1867 = vmul.f32 %v1277, %v1645
        %v1868 = vmul.f32 %v1283, %v1649
        %v1869 = vmul.f32 %v1289, %v1653
        %v1870 = vadd.f32 %v1838, %v1854
        %v1871 = vadd.f32 %v1839, %v1855
        %v1872 = vadd.f32 %v1840, %v1856
        %v1873 = vadd.f32 %v1841, %v1857
        %v1874 = vadd.f32 %v1842, %v1858
        %v1875 = vadd.f32 %v1843, %v1859
        %v1876 = vadd.f32 %v1844, %v1860
        %v1877 = vadd.f32 %v1845, %v1861
        %v1878 = vadd.f32 %v1846, %v1862
        %v1879 = vadd.f32 %v1847, %v1863
        %v1880 = vadd.f32 %v1848, %v1864
        %v1881 = vadd.f32 %v1849, %v1865
        %v1882 = vadd.f32 %v1850, %v1866
        %v1883 = vadd.f32 %v1851, %v1867
        %v1884 = vadd.f32 %v1852, %v1868
        %v1885 = vadd.f32 %v1853, %v1869
        %v1886 = vmul.f32 %v1083, %v1870
        %v1887 = vmul.f32 %v1089, %v1871
        %v1888 = vmul.f32 %v1095, %v1872
        %v1889 = vmul.f32 %v1101, %v1873
        %v1890 = vmul.f32 %v1107, %v1874
        %v1891 = vmul.f32 %v1113, %v1875
        %v1892 = vmul.f32 %v1119, %v1876
        %v1893 = vmul.f32 %v1125, %v1877
        %v1894 = vmul.f32 %v1131, %v1878
        %v1895 = vmul.f32 %v1137, %v1879
        %v1896 = vmul.f32 %v1143, %v1880
        %v1897 = vmul.f32 %v1149, %v1881
        %v1898 = vmul.f32 %v1155, %v1882
        %v1899 = vmul.f32 %v1161, %v1883
        %v1900 = vmul.f32 %v1167, %v1884
        %v1901 = vmul.f32 %v1173, %v1885
        %v1902 = vmul.f32 %v1886, %v1703
        %v1903 = vmul.f32 %v1887, %v1705
        %v1904 = vmul.f32 %v1888, %v1707
        %v1905 = vmul.f32 %v1889, %v1709
        %v1906 = vmul.f32 %v1890, %v1711
        %v1907 = vmul.f32 %v1891, %v1713
        %v1908 = vmul.f32 %v1892, %v1715
        %v1909 = vmul.f32 %v1893, %v1717
        %v1910 = vmul.f32 %v1894, %v1719
        %v1911 = vmul.f32 %v1895, %v1721
        %v1912 = vmul.f32 %v1896, %v1723
        %v1913 = vmul.f32 %v1897, %v1725
        %v1914 = vmul.f32 %v1898, %v1727
        %v1915 = vmul.f32 %v1899, %v1729
        %v1916 = vmul.f32 %v1900, %v1731
        %v1917 = vmul.f32 %v1901, %v1733
        %v1918 = vadd.f32 %v851, %v1902
        %v1919 = vadd.f32 %v857, %v1903
        %v1920 = vadd.f32 %v863, %v1904
        %v1921 = vadd.f32 %v869, %v1905
        %v1922 = vadd.f32 %v875, %v1906
        %v1923 = vadd.f32 %v881, %v1907
        %v1924 = vadd.f32 %v887, %v1908
        %v1925 = vadd.f32 %v893, %v1909
        %v1926 = vadd.f32 %v899, %v1910
        %v1927 = vadd.f32 %v905, %v1911
        %v1928 = vadd.f32 %v911, %v1912
        %v1929 = vadd.f32 %v917, %v1913
        %v1930 = vadd.f32 %v923, %v1914
        %v1931 = vadd.f32 %v929, %v1915
        %v1932 = vadd.f32 %v935, %v1916
        %v1933 = vadd.f32 %v941, %v1917
        %v1934 = vmul.f32 %v1406, %v1406
        %v1935 = vmul.f32 %v1407, %v1407
        %v1936 = vmul.f32 %v1408, %v1408
        %v1937 = vmul.f32 %v1409, %v1409
        %v1938 = vmul.f32 %v1410, %v1410
        %v1939 = vmul.f32 %v1411, %v1411
        %v1940 = vmul.f32 %v1412, %v1412
        %v1941 = vmul.f32 %v1413, %v1413
        %v1942 = vmul.f32 %v1414, %v1414
        %v1943 = vmul.f32 %v1415, %v1415
        %v1944 = vmul.f32 %v1416, %v1416
        %v1945 = vmul.f32 %v1417, %v1417
        %v1946 = vmul.f32 %v1418, %v1418
        %v1947 = vmul.f32 %v1419, %v1419
        %v1948 = vmul.f32 %v1420, %v1420
        %v1949 = vmul.f32 %v1421, %v1421
        %v1950 = vmul.f32 %v1315, %v1745
        %v1951 = vmul.f32 %v1321, %v1749
        %v1952 = vmul.f32 %v1327, %v1753
        %v1953 = vmul.f32 %v1333, %v1757
        %v1954 = vmul.f32 %v1339, %v1761
        %v1955 = vmul.f32 %v1345, %v1765
        %v1956 = vmul.f32 %v1351, %v1769
        %v1957 = vmul.f32 %v1357, %v1773
        %v1958 = vmul.f32 %v1363, %v1777
        %v1959 = vmul.f32 %v1369, %v1781
        %v1960 = vmul.f32 %v1375, %v1785
        %v1961 = vmul.f32 %v1381, %v1789
        %v1962 = vmul.f32 %v1387, %v1793
        %v1963 = vmul.f32 %v1393, %v1797
        %v1964 = vmul.f32 %v1399, %v1801
        %v1965 = vmul.f32 %v1405, %v1805
        %v1966 = vmul.f32 %v1950, %v1745
        %v1967 = vmul.f32 %v1951, %v1749
        %v1968 = vmul.f32 %v1952, %v1753
        %v1969 = vmul.f32 %v1953, %v1757
        %v1970 = vmul.f32 %v1954, %v1761
        %v1971 = vmul.f32 %v1955, %v1765
        %v1972 = vmul.f32 %v1956, %v1769
        %v1973 = vmul.f32 %v1957, %v1773
        %v1974 = vmul.f32 %v1958, %v1777
        %v1975 = vmul.f32 %v1959, %v1781
        %v1976 = vmul.f32 %v1960, %v1785
        %v1977 = vmul.f32 %v1961, %v1789
        %v1978 = vmul.f32 %v1962, %v1793
        %v1979 = vmul.f32 %v1963, %v1797
        %v1980 = vmul.f32 %v1964, %v1801
        %v1981 = vmul.f32 %v1965, %v1805
        %v1982 = vmul.f32 %v1550, %v1593
        %v1983 = vmul.f32 %v1551, %v1597
        %v1984 = vmul.f32 %v1552, %v1601
        %v1985 = vmul.f32 %v1553, %v1605
        %v1986 = vmul.f32 %v1554, %v1609
        %v1987 = vmul.f32 %v1555, %v1613
        %v1988 = vmul.f32 %v1556, %v1617
        %v1989 = vmul.f32 %v1557, %v1621
        %v1990 = vmul.f32 %v1558, %v1625
        %v1991 = vmul.f32 %v1559, %v1629
        %v1992 = vmul.f32 %v1560, %v1633
        %v1993 = vmul.f32 %v1561, %v1637
        %v1994 = vmul.f32 %v1562, %v1641
        %v1995 = vmul.f32 %v1563, %v1645
        %v1996 = vmul.f32 %v1564, %v1649
        %v1997 = vmul.f32 %v1565, %v1653
        %v1998 = vadd.f32 %v1966, %v1982
        %v1999 = vadd.f32 %v1967, %v1983
        %v2000 = vadd.f32 %v1968, %v1984
        %v2001 = vadd.f32 %v1969, %v1985
        %v2002 = vadd.f32 %v1970, %v1986
        %v2003 = vadd.f32 %v1971, %v1987
        %v2004 = vadd.f32 %v1972, %v1988
        %v2005 = vadd.f32 %v1973, %v1989
        %v2006 = vadd.f32 %v1974, %v1990
        %v2007 = vadd.f32 %v1975, %v1991
        %v2008 = vadd.f32 %v1976, %v1992
        %v2009 = vadd.f32 %v1977, %v1993
        %v2010 = vadd.f32 %v1978, %v1994
        %v2011 = vadd.f32 %v1979, %v1995
        %v2012 = vadd.f32 %v1980, %v1996
        %v2013 = vadd.f32 %v1981, %v1997
        %v2022 = vlaneseq
        %v2023 = vshrl.u32 %v2022, 7
        %v2024 = vsub.s32 2, %v2023
        %v2025 = vrot.slane %v1518, %v2024
        %v2026 = vlaneseq
        %v2027 = vshrl.u32 %v2026, 7
        %v2028 = vsub.s32 6, %v2027
        %v2029 = vrot.slane %v1518, %v2028
        %v2030 = vlaneseq
        %v2031 = vshrl.u32 %v2030, 7
        %v2032 = vsub.s32 2, %v2031
        %v2033 = vrot.slane %v1519, %v2032
        %v2034 = vlaneseq
        %v2035 = vshrl.u32 %v2034, 7
        %v2036 = vsub.s32 6, %v2035
        %v2037 = vrot.slane %v1519, %v2036
        %v2038 = vlaneseq
        %v2039 = vshrl.u32 %v2038, 7
        %v2040 = vsub.s32 2, %v2039
        %v2041 = vrot.slane %v1520, %v2040
        %v2042 = vlaneseq
        %v2043 = vshrl.u32 %v2042, 7
        %v2044 = vsub.s32 6, %v2043
        %v2045 = vrot.slane %v1520, %v2044
        %v2046 = vlaneseq
        %v2047 = vshrl.u32 %v2046, 7
        %v2048 = vsub.s32 2, %v2047
        %v2049 = vrot.slane %v1521, %v2048
        %v2050 = vlaneseq
        %v2051 = vshrl.u32 %v2050, 7
        %v2052 = vsub.s32 6, %v2051
        %v2053 = vrot.slane %v1521, %v2052
        %v2054 = vlaneseq
        %v2055 = vshrl.u32 %v2054, 7
        %v2056 = vsub.s32 2, %v2055
        %v2057 = vrot.slane %v1522, %v2056
        %v2058 = vlaneseq
        %v2059 = vshrl.u32 %v2058, 7
        %v2060 = vsub.s32 6, %v2059
        %v2061 = vrot.slane %v1522, %v2060
        %v2062 = vlaneseq
        %v2063 = vshrl.u32 %v2062, 7
        %v2064 = vsub.s32 2, %v2063
        %v2065 = vrot.slane %v1523, %v2064
        %v2066 = vlaneseq
        %v2067 = vshrl.u32 %v2066, 7
        %v2068 = vsub.s32 6, %v2067
        %v2069 = vrot.slane %v1523, %v2068
        %v2070 = vlaneseq
        %v2071 = vshrl.u32 %v2070, 7
        %v2072 = vsub.s32 2, %v2071
        %v2073 = vrot.slane %v1524, %v2072
        %v2074 = vlaneseq
        %v2075 = vshrl.u32 %v2074, 7
        %v2076 = vsub.s32 6, %v2075
        %v2077 = vrot.slane %v1524, %v2076
        %v2078 = vlaneseq
        %v2079 = vshrl.u32 %v2078, 7
        %v2080 = vsub.s32 2, %v2079
        %v2081 = vrot.slane %v1525, %v2080
        %v2082 = vlaneseq
        %v2083 = vshrl.u32 %v2082, 7
        %v2084 = vsub.s32 6, %v2083
        %v2085 = vrot.slane %v1525, %v2084
        %v2102 = vmul.f32 %v1199, %v2025
        %v2103 = vmul.f32 %v1205, %v2029
        %v2104 = vmul.f32 %v1211, %v2033
        %v2105 = vmul.f32 %v1217, %v2037
        %v2106 = vmul.f32 %v1223, %v2041
        %v2107 = vmul.f32 %v1229, %v2045
        %v2108 = vmul.f32 %v1235, %v2049
        %v2109 = vmul.f32 %v1241, %v2053
        %v2110 = vmul.f32 %v1247, %v2057
        %v2111 = vmul.f32 %v1253, %v2061
        %v2112 = vmul.f32 %v1259, %v2065
        %v2113 = vmul.f32 %v1265, %v2069
        %v2114 = vmul.f32 %v1271, %v2073
        %v2115 = vmul.f32 %v1277, %v2077
        %v2116 = vmul.f32 %v1283, %v2081
        %v2117 = vmul.f32 %v1289, %v2085
        %v2118 = vmul.f32 %v2102, %v2025
        %v2119 = vmul.f32 %v2103, %v2029
        %v2120 = vmul.f32 %v2104, %v2033
        %v2121 = vmul.f32 %v2105, %v2037
        %v2122 = vmul.f32 %v2106, %v2041
        %v2123 = vmul.f32 %v2107, %v2045
        %v2124 = vmul.f32 %v2108, %v2049
        %v2125 = vmul.f32 %v2109, %v2053
        %v2126 = vmul.f32 %v2110, %v2057
        %v2127 = vmul.f32 %v2111, %v2061
        %v2128 = vmul.f32 %v2112, %v2065
        %v2129 = vmul.f32 %v2113, %v2069
        %v2130 = vmul.f32 %v2114, %v2073
        %v2131 = vmul.f32 %v2115, %v2077
        %v2132 = vmul.f32 %v2116, %v2081
        %v2133 = vmul.f32 %v2117, %v2085
        %v2134 = vadd.f32 %v1998, %v2118
        %v2135 = vadd.f32 %v1999, %v2119
        %v2136 = vadd.f32 %v2000, %v2120
        %v2137 = vadd.f32 %v2001, %v2121
        %v2138 = vadd.f32 %v2002, %v2122
        %v2139 = vadd.f32 %v2003, %v2123
        %v2140 = vadd.f32 %v2004, %v2124
        %v2141 = vadd.f32 %v2005, %v2125
        %v2142 = vadd.f32 %v2006, %v2126
        %v2143 = vadd.f32 %v2007, %v2127
        %v2144 = vadd.f32 %v2008, %v2128
        %v2145 = vadd.f32 %v2009, %v2129
        %v2146 = vadd.f32 %v2010, %v2130
        %v2147 = vadd.f32 %v2011, %v2131
        %v2148 = vadd.f32 %v2012, %v2132
        %v2149 = vadd.f32 %v2013, %v2133
        %v2150 = vmul.f32 %v1934, %v2134
        %v2151 = vmul.f32 %v1935, %v2135
        %v2152 = vmul.f32 %v1936, %v2136
        %v2153 = vmul.f32 %v1937, %v2137
        %v2154 = vmul.f32 %v1938, %v2138
        %v2155 = vmul.f32 %v1939, %v2139
        %v2156 = vmul.f32 %v1940, %v2140
        %v2157 = vmul.f32 %v1941, %v2141
        %v2158 = vmul.f32 %v1942, %v2142
        %v2159 = vmul.f32 %v1943, %v2143
        %v2160 = vmul.f32 %v1944, %v2144
        %v2161 = vmul.f32 %v1945, %v2145
        %v2162 = vmul.f32 %v1946, %v2146
        %v2163 = vmul.f32 %v1947, %v2147
        %v2164 = vmul.f32 %v1948, %v2148
        %v2165 = vmul.f32 %v1949, %v2149
        %v2166 = vmul.f32 %v2150, %v1703
        %v2167 = vmul.f32 %v2151, %v1705
        %v2168 = vmul.f32 %v2152, %v1707
        %v2169 = vmul.f32 %v2153, %v1709
        %v2170 = vmul.f32 %v2154, %v1711
        %v2171 = vmul.f32 %v2155, %v1713
        %v2172 = vmul.f32 %v2156, %v1715
        %v2173 = vmul.f32 %v2157, %v1717
        %v2174 = vmul.f32 %v2158, %v1719
        %v2175 = vmul.f32 %v2159, %v1721
        %v2176 = vmul.f32 %v2160, %v1723
        %v2177 = vmul.f32 %v2161, %v1725
        %v2178 = vmul.f32 %v2162, %v1727
        %v2179 = vmul.f32 %v2163, %v1729
        %v2180 = vmul.f32 %v2164, %v1731
        %v2181 = vmul.f32 %v2165, %v1733
        %v2182 = vmul.f32 %v2166, %v1703
        %v2183 = vmul.f32 %v2167, %v1705
        %v2184 = vmul.f32 %v2168, %v1707
        %v2185 = vmul.f32 %v2169, %v1709
        %v2186 = vmul.f32 %v2170, %v1711
        %v2187 = vmul.f32 %v2171, %v1713
        %v2188 = vmul.f32 %v2172, %v1715
        %v2189 = vmul.f32 %v2173, %v1717
        %v2190 = vmul.f32 %v2174, %v1719
        %v2191 = vmul.f32 %v2175, %v1721
        %v2192 = vmul.f32 %v2176, %v1723
        %v2193 = vmul.f32 %v2177, %v1725
        %v2194 = vmul.f32 %v2178, %v1727
        %v2195 = vmul.f32 %v2179, %v1729
        %v2196 = vmul.f32 %v2180, %v1731
        %v2197 = vmul.f32 %v2181, %v1733
        %v2214 = vcombine.low %v1918, %v1919
        %v2215 = vcombine.low %v1920, %v1921
        %v2216 = vcombine.low %v1922, %v1923
        %v2217 = vcombine.low %v1924, %v1925
        %v2219 = vunpack.c.l.s4 1966171168
        %v2220 = vunpack.c.0.s8 %v2219
        %v2221 = vlaneseq
        %v2222 = vshrl.u32 %v2221, 7
        %v2223 = vsub.s32 %v2220, %v2222
        %v2224 = vrot.slane %v2214, %v2223
        %v2226 = vunpack.c.l.s4 1966171168
        %v2227 = vunpack.c.0.s8 %v2226
        %v2228 = vlaneseq
        %v2229 = vshrl.u32 %v2228, 7
        %v2230 = vsub.s32 %v2227, %v2229
        %v2231 = vrot.slane %v2215, %v2230
        %v2233 = vunpack.c.l.s4 1966171168
        %v2234 = vunpack.c.0.s8 %v2233
        %v2235 = vlaneseq
        %v2236 = vshrl.u32 %v2235, 7
        %v2237 = vsub.s32 %v2234, %v2236
        %v2238 = vrot.slane %v2216, %v2237
        %v2240 = vunpack.c.l.s4 1966171168
        %v2241 = vunpack.c.0.s8 %v2240
        %v2242 = vlaneseq
        %v2243 = vshrl.u32 %v2242, 7
        %v2244 = vsub.s32 %v2241, %v2243
        %v2245 = vrot.slane %v2217, %v2244
        %v2246 = vcombine.low %v2224, %v2231
        %v2247 = vcombine.low %v2238, %v2245
        %v2249 = vunpack.c.l.s4 1966171168
        %v2250 = vunpack.c.0.s8 %v2249
        %v2251 = vlaneseq
        %v2252 = vshrl.u32 %v2251, 7
        %v2253 = vsub.s32 %v2250, %v2252
        %v2254 = vrot.slane %v2246, %v2253
        %v2256 = vunpack.c.l.s4 1966171168
        %v2257 = vunpack.c.0.s8 %v2256
        %v2258 = vlaneseq
        %v2259 = vshrl.u32 %v2258, 7
        %v2260 = vsub.s32 %v2257, %v2259
        %v2261 = vrot.slane %v2247, %v2260
        %v2262 = vcombine.low %v2254, %v2261
        %v2263 = vcombine.low %v1926, %v1927
        %v2264 = vcombine.low %v1928, %v1929
        %v2265 = vcombine.low %v1930, %v1931
        %v2266 = vcombine.low %v1932, %v1933
        %v2268 = vunpack.c.l.s4 1966171168
        %v2269 = vunpack.c.0.s8 %v2268
        %v2270 = vlaneseq
        %v2271 = vshrl.u32 %v2270, 7
        %v2272 = vsub.s32 %v2269, %v2271
        %v2273 = vrot.slane %v2263, %v2272
        %v2275 = vunpack.c.l.s4 1966171168
        %v2276 = vunpack.c.0.s8 %v2275
        %v2277 = vlaneseq
        %v2278 = vshrl.u32 %v2277, 7
        %v2279 = vsub.s32 %v2276, %v2278
        %v2280 = vrot.slane %v2264, %v2279
        %v2282 = vunpack.c.l.s4 1966171168
        %v2283 = vunpack.c.0.s8 %v2282
        %v2284 = vlaneseq
        %v2285 = vshrl.u32 %v2284, 7
        %v2286 = vsub.s32 %v2283, %v2285
        %v2287 = vrot.slane %v2265, %v2286
        %v2289 = vunpack.c.l.s4 1966171168
        %v2290 = vunpack.c.0.s8 %v2289
        %v2291 = vlaneseq
        %v2292 = vshrl.u32 %v2291, 7
        %v2293 = vsub.s32 %v2290, %v2292
        %v2294 = vrot.slane %v2266, %v2293
        %v2295 = vcombine.low %v2273, %v2280
        %v2296 = vcombine.low %v2287, %v2294
        %v2298 = vunpack.c.l.s4 1966171168
        %v2299 = vunpack.c.0.s8 %v2298
        %v2300 = vlaneseq
        %v2301 = vshrl.u32 %v2300, 7
        %v2302 = vsub.s32 %v2299, %v2301
        %v2303 = vrot.slane %v2295, %v2302
        %v2305 = vunpack.c.l.s4 1966171168
        %v2306 = vunpack.c.0.s8 %v2305
        %v2307 = vlaneseq
        %v2308 = vshrl.u32 %v2307, 7
        %v2309 = vsub.s32 %v2306, %v2308
        %v2310 = vrot.slane %v2296, %v2309
        %v2311 = vcombine.low %v2303, %v2310
        %s2314 = scalar_lea.vmem %s267, 2 [#allocation5]
        %2315 = vst [vmem:[%s2314] ss:$4 sm:$0xff] %v2262
        %s2316 = scalar_lea.vmem %s267, 34 [#allocation5]
        %2317 = vst [vmem:[%s2316] ss:$4 sm:$0xff] %v2311
        %v2318 = vld [vmem:[%s2] sm:$0xff]
        %v2319 = vld [vmem:[%s2 + $0x8] sm:$0xff]
        %v2320 = vld [vmem:[%s2 + $0x10] sm:$0xff]
        %v2321 = vld [vmem:[%s2 + $0x18] sm:$0xff]
        %v2322 = vld [vmem:[%s2 + $0x20] sm:$0xff]
        %v2323 = vld [vmem:[%s2 + $0x28] sm:$0xff]
        %v2324 = vld [vmem:[%s2 + $0x30] sm:$0xff]
        %v2325 = vld [vmem:[%s2 + $0x38] sm:$0xff]
        %2327 = vset.pattern.permute.xlu0 0
        %2328 = vperm.xlu0 %2327, %v2318
        %v2329 = vpop.permute.xlu0 %2328
        %2332 = vset.pattern.permute.xlu0 0
        %2333 = vperm.xlu0 %2332, %v2319
        %v2334 = vpop.permute.xlu0 %2333
        %2337 = vset.pattern.permute.xlu0 0
        %2338 = vperm.xlu0 %2337, %v2320
        %v2339 = vpop.permute.xlu0 %2338
        %2342 = vset.pattern.permute.xlu0 0
        %2343 = vperm.xlu0 %2342, %v2321
        %v2344 = vpop.permute.xlu0 %2343
        %2347 = vset.pattern.permute.xlu0 0
        %2348 = vperm.xlu0 %2347, %v2322
        %v2349 = vpop.permute.xlu0 %2348
        %2352 = vset.pattern.permute.xlu0 0
        %2353 = vperm.xlu0 %2352, %v2323
        %v2354 = vpop.permute.xlu0 %2353
        %2357 = vset.pattern.permute.xlu0 0
        %2358 = vperm.xlu0 %2357, %v2324
        %v2359 = vpop.permute.xlu0 %2358
        %2362 = vset.pattern.permute.xlu0 0
        %2363 = vperm.xlu0 %2362, %v2325
        %v2364 = vpop.permute.xlu0 %2363
        %v2366 = vmul.f32 %v2329, %v471
        %v2367 = vmul.f32 %v2329, %v475
        %v2368 = vmul.f32 %v2329, %v479
        %v2369 = vmul.f32 %v2329, %v483
        %v2370 = vmul.f32 %v2329, %v487
        %v2371 = vmul.f32 %v2329, %v491
        %v2372 = vmul.f32 %v2329, %v495
        %v2373 = vmul.f32 %v2329, %v499
        %v2374 = vmul.f32 %v2329, %v503
        %v2375 = vmul.f32 %v2329, %v507
        %v2376 = vmul.f32 %v2329, %v511
        %v2377 = vmul.f32 %v2329, %v515
        %v2378 = vmul.f32 %v2329, %v519
        %v2379 = vmul.f32 %v2329, %v523
        %v2380 = vmul.f32 %v2329, %v527
        %v2381 = vmul.f32 %v2329, %v531
        %v2382 = vmul.f32 %v2334, %v471
        %v2383 = vmul.f32 %v2334, %v475
        %v2384 = vmul.f32 %v2334, %v479
        %v2385 = vmul.f32 %v2334, %v483
        %v2386 = vmul.f32 %v2334, %v487
        %v2387 = vmul.f32 %v2334, %v491
        %v2388 = vmul.f32 %v2334, %v495
        %v2389 = vmul.f32 %v2334, %v499
        %v2390 = vmul.f32 %v2334, %v503
        %v2391 = vmul.f32 %v2334, %v507
        %v2392 = vmul.f32 %v2334, %v511
        %v2393 = vmul.f32 %v2334, %v515
        %v2394 = vmul.f32 %v2334, %v519
        %v2395 = vmul.f32 %v2334, %v523
        %v2396 = vmul.f32 %v2334, %v527
        %v2397 = vmul.f32 %v2334, %v531
        %v2398 = vmul.f32 %v2339, %v471
        %v2399 = vmul.f32 %v2339, %v475
        %v2400 = vmul.f32 %v2339, %v479
        %v2401 = vmul.f32 %v2339, %v483
        %v2402 = vmul.f32 %v2339, %v487
        %v2403 = vmul.f32 %v2339, %v491
        %v2404 = vmul.f32 %v2339, %v495
        %v2405 = vmul.f32 %v2339, %v499
        %v2406 = vmul.f32 %v2339, %v503
        %v2407 = vmul.f32 %v2339, %v507
        %v2408 = vmul.f32 %v2339, %v511
        %v2409 = vmul.f32 %v2339, %v515
        %v2410 = vmul.f32 %v2339, %v519
        %v2411 = vmul.f32 %v2339, %v523
        %v2412 = vmul.f32 %v2339, %v527
        %v2413 = vmul.f32 %v2339, %v531
        %v2414 = vmul.f32 %v2344, %v471
        %v2415 = vmul.f32 %v2344, %v475
        %v2416 = vmul.f32 %v2344, %v479
        %v2417 = vmul.f32 %v2344, %v483
        %v2418 = vmul.f32 %v2344, %v487
        %v2419 = vmul.f32 %v2344, %v491
        %v2420 = vmul.f32 %v2344, %v495
        %v2421 = vmul.f32 %v2344, %v499
        %v2422 = vmul.f32 %v2344, %v503
        %v2423 = vmul.f32 %v2344, %v507
        %v2424 = vmul.f32 %v2344, %v511
        %v2425 = vmul.f32 %v2344, %v515
        %v2426 = vmul.f32 %v2344, %v519
        %v2427 = vmul.f32 %v2344, %v523
        %v2428 = vmul.f32 %v2344, %v527
        %v2429 = vmul.f32 %v2344, %v531
        %v2430 = vmul.f32 %v2349, %v471
        %v2431 = vmul.f32 %v2349, %v475
        %v2432 = vmul.f32 %v2349, %v479
        %v2433 = vmul.f32 %v2349, %v483
        %v2434 = vmul.f32 %v2349, %v487
        %v2435 = vmul.f32 %v2349, %v491
        %v2436 = vmul.f32 %v2349, %v495
        %v2437 = vmul.f32 %v2349, %v499
        %v2438 = vmul.f32 %v2349, %v503
        %v2439 = vmul.f32 %v2349, %v507
        %v2440 = vmul.f32 %v2349, %v511
        %v2441 = vmul.f32 %v2349, %v515
        %v2442 = vmul.f32 %v2349, %v519
        %v2443 = vmul.f32 %v2349, %v523
        %v2444 = vmul.f32 %v2349, %v527
        %v2445 = vmul.f32 %v2349, %v531
        %v2446 = vmul.f32 %v2354, %v471
        %v2447 = vmul.f32 %v2354, %v475
        %v2448 = vmul.f32 %v2354, %v479
        %v2449 = vmul.f32 %v2354, %v483
        %v2450 = vmul.f32 %v2354, %v487
        %v2451 = vmul.f32 %v2354, %v491
        %v2452 = vmul.f32 %v2354, %v495
        %v2453 = vmul.f32 %v2354, %v499
        %v2454 = vmul.f32 %v2354, %v503
        %v2455 = vmul.f32 %v2354, %v507
        %v2456 = vmul.f32 %v2354, %v511
        %v2457 = vmul.f32 %v2354, %v515
        %v2458 = vmul.f32 %v2354, %v519
        %v2459 = vmul.f32 %v2354, %v523
        %v2460 = vmul.f32 %v2354, %v527
        %v2461 = vmul.f32 %v2354, %v531
        %v2462 = vmul.f32 %v2359, %v471
        %v2463 = vmul.f32 %v2359, %v475
        %v2464 = vmul.f32 %v2359, %v479
        %v2465 = vmul.f32 %v2359, %v483
        %v2466 = vmul.f32 %v2359, %v487
        %v2467 = vmul.f32 %v2359, %v491
        %v2468 = vmul.f32 %v2359, %v495
        %v2469 = vmul.f32 %v2359, %v499
        %v2470 = vmul.f32 %v2359, %v503
        %v2471 = vmul.f32 %v2359, %v507
        %v2472 = vmul.f32 %v2359, %v511
        %v2473 = vmul.f32 %v2359, %v515
        %v2474 = vmul.f32 %v2359, %v519
        %v2475 = vmul.f32 %v2359, %v523
        %v2476 = vmul.f32 %v2359, %v527
        %v2477 = vmul.f32 %v2359, %v531
        %v2478 = vmul.f32 %v2364, %v471
        %v2479 = vmul.f32 %v2364, %v475
        %v2480 = vmul.f32 %v2364, %v479
        %v2481 = vmul.f32 %v2364, %v483
        %v2482 = vmul.f32 %v2364, %v487
        %v2483 = vmul.f32 %v2364, %v491
        %v2484 = vmul.f32 %v2364, %v495
        %v2485 = vmul.f32 %v2364, %v499
        %v2486 = vmul.f32 %v2364, %v503
        %v2487 = vmul.f32 %v2364, %v507
        %v2488 = vmul.f32 %v2364, %v511
        %v2489 = vmul.f32 %v2364, %v515
        %v2490 = vmul.f32 %v2364, %v519
        %v2491 = vmul.f32 %v2364, %v523
        %v2492 = vmul.f32 %v2364, %v527
        %v2493 = vmul.f32 %v2364, %v531
        %2494 = vset.pattern.permute.xlu0 1
        %2495 = vperm.xlu0 %2494, %v2318
        %v2496 = vpop.permute.xlu0 %2495
        %2498 = vset.pattern.permute.xlu0 1
        %2499 = vperm.xlu0 %2498, %v2319
        %v2500 = vpop.permute.xlu0 %2499
        %2502 = vset.pattern.permute.xlu0 1
        %2503 = vperm.xlu0 %2502, %v2320
        %v2504 = vpop.permute.xlu0 %2503
        %2506 = vset.pattern.permute.xlu0 1
        %2507 = vperm.xlu0 %2506, %v2321
        %v2508 = vpop.permute.xlu0 %2507
        %2510 = vset.pattern.permute.xlu0 1
        %2511 = vperm.xlu0 %2510, %v2322
        %v2512 = vpop.permute.xlu0 %2511
        %2514 = vset.pattern.permute.xlu0 1
        %2515 = vperm.xlu0 %2514, %v2323
        %v2516 = vpop.permute.xlu0 %2515
        %2518 = vset.pattern.permute.xlu0 1
        %2519 = vperm.xlu0 %2518, %v2324
        %v2520 = vpop.permute.xlu0 %2519
        %2522 = vset.pattern.permute.xlu0 1
        %2523 = vperm.xlu0 %2522, %v2325
        %v2524 = vpop.permute.xlu0 %2523
        %v2526 = vadd.f32 %v2366, %v2496
        %v2527 = vadd.f32 %v2367, %v2496
        %v2528 = vadd.f32 %v2368, %v2496
        %v2529 = vadd.f32 %v2369, %v2496
        %v2530 = vadd.f32 %v2370, %v2496
        %v2531 = vadd.f32 %v2371, %v2496
        %v2532 = vadd.f32 %v2372, %v2496
        %v2533 = vadd.f32 %v2373, %v2496
        %v2534 = vadd.f32 %v2374, %v2496
        %v2535 = vadd.f32 %v2375, %v2496
        %v2536 = vadd.f32 %v2376, %v2496
        %v2537 = vadd.f32 %v2377, %v2496
        %v2538 = vadd.f32 %v2378, %v2496
        %v2539 = vadd.f32 %v2379, %v2496
        %v2540 = vadd.f32 %v2380, %v2496
        %v2541 = vadd.f32 %v2381, %v2496
        %v2542 = vadd.f32 %v2382, %v2500
        %v2543 = vadd.f32 %v2383, %v2500
        %v2544 = vadd.f32 %v2384, %v2500
        %v2545 = vadd.f32 %v2385, %v2500
        %v2546 = vadd.f32 %v2386, %v2500
        %v2547 = vadd.f32 %v2387, %v2500
        %v2548 = vadd.f32 %v2388, %v2500
        %v2549 = vadd.f32 %v2389, %v2500
        %v2550 = vadd.f32 %v2390, %v2500
        %v2551 = vadd.f32 %v2391, %v2500
        %v2552 = vadd.f32 %v2392, %v2500
        %v2553 = vadd.f32 %v2393, %v2500
        %v2554 = vadd.f32 %v2394, %v2500
        %v2555 = vadd.f32 %v2395, %v2500
        %v2556 = vadd.f32 %v2396, %v2500
        %v2557 = vadd.f32 %v2397, %v2500
        %v2558 = vadd.f32 %v2398, %v2504
        %v2559 = vadd.f32 %v2399, %v2504
        %v2560 = vadd.f32 %v2400, %v2504
        %v2561 = vadd.f32 %v2401, %v2504
        %v2562 = vadd.f32 %v2402, %v2504
        %v2563 = vadd.f32 %v2403, %v2504
        %v2564 = vadd.f32 %v2404, %v2504
        %v2565 = vadd.f32 %v2405, %v2504
        %v2566 = vadd.f32 %v2406, %v2504
        %v2567 = vadd.f32 %v2407, %v2504
        %v2568 = vadd.f32 %v2408, %v2504
        %v2569 = vadd.f32 %v2409, %v2504
        %v2570 = vadd.f32 %v2410, %v2504
        %v2571 = vadd.f32 %v2411, %v2504
        %v2572 = vadd.f32 %v2412, %v2504
        %v2573 = vadd.f32 %v2413, %v2504
        %v2574 = vadd.f32 %v2414, %v2508
        %v2575 = vadd.f32 %v2415, %v2508
        %v2576 = vadd.f32 %v2416, %v2508
        %v2577 = vadd.f32 %v2417, %v2508
        %v2578 = vadd.f32 %v2418, %v2508
        %v2579 = vadd.f32 %v2419, %v2508
        %v2580 = vadd.f32 %v2420, %v2508
        %v2581 = vadd.f32 %v2421, %v2508
        %v2582 = vadd.f32 %v2422, %v2508
        %v2583 = vadd.f32 %v2423, %v2508
        %v2584 = vadd.f32 %v2424, %v2508
        %v2585 = vadd.f32 %v2425, %v2508
        %v2586 = vadd.f32 %v2426, %v2508
        %v2587 = vadd.f32 %v2427, %v2508
        %v2588 = vadd.f32 %v2428, %v2508
        %v2589 = vadd.f32 %v2429, %v2508
        %v2590 = vadd.f32 %v2430, %v2512
        %v2591 = vadd.f32 %v2431, %v2512
        %v2592 = vadd.f32 %v2432, %v2512
        %v2593 = vadd.f32 %v2433, %v2512
        %v2594 = vadd.f32 %v2434, %v2512
        %v2595 = vadd.f32 %v2435, %v2512
        %v2596 = vadd.f32 %v2436, %v2512
        %v2597 = vadd.f32 %v2437, %v2512
        %v2598 = vadd.f32 %v2438, %v2512
        %v2599 = vadd.f32 %v2439, %v2512
        %v2600 = vadd.f32 %v2440, %v2512
        %v2601 = vadd.f32 %v2441, %v2512
        %v2602 = vadd.f32 %v2442, %v2512
        %v2603 = vadd.f32 %v2443, %v2512
        %v2604 = vadd.f32 %v2444, %v2512
        %v2605 = vadd.f32 %v2445, %v2512
        %v2606 = vadd.f32 %v2446, %v2516
        %v2607 = vadd.f32 %v2447, %v2516
        %v2608 = vadd.f32 %v2448, %v2516
        %v2609 = vadd.f32 %v2449, %v2516
        %v2610 = vadd.f32 %v2450, %v2516
        %v2611 = vadd.f32 %v2451, %v2516
        %v2612 = vadd.f32 %v2452, %v2516
        %v2613 = vadd.f32 %v2453, %v2516
        %v2614 = vadd.f32 %v2454, %v2516
        %v2615 = vadd.f32 %v2455, %v2516
        %v2616 = vadd.f32 %v2456, %v2516
        %v2617 = vadd.f32 %v2457, %v2516
        %v2618 = vadd.f32 %v2458, %v2516
        %v2619 = vadd.f32 %v2459, %v2516
        %v2620 = vadd.f32 %v2460, %v2516
        %v2621 = vadd.f32 %v2461, %v2516
        %v2622 = vadd.f32 %v2462, %v2520
        %v2623 = vadd.f32 %v2463, %v2520
        %v2624 = vadd.f32 %v2464, %v2520
        %v2625 = vadd.f32 %v2465, %v2520
        %v2626 = vadd.f32 %v2466, %v2520
        %v2627 = vadd.f32 %v2467, %v2520
        %v2628 = vadd.f32 %v2468, %v2520
        %v2629 = vadd.f32 %v2469, %v2520
        %v2630 = vadd.f32 %v2470, %v2520
        %v2631 = vadd.f32 %v2471, %v2520
        %v2632 = vadd.f32 %v2472, %v2520
        %v2633 = vadd.f32 %v2473, %v2520
        %v2634 = vadd.f32 %v2474, %v2520
        %v2635 = vadd.f32 %v2475, %v2520
        %v2636 = vadd.f32 %v2476, %v2520
        %v2637 = vadd.f32 %v2477, %v2520
        %v2638 = vadd.f32 %v2478, %v2524
        %v2639 = vadd.f32 %v2479, %v2524
        %v2640 = vadd.f32 %v2480, %v2524
        %v2641 = vadd.f32 %v2481, %v2524
        %v2642 = vadd.f32 %v2482, %v2524
        %v2643 = vadd.f32 %v2483, %v2524
        %v2644 = vadd.f32 %v2484, %v2524
        %v2645 = vadd.f32 %v2485, %v2524
        %v2646 = vadd.f32 %v2486, %v2524
        %v2647 = vadd.f32 %v2487, %v2524
        %v2648 = vadd.f32 %v2488, %v2524
        %v2649 = vadd.f32 %v2489, %v2524
        %v2650 = vadd.f32 %v2490, %v2524
        %v2651 = vadd.f32 %v2491, %v2524
        %v2652 = vadd.f32 %v2492, %v2524
        %v2653 = vadd.f32 %v2493, %v2524
        %v2654 = vmax.f32 %v2526, 0.0
        %v2655 = vmax.f32 %v2527, 0.0
        %v2656 = vmax.f32 %v2528, 0.0
        %v2657 = vmax.f32 %v2529, 0.0
        %v2658 = vmax.f32 %v2530, 0.0
        %v2659 = vmax.f32 %v2531, 0.0
        %v2660 = vmax.f32 %v2532, 0.0
        %v2661 = vmax.f32 %v2533, 0.0
        %v2662 = vmax.f32 %v2534, 0.0
        %v2663 = vmax.f32 %v2535, 0.0
        %v2664 = vmax.f32 %v2536, 0.0
        %v2665 = vmax.f32 %v2537, 0.0
        %v2666 = vmax.f32 %v2538, 0.0
        %v2667 = vmax.f32 %v2539, 0.0
        %v2668 = vmax.f32 %v2540, 0.0
        %v2669 = vmax.f32 %v2541, 0.0
        %v2670 = vmax.f32 %v2542, 0.0
        %v2671 = vmax.f32 %v2543, 0.0
        %v2672 = vmax.f32 %v2544, 0.0
        %v2673 = vmax.f32 %v2545, 0.0
        %v2674 = vmax.f32 %v2546, 0.0
        %v2675 = vmax.f32 %v2547, 0.0
        %v2676 = vmax.f32 %v2548, 0.0
        %v2677 = vmax.f32 %v2549, 0.0
        %v2678 = vmax.f32 %v2550, 0.0
        %v2679 = vmax.f32 %v2551, 0.0
        %v2680 = vmax.f32 %v2552, 0.0
        %v2681 = vmax.f32 %v2553, 0.0
        %v2682 = vmax.f32 %v2554, 0.0
        %v2683 = vmax.f32 %v2555, 0.0
        %v2684 = vmax.f32 %v2556, 0.0
        %v2685 = vmax.f32 %v2557, 0.0
        %v2686 = vmax.f32 %v2558, 0.0
        %v2687 = vmax.f32 %v2559, 0.0
        %v2688 = vmax.f32 %v2560, 0.0
        %v2689 = vmax.f32 %v2561, 0.0
        %v2690 = vmax.f32 %v2562, 0.0
        %v2691 = vmax.f32 %v2563, 0.0
        %v2692 = vmax.f32 %v2564, 0.0
        %v2693 = vmax.f32 %v2565, 0.0
        %v2694 = vmax.f32 %v2566, 0.0
        %v2695 = vmax.f32 %v2567, 0.0
        %v2696 = vmax.f32 %v2568, 0.0
        %v2697 = vmax.f32 %v2569, 0.0
        %v2698 = vmax.f32 %v2570, 0.0
        %v2699 = vmax.f32 %v2571, 0.0
        %v2700 = vmax.f32 %v2572, 0.0
        %v2701 = vmax.f32 %v2573, 0.0
        %v2702 = vmax.f32 %v2574, 0.0
        %v2703 = vmax.f32 %v2575, 0.0
        %v2704 = vmax.f32 %v2576, 0.0
        %v2705 = vmax.f32 %v2577, 0.0
        %v2706 = vmax.f32 %v2578, 0.0
        %v2707 = vmax.f32 %v2579, 0.0
        %v2708 = vmax.f32 %v2580, 0.0
        %v2709 = vmax.f32 %v2581, 0.0
        %v2710 = vmax.f32 %v2582, 0.0
        %v2711 = vmax.f32 %v2583, 0.0
        %v2712 = vmax.f32 %v2584, 0.0
        %v2713 = vmax.f32 %v2585, 0.0
        %v2714 = vmax.f32 %v2586, 0.0
        %v2715 = vmax.f32 %v2587, 0.0
        %v2716 = vmax.f32 %v2588, 0.0
        %v2717 = vmax.f32 %v2589, 0.0
        %v2718 = vmax.f32 %v2590, 0.0
        %v2719 = vmax.f32 %v2591, 0.0
        %v2720 = vmax.f32 %v2592, 0.0
        %v2721 = vmax.f32 %v2593, 0.0
        %v2722 = vmax.f32 %v2594, 0.0
        %v2723 = vmax.f32 %v2595, 0.0
        %v2724 = vmax.f32 %v2596, 0.0
        %v2725 = vmax.f32 %v2597, 0.0
        %v2726 = vmax.f32 %v2598, 0.0
        %v2727 = vmax.f32 %v2599, 0.0
        %v2728 = vmax.f32 %v2600, 0.0
        %v2729 = vmax.f32 %v2601, 0.0
        %v2730 = vmax.f32 %v2602, 0.0
        %v2731 = vmax.f32 %v2603, 0.0
        %v2732 = vmax.f32 %v2604, 0.0
        %v2733 = vmax.f32 %v2605, 0.0
        %v2734 = vmax.f32 %v2606, 0.0
        %v2735 = vmax.f32 %v2607, 0.0
        %v2736 = vmax.f32 %v2608, 0.0
        %v2737 = vmax.f32 %v2609, 0.0
        %v2738 = vmax.f32 %v2610, 0.0
        %v2739 = vmax.f32 %v2611, 0.0
        %v2740 = vmax.f32 %v2612, 0.0
        %v2741 = vmax.f32 %v2613, 0.0
        %v2742 = vmax.f32 %v2614, 0.0
        %v2743 = vmax.f32 %v2615, 0.0
        %v2744 = vmax.f32 %v2616, 0.0
        %v2745 = vmax.f32 %v2617, 0.0
        %v2746 = vmax.f32 %v2618, 0.0
        %v2747 = vmax.f32 %v2619, 0.0
        %v2748 = vmax.f32 %v2620, 0.0
        %v2749 = vmax.f32 %v2621, 0.0
        %v2750 = vmax.f32 %v2622, 0.0
        %v2751 = vmax.f32 %v2623, 0.0
        %v2752 = vmax.f32 %v2624, 0.0
        %v2753 = vmax.f32 %v2625, 0.0
        %v2754 = vmax.f32 %v2626, 0.0
        %v2755 = vmax.f32 %v2627, 0.0
        %v2756 = vmax.f32 %v2628, 0.0
        %v2757 = vmax.f32 %v2629, 0.0
        %v2758 = vmax.f32 %v2630, 0.0
        %v2759 = vmax.f32 %v2631, 0.0
        %v2760 = vmax.f32 %v2632, 0.0
        %v2761 = vmax.f32 %v2633, 0.0
        %v2762 = vmax.f32 %v2634, 0.0
        %v2763 = vmax.f32 %v2635, 0.0
        %v2764 = vmax.f32 %v2636, 0.0
        %v2765 = vmax.f32 %v2637, 0.0
        %v2766 = vmax.f32 %v2638, 0.0
        %v2767 = vmax.f32 %v2639, 0.0
        %v2768 = vmax.f32 %v2640, 0.0
        %v2769 = vmax.f32 %v2641, 0.0
        %v2770 = vmax.f32 %v2642, 0.0
        %v2771 = vmax.f32 %v2643, 0.0
        %v2772 = vmax.f32 %v2644, 0.0
        %v2773 = vmax.f32 %v2645, 0.0
        %v2774 = vmax.f32 %v2646, 0.0
        %v2775 = vmax.f32 %v2647, 0.0
        %v2776 = vmax.f32 %v2648, 0.0
        %v2777 = vmax.f32 %v2649, 0.0
        %v2778 = vmax.f32 %v2650, 0.0
        %v2779 = vmax.f32 %v2651, 0.0
        %v2780 = vmax.f32 %v2652, 0.0
        %v2781 = vmax.f32 %v2653, 0.0
        %v2782 = vld [vmem:[%s3] sm:$0xff]
        %v2783 = vld [vmem:[%s3 + $0x8] sm:$0xff]
        %v2784 = vld [vmem:[%s3 + $0x10] sm:$0xff]
        %v2785 = vld [vmem:[%s3 + $0x18] sm:$0xff]
        %v2786 = vld [vmem:[%s3 + $0x20] sm:$0xff]
        %v2787 = vld [vmem:[%s3 + $0x28] sm:$0xff]
        %v2788 = vld [vmem:[%s3 + $0x30] sm:$0xff]
        %v2789 = vld [vmem:[%s3 + $0x38] sm:$0xff]
        %2790 = vset.pattern.permute.xlu0 2
        %2791 = vperm.xlu0 %2790, %v2318
        %v2792 = vpop.permute.xlu0 %2791
        %2794 = vset.pattern.permute.xlu0 2
        %2795 = vperm.xlu0 %2794, %v2319
        %v2796 = vpop.permute.xlu0 %2795
        %2798 = vset.pattern.permute.xlu0 2
        %2799 = vperm.xlu0 %2798, %v2320
        %v2800 = vpop.permute.xlu0 %2799
        %2802 = vset.pattern.permute.xlu0 2
        %2803 = vperm.xlu0 %2802, %v2321
        %v2804 = vpop.permute.xlu0 %2803
        %2806 = vset.pattern.permute.xlu0 2
        %2807 = vperm.xlu0 %2806, %v2322
        %v2808 = vpop.permute.xlu0 %2807
        %2810 = vset.pattern.permute.xlu0 2
        %2811 = vperm.xlu0 %2810, %v2323
        %v2812 = vpop.permute.xlu0 %2811
        %2814 = vset.pattern.permute.xlu0 2
        %2815 = vperm.xlu0 %2814, %v2324
        %v2816 = vpop.permute.xlu0 %2815
        %2818 = vset.pattern.permute.xlu0 2
        %2819 = vperm.xlu0 %2818, %v2325
        %v2820 = vpop.permute.xlu0 %2819
        %vm2822 = vcmask 523264
        %v2824 = vsel %vm2822, %v2782, 0
        %v2827 = vsel %vm2822, %v2783, 0
        %v2830 = vsel %vm2822, %v2784, 0
        %v2833 = vsel %vm2822, %v2785, 0
        %v2836 = vsel %vm2822, %v2786, 0
        %v2839 = vsel %vm2822, %v2787, 0
        %v2842 = vsel %vm2822, %v2788, 0
        %v2845 = vsel %vm2822, %v2789, 0
        %2847 = vmatprep.subr.mxu0 0.0
        %2848 = vmatpush1.msra.mxu0 0.0
        %2849 = vmatprep.subr.mxu0 0.0
        %2850 = vmatpush1.msra.mxu0 0.0
        %2851 = vmatprep.subr.mxu0 0.0
        %2852 = vmatpush1.msra.mxu0 0.0
        %2853 = vmatprep.subr.mxu0 0.0
        %2854 = vmatpush1.msra.mxu0 0.0
        %2855 = vmatprep.subr.mxu0 0.0
        %2856 = vmatpush1.msra.mxu0 0.0
        %2857 = vmatprep.subr.mxu0 0.0
        %2858 = vmatpush1.msra.mxu0 0.0
        %2859 = vmatprep.subr.mxu0 0.0
        %2860 = vmatpush1.msra.mxu0 0.0
        %2861 = vmatprep.subr.mxu0 0.0
        %2862 = vmatpush1.msra.mxu0 0.0
        %2863 = vmatprep.subr.mxu0 %v2767
        %2864 = vmatpush1.msra.mxu0 %v2766
        %2865 = vmatprep.subr.mxu0 %v2751
        %2866 = vmatpush1.msra.mxu0 %v2750
        %2867 = vmatprep.subr.mxu0 %v2735
        %2868 = vmatpush1.msra.mxu0 %v2734
        %2869 = vmatprep.subr.mxu0 %v2719
        %2870 = vmatpush1.msra.mxu0 %v2718
        %2871 = vmatprep.subr.mxu0 %v2703
        %2872 = vmatpush1.msra.mxu0 %v2702
        %2873 = vmatprep.subr.mxu0 %v2687
        %2874 = vmatpush1.msra.mxu0 %v2686
        %2875 = vmatprep.subr.mxu0 %v2671
        %2876 = vmatpush1.msra.mxu0 %v2670
        %2877 = vmatprep.subr.mxu0 %v2655
        %2878 = vmatpush1.msra.mxu0 %v2654
        %2879 = vmatprep.subr.mxu0 0.0
        %2880 = vmatpush2.msra.mxu0 0.0
        %2881 = vmatprep.subr.mxu0 0.0
        %2882 = vmatpush2.msra.mxu0 0.0
        %2883 = vmatprep.subr.mxu0 0.0
        %2884 = vmatpush2.msra.mxu0 0.0
        %2885 = vmatprep.subr.mxu0 0.0
        %2886 = vmatpush2.msra.mxu0 0.0
        %2887 = vmatprep.subr.mxu0 0.0
        %2888 = vmatpush2.msra.mxu0 0.0
        %2889 = vmatprep.subr.mxu0 0.0
        %2890 = vmatpush2.msra.mxu0 0.0
        %2891 = vmatprep.subr.mxu0 0.0
        %2892 = vmatpush2.msra.mxu0 0.0
        %2893 = vmatprep.subr.mxu0 0.0
        %2894 = vmatpush2.msra.mxu0 0.0
        %2895 = vmatprep.subr.mxu0 0.0
        %2896 = vmatpush2.msra.mxu0 0.0
        %2897 = vmatprep.subr.mxu0 0.0
        %2898 = vmatpush2.msra.mxu0 0.0
        %2899 = vmatprep.subr.mxu0 0.0
        %2900 = vmatpush2.msra.mxu0 0.0
        %2901 = vmatprep.subr.mxu0 0.0
        %2902 = vmatpush2.msra.mxu0 0.0
        %2903 = vmatprep.subr.mxu0 0.0
        %2904 = vmatpush2.msra.mxu0 0.0
        %2905 = vmatprep.subr.mxu0 0.0
        %2906 = vmatpush2.msra.mxu0 0.0
        %2907 = vmatprep.subr.mxu0 0.0
        %2908 = vmatpush2.msra.mxu0 0.0
        %2909 = vmatprep.subr.mxu0 0.0
        %2910 = vmatpush2.msra.mxu0 0.0
        %2911 = vmatprep.mubr.f32.mxu0 0.0
        %2912 = vmatmul.mubr.f32.gmra.mxu0 %v2824
        %v2913 = vpop.f32.mrf.mxu0
        %v2914 = vadd.f32 %v2792, %v2913
        %v2915 = vpop.f32.mrf.mxu0
        %v2916 = vadd.f32 %v2792, %v2915
        %2917 = vmatprep.mubr.f32.mxu0 0.0
        %2918 = vmatmul.mubr.f32.gmra.mxu0 %v2827
        %v2919 = vpop.f32.mrf.mxu0
        %v2920 = vadd.f32 %v2796, %v2919
        %v2921 = vpop.f32.mrf.mxu0
        %v2922 = vadd.f32 %v2796, %v2921
        %2923 = vmatprep.mubr.f32.mxu0 0.0
        %2924 = vmatmul.mubr.f32.gmra.mxu0 %v2830
        %v2925 = vpop.f32.mrf.mxu0
        %v2926 = vadd.f32 %v2800, %v2925
        %v2927 = vpop.f32.mrf.mxu0
        %v2928 = vadd.f32 %v2800, %v2927
        %2929 = vmatprep.mubr.f32.mxu0 0.0
        %2930 = vmatmul.mubr.f32.gmra.mxu0 %v2833
        %v2931 = vpop.f32.mrf.mxu0
        %v2932 = vadd.f32 %v2804, %v2931
        %v2933 = vpop.f32.mrf.mxu0
        %v2934 = vadd.f32 %v2804, %v2933
        %2935 = vmatprep.mubr.f32.mxu0 0.0
        %2936 = vmatmul.mubr.f32.gmra.mxu0 %v2836
        %v2937 = vpop.f32.mrf.mxu0
        %v2938 = vadd.f32 %v2808, %v2937
        %v2939 = vpop.f32.mrf.mxu0
        %v2940 = vadd.f32 %v2808, %v2939
        %2941 = vmatprep.mubr.f32.mxu0 0.0
        %2942 = vmatmul.mubr.f32.gmra.mxu0 %v2839
        %v2943 = vpop.f32.mrf.mxu0
        %v2944 = vadd.f32 %v2812, %v2943
        %v2945 = vpop.f32.mrf.mxu0
        %v2946 = vadd.f32 %v2812, %v2945
        %2947 = vmatprep.mubr.f32.mxu0 0.0
        %2948 = vmatmul.mubr.f32.gmra.mxu0 %v2842
        %v2949 = vpop.f32.mrf.mxu0
        %v2950 = vadd.f32 %v2816, %v2949
        %v2951 = vpop.f32.mrf.mxu0
        %v2952 = vadd.f32 %v2816, %v2951
        %2953 = vmatprep.mubr.f32.mxu0 0.0
        %2954 = vmatmul.mubr.f32.gmra.mxu0 %v2845
        %v2955 = vpop.f32.mrf.mxu0
        %v2956 = vadd.f32 %v2820, %v2955
        %v2957 = vpop.f32.mrf.mxu0
        %v2958 = vadd.f32 %v2820, %v2957
        %2959 = vdwg.mxu0
        %2960 = vmatprep.subr.mxu0 0.0
        %2961 = vmatpush1.msra.mxu0 0.0
        %2962 = vmatprep.subr.mxu0 0.0
        %2963 = vmatpush1.msra.mxu0 0.0
        %2964 = vmatprep.subr.mxu0 0.0
        %2965 = vmatpush1.msra.mxu0 0.0
        %2966 = vmatprep.subr.mxu0 0.0
        %2967 = vmatpush1.msra.mxu0 0.0
        %2968 = vmatprep.subr.mxu0 0.0
        %2969 = vmatpush1.msra.mxu0 0.0
        %2970 = vmatprep.subr.mxu0 0.0
        %2971 = vmatpush1.msra.mxu0 0.0
        %2972 = vmatprep.subr.mxu0 0.0
        %2973 = vmatpush1.msra.mxu0 0.0
        %2974 = vmatprep.subr.mxu0 0.0
        %2975 = vmatpush1.msra.mxu0 0.0
        %2976 = vmatprep.subr.mxu0 %v2769
        %2977 = vmatpush1.msra.mxu0 %v2768
        %2978 = vmatprep.subr.mxu0 %v2753
        %2979 = vmatpush1.msra.mxu0 %v2752
        %2980 = vmatprep.subr.mxu0 %v2737
        %2981 = vmatpush1.msra.mxu0 %v2736
        %2982 = vmatprep.subr.mxu0 %v2721
        %2983 = vmatpush1.msra.mxu0 %v2720
        %2984 = vmatprep.subr.mxu0 %v2705
        %2985 = vmatpush1.msra.mxu0 %v2704
        %2986 = vmatprep.subr.mxu0 %v2689
        %2987 = vmatpush1.msra.mxu0 %v2688
        %2988 = vmatprep.subr.mxu0 %v2673
        %2989 = vmatpush1.msra.mxu0 %v2672
        %2990 = vmatprep.subr.mxu0 %v2657
        %2991 = vmatpush1.msra.mxu0 %v2656
        %2992 = vmatprep.subr.mxu0 0.0
        %2993 = vmatpush2.msra.mxu0 0.0
        %2994 = vmatprep.subr.mxu0 0.0
        %2995 = vmatpush2.msra.mxu0 0.0
        %2996 = vmatprep.subr.mxu0 0.0
        %2997 = vmatpush2.msra.mxu0 0.0
        %2998 = vmatprep.subr.mxu0 0.0
        %2999 = vmatpush2.msra.mxu0 0.0
        %3000 = vmatprep.subr.mxu0 0.0
        %3001 = vmatpush2.msra.mxu0 0.0
        %3002 = vmatprep.subr.mxu0 0.0
        %3003 = vmatpush2.msra.mxu0 0.0
        %3004 = vmatprep.subr.mxu0 0.0
        %3005 = vmatpush2.msra.mxu0 0.0
        %3006 = vmatprep.subr.mxu0 0.0
        %3007 = vmatpush2.msra.mxu0 0.0
        %3008 = vmatprep.subr.mxu0 0.0
        %3009 = vmatpush2.msra.mxu0 0.0
        %3010 = vmatprep.subr.mxu0 0.0
        %3011 = vmatpush2.msra.mxu0 0.0
        %3012 = vmatprep.subr.mxu0 0.0
        %3013 = vmatpush2.msra.mxu0 0.0
        %3014 = vmatprep.subr.mxu0 0.0
        %3015 = vmatpush2.msra.mxu0 0.0
        %3016 = vmatprep.subr.mxu0 0.0
        %3017 = vmatpush2.msra.mxu0 0.0
        %3018 = vmatprep.subr.mxu0 0.0
        %3019 = vmatpush2.msra.mxu0 0.0
        %3020 = vmatprep.subr.mxu0 0.0
        %3021 = vmatpush2.msra.mxu0 0.0
        %3022 = vmatprep.subr.mxu0 0.0
        %3023 = vmatpush2.msra.mxu0 0.0
        %3024 = vmatprep.mubr.f32.mxu0 0.0
        %3025 = vmatmul.mubr.f32.gmra.mxu0 %v2824
        %v3026 = vpop.f32.mrf.mxu0
        %v3027 = vadd.f32 %v2792, %v3026
        %v3028 = vpop.f32.mrf.mxu0
        %v3029 = vadd.f32 %v2792, %v3028
        %3030 = vmatprep.mubr.f32.mxu0 0.0
        %3031 = vmatmul.mubr.f32.gmra.mxu0 %v2827
        %v3032 = vpop.f32.mrf.mxu0
        %v3033 = vadd.f32 %v2796, %v3032
        %v3034 = vpop.f32.mrf.mxu0
        %v3035 = vadd.f32 %v2796, %v3034
        %3036 = vmatprep.mubr.f32.mxu0 0.0
        %3037 = vmatmul.mubr.f32.gmra.mxu0 %v2830
        %v3038 = vpop.f32.mrf.mxu0
        %v3039 = vadd.f32 %v2800, %v3038
        %v3040 = vpop.f32.mrf.mxu0
        %v3041 = vadd.f32 %v2800, %v3040
        %3042 = vmatprep.mubr.f32.mxu0 0.0
        %3043 = vmatmul.mubr.f32.gmra.mxu0 %v2833
        %v3044 = vpop.f32.mrf.mxu0
        %v3045 = vadd.f32 %v2804, %v3044
        %v3046 = vpop.f32.mrf.mxu0
        %v3047 = vadd.f32 %v2804, %v3046
        %3048 = vmatprep.mubr.f32.mxu0 0.0
        %3049 = vmatmul.mubr.f32.gmra.mxu0 %v2836
        %v3050 = vpop.f32.mrf.mxu0
        %v3051 = vadd.f32 %v2808, %v3050
        %v3052 = vpop.f32.mrf.mxu0
        %v3053 = vadd.f32 %v2808, %v3052
        %3054 = vmatprep.mubr.f32.mxu0 0.0
        %3055 = vmatmul.mubr.f32.gmra.mxu0 %v2839
        %v3056 = vpop.f32.mrf.mxu0
        %v3057 = vadd.f32 %v2812, %v3056
        %v3058 = vpop.f32.mrf.mxu0
        %v3059 = vadd.f32 %v2812, %v3058
        %3060 = vmatprep.mubr.f32.mxu0 0.0
        %3061 = vmatmul.mubr.f32.gmra.mxu0 %v2842
        %v3062 = vpop.f32.mrf.mxu0
        %v3063 = vadd.f32 %v2816, %v3062
        %v3064 = vpop.f32.mrf.mxu0
        %v3065 = vadd.f32 %v2816, %v3064
        %3066 = vmatprep.mubr.f32.mxu0 0.0
        %3067 = vmatmul.mubr.f32.gmra.mxu0 %v2845
        %v3068 = vpop.f32.mrf.mxu0
        %v3069 = vadd.f32 %v2820, %v3068
        %v3070 = vpop.f32.mrf.mxu0
        %v3071 = vadd.f32 %v2820, %v3070
        %3072 = vdwg.mxu0
        %3073 = vmatprep.subr.mxu0 0.0
        %3074 = vmatpush1.msra.mxu0 0.0
        %3075 = vmatprep.subr.mxu0 0.0
        %3076 = vmatpush1.msra.mxu0 0.0
        %3077 = vmatprep.subr.mxu0 0.0
        %3078 = vmatpush1.msra.mxu0 0.0
        %3079 = vmatprep.subr.mxu0 0.0
        %3080 = vmatpush1.msra.mxu0 0.0
        %3081 = vmatprep.subr.mxu0 0.0
        %3082 = vmatpush1.msra.mxu0 0.0
        %3083 = vmatprep.subr.mxu0 0.0
        %3084 = vmatpush1.msra.mxu0 0.0
        %3085 = vmatprep.subr.mxu0 0.0
        %3086 = vmatpush1.msra.mxu0 0.0
        %3087 = vmatprep.subr.mxu0 0.0
        %3088 = vmatpush1.msra.mxu0 0.0
        %3089 = vmatprep.subr.mxu0 %v2771
        %3090 = vmatpush1.msra.mxu0 %v2770
        %3091 = vmatprep.subr.mxu0 %v2755
        %3092 = vmatpush1.msra.mxu0 %v2754
        %3093 = vmatprep.subr.mxu0 %v2739
        %3094 = vmatpush1.msra.mxu0 %v2738
        %3095 = vmatprep.subr.mxu0 %v2723
        %3096 = vmatpush1.msra.mxu0 %v2722
        %3097 = vmatprep.subr.mxu0 %v2707
        %3098 = vmatpush1.msra.mxu0 %v2706
        %3099 = vmatprep.subr.mxu0 %v2691
        %3100 = vmatpush1.msra.mxu0 %v2690
        %3101 = vmatprep.subr.mxu0 %v2675
        %3102 = vmatpush1.msra.mxu0 %v2674
        %3103 = vmatprep.subr.mxu0 %v2659
        %3104 = vmatpush1.msra.mxu0 %v2658
        %3105 = vmatprep.subr.mxu0 0.0
        %3106 = vmatpush2.msra.mxu0 0.0
        %3107 = vmatprep.subr.mxu0 0.0
        %3108 = vmatpush2.msra.mxu0 0.0
        %3109 = vmatprep.subr.mxu0 0.0
        %3110 = vmatpush2.msra.mxu0 0.0
        %3111 = vmatprep.subr.mxu0 0.0
        %3112 = vmatpush2.msra.mxu0 0.0
        %3113 = vmatprep.subr.mxu0 0.0
        %3114 = vmatpush2.msra.mxu0 0.0
        %3115 = vmatprep.subr.mxu0 0.0
        %3116 = vmatpush2.msra.mxu0 0.0
        %3117 = vmatprep.subr.mxu0 0.0
        %3118 = vmatpush2.msra.mxu0 0.0
        %3119 = vmatprep.subr.mxu0 0.0
        %3120 = vmatpush2.msra.mxu0 0.0
        %3121 = vmatprep.subr.mxu0 0.0
        %3122 = vmatpush2.msra.mxu0 0.0
        %3123 = vmatprep.subr.mxu0 0.0
        %3124 = vmatpush2.msra.mxu0 0.0
        %3125 = vmatprep.subr.mxu0 0.0
        %3126 = vmatpush2.msra.mxu0 0.0
        %3127 = vmatprep.subr.mxu0 0.0
        %3128 = vmatpush2.msra.mxu0 0.0
        %3129 = vmatprep.subr.mxu0 0.0
        %3130 = vmatpush2.msra.mxu0 0.0
        %3131 = vmatprep.subr.mxu0 0.0
        %3132 = vmatpush2.msra.mxu0 0.0
        %3133 = vmatprep.subr.mxu0 0.0
        %3134 = vmatpush2.msra.mxu0 0.0
        %3135 = vmatprep.subr.mxu0 0.0
        %3136 = vmatpush2.msra.mxu0 0.0
        %3137 = vmatprep.mubr.f32.mxu0 0.0
        %3138 = vmatmul.mubr.f32.gmra.mxu0 %v2824
        %v3139 = vpop.f32.mrf.mxu0
        %v3140 = vadd.f32 %v2792, %v3139
        %v3141 = vpop.f32.mrf.mxu0
        %v3142 = vadd.f32 %v2792, %v3141
        %3143 = vmatprep.mubr.f32.mxu0 0.0
        %3144 = vmatmul.mubr.f32.gmra.mxu0 %v2827
        %v3145 = vpop.f32.mrf.mxu0
        %v3146 = vadd.f32 %v2796, %v3145
        %v3147 = vpop.f32.mrf.mxu0
        %v3148 = vadd.f32 %v2796, %v3147
        %3149 = vmatprep.mubr.f32.mxu0 0.0
        %3150 = vmatmul.mubr.f32.gmra.mxu0 %v2830
        %v3151 = vpop.f32.mrf.mxu0
        %v3152 = vadd.f32 %v2800, %v3151
        %v3153 = vpop.f32.mrf.mxu0
        %v3154 = vadd.f32 %v2800, %v3153
        %3155 = vmatprep.mubr.f32.mxu0 0.0
        %3156 = vmatmul.mubr.f32.gmra.mxu0 %v2833
        %v3157 = vpop.f32.mrf.mxu0
        %v3158 = vadd.f32 %v2804, %v3157
        %v3159 = vpop.f32.mrf.mxu0
        %v3160 = vadd.f32 %v2804, %v3159
        %3161 = vmatprep.mubr.f32.mxu0 0.0
        %3162 = vmatmul.mubr.f32.gmra.mxu0 %v2836
        %v3163 = vpop.f32.mrf.mxu0
        %v3164 = vadd.f32 %v2808, %v3163
        %v3165 = vpop.f32.mrf.mxu0
        %v3166 = vadd.f32 %v2808, %v3165
        %3167 = vmatprep.mubr.f32.mxu0 0.0
        %3168 = vmatmul.mubr.f32.gmra.mxu0 %v2839
        %v3169 = vpop.f32.mrf.mxu0
        %v3170 = vadd.f32 %v2812, %v3169
        %v3171 = vpop.f32.mrf.mxu0
        %v3172 = vadd.f32 %v2812, %v3171
        %3173 = vmatprep.mubr.f32.mxu0 0.0
        %3174 = vmatmul.mubr.f32.gmra.mxu0 %v2842
        %v3175 = vpop.f32.mrf.mxu0
        %v3176 = vadd.f32 %v2816, %v3175
        %v3177 = vpop.f32.mrf.mxu0
        %v3178 = vadd.f32 %v2816, %v3177
        %3179 = vmatprep.mubr.f32.mxu0 0.0
        %3180 = vmatmul.mubr.f32.gmra.mxu0 %v2845
        %v3181 = vpop.f32.mrf.mxu0
        %v3182 = vadd.f32 %v2820, %v3181
        %v3183 = vpop.f32.mrf.mxu0
        %v3184 = vadd.f32 %v2820, %v3183
        %3185 = vdwg.mxu0
        %3186 = vmatprep.subr.mxu0 0.0
        %3187 = vmatpush1.msra.mxu0 0.0
        %3188 = vmatprep.subr.mxu0 0.0
        %3189 = vmatpush1.msra.mxu0 0.0
        %3190 = vmatprep.subr.mxu0 0.0
        %3191 = vmatpush1.msra.mxu0 0.0
        %3192 = vmatprep.subr.mxu0 0.0
        %3193 = vmatpush1.msra.mxu0 0.0
        %3194 = vmatprep.subr.mxu0 0.0
        %3195 = vmatpush1.msra.mxu0 0.0
        %3196 = vmatprep.subr.mxu0 0.0
        %3197 = vmatpush1.msra.mxu0 0.0
        %3198 = vmatprep.subr.mxu0 0.0
        %3199 = vmatpush1.msra.mxu0 0.0
        %3200 = vmatprep.subr.mxu0 0.0
        %3201 = vmatpush1.msra.mxu0 0.0
        %3202 = vmatprep.subr.mxu0 %v2773
        %3203 = vmatpush1.msra.mxu0 %v2772
        %3204 = vmatprep.subr.mxu0 %v2757
        %3205 = vmatpush1.msra.mxu0 %v2756
        %3206 = vmatprep.subr.mxu0 %v2741
        %3207 = vmatpush1.msra.mxu0 %v2740
        %3208 = vmatprep.subr.mxu0 %v2725
        %3209 = vmatpush1.msra.mxu0 %v2724
        %3210 = vmatprep.subr.mxu0 %v2709
        %3211 = vmatpush1.msra.mxu0 %v2708
        %3212 = vmatprep.subr.mxu0 %v2693
        %3213 = vmatpush1.msra.mxu0 %v2692
        %3214 = vmatprep.subr.mxu0 %v2677
        %3215 = vmatpush1.msra.mxu0 %v2676
        %3216 = vmatprep.subr.mxu0 %v2661
        %3217 = vmatpush1.msra.mxu0 %v2660
        %3218 = vmatprep.subr.mxu0 0.0
        %3219 = vmatpush2.msra.mxu0 0.0
        %3220 = vmatprep.subr.mxu0 0.0
        %3221 = vmatpush2.msra.mxu0 0.0
        %3222 = vmatprep.subr.mxu0 0.0
        %3223 = vmatpush2.msra.mxu0 0.0
        %3224 = vmatprep.subr.mxu0 0.0
        %3225 = vmatpush2.msra.mxu0 0.0
        %3226 = vmatprep.subr.mxu0 0.0
        %3227 = vmatpush2.msra.mxu0 0.0
        %3228 = vmatprep.subr.mxu0 0.0
        %3229 = vmatpush2.msra.mxu0 0.0
        %3230 = vmatprep.subr.mxu0 0.0
        %3231 = vmatpush2.msra.mxu0 0.0
        %3232 = vmatprep.subr.mxu0 0.0
        %3233 = vmatpush2.msra.mxu0 0.0
        %3234 = vmatprep.subr.mxu0 0.0
        %3235 = vmatpush2.msra.mxu0 0.0
        %3236 = vmatprep.subr.mxu0 0.0
        %3237 = vmatpush2.msra.mxu0 0.0
        %3238 = vmatprep.subr.mxu0 0.0
        %3239 = vmatpush2.msra.mxu0 0.0
        %3240 = vmatprep.subr.mxu0 0.0
        %3241 = vmatpush2.msra.mxu0 0.0
        %3242 = vmatprep.subr.mxu0 0.0
        %3243 = vmatpush2.msra.mxu0 0.0
        %3244 = vmatprep.subr.mxu0 0.0
        %3245 = vmatpush2.msra.mxu0 0.0
        %3246 = vmatprep.subr.mxu0 0.0
        %3247 = vmatpush2.msra.mxu0 0.0
        %3248 = vmatprep.subr.mxu0 0.0
        %3249 = vmatpush2.msra.mxu0 0.0
        %3250 = vmatprep.mubr.f32.mxu0 0.0
        %3251 = vmatmul.mubr.f32.gmra.mxu0 %v2824
        %v3252 = vpop.f32.mrf.mxu0
        %v3253 = vadd.f32 %v2792, %v3252
        %v3254 = vpop.f32.mrf.mxu0
        %v3255 = vadd.f32 %v2792, %v3254
        %3256 = vmatprep.mubr.f32.mxu0 0.0
        %3257 = vmatmul.mubr.f32.gmra.mxu0 %v2827
        %v3258 = vpop.f32.mrf.mxu0
        %v3259 = vadd.f32 %v2796, %v3258
        %v3260 = vpop.f32.mrf.mxu0
        %v3261 = vadd.f32 %v2796, %v3260
        %3262 = vmatprep.mubr.f32.mxu0 0.0
        %3263 = vmatmul.mubr.f32.gmra.mxu0 %v2830
        %v3264 = vpop.f32.mrf.mxu0
        %v3265 = vadd.f32 %v2800, %v3264
        %v3266 = vpop.f32.mrf.mxu0
        %v3267 = vadd.f32 %v2800, %v3266
        %3268 = vmatprep.mubr.f32.mxu0 0.0
        %3269 = vmatmul.mubr.f32.gmra.mxu0 %v2833
        %v3270 = vpop.f32.mrf.mxu0
        %v3271 = vadd.f32 %v2804, %v3270
        %v3272 = vpop.f32.mrf.mxu0
        %v3273 = vadd.f32 %v2804, %v3272
        %3274 = vmatprep.mubr.f32.mxu0 0.0
        %3275 = vmatmul.mubr.f32.gmra.mxu0 %v2836
        %v3276 = vpop.f32.mrf.mxu0
        %v3277 = vadd.f32 %v2808, %v3276
        %v3278 = vpop.f32.mrf.mxu0
        %v3279 = vadd.f32 %v2808, %v3278
        %3280 = vmatprep.mubr.f32.mxu0 0.0
        %3281 = vmatmul.mubr.f32.gmra.mxu0 %v2839
        %v3282 = vpop.f32.mrf.mxu0
        %v3283 = vadd.f32 %v2812, %v3282
        %v3284 = vpop.f32.mrf.mxu0
        %v3285 = vadd.f32 %v2812, %v3284
        %3286 = vmatprep.mubr.f32.mxu0 0.0
        %3287 = vmatmul.mubr.f32.gmra.mxu0 %v2842
        %v3288 = vpop.f32.mrf.mxu0
        %v3289 = vadd.f32 %v2816, %v3288
        %v3290 = vpop.f32.mrf.mxu0
        %v3291 = vadd.f32 %v2816, %v3290
        %3292 = vmatprep.mubr.f32.mxu0 0.0
        %3293 = vmatmul.mubr.f32.gmra.mxu0 %v2845
        %v3294 = vpop.f32.mrf.mxu0
        %v3295 = vadd.f32 %v2820, %v3294
        %v3296 = vpop.f32.mrf.mxu0
        %v3297 = vadd.f32 %v2820, %v3296
        %3298 = vdwg.mxu0
        %3299 = vmatprep.subr.mxu0 0.0
        %3300 = vmatpush1.msra.mxu0 0.0
        %3301 = vmatprep.subr.mxu0 0.0
        %3302 = vmatpush1.msra.mxu0 0.0
        %3303 = vmatprep.subr.mxu0 0.0
        %3304 = vmatpush1.msra.mxu0 0.0
        %3305 = vmatprep.subr.mxu0 0.0
        %3306 = vmatpush1.msra.mxu0 0.0
        %3307 = vmatprep.subr.mxu0 0.0
        %3308 = vmatpush1.msra.mxu0 0.0
        %3309 = vmatprep.subr.mxu0 0.0
        %3310 = vmatpush1.msra.mxu0 0.0
        %3311 = vmatprep.subr.mxu0 0.0
        %3312 = vmatpush1.msra.mxu0 0.0
        %3313 = vmatprep.subr.mxu0 0.0
        %3314 = vmatpush1.msra.mxu0 0.0
        %3315 = vmatprep.subr.mxu0 %v2775
        %3316 = vmatpush1.msra.mxu0 %v2774
        %3317 = vmatprep.subr.mxu0 %v2759
        %3318 = vmatpush1.msra.mxu0 %v2758
        %3319 = vmatprep.subr.mxu0 %v2743
        %3320 = vmatpush1.msra.mxu0 %v2742
        %3321 = vmatprep.subr.mxu0 %v2727
        %3322 = vmatpush1.msra.mxu0 %v2726
        %3323 = vmatprep.subr.mxu0 %v2711
        %3324 = vmatpush1.msra.mxu0 %v2710
        %3325 = vmatprep.subr.mxu0 %v2695
        %3326 = vmatpush1.msra.mxu0 %v2694
        %3327 = vmatprep.subr.mxu0 %v2679
        %3328 = vmatpush1.msra.mxu0 %v2678
        %3329 = vmatprep.subr.mxu0 %v2663
        %3330 = vmatpush1.msra.mxu0 %v2662
        %3331 = vmatprep.subr.mxu0 0.0
        %3332 = vmatpush2.msra.mxu0 0.0
        %3333 = vmatprep.subr.mxu0 0.0
        %3334 = vmatpush2.msra.mxu0 0.0
        %3335 = vmatprep.subr.mxu0 0.0
        %3336 = vmatpush2.msra.mxu0 0.0
        %3337 = vmatprep.subr.mxu0 0.0
        %3338 = vmatpush2.msra.mxu0 0.0
        %3339 = vmatprep.subr.mxu0 0.0
        %3340 = vmatpush2.msra.mxu0 0.0
        %3341 = vmatprep.subr.mxu0 0.0
        %3342 = vmatpush2.msra.mxu0 0.0
        %3343 = vmatprep.subr.mxu0 0.0
        %3344 = vmatpush2.msra.mxu0 0.0
        %3345 = vmatprep.subr.mxu0 0.0
        %3346 = vmatpush2.msra.mxu0 0.0
        %3347 = vmatprep.subr.mxu0 0.0
        %3348 = vmatpush2.msra.mxu0 0.0
        %3349 = vmatprep.subr.mxu0 0.0
        %3350 = vmatpush2.msra.mxu0 0.0
        %3351 = vmatprep.subr.mxu0 0.0
        %3352 = vmatpush2.msra.mxu0 0.0
        %3353 = vmatprep.subr.mxu0 0.0
        %3354 = vmatpush2.msra.mxu0 0.0
        %3355 = vmatprep.subr.mxu0 0.0
        %3356 = vmatpush2.msra.mxu0 0.0
        %3357 = vmatprep.subr.mxu0 0.0
        %3358 = vmatpush2.msra.mxu0 0.0
        %3359 = vmatprep.subr.mxu0 0.0
        %3360 = vmatpush2.msra.mxu0 0.0
        %3361 = vmatprep.subr.mxu0 0.0
        %3362 = vmatpush2.msra.mxu0 0.0
        %3363 = vmatprep.mubr.f32.mxu0 0.0
        %3364 = vmatmul.mubr.f32.gmra.mxu0 %v2824
        %v3365 = vpop.f32.mrf.mxu0
        %v3366 = vadd.f32 %v2792, %v3365
        %v3367 = vpop.f32.mrf.mxu0
        %v3368 = vadd.f32 %v2792, %v3367
        %3369 = vmatprep.mubr.f32.mxu0 0.0
        %3370 = vmatmul.mubr.f32.gmra.mxu0 %v2827
        %v3371 = vpop.f32.mrf.mxu0
        %v3372 = vadd.f32 %v2796, %v3371
        %v3373 = vpop.f32.mrf.mxu0
        %v3374 = vadd.f32 %v2796, %v3373
        %3375 = vmatprep.mubr.f32.mxu0 0.0
        %3376 = vmatmul.mubr.f32.gmra.mxu0 %v2830
        %v3377 = vpop.f32.mrf.mxu0
        %v3378 = vadd.f32 %v2800, %v3377
        %v3379 = vpop.f32.mrf.mxu0
        %v3380 = vadd.f32 %v2800, %v3379
        %3381 = vmatprep.mubr.f32.mxu0 0.0
        %3382 = vmatmul.mubr.f32.gmra.mxu0 %v2833
        %v3383 = vpop.f32.mrf.mxu0
        %v3384 = vadd.f32 %v2804, %v3383
        %v3385 = vpop.f32.mrf.mxu0
        %v3386 = vadd.f32 %v2804, %v3385
        %3387 = vmatprep.mubr.f32.mxu0 0.0
        %3388 = vmatmul.mubr.f32.gmra.mxu0 %v2836
        %v3389 = vpop.f32.mrf.mxu0
        %v3390 = vadd.f32 %v2808, %v3389
        %v3391 = vpop.f32.mrf.mxu0
        %v3392 = vadd.f32 %v2808, %v3391
        %3393 = vmatprep.mubr.f32.mxu0 0.0
        %3394 = vmatmul.mubr.f32.gmra.mxu0 %v2839
        %v3395 = vpop.f32.mrf.mxu0
        %v3396 = vadd.f32 %v2812, %v3395
        %v3397 = vpop.f32.mrf.mxu0
        %v3398 = vadd.f32 %v2812, %v3397
        %3399 = vmatprep.mubr.f32.mxu0 0.0
        %3400 = vmatmul.mubr.f32.gmra.mxu0 %v2842
        %v3401 = vpop.f32.mrf.mxu0
        %v3402 = vadd.f32 %v2816, %v3401
        %v3403 = vpop.f32.mrf.mxu0
        %v3404 = vadd.f32 %v2816, %v3403
        %3405 = vmatprep.mubr.f32.mxu0 0.0
        %3406 = vmatmul.mubr.f32.gmra.mxu0 %v2845
        %v3407 = vpop.f32.mrf.mxu0
        %v3408 = vadd.f32 %v2820, %v3407
        %v3409 = vpop.f32.mrf.mxu0
        %v3410 = vadd.f32 %v2820, %v3409
        %3411 = vdwg.mxu0
        %3412 = vmatprep.subr.mxu0 0.0
        %3413 = vmatpush1.msra.mxu0 0.0
        %3414 = vmatprep.subr.mxu0 0.0
        %3415 = vmatpush1.msra.mxu0 0.0
        %3416 = vmatprep.subr.mxu0 0.0
        %3417 = vmatpush1.msra.mxu0 0.0
        %3418 = vmatprep.subr.mxu0 0.0
        %3419 = vmatpush1.msra.mxu0 0.0
        %3420 = vmatprep.subr.mxu0 0.0
        %3421 = vmatpush1.msra.mxu0 0.0
        %3422 = vmatprep.subr.mxu0 0.0
        %3423 = vmatpush1.msra.mxu0 0.0
        %3424 = vmatprep.subr.mxu0 0.0
        %3425 = vmatpush1.msra.mxu0 0.0
        %3426 = vmatprep.subr.mxu0 0.0
        %3427 = vmatpush1.msra.mxu0 0.0
        %3428 = vmatprep.subr.mxu0 %v2777
        %3429 = vmatpush1.msra.mxu0 %v2776
        %3430 = vmatprep.subr.mxu0 %v2761
        %3431 = vmatpush1.msra.mxu0 %v2760
        %3432 = vmatprep.subr.mxu0 %v2745
        %3433 = vmatpush1.msra.mxu0 %v2744
        %3434 = vmatprep.subr.mxu0 %v2729
        %3435 = vmatpush1.msra.mxu0 %v2728
        %3436 = vmatprep.subr.mxu0 %v2713
        %3437 = vmatpush1.msra.mxu0 %v2712
        %3438 = vmatprep.subr.mxu0 %v2697
        %3439 = vmatpush1.msra.mxu0 %v2696
        %3440 = vmatprep.subr.mxu0 %v2681
        %3441 = vmatpush1.msra.mxu0 %v2680
        %3442 = vmatprep.subr.mxu0 %v2665
        %3443 = vmatpush1.msra.mxu0 %v2664
        %3444 = vmatprep.subr.mxu0 0.0
        %3445 = vmatpush2.msra.mxu0 0.0
        %3446 = vmatprep.subr.mxu0 0.0
        %3447 = vmatpush2.msra.mxu0 0.0
        %3448 = vmatprep.subr.mxu0 0.0
        %3449 = vmatpush2.msra.mxu0 0.0
        %3450 = vmatprep.subr.mxu0 0.0
        %3451 = vmatpush2.msra.mxu0 0.0
        %3452 = vmatprep.subr.mxu0 0.0
        %3453 = vmatpush2.msra.mxu0 0.0
        %3454 = vmatprep.subr.mxu0 0.0
        %3455 = vmatpush2.msra.mxu0 0.0
        %3456 = vmatprep.subr.mxu0 0.0
        %3457 = vmatpush2.msra.mxu0 0.0
        %3458 = vmatprep.subr.mxu0 0.0
        %3459 = vmatpush2.msra.mxu0 0.0
        %3460 = vmatprep.subr.mxu0 0.0
        %3461 = vmatpush2.msra.mxu0 0.0
        %3462 = vmatprep.subr.mxu0 0.0
        %3463 = vmatpush2.msra.mxu0 0.0
        %3464 = vmatprep.subr.mxu0 0.0
        %3465 = vmatpush2.msra.mxu0 0.0
        %3466 = vmatprep.subr.mxu0 0.0
        %3467 = vmatpush2.msra.mxu0 0.0
        %3468 = vmatprep.subr.mxu0 0.0
        %3469 = vmatpush2.msra.mxu0 0.0
        %3470 = vmatprep.subr.mxu0 0.0
        %3471 = vmatpush2.msra.mxu0 0.0
        %3472 = vmatprep.subr.mxu0 0.0
        %3473 = vmatpush2.msra.mxu0 0.0
        %3474 = vmatprep.subr.mxu0 0.0
        %3475 = vmatpush2.msra.mxu0 0.0
        %3476 = vmatprep.mubr.f32.mxu0 0.0
        %3477 = vmatmul.mubr.f32.gmra.mxu0 %v2824
        %v3478 = vpop.f32.mrf.mxu0
        %v3479 = vadd.f32 %v2792, %v3478
        %v3480 = vpop.f32.mrf.mxu0
        %v3481 = vadd.f32 %v2792, %v3480
        %3482 = vmatprep.mubr.f32.mxu0 0.0
        %3483 = vmatmul.mubr.f32.gmra.mxu0 %v2827
        %v3484 = vpop.f32.mrf.mxu0
        %v3485 = vadd.f32 %v2796, %v3484
        %v3486 = vpop.f32.mrf.mxu0
        %v3487 = vadd.f32 %v2796, %v3486
        %3488 = vmatprep.mubr.f32.mxu0 0.0
        %3489 = vmatmul.mubr.f32.gmra.mxu0 %v2830
        %v3490 = vpop.f32.mrf.mxu0
        %v3491 = vadd.f32 %v2800, %v3490
        %v3492 = vpop.f32.mrf.mxu0
        %v3493 = vadd.f32 %v2800, %v3492
        %3494 = vmatprep.mubr.f32.mxu0 0.0
        %3495 = vmatmul.mubr.f32.gmra.mxu0 %v2833
        %v3496 = vpop.f32.mrf.mxu0
        %v3497 = vadd.f32 %v2804, %v3496
        %v3498 = vpop.f32.mrf.mxu0
        %v3499 = vadd.f32 %v2804, %v3498
        %3500 = vmatprep.mubr.f32.mxu0 0.0
        %3501 = vmatmul.mubr.f32.gmra.mxu0 %v2836
        %v3502 = vpop.f32.mrf.mxu0
        %v3503 = vadd.f32 %v2808, %v3502
        %v3504 = vpop.f32.mrf.mxu0
        %v3505 = vadd.f32 %v2808, %v3504
        %3506 = vmatprep.mubr.f32.mxu0 0.0
        %3507 = vmatmul.mubr.f32.gmra.mxu0 %v2839
        %v3508 = vpop.f32.mrf.mxu0
        %v3509 = vadd.f32 %v2812, %v3508
        %v3510 = vpop.f32.mrf.mxu0
        %v3511 = vadd.f32 %v2812, %v3510
        %3512 = vmatprep.mubr.f32.mxu0 0.0
        %3513 = vmatmul.mubr.f32.gmra.mxu0 %v2842
        %v3514 = vpop.f32.mrf.mxu0
        %v3515 = vadd.f32 %v2816, %v3514
        %v3516 = vpop.f32.mrf.mxu0
        %v3517 = vadd.f32 %v2816, %v3516
        %3518 = vmatprep.mubr.f32.mxu0 0.0
        %3519 = vmatmul.mubr.f32.gmra.mxu0 %v2845
        %v3520 = vpop.f32.mrf.mxu0
        %v3521 = vadd.f32 %v2820, %v3520
        %v3522 = vpop.f32.mrf.mxu0
        %v3523 = vadd.f32 %v2820, %v3522
        %3524 = vdwg.mxu0
        %3525 = vmatprep.subr.mxu0 0.0
        %3526 = vmatpush1.msra.mxu0 0.0
        %3527 = vmatprep.subr.mxu0 0.0
        %3528 = vmatpush1.msra.mxu0 0.0
        %3529 = vmatprep.subr.mxu0 0.0
        %3530 = vmatpush1.msra.mxu0 0.0
        %3531 = vmatprep.subr.mxu0 0.0
        %3532 = vmatpush1.msra.mxu0 0.0
        %3533 = vmatprep.subr.mxu0 0.0
        %3534 = vmatpush1.msra.mxu0 0.0
        %3535 = vmatprep.subr.mxu0 0.0
        %3536 = vmatpush1.msra.mxu0 0.0
        %3537 = vmatprep.subr.mxu0 0.0
        %3538 = vmatpush1.msra.mxu0 0.0
        %3539 = vmatprep.subr.mxu0 0.0
        %3540 = vmatpush1.msra.mxu0 0.0
        %3541 = vmatprep.subr.mxu0 %v2779
        %3542 = vmatpush1.msra.mxu0 %v2778
        %3543 = vmatprep.subr.mxu0 %v2763
        %3544 = vmatpush1.msra.mxu0 %v2762
        %3545 = vmatprep.subr.mxu0 %v2747
        %3546 = vmatpush1.msra.mxu0 %v2746
        %3547 = vmatprep.subr.mxu0 %v2731
        %3548 = vmatpush1.msra.mxu0 %v2730
        %3549 = vmatprep.subr.mxu0 %v2715
        %3550 = vmatpush1.msra.mxu0 %v2714
        %3551 = vmatprep.subr.mxu0 %v2699
        %3552 = vmatpush1.msra.mxu0 %v2698
        %3553 = vmatprep.subr.mxu0 %v2683
        %3554 = vmatpush1.msra.mxu0 %v2682
        %3555 = vmatprep.subr.mxu0 %v2667
        %3556 = vmatpush1.msra.mxu0 %v2666
        %3557 = vmatprep.subr.mxu0 0.0
        %3558 = vmatpush2.msra.mxu0 0.0
        %3559 = vmatprep.subr.mxu0 0.0
        %3560 = vmatpush2.msra.mxu0 0.0
        %3561 = vmatprep.subr.mxu0 0.0
        %3562 = vmatpush2.msra.mxu0 0.0
        %3563 = vmatprep.subr.mxu0 0.0
        %3564 = vmatpush2.msra.mxu0 0.0
        %3565 = vmatprep.subr.mxu0 0.0
        %3566 = vmatpush2.msra.mxu0 0.0
        %3567 = vmatprep.subr.mxu0 0.0
        %3568 = vmatpush2.msra.mxu0 0.0
        %3569 = vmatprep.subr.mxu0 0.0
        %3570 = vmatpush2.msra.mxu0 0.0
        %3571 = vmatprep.subr.mxu0 0.0
        %3572 = vmatpush2.msra.mxu0 0.0
        %3573 = vmatprep.subr.mxu0 0.0
        %3574 = vmatpush2.msra.mxu0 0.0
        %3575 = vmatprep.subr.mxu0 0.0
        %3576 = vmatpush2.msra.mxu0 0.0
        %3577 = vmatprep.subr.mxu0 0.0
        %3578 = vmatpush2.msra.mxu0 0.0
        %3579 = vmatprep.subr.mxu0 0.0
        %3580 = vmatpush2.msra.mxu0 0.0
        %3581 = vmatprep.subr.mxu0 0.0
        %3582 = vmatpush2.msra.mxu0 0.0
        %3583 = vmatprep.subr.mxu0 0.0
        %3584 = vmatpush2.msra.mxu0 0.0
        %3585 = vmatprep.subr.mxu0 0.0
        %3586 = vmatpush2.msra.mxu0 0.0
        %3587 = vmatprep.subr.mxu0 0.0
        %3588 = vmatpush2.msra.mxu0 0.0
        %3589 = vmatprep.mubr.f32.mxu0 0.0
        %3590 = vmatmul.mubr.f32.gmra.mxu0 %v2824
        %v3591 = vpop.f32.mrf.mxu0
        %v3592 = vadd.f32 %v2792, %v3591
        %v3593 = vpop.f32.mrf.mxu0
        %v3594 = vadd.f32 %v2792, %v3593
        %3595 = vmatprep.mubr.f32.mxu0 0.0
        %3596 = vmatmul.mubr.f32.gmra.mxu0 %v2827
        %v3597 = vpop.f32.mrf.mxu0
        %v3598 = vadd.f32 %v2796, %v3597
        %v3599 = vpop.f32.mrf.mxu0
        %v3600 = vadd.f32 %v2796, %v3599
        %3601 = vmatprep.mubr.f32.mxu0 0.0
        %3602 = vmatmul.mubr.f32.gmra.mxu0 %v2830
        %v3603 = vpop.f32.mrf.mxu0
        %v3604 = vadd.f32 %v2800, %v3603
        %v3605 = vpop.f32.mrf.mxu0
        %v3606 = vadd.f32 %v2800, %v3605
        %3607 = vmatprep.mubr.f32.mxu0 0.0
        %3608 = vmatmul.mubr.f32.gmra.mxu0 %v2833
        %v3609 = vpop.f32.mrf.mxu0
        %v3610 = vadd.f32 %v2804, %v3609
        %v3611 = vpop.f32.mrf.mxu0
        %v3612 = vadd.f32 %v2804, %v3611
        %3613 = vmatprep.mubr.f32.mxu0 0.0
        %3614 = vmatmul.mubr.f32.gmra.mxu0 %v2836
        %v3615 = vpop.f32.mrf.mxu0
        %v3616 = vadd.f32 %v2808, %v3615
        %v3617 = vpop.f32.mrf.mxu0
        %v3618 = vadd.f32 %v2808, %v3617
        %3619 = vmatprep.mubr.f32.mxu0 0.0
        %3620 = vmatmul.mubr.f32.gmra.mxu0 %v2839
        %v3621 = vpop.f32.mrf.mxu0
        %v3622 = vadd.f32 %v2812, %v3621
        %v3623 = vpop.f32.mrf.mxu0
        %v3624 = vadd.f32 %v2812, %v3623
        %3625 = vmatprep.mubr.f32.mxu0 0.0
        %3626 = vmatmul.mubr.f32.gmra.mxu0 %v2842
        %v3627 = vpop.f32.mrf.mxu0
        %v3628 = vadd.f32 %v2816, %v3627
        %v3629 = vpop.f32.mrf.mxu0
        %v3630 = vadd.f32 %v2816, %v3629
        %3631 = vmatprep.mubr.f32.mxu0 0.0
        %3632 = vmatmul.mubr.f32.gmra.mxu0 %v2845
        %v3633 = vpop.f32.mrf.mxu0
        %v3634 = vadd.f32 %v2820, %v3633
        %v3635 = vpop.f32.mrf.mxu0
        %v3636 = vadd.f32 %v2820, %v3635
        %3637 = vdwg.mxu0
        %3638 = vmatprep.subr.mxu0 0.0
        %3639 = vmatpush1.msra.mxu0 0.0
        %3640 = vmatprep.subr.mxu0 0.0
        %3641 = vmatpush1.msra.mxu0 0.0
        %3642 = vmatprep.subr.mxu0 0.0
        %3643 = vmatpush1.msra.mxu0 0.0
        %3644 = vmatprep.subr.mxu0 0.0
        %3645 = vmatpush1.msra.mxu0 0.0
        %3646 = vmatprep.subr.mxu0 0.0
        %3647 = vmatpush1.msra.mxu0 0.0
        %3648 = vmatprep.subr.mxu0 0.0
        %3649 = vmatpush1.msra.mxu0 0.0
        %3650 = vmatprep.subr.mxu0 0.0
        %3651 = vmatpush1.msra.mxu0 0.0
        %3652 = vmatprep.subr.mxu0 0.0
        %3653 = vmatpush1.msra.mxu0 0.0
        %3654 = vmatprep.subr.mxu0 %v2781
        %3655 = vmatpush1.msra.mxu0 %v2780
        %3656 = vmatprep.subr.mxu0 %v2765
        %3657 = vmatpush1.msra.mxu0 %v2764
        %3658 = vmatprep.subr.mxu0 %v2749
        %3659 = vmatpush1.msra.mxu0 %v2748
        %3660 = vmatprep.subr.mxu0 %v2733
        %3661 = vmatpush1.msra.mxu0 %v2732
        %3662 = vmatprep.subr.mxu0 %v2717
        %3663 = vmatpush1.msra.mxu0 %v2716
        %3664 = vmatprep.subr.mxu0 %v2701
        %3665 = vmatpush1.msra.mxu0 %v2700
        %3666 = vmatprep.subr.mxu0 %v2685
        %3667 = vmatpush1.msra.mxu0 %v2684
        %3668 = vmatprep.subr.mxu0 %v2669
        %3669 = vmatpush1.msra.mxu0 %v2668
        %3670 = vmatprep.subr.mxu0 0.0
        %3671 = vmatpush2.msra.mxu0 0.0
        %3672 = vmatprep.subr.mxu0 0.0
        %3673 = vmatpush2.msra.mxu0 0.0
        %3674 = vmatprep.subr.mxu0 0.0
        %3675 = vmatpush2.msra.mxu0 0.0
        %3676 = vmatprep.subr.mxu0 0.0
        %3677 = vmatpush2.msra.mxu0 0.0
        %3678 = vmatprep.subr.mxu0 0.0
        %3679 = vmatpush2.msra.mxu0 0.0
        %3680 = vmatprep.subr.mxu0 0.0
        %3681 = vmatpush2.msra.mxu0 0.0
        %3682 = vmatprep.subr.mxu0 0.0
        %3683 = vmatpush2.msra.mxu0 0.0
        %3684 = vmatprep.subr.mxu0 0.0
        %3685 = vmatpush2.msra.mxu0 0.0
        %3686 = vmatprep.subr.mxu0 0.0
        %3687 = vmatpush2.msra.mxu0 0.0
        %3688 = vmatprep.subr.mxu0 0.0
        %3689 = vmatpush2.msra.mxu0 0.0
        %3690 = vmatprep.subr.mxu0 0.0
        %3691 = vmatpush2.msra.mxu0 0.0
        %3692 = vmatprep.subr.mxu0 0.0
        %3693 = vmatpush2.msra.mxu0 0.0
        %3694 = vmatprep.subr.mxu0 0.0
        %3695 = vmatpush2.msra.mxu0 0.0
        %3696 = vmatprep.subr.mxu0 0.0
        %3697 = vmatpush2.msra.mxu0 0.0
        %3698 = vmatprep.subr.mxu0 0.0
        %3699 = vmatpush2.msra.mxu0 0.0
        %3700 = vmatprep.subr.mxu0 0.0
        %3701 = vmatpush2.msra.mxu0 0.0
        %3702 = vmatprep.mubr.f32.mxu0 0.0
        %3703 = vmatmul.mubr.f32.gmra.mxu0 %v2824
        %v3704 = vpop.f32.mrf.mxu0
        %v3705 = vadd.f32 %v2792, %v3704
        %v3706 = vpop.f32.mrf.mxu0
        %v3707 = vadd.f32 %v2792, %v3706
        %3708 = vmatprep.mubr.f32.mxu0 0.0
        %3709 = vmatmul.mubr.f32.gmra.mxu0 %v2827
        %v3710 = vpop.f32.mrf.mxu0
        %v3711 = vadd.f32 %v2796, %v3710
        %v3712 = vpop.f32.mrf.mxu0
        %v3713 = vadd.f32 %v2796, %v3712
        %3714 = vmatprep.mubr.f32.mxu0 0.0
        %3715 = vmatmul.mubr.f32.gmra.mxu0 %v2830
        %v3716 = vpop.f32.mrf.mxu0
        %v3717 = vadd.f32 %v2800, %v3716
        %v3718 = vpop.f32.mrf.mxu0
        %v3719 = vadd.f32 %v2800, %v3718
        %3720 = vmatprep.mubr.f32.mxu0 0.0
        %3721 = vmatmul.mubr.f32.gmra.mxu0 %v2833
        %v3722 = vpop.f32.mrf.mxu0
        %v3723 = vadd.f32 %v2804, %v3722
        %v3724 = vpop.f32.mrf.mxu0
        %v3725 = vadd.f32 %v2804, %v3724
        %3726 = vmatprep.mubr.f32.mxu0 0.0
        %3727 = vmatmul.mubr.f32.gmra.mxu0 %v2836
        %v3728 = vpop.f32.mrf.mxu0
        %v3729 = vadd.f32 %v2808, %v3728
        %v3730 = vpop.f32.mrf.mxu0
        %v3731 = vadd.f32 %v2808, %v3730
        %3732 = vmatprep.mubr.f32.mxu0 0.0
        %3733 = vmatmul.mubr.f32.gmra.mxu0 %v2839
        %v3734 = vpop.f32.mrf.mxu0
        %v3735 = vadd.f32 %v2812, %v3734
        %v3736 = vpop.f32.mrf.mxu0
        %v3737 = vadd.f32 %v2812, %v3736
        %3738 = vmatprep.mubr.f32.mxu0 0.0
        %3739 = vmatmul.mubr.f32.gmra.mxu0 %v2842
        %v3740 = vpop.f32.mrf.mxu0
        %v3741 = vadd.f32 %v2816, %v3740
        %v3742 = vpop.f32.mrf.mxu0
        %v3743 = vadd.f32 %v2816, %v3742
        %3744 = vmatprep.mubr.f32.mxu0 0.0
        %3745 = vmatmul.mubr.f32.gmra.mxu0 %v2845
        %v3746 = vpop.f32.mrf.mxu0
        %v3747 = vadd.f32 %v2820, %v3746
        %v3748 = vpop.f32.mrf.mxu0
        %v3749 = vadd.f32 %v2820, %v3748
        %3750 = vdwg.mxu0
        %v3751 = vmax.f32 %v2914, 0.0
        %v3752 = vmax.f32 %v2916, 0.0
        %v3753 = vmax.f32 %v3027, 0.0
        %v3754 = vmax.f32 %v3029, 0.0
        %v3755 = vmax.f32 %v3140, 0.0
        %v3756 = vmax.f32 %v3142, 0.0
        %v3757 = vmax.f32 %v3253, 0.0
        %v3758 = vmax.f32 %v3255, 0.0
        %v3759 = vmax.f32 %v3366, 0.0
        %v3760 = vmax.f32 %v3368, 0.0
        %v3761 = vmax.f32 %v3479, 0.0
        %v3762 = vmax.f32 %v3481, 0.0
        %v3763 = vmax.f32 %v3592, 0.0
        %v3764 = vmax.f32 %v3594, 0.0
        %v3765 = vmax.f32 %v3705, 0.0
        %v3766 = vmax.f32 %v3707, 0.0
        %v3767 = vmax.f32 %v2920, 0.0
        %v3768 = vmax.f32 %v2922, 0.0
        %v3769 = vmax.f32 %v3033, 0.0
        %v3770 = vmax.f32 %v3035, 0.0
        %v3771 = vmax.f32 %v3146, 0.0
        %v3772 = vmax.f32 %v3148, 0.0
        %v3773 = vmax.f32 %v3259, 0.0
        %v3774 = vmax.f32 %v3261, 0.0
        %v3775 = vmax.f32 %v3372, 0.0
        %v3776 = vmax.f32 %v3374, 0.0
        %v3777 = vmax.f32 %v3485, 0.0
        %v3778 = vmax.f32 %v3487, 0.0
        %v3779 = vmax.f32 %v3598, 0.0
        %v3780 = vmax.f32 %v3600, 0.0
        %v3781 = vmax.f32 %v3711, 0.0
        %v3782 = vmax.f32 %v3713, 0.0
        %v3783 = vmax.f32 %v2926, 0.0
        %v3784 = vmax.f32 %v2928, 0.0
        %v3785 = vmax.f32 %v3039, 0.0
        %v3786 = vmax.f32 %v3041, 0.0
        %v3787 = vmax.f32 %v3152, 0.0
        %v3788 = vmax.f32 %v3154, 0.0
        %v3789 = vmax.f32 %v3265, 0.0
        %v3790 = vmax.f32 %v3267, 0.0
        %v3791 = vmax.f32 %v3378, 0.0
        %v3792 = vmax.f32 %v3380, 0.0
        %v3793 = vmax.f32 %v3491, 0.0
        %v3794 = vmax.f32 %v3493, 0.0
        %v3795 = vmax.f32 %v3604, 0.0
        %v3796 = vmax.f32 %v3606, 0.0
        %v3797 = vmax.f32 %v3717, 0.0
        %v3798 = vmax.f32 %v3719, 0.0
        %v3799 = vmax.f32 %v2932, 0.0
        %v3800 = vmax.f32 %v2934, 0.0
        %v3801 = vmax.f32 %v3045, 0.0
        %v3802 = vmax.f32 %v3047, 0.0
        %v3803 = vmax.f32 %v3158, 0.0
        %v3804 = vmax.f32 %v3160, 0.0
        %v3805 = vmax.f32 %v3271, 0.0
        %v3806 = vmax.f32 %v3273, 0.0
        %v3807 = vmax.f32 %v3384, 0.0
        %v3808 = vmax.f32 %v3386, 0.0
        %v3809 = vmax.f32 %v3497, 0.0
        %v3810 = vmax.f32 %v3499, 0.0
        %v3811 = vmax.f32 %v3610, 0.0
        %v3812 = vmax.f32 %v3612, 0.0
        %v3813 = vmax.f32 %v3723, 0.0
        %v3814 = vmax.f32 %v3725, 0.0
        %v3815 = vmax.f32 %v2938, 0.0
        %v3816 = vmax.f32 %v2940, 0.0
        %v3817 = vmax.f32 %v3051, 0.0
        %v3818 = vmax.f32 %v3053, 0.0
        %v3819 = vmax.f32 %v3164, 0.0
        %v3820 = vmax.f32 %v3166, 0.0
        %v3821 = vmax.f32 %v3277, 0.0
        %v3822 = vmax.f32 %v3279, 0.0
        %v3823 = vmax.f32 %v3390, 0.0
        %v3824 = vmax.f32 %v3392, 0.0
        %v3825 = vmax.f32 %v3503, 0.0
        %v3826 = vmax.f32 %v3505, 0.0
        %v3827 = vmax.f32 %v3616, 0.0
        %v3828 = vmax.f32 %v3618, 0.0
        %v3829 = vmax.f32 %v3729, 0.0
        %v3830 = vmax.f32 %v3731, 0.0
        %v3831 = vmax.f32 %v2944, 0.0
        %v3832 = vmax.f32 %v2946, 0.0
        %v3833 = vmax.f32 %v3057, 0.0
        %v3834 = vmax.f32 %v3059, 0.0
        %v3835 = vmax.f32 %v3170, 0.0
        %v3836 = vmax.f32 %v3172, 0.0
        %v3837 = vmax.f32 %v3283, 0.0
        %v3838 = vmax.f32 %v3285, 0.0
        %v3839 = vmax.f32 %v3396, 0.0
        %v3840 = vmax.f32 %v3398, 0.0
        %v3841 = vmax.f32 %v3509, 0.0
        %v3842 = vmax.f32 %v3511, 0.0
        %v3843 = vmax.f32 %v3622, 0.0
        %v3844 = vmax.f32 %v3624, 0.0
        %v3845 = vmax.f32 %v3735, 0.0
        %v3846 = vmax.f32 %v3737, 0.0
        %v3847 = vmax.f32 %v2950, 0.0
        %v3848 = vmax.f32 %v2952, 0.0
        %v3849 = vmax.f32 %v3063, 0.0
        %v3850 = vmax.f32 %v3065, 0.0
        %v3851 = vmax.f32 %v3176, 0.0
        %v3852 = vmax.f32 %v3178, 0.0
        %v3853 = vmax.f32 %v3289, 0.0
        %v3854 = vmax.f32 %v3291, 0.0
        %v3855 = vmax.f32 %v3402, 0.0
        %v3856 = vmax.f32 %v3404, 0.0
        %v3857 = vmax.f32 %v3515, 0.0
        %v3858 = vmax.f32 %v3517, 0.0
        %v3859 = vmax.f32 %v3628, 0.0
        %v3860 = vmax.f32 %v3630, 0.0
        %v3861 = vmax.f32 %v3741, 0.0
        %v3862 = vmax.f32 %v3743, 0.0
        %v3863 = vmax.f32 %v2956, 0.0
        %v3864 = vmax.f32 %v2958, 0.0
        %v3865 = vmax.f32 %v3069, 0.0
        %v3866 = vmax.f32 %v3071, 0.0
        %v3867 = vmax.f32 %v3182, 0.0
        %v3868 = vmax.f32 %v3184, 0.0
        %v3869 = vmax.f32 %v3295, 0.0
        %v3870 = vmax.f32 %v3297, 0.0
        %v3871 = vmax.f32 %v3408, 0.0
        %v3872 = vmax.f32 %v3410, 0.0
        %v3873 = vmax.f32 %v3521, 0.0
        %v3874 = vmax.f32 %v3523, 0.0
        %v3875 = vmax.f32 %v3634, 0.0
        %v3876 = vmax.f32 %v3636, 0.0
        %v3877 = vmax.f32 %v3747, 0.0
        %v3878 = vmax.f32 %v3749, 0.0
        %v3879 = vld [vmem:[%s4] sm:$0xff]
        %v3880 = vld [vmem:[%s4 + $0x8] sm:$0xff]
        %v3881 = vld [vmem:[%s4 + $0x10] sm:$0xff]
        %v3882 = vld [vmem:[%s5] sm:$0xff]
        %v3883 = vld [vmem:[%s5 + $0x8] sm:$0xff]
        %v3884 = vld [vmem:[%s5 + $0x10] sm:$0xff]
        %3886 = vset.pattern.permute.xlu0 0
        %3887 = vperm.xlu0 %3886, %v3882
        %v3888 = vpop.permute.xlu0 %3887
        %3891 = vset.pattern.permute.xlu0 0
        %3892 = vperm.xlu0 %3891, %v3883
        %v3893 = vpop.permute.xlu0 %3892
        %3896 = vset.pattern.permute.xlu0 0
        %3897 = vperm.xlu0 %3896, %v3884
        %v3898 = vpop.permute.xlu0 %3897
        %v3901 = vsel %vm2822, %v3879, 0
        %v3904 = vsel %vm2822, %v3880, 0
        %v3907 = vsel %vm2822, %v3881, 0
        %3909 = vmatprep.subr.mxu0 0.0
        %3910 = vmatpush1.msra.mxu0 0.0
        %3911 = vmatprep.subr.mxu0 0.0
        %3912 = vmatpush1.msra.mxu0 0.0
        %3913 = vmatprep.subr.mxu0 0.0
        %3914 = vmatpush1.msra.mxu0 0.0
        %3915 = vmatprep.subr.mxu0 0.0
        %3916 = vmatpush1.msra.mxu0 0.0
        %3917 = vmatprep.subr.mxu0 0.0
        %3918 = vmatpush1.msra.mxu0 0.0
        %3919 = vmatprep.subr.mxu0 0.0
        %3920 = vmatpush1.msra.mxu0 0.0
        %3921 = vmatprep.subr.mxu0 0.0
        %3922 = vmatpush1.msra.mxu0 0.0
        %3923 = vmatprep.subr.mxu0 0.0
        %3924 = vmatpush1.msra.mxu0 0.0
        %3925 = vmatprep.subr.mxu0 %v3864
        %3926 = vmatpush1.msra.mxu0 %v3863
        %3927 = vmatprep.subr.mxu0 %v3848
        %3928 = vmatpush1.msra.mxu0 %v3847
        %3929 = vmatprep.subr.mxu0 %v3832
        %3930 = vmatpush1.msra.mxu0 %v3831
        %3931 = vmatprep.subr.mxu0 %v3816
        %3932 = vmatpush1.msra.mxu0 %v3815
        %3933 = vmatprep.subr.mxu0 %v3800
        %3934 = vmatpush1.msra.mxu0 %v3799
        %3935 = vmatprep.subr.mxu0 %v3784
        %3936 = vmatpush1.msra.mxu0 %v3783
        %3937 = vmatprep.subr.mxu0 %v3768
        %3938 = vmatpush1.msra.mxu0 %v3767
        %3939 = vmatprep.subr.mxu0 %v3752
        %3940 = vmatpush1.msra.mxu0 %v3751
        %3941 = vmatprep.subr.mxu0 0.0
        %3942 = vmatpush2.msra.mxu0 0.0
        %3943 = vmatprep.subr.mxu0 0.0
        %3944 = vmatpush2.msra.mxu0 0.0
        %3945 = vmatprep.subr.mxu0 0.0
        %3946 = vmatpush2.msra.mxu0 0.0
        %3947 = vmatprep.subr.mxu0 0.0
        %3948 = vmatpush2.msra.mxu0 0.0
        %3949 = vmatprep.subr.mxu0 0.0
        %3950 = vmatpush2.msra.mxu0 0.0
        %3951 = vmatprep.subr.mxu0 0.0
        %3952 = vmatpush2.msra.mxu0 0.0
        %3953 = vmatprep.subr.mxu0 0.0
        %3954 = vmatpush2.msra.mxu0 0.0
        %3955 = vmatprep.subr.mxu0 0.0
        %3956 = vmatpush2.msra.mxu0 0.0
        %3957 = vmatprep.subr.mxu0 0.0
        %3958 = vmatpush2.msra.mxu0 0.0
        %3959 = vmatprep.subr.mxu0 0.0
        %3960 = vmatpush2.msra.mxu0 0.0
        %3961 = vmatprep.subr.mxu0 0.0
        %3962 = vmatpush2.msra.mxu0 0.0
        %3963 = vmatprep.subr.mxu0 0.0
        %3964 = vmatpush2.msra.mxu0 0.0
        %3965 = vmatprep.subr.mxu0 0.0
        %3966 = vmatpush2.msra.mxu0 0.0
        %3967 = vmatprep.subr.mxu0 0.0
        %3968 = vmatpush2.msra.mxu0 0.0
        %3969 = vmatprep.subr.mxu0 0.0
        %3970 = vmatpush2.msra.mxu0 0.0
        %3971 = vmatprep.subr.mxu0 0.0
        %3972 = vmatpush2.msra.mxu0 0.0
        %3973 = vmatprep.mubr.f32.mxu0 0.0
        %3974 = vmatmul.mubr.f32.gmra.mxu0 %v3901
        %v3975 = vpop.f32.mrf.mxu0
        %v3976 = vadd.f32 %v3888, %v3975
        %v3977 = vpop.f32.mrf.mxu0
        %v3978 = vadd.f32 %v3888, %v3977
        %3979 = vmatprep.mubr.f32.mxu0 0.0
        %3980 = vmatmul.mubr.f32.gmra.mxu0 %v3904
        %v3981 = vpop.f32.mrf.mxu0
        %v3982 = vadd.f32 %v3893, %v3981
        %v3983 = vpop.f32.mrf.mxu0
        %v3984 = vadd.f32 %v3893, %v3983
        %3985 = vmatprep.mubr.f32.mxu0 0.0
        %3986 = vmatmul.mubr.f32.gmra.mxu0 %v3907
        %v3987 = vpop.f32.mrf.mxu0
        %v3988 = vadd.f32 %v3898, %v3987
        %v3989 = vpop.f32.mrf.mxu0
        %v3990 = vadd.f32 %v3898, %v3989
        %3991 = vdwg.mxu0
        %3992 = vmatprep.subr.mxu0 0.0
        %3993 = vmatpush1.msra.mxu0 0.0
        %3994 = vmatprep.subr.mxu0 0.0
        %3995 = vmatpush1.msra.mxu0 0.0
        %3996 = vmatprep.subr.mxu0 0.0
        %3997 = vmatpush1.msra.mxu0 0.0
        %3998 = vmatprep.subr.mxu0 0.0
        %3999 = vmatpush1.msra.mxu0 0.0
        %4000 = vmatprep.subr.mxu0 0.0
        %4001 = vmatpush1.msra.mxu0 0.0
        %4002 = vmatprep.subr.mxu0 0.0
        %4003 = vmatpush1.msra.mxu0 0.0
        %4004 = vmatprep.subr.mxu0 0.0
        %4005 = vmatpush1.msra.mxu0 0.0
        %4006 = vmatprep.subr.mxu0 0.0
        %4007 = vmatpush1.msra.mxu0 0.0
        %4008 = vmatprep.subr.mxu0 %v3866
        %4009 = vmatpush1.msra.mxu0 %v3865
        %4010 = vmatprep.subr.mxu0 %v3850
        %4011 = vmatpush1.msra.mxu0 %v3849
        %4012 = vmatprep.subr.mxu0 %v3834
        %4013 = vmatpush1.msra.mxu0 %v3833
        %4014 = vmatprep.subr.mxu0 %v3818
        %4015 = vmatpush1.msra.mxu0 %v3817
        %4016 = vmatprep.subr.mxu0 %v3802
        %4017 = vmatpush1.msra.mxu0 %v3801
        %4018 = vmatprep.subr.mxu0 %v3786
        %4019 = vmatpush1.msra.mxu0 %v3785
        %4020 = vmatprep.subr.mxu0 %v3770
        %4021 = vmatpush1.msra.mxu0 %v3769
        %4022 = vmatprep.subr.mxu0 %v3754
        %4023 = vmatpush1.msra.mxu0 %v3753
        %4024 = vmatprep.subr.mxu0 0.0
        %4025 = vmatpush2.msra.mxu0 0.0
        %4026 = vmatprep.subr.mxu0 0.0
        %4027 = vmatpush2.msra.mxu0 0.0
        %4028 = vmatprep.subr.mxu0 0.0
        %4029 = vmatpush2.msra.mxu0 0.0
        %4030 = vmatprep.subr.mxu0 0.0
        %4031 = vmatpush2.msra.mxu0 0.0
        %4032 = vmatprep.subr.mxu0 0.0
        %4033 = vmatpush2.msra.mxu0 0.0
        %4034 = vmatprep.subr.mxu0 0.0
        %4035 = vmatpush2.msra.mxu0 0.0
        %4036 = vmatprep.subr.mxu0 0.0
        %4037 = vmatpush2.msra.mxu0 0.0
        %4038 = vmatprep.subr.mxu0 0.0
        %4039 = vmatpush2.msra.mxu0 0.0
        %4040 = vmatprep.subr.mxu0 0.0
        %4041 = vmatpush2.msra.mxu0 0.0
        %4042 = vmatprep.subr.mxu0 0.0
        %4043 = vmatpush2.msra.mxu0 0.0
        %4044 = vmatprep.subr.mxu0 0.0
        %4045 = vmatpush2.msra.mxu0 0.0
        %4046 = vmatprep.subr.mxu0 0.0
        %4047 = vmatpush2.msra.mxu0 0.0
        %4048 = vmatprep.subr.mxu0 0.0
        %4049 = vmatpush2.msra.mxu0 0.0
        %4050 = vmatprep.subr.mxu0 0.0
        %4051 = vmatpush2.msra.mxu0 0.0
        %4052 = vmatprep.subr.mxu0 0.0
        %4053 = vmatpush2.msra.mxu0 0.0
        %4054 = vmatprep.subr.mxu0 0.0
        %4055 = vmatpush2.msra.mxu0 0.0
        %4056 = vmatprep.mubr.f32.mxu0 0.0
        %4057 = vmatmul.mubr.f32.gmra.mxu0 %v3901
        %v4058 = vpop.f32.mrf.mxu0
        %v4059 = vadd.f32 %v3888, %v4058
        %v4060 = vpop.f32.mrf.mxu0
        %v4061 = vadd.f32 %v3888, %v4060
        %4062 = vmatprep.mubr.f32.mxu0 0.0
        %4063 = vmatmul.mubr.f32.gmra.mxu0 %v3904
        %v4064 = vpop.f32.mrf.mxu0
        %v4065 = vadd.f32 %v3893, %v4064
        %v4066 = vpop.f32.mrf.mxu0
        %v4067 = vadd.f32 %v3893, %v4066
        %4068 = vmatprep.mubr.f32.mxu0 0.0
        %4069 = vmatmul.mubr.f32.gmra.mxu0 %v3907
        %v4070 = vpop.f32.mrf.mxu0
        %v4071 = vadd.f32 %v3898, %v4070
        %v4072 = vpop.f32.mrf.mxu0
        %v4073 = vadd.f32 %v3898, %v4072
        %4074 = vdwg.mxu0
        %4075 = vmatprep.subr.mxu0 0.0
        %4076 = vmatpush1.msra.mxu0 0.0
        %4077 = vmatprep.subr.mxu0 0.0
        %4078 = vmatpush1.msra.mxu0 0.0
        %4079 = vmatprep.subr.mxu0 0.0
        %4080 = vmatpush1.msra.mxu0 0.0
        %4081 = vmatprep.subr.mxu0 0.0
        %4082 = vmatpush1.msra.mxu0 0.0
        %4083 = vmatprep.subr.mxu0 0.0
        %4084 = vmatpush1.msra.mxu0 0.0
        %4085 = vmatprep.subr.mxu0 0.0
        %4086 = vmatpush1.msra.mxu0 0.0
        %4087 = vmatprep.subr.mxu0 0.0
        %4088 = vmatpush1.msra.mxu0 0.0
        %4089 = vmatprep.subr.mxu0 0.0
        %4090 = vmatpush1.msra.mxu0 0.0
        %4091 = vmatprep.subr.mxu0 %v3868
        %4092 = vmatpush1.msra.mxu0 %v3867
        %4093 = vmatprep.subr.mxu0 %v3852
        %4094 = vmatpush1.msra.mxu0 %v3851
        %4095 = vmatprep.subr.mxu0 %v3836
        %4096 = vmatpush1.msra.mxu0 %v3835
        %4097 = vmatprep.subr.mxu0 %v3820
        %4098 = vmatpush1.msra.mxu0 %v3819
        %4099 = vmatprep.subr.mxu0 %v3804
        %4100 = vmatpush1.msra.mxu0 %v3803
        %4101 = vmatprep.subr.mxu0 %v3788
        %4102 = vmatpush1.msra.mxu0 %v3787
        %4103 = vmatprep.subr.mxu0 %v3772
        %4104 = vmatpush1.msra.mxu0 %v3771
        %4105 = vmatprep.subr.mxu0 %v3756
        %4106 = vmatpush1.msra.mxu0 %v3755
        %4107 = vmatprep.subr.mxu0 0.0
        %4108 = vmatpush2.msra.mxu0 0.0
        %4109 = vmatprep.subr.mxu0 0.0
        %4110 = vmatpush2.msra.mxu0 0.0
        %4111 = vmatprep.subr.mxu0 0.0
        %4112 = vmatpush2.msra.mxu0 0.0
        %4113 = vmatprep.subr.mxu0 0.0
        %4114 = vmatpush2.msra.mxu0 0.0
        %4115 = vmatprep.subr.mxu0 0.0
        %4116 = vmatpush2.msra.mxu0 0.0
        %4117 = vmatprep.subr.mxu0 0.0
        %4118 = vmatpush2.msra.mxu0 0.0
        %4119 = vmatprep.subr.mxu0 0.0
        %4120 = vmatpush2.msra.mxu0 0.0
        %4121 = vmatprep.subr.mxu0 0.0
        %4122 = vmatpush2.msra.mxu0 0.0
        %4123 = vmatprep.subr.mxu0 0.0
        %4124 = vmatpush2.msra.mxu0 0.0
        %4125 = vmatprep.subr.mxu0 0.0
        %4126 = vmatpush2.msra.mxu0 0.0
        %4127 = vmatprep.subr.mxu0 0.0
        %4128 = vmatpush2.msra.mxu0 0.0
        %4129 = vmatprep.subr.mxu0 0.0
        %4130 = vmatpush2.msra.mxu0 0.0
        %4131 = vmatprep.subr.mxu0 0.0
        %4132 = vmatpush2.msra.mxu0 0.0
        %4133 = vmatprep.subr.mxu0 0.0
        %4134 = vmatpush2.msra.mxu0 0.0
        %4135 = vmatprep.subr.mxu0 0.0
        %4136 = vmatpush2.msra.mxu0 0.0
        %4137 = vmatprep.subr.mxu0 0.0
        %4138 = vmatpush2.msra.mxu0 0.0
        %4139 = vmatprep.mubr.f32.mxu0 0.0
        %4140 = vmatmul.mubr.f32.gmra.mxu0 %v3901
        %v4141 = vpop.f32.mrf.mxu0
        %v4142 = vadd.f32 %v3888, %v4141
        %v4143 = vpop.f32.mrf.mxu0
        %v4144 = vadd.f32 %v3888, %v4143
        %4145 = vmatprep.mubr.f32.mxu0 0.0
        %4146 = vmatmul.mubr.f32.gmra.mxu0 %v3904
        %v4147 = vpop.f32.mrf.mxu0
        %v4148 = vadd.f32 %v3893, %v4147
        %v4149 = vpop.f32.mrf.mxu0
        %v4150 = vadd.f32 %v3893, %v4149
        %4151 = vmatprep.mubr.f32.mxu0 0.0
        %4152 = vmatmul.mubr.f32.gmra.mxu0 %v3907
        %v4153 = vpop.f32.mrf.mxu0
        %v4154 = vadd.f32 %v3898, %v4153
        %v4155 = vpop.f32.mrf.mxu0
        %v4156 = vadd.f32 %v3898, %v4155
        %4157 = vdwg.mxu0
        %4158 = vmatprep.subr.mxu0 0.0
        %4159 = vmatpush1.msra.mxu0 0.0
        %4160 = vmatprep.subr.mxu0 0.0
        %4161 = vmatpush1.msra.mxu0 0.0
        %4162 = vmatprep.subr.mxu0 0.0
        %4163 = vmatpush1.msra.mxu0 0.0
        %4164 = vmatprep.subr.mxu0 0.0
        %4165 = vmatpush1.msra.mxu0 0.0
        %4166 = vmatprep.subr.mxu0 0.0
        %4167 = vmatpush1.msra.mxu0 0.0
        %4168 = vmatprep.subr.mxu0 0.0
        %4169 = vmatpush1.msra.mxu0 0.0
        %4170 = vmatprep.subr.mxu0 0.0
        %4171 = vmatpush1.msra.mxu0 0.0
        %4172 = vmatprep.subr.mxu0 0.0
        %4173 = vmatpush1.msra.mxu0 0.0
        %4174 = vmatprep.subr.mxu0 %v3870
        %4175 = vmatpush1.msra.mxu0 %v3869
        %4176 = vmatprep.subr.mxu0 %v3854
        %4177 = vmatpush1.msra.mxu0 %v3853
        %4178 = vmatprep.subr.mxu0 %v3838
        %4179 = vmatpush1.msra.mxu0 %v3837
        %4180 = vmatprep.subr.mxu0 %v3822
        %4181 = vmatpush1.msra.mxu0 %v3821
        %4182 = vmatprep.subr.mxu0 %v3806
        %4183 = vmatpush1.msra.mxu0 %v3805
        %4184 = vmatprep.subr.mxu0 %v3790
        %4185 = vmatpush1.msra.mxu0 %v3789
        %4186 = vmatprep.subr.mxu0 %v3774
        %4187 = vmatpush1.msra.mxu0 %v3773
        %4188 = vmatprep.subr.mxu0 %v3758
        %4189 = vmatpush1.msra.mxu0 %v3757
        %4190 = vmatprep.subr.mxu0 0.0
        %4191 = vmatpush2.msra.mxu0 0.0
        %4192 = vmatprep.subr.mxu0 0.0
        %4193 = vmatpush2.msra.mxu0 0.0
        %4194 = vmatprep.subr.mxu0 0.0
        %4195 = vmatpush2.msra.mxu0 0.0
        %4196 = vmatprep.subr.mxu0 0.0
        %4197 = vmatpush2.msra.mxu0 0.0
        %4198 = vmatprep.subr.mxu0 0.0
        %4199 = vmatpush2.msra.mxu0 0.0
        %4200 = vmatprep.subr.mxu0 0.0
        %4201 = vmatpush2.msra.mxu0 0.0
        %4202 = vmatprep.subr.mxu0 0.0
        %4203 = vmatpush2.msra.mxu0 0.0
        %4204 = vmatprep.subr.mxu0 0.0
        %4205 = vmatpush2.msra.mxu0 0.0
        %4206 = vmatprep.subr.mxu0 0.0
        %4207 = vmatpush2.msra.mxu0 0.0
        %4208 = vmatprep.subr.mxu0 0.0
        %4209 = vmatpush2.msra.mxu0 0.0
        %4210 = vmatprep.subr.mxu0 0.0
        %4211 = vmatpush2.msra.mxu0 0.0
        %4212 = vmatprep.subr.mxu0 0.0
        %4213 = vmatpush2.msra.mxu0 0.0
        %4214 = vmatprep.subr.mxu0 0.0
        %4215 = vmatpush2.msra.mxu0 0.0
        %4216 = vmatprep.subr.mxu0 0.0
        %4217 = vmatpush2.msra.mxu0 0.0
        %4218 = vmatprep.subr.mxu0 0.0
        %4219 = vmatpush2.msra.mxu0 0.0
        %4220 = vmatprep.subr.mxu0 0.0
        %4221 = vmatpush2.msra.mxu0 0.0
        %4222 = vmatprep.mubr.f32.mxu0 0.0
        %4223 = vmatmul.mubr.f32.gmra.mxu0 %v3901
        %v4224 = vpop.f32.mrf.mxu0
        %v4225 = vadd.f32 %v3888, %v4224
        %v4226 = vpop.f32.mrf.mxu0
        %v4227 = vadd.f32 %v3888, %v4226
        %4228 = vmatprep.mubr.f32.mxu0 0.0
        %4229 = vmatmul.mubr.f32.gmra.mxu0 %v3904
        %v4230 = vpop.f32.mrf.mxu0
        %v4231 = vadd.f32 %v3893, %v4230
        %v4232 = vpop.f32.mrf.mxu0
        %v4233 = vadd.f32 %v3893, %v4232
        %4234 = vmatprep.mubr.f32.mxu0 0.0
        %4235 = vmatmul.mubr.f32.gmra.mxu0 %v3907
        %v4236 = vpop.f32.mrf.mxu0
        %v4237 = vadd.f32 %v3898, %v4236
        %v4238 = vpop.f32.mrf.mxu0
        %v4239 = vadd.f32 %v3898, %v4238
        %4240 = vdwg.mxu0
        %4241 = vmatprep.subr.mxu0 0.0
        %4242 = vmatpush1.msra.mxu0 0.0
        %4243 = vmatprep.subr.mxu0 0.0
        %4244 = vmatpush1.msra.mxu0 0.0
        %4245 = vmatprep.subr.mxu0 0.0
        %4246 = vmatpush1.msra.mxu0 0.0
        %4247 = vmatprep.subr.mxu0 0.0
        %4248 = vmatpush1.msra.mxu0 0.0
        %4249 = vmatprep.subr.mxu0 0.0
        %4250 = vmatpush1.msra.mxu0 0.0
        %4251 = vmatprep.subr.mxu0 0.0
        %4252 = vmatpush1.msra.mxu0 0.0
        %4253 = vmatprep.subr.mxu0 0.0
        %4254 = vmatpush1.msra.mxu0 0.0
        %4255 = vmatprep.subr.mxu0 0.0
        %4256 = vmatpush1.msra.mxu0 0.0
        %4257 = vmatprep.subr.mxu0 %v3872
        %4258 = vmatpush1.msra.mxu0 %v3871
        %4259 = vmatprep.subr.mxu0 %v3856
        %4260 = vmatpush1.msra.mxu0 %v3855
        %4261 = vmatprep.subr.mxu0 %v3840
        %4262 = vmatpush1.msra.mxu0 %v3839
        %4263 = vmatprep.subr.mxu0 %v3824
        %4264 = vmatpush1.msra.mxu0 %v3823
        %4265 = vmatprep.subr.mxu0 %v3808
        %4266 = vmatpush1.msra.mxu0 %v3807
        %4267 = vmatprep.subr.mxu0 %v3792
        %4268 = vmatpush1.msra.mxu0 %v3791
        %4269 = vmatprep.subr.mxu0 %v3776
        %4270 = vmatpush1.msra.mxu0 %v3775
        %4271 = vmatprep.subr.mxu0 %v3760
        %4272 = vmatpush1.msra.mxu0 %v3759
        %4273 = vmatprep.subr.mxu0 0.0
        %4274 = vmatpush2.msra.mxu0 0.0
        %4275 = vmatprep.subr.mxu0 0.0
        %4276 = vmatpush2.msra.mxu0 0.0
        %4277 = vmatprep.subr.mxu0 0.0
        %4278 = vmatpush2.msra.mxu0 0.0
        %4279 = vmatprep.subr.mxu0 0.0
        %4280 = vmatpush2.msra.mxu0 0.0
        %4281 = vmatprep.subr.mxu0 0.0
        %4282 = vmatpush2.msra.mxu0 0.0
        %4283 = vmatprep.subr.mxu0 0.0
        %4284 = vmatpush2.msra.mxu0 0.0
        %4285 = vmatprep.subr.mxu0 0.0
        %4286 = vmatpush2.msra.mxu0 0.0
        %4287 = vmatprep.subr.mxu0 0.0
        %4288 = vmatpush2.msra.mxu0 0.0
        %4289 = vmatprep.subr.mxu0 0.0
        %4290 = vmatpush2.msra.mxu0 0.0
        %4291 = vmatprep.subr.mxu0 0.0
        %4292 = vmatpush2.msra.mxu0 0.0
        %4293 = vmatprep.subr.mxu0 0.0
        %4294 = vmatpush2.msra.mxu0 0.0
        %4295 = vmatprep.subr.mxu0 0.0
        %4296 = vmatpush2.msra.mxu0 0.0
        %4297 = vmatprep.subr.mxu0 0.0
        %4298 = vmatpush2.msra.mxu0 0.0
        %4299 = vmatprep.subr.mxu0 0.0
        %4300 = vmatpush2.msra.mxu0 0.0
        %4301 = vmatprep.subr.mxu0 0.0
        %4302 = vmatpush2.msra.mxu0 0.0
        %4303 = vmatprep.subr.mxu0 0.0
        %4304 = vmatpush2.msra.mxu0 0.0
        %4305 = vmatprep.mubr.f32.mxu0 0.0
        %4306 = vmatmul.mubr.f32.gmra.mxu0 %v3901
        %v4307 = vpop.f32.mrf.mxu0
        %v4308 = vadd.f32 %v3888, %v4307
        %v4309 = vpop.f32.mrf.mxu0
        %v4310 = vadd.f32 %v3888, %v4309
        %4311 = vmatprep.mubr.f32.mxu0 0.0
        %4312 = vmatmul.mubr.f32.gmra.mxu0 %v3904
        %v4313 = vpop.f32.mrf.mxu0
        %v4314 = vadd.f32 %v3893, %v4313
        %v4315 = vpop.f32.mrf.mxu0
        %v4316 = vadd.f32 %v3893, %v4315
        %4317 = vmatprep.mubr.f32.mxu0 0.0
        %4318 = vmatmul.mubr.f32.gmra.mxu0 %v3907
        %v4319 = vpop.f32.mrf.mxu0
        %v4320 = vadd.f32 %v3898, %v4319
        %v4321 = vpop.f32.mrf.mxu0
        %v4322 = vadd.f32 %v3898, %v4321
        %4323 = vdwg.mxu0
        %4324 = vmatprep.subr.mxu0 0.0
        %4325 = vmatpush1.msra.mxu0 0.0
        %4326 = vmatprep.subr.mxu0 0.0
        %4327 = vmatpush1.msra.mxu0 0.0
        %4328 = vmatprep.subr.mxu0 0.0
        %4329 = vmatpush1.msra.mxu0 0.0
        %4330 = vmatprep.subr.mxu0 0.0
        %4331 = vmatpush1.msra.mxu0 0.0
        %4332 = vmatprep.subr.mxu0 0.0
        %4333 = vmatpush1.msra.mxu0 0.0
        %4334 = vmatprep.subr.mxu0 0.0
        %4335 = vmatpush1.msra.mxu0 0.0
        %4336 = vmatprep.subr.mxu0 0.0
        %4337 = vmatpush1.msra.mxu0 0.0
        %4338 = vmatprep.subr.mxu0 0.0
        %4339 = vmatpush1.msra.mxu0 0.0
        %4340 = vmatprep.subr.mxu0 %v3874
        %4341 = vmatpush1.msra.mxu0 %v3873
        %4342 = vmatprep.subr.mxu0 %v3858
        %4343 = vmatpush1.msra.mxu0 %v3857
        %4344 = vmatprep.subr.mxu0 %v3842
        %4345 = vmatpush1.msra.mxu0 %v3841
        %4346 = vmatprep.subr.mxu0 %v3826
        %4347 = vmatpush1.msra.mxu0 %v3825
        %4348 = vmatprep.subr.mxu0 %v3810
        %4349 = vmatpush1.msra.mxu0 %v3809
        %4350 = vmatprep.subr.mxu0 %v3794
        %4351 = vmatpush1.msra.mxu0 %v3793
        %4352 = vmatprep.subr.mxu0 %v3778
        %4353 = vmatpush1.msra.mxu0 %v3777
        %4354 = vmatprep.subr.mxu0 %v3762
        %4355 = vmatpush1.msra.mxu0 %v3761
        %4356 = vmatprep.subr.mxu0 0.0
        %4357 = vmatpush2.msra.mxu0 0.0
        %4358 = vmatprep.subr.mxu0 0.0
        %4359 = vmatpush2.msra.mxu0 0.0
        %4360 = vmatprep.subr.mxu0 0.0
        %4361 = vmatpush2.msra.mxu0 0.0
        %4362 = vmatprep.subr.mxu0 0.0
        %4363 = vmatpush2.msra.mxu0 0.0
        %4364 = vmatprep.subr.mxu0 0.0
        %4365 = vmatpush2.msra.mxu0 0.0
        %4366 = vmatprep.subr.mxu0 0.0
        %4367 = vmatpush2.msra.mxu0 0.0
        %4368 = vmatprep.subr.mxu0 0.0
        %4369 = vmatpush2.msra.mxu0 0.0
        %4370 = vmatprep.subr.mxu0 0.0
        %4371 = vmatpush2.msra.mxu0 0.0
        %4372 = vmatprep.subr.mxu0 0.0
        %4373 = vmatpush2.msra.mxu0 0.0
        %4374 = vmatprep.subr.mxu0 0.0
        %4375 = vmatpush2.msra.mxu0 0.0
        %4376 = vmatprep.subr.mxu0 0.0
        %4377 = vmatpush2.msra.mxu0 0.0
        %4378 = vmatprep.subr.mxu0 0.0
        %4379 = vmatpush2.msra.mxu0 0.0
        %4380 = vmatprep.subr.mxu0 0.0
        %4381 = vmatpush2.msra.mxu0 0.0
        %4382 = vmatprep.subr.mxu0 0.0
        %4383 = vmatpush2.msra.mxu0 0.0
        %4384 = vmatprep.subr.mxu0 0.0
        %4385 = vmatpush2.msra.mxu0 0.0
        %4386 = vmatprep.subr.mxu0 0.0
        %4387 = vmatpush2.msra.mxu0 0.0
        %4388 = vmatprep.mubr.f32.mxu0 0.0
        %4389 = vmatmul.mubr.f32.gmra.mxu0 %v3901
        %v4390 = vpop.f32.mrf.mxu0
        %v4391 = vadd.f32 %v3888, %v4390
        %v4392 = vpop.f32.mrf.mxu0
        %v4393 = vadd.f32 %v3888, %v4392
        %4394 = vmatprep.mubr.f32.mxu0 0.0
        %4395 = vmatmul.mubr.f32.gmra.mxu0 %v3904
        %v4396 = vpop.f32.mrf.mxu0
        %v4397 = vadd.f32 %v3893, %v4396
        %v4398 = vpop.f32.mrf.mxu0
        %v4399 = vadd.f32 %v3893, %v4398
        %4400 = vmatprep.mubr.f32.mxu0 0.0
        %4401 = vmatmul.mubr.f32.gmra.mxu0 %v3907
        %v4402 = vpop.f32.mrf.mxu0
        %v4403 = vadd.f32 %v3898, %v4402
        %v4404 = vpop.f32.mrf.mxu0
        %v4405 = vadd.f32 %v3898, %v4404
        %4406 = vdwg.mxu0
        %4407 = vmatprep.subr.mxu0 0.0
        %4408 = vmatpush1.msra.mxu0 0.0
        %4409 = vmatprep.subr.mxu0 0.0
        %4410 = vmatpush1.msra.mxu0 0.0
        %4411 = vmatprep.subr.mxu0 0.0
        %4412 = vmatpush1.msra.mxu0 0.0
        %4413 = vmatprep.subr.mxu0 0.0
        %4414 = vmatpush1.msra.mxu0 0.0
        %4415 = vmatprep.subr.mxu0 0.0
        %4416 = vmatpush1.msra.mxu0 0.0
        %4417 = vmatprep.subr.mxu0 0.0
        %4418 = vmatpush1.msra.mxu0 0.0
        %4419 = vmatprep.subr.mxu0 0.0
        %4420 = vmatpush1.msra.mxu0 0.0
        %4421 = vmatprep.subr.mxu0 0.0
        %4422 = vmatpush1.msra.mxu0 0.0
        %4423 = vmatprep.subr.mxu0 %v3876
        %4424 = vmatpush1.msra.mxu0 %v3875
        %4425 = vmatprep.subr.mxu0 %v3860
        %4426 = vmatpush1.msra.mxu0 %v3859
        %4427 = vmatprep.subr.mxu0 %v3844
        %4428 = vmatpush1.msra.mxu0 %v3843
        %4429 = vmatprep.subr.mxu0 %v3828
        %4430 = vmatpush1.msra.mxu0 %v3827
        %4431 = vmatprep.subr.mxu0 %v3812
        %4432 = vmatpush1.msra.mxu0 %v3811
        %4433 = vmatprep.subr.mxu0 %v3796
        %4434 = vmatpush1.msra.mxu0 %v3795
        %4435 = vmatprep.subr.mxu0 %v3780
        %4436 = vmatpush1.msra.mxu0 %v3779
        %4437 = vmatprep.subr.mxu0 %v3764
        %4438 = vmatpush1.msra.mxu0 %v3763
        %4439 = vmatprep.subr.mxu0 0.0
        %4440 = vmatpush2.msra.mxu0 0.0
        %4441 = vmatprep.subr.mxu0 0.0
        %4442 = vmatpush2.msra.mxu0 0.0
        %4443 = vmatprep.subr.mxu0 0.0
        %4444 = vmatpush2.msra.mxu0 0.0
        %4445 = vmatprep.subr.mxu0 0.0
        %4446 = vmatpush2.msra.mxu0 0.0
        %4447 = vmatprep.subr.mxu0 0.0
        %4448 = vmatpush2.msra.mxu0 0.0
        %4449 = vmatprep.subr.mxu0 0.0
        %4450 = vmatpush2.msra.mxu0 0.0
        %4451 = vmatprep.subr.mxu0 0.0
        %4452 = vmatpush2.msra.mxu0 0.0
        %4453 = vmatprep.subr.mxu0 0.0
        %4454 = vmatpush2.msra.mxu0 0.0
        %4455 = vmatprep.subr.mxu0 0.0
        %4456 = vmatpush2.msra.mxu0 0.0
        %4457 = vmatprep.subr.mxu0 0.0
        %4458 = vmatpush2.msra.mxu0 0.0
        %4459 = vmatprep.subr.mxu0 0.0
        %4460 = vmatpush2.msra.mxu0 0.0
        %4461 = vmatprep.subr.mxu0 0.0
        %4462 = vmatpush2.msra.mxu0 0.0
        %4463 = vmatprep.subr.mxu0 0.0
        %4464 = vmatpush2.msra.mxu0 0.0
        %4465 = vmatprep.subr.mxu0 0.0
        %4466 = vmatpush2.msra.mxu0 0.0
        %4467 = vmatprep.subr.mxu0 0.0
        %4468 = vmatpush2.msra.mxu0 0.0
        %4469 = vmatprep.subr.mxu0 0.0
        %4470 = vmatpush2.msra.mxu0 0.0
        %4471 = vmatprep.mubr.f32.mxu0 0.0
        %4472 = vmatmul.mubr.f32.gmra.mxu0 %v3901
        %v4473 = vpop.f32.mrf.mxu0
        %v4474 = vadd.f32 %v3888, %v4473
        %v4475 = vpop.f32.mrf.mxu0
        %v4476 = vadd.f32 %v3888, %v4475
        %4477 = vmatprep.mubr.f32.mxu0 0.0
        %4478 = vmatmul.mubr.f32.gmra.mxu0 %v3904
        %v4479 = vpop.f32.mrf.mxu0
        %v4480 = vadd.f32 %v3893, %v4479
        %v4481 = vpop.f32.mrf.mxu0
        %v4482 = vadd.f32 %v3893, %v4481
        %4483 = vmatprep.mubr.f32.mxu0 0.0
        %4484 = vmatmul.mubr.f32.gmra.mxu0 %v3907
        %v4485 = vpop.f32.mrf.mxu0
        %v4486 = vadd.f32 %v3898, %v4485
        %v4487 = vpop.f32.mrf.mxu0
        %v4488 = vadd.f32 %v3898, %v4487
        %4489 = vdwg.mxu0
        %4490 = vmatprep.subr.mxu0 0.0
        %4491 = vmatpush1.msra.mxu0 0.0
        %4492 = vmatprep.subr.mxu0 0.0
        %4493 = vmatpush1.msra.mxu0 0.0
        %4494 = vmatprep.subr.mxu0 0.0
        %4495 = vmatpush1.msra.mxu0 0.0
        %4496 = vmatprep.subr.mxu0 0.0
        %4497 = vmatpush1.msra.mxu0 0.0
        %4498 = vmatprep.subr.mxu0 0.0
        %4499 = vmatpush1.msra.mxu0 0.0
        %4500 = vmatprep.subr.mxu0 0.0
        %4501 = vmatpush1.msra.mxu0 0.0
        %4502 = vmatprep.subr.mxu0 0.0
        %4503 = vmatpush1.msra.mxu0 0.0
        %4504 = vmatprep.subr.mxu0 0.0
        %4505 = vmatpush1.msra.mxu0 0.0
        %4506 = vmatprep.subr.mxu0 %v3878
        %4507 = vmatpush1.msra.mxu0 %v3877
        %4508 = vmatprep.subr.mxu0 %v3862
        %4509 = vmatpush1.msra.mxu0 %v3861
        %4510 = vmatprep.subr.mxu0 %v3846
        %4511 = vmatpush1.msra.mxu0 %v3845
        %4512 = vmatprep.subr.mxu0 %v3830
        %4513 = vmatpush1.msra.mxu0 %v3829
        %4514 = vmatprep.subr.mxu0 %v3814
        %4515 = vmatpush1.msra.mxu0 %v3813
        %4516 = vmatprep.subr.mxu0 %v3798
        %4517 = vmatpush1.msra.mxu0 %v3797
        %4518 = vmatprep.subr.mxu0 %v3782
        %4519 = vmatpush1.msra.mxu0 %v3781
        %4520 = vmatprep.subr.mxu0 %v3766
        %4521 = vmatpush1.msra.mxu0 %v3765
        %4522 = vmatprep.subr.mxu0 0.0
        %4523 = vmatpush2.msra.mxu0 0.0
        %4524 = vmatprep.subr.mxu0 0.0
        %4525 = vmatpush2.msra.mxu0 0.0
        %4526 = vmatprep.subr.mxu0 0.0
        %4527 = vmatpush2.msra.mxu0 0.0
        %4528 = vmatprep.subr.mxu0 0.0
        %4529 = vmatpush2.msra.mxu0 0.0
        %4530 = vmatprep.subr.mxu0 0.0
        %4531 = vmatpush2.msra.mxu0 0.0
        %4532 = vmatprep.subr.mxu0 0.0
        %4533 = vmatpush2.msra.mxu0 0.0
        %4534 = vmatprep.subr.mxu0 0.0
        %4535 = vmatpush2.msra.mxu0 0.0
        %4536 = vmatprep.subr.mxu0 0.0
        %4537 = vmatpush2.msra.mxu0 0.0
        %4538 = vmatprep.subr.mxu0 0.0
        %4539 = vmatpush2.msra.mxu0 0.0
        %4540 = vmatprep.subr.mxu0 0.0
        %4541 = vmatpush2.msra.mxu0 0.0
        %4542 = vmatprep.subr.mxu0 0.0
        %4543 = vmatpush2.msra.mxu0 0.0
        %4544 = vmatprep.subr.mxu0 0.0
        %4545 = vmatpush2.msra.mxu0 0.0
        %4546 = vmatprep.subr.mxu0 0.0
        %4547 = vmatpush2.msra.mxu0 0.0
        %4548 = vmatprep.subr.mxu0 0.0
        %4549 = vmatpush2.msra.mxu0 0.0
        %4550 = vmatprep.subr.mxu0 0.0
        %4551 = vmatpush2.msra.mxu0 0.0
        %4552 = vmatprep.subr.mxu0 0.0
        %4553 = vmatpush2.msra.mxu0 0.0
        %4554 = vmatprep.mubr.f32.mxu0 0.0
        %4555 = vmatmul.mubr.f32.gmra.mxu0 %v3901
        %v4556 = vpop.f32.mrf.mxu0
        %v4557 = vadd.f32 %v3888, %v4556
        %v4558 = vpop.f32.mrf.mxu0
        %v4559 = vadd.f32 %v3888, %v4558
        %4560 = vmatprep.mubr.f32.mxu0 0.0
        %4561 = vmatmul.mubr.f32.gmra.mxu0 %v3904
        %v4562 = vpop.f32.mrf.mxu0
        %v4563 = vadd.f32 %v3893, %v4562
        %v4564 = vpop.f32.mrf.mxu0
        %v4565 = vadd.f32 %v3893, %v4564
        %4566 = vmatprep.mubr.f32.mxu0 0.0
        %4567 = vmatmul.mubr.f32.gmra.mxu0 %v3907
        %v4568 = vpop.f32.mrf.mxu0
        %v4569 = vadd.f32 %v3898, %v4568
        %v4570 = vpop.f32.mrf.mxu0
        %v4571 = vadd.f32 %v3898, %v4570
        %4572 = vdwg.mxu0
        %v4573 = vrot.slane %v3976, 4
        %v4574 = vmax.f32 %v3976, %v4573
        %v4575 = vrot.slane %v4574, 2
        %v4576 = vmax.f32 %v4574, %v4575
        %v4577 = vrot.slane %v4576, 1
        %v4578 = vmax.f32 %v4576, %v4577
        %v4579 = vrot.slane %v3978, 4
        %v4580 = vmax.f32 %v3978, %v4579
        %v4581 = vrot.slane %v4580, 2
        %v4582 = vmax.f32 %v4580, %v4581
        %v4583 = vrot.slane %v4582, 1
        %v4584 = vmax.f32 %v4582, %v4583
        %v4585 = vrot.slane %v4059, 4
        %v4586 = vmax.f32 %v4059, %v4585
        %v4587 = vrot.slane %v4586, 2
        %v4588 = vmax.f32 %v4586, %v4587
        %v4589 = vrot.slane %v4588, 1
        %v4590 = vmax.f32 %v4588, %v4589
        %v4591 = vrot.slane %v4061, 4
        %v4592 = vmax.f32 %v4061, %v4591
        %v4593 = vrot.slane %v4592, 2
        %v4594 = vmax.f32 %v4592, %v4593
        %v4595 = vrot.slane %v4594, 1
        %v4596 = vmax.f32 %v4594, %v4595
        %v4597 = vrot.slane %v4142, 4
        %v4598 = vmax.f32 %v4142, %v4597
        %v4599 = vrot.slane %v4598, 2
        %v4600 = vmax.f32 %v4598, %v4599
        %v4601 = vrot.slane %v4600, 1
        %v4602 = vmax.f32 %v4600, %v4601
        %v4603 = vrot.slane %v4144, 4
        %v4604 = vmax.f32 %v4144, %v4603
        %v4605 = vrot.slane %v4604, 2
        %v4606 = vmax.f32 %v4604, %v4605
        %v4607 = vrot.slane %v4606, 1
        %v4608 = vmax.f32 %v4606, %v4607
        %v4609 = vrot.slane %v4225, 4
        %v4610 = vmax.f32 %v4225, %v4609
        %v4611 = vrot.slane %v4610, 2
        %v4612 = vmax.f32 %v4610, %v4611
        %v4613 = vrot.slane %v4612, 1
        %v4614 = vmax.f32 %v4612, %v4613
        %v4615 = vrot.slane %v4227, 4
        %v4616 = vmax.f32 %v4227, %v4615
        %v4617 = vrot.slane %v4616, 2
        %v4618 = vmax.f32 %v4616, %v4617
        %v4619 = vrot.slane %v4618, 1
        %v4620 = vmax.f32 %v4618, %v4619
        %v4621 = vrot.slane %v4308, 4
        %v4622 = vmax.f32 %v4308, %v4621
        %v4623 = vrot.slane %v4622, 2
        %v4624 = vmax.f32 %v4622, %v4623
        %v4625 = vrot.slane %v4624, 1
        %v4626 = vmax.f32 %v4624, %v4625
        %v4627 = vrot.slane %v4310, 4
        %v4628 = vmax.f32 %v4310, %v4627
        %v4629 = vrot.slane %v4628, 2
        %v4630 = vmax.f32 %v4628, %v4629
        %v4631 = vrot.slane %v4630, 1
        %v4632 = vmax.f32 %v4630, %v4631
        %v4633 = vrot.slane %v4391, 4
        %v4634 = vmax.f32 %v4391, %v4633
        %v4635 = vrot.slane %v4634, 2
        %v4636 = vmax.f32 %v4634, %v4635
        %v4637 = vrot.slane %v4636, 1
        %v4638 = vmax.f32 %v4636, %v4637
        %v4639 = vrot.slane %v4393, 4
        %v4640 = vmax.f32 %v4393, %v4639
        %v4641 = vrot.slane %v4640, 2
        %v4642 = vmax.f32 %v4640, %v4641
        %v4643 = vrot.slane %v4642, 1
        %v4644 = vmax.f32 %v4642, %v4643
        %v4645 = vrot.slane %v4474, 4
        %v4646 = vmax.f32 %v4474, %v4645
        %v4647 = vrot.slane %v4646, 2
        %v4648 = vmax.f32 %v4646, %v4647
        %v4649 = vrot.slane %v4648, 1
        %v4650 = vmax.f32 %v4648, %v4649
        %v4651 = vrot.slane %v4476, 4
        %v4652 = vmax.f32 %v4476, %v4651
        %v4653 = vrot.slane %v4652, 2
        %v4654 = vmax.f32 %v4652, %v4653
        %v4655 = vrot.slane %v4654, 1
        %v4656 = vmax.f32 %v4654, %v4655
        %v4657 = vrot.slane %v4557, 4
        %v4658 = vmax.f32 %v4557, %v4657
        %v4659 = vrot.slane %v4658, 2
        %v4660 = vmax.f32 %v4658, %v4659
        %v4661 = vrot.slane %v4660, 1
        %v4662 = vmax.f32 %v4660, %v4661
        %v4663 = vrot.slane %v4559, 4
        %v4664 = vmax.f32 %v4559, %v4663
        %v4665 = vrot.slane %v4664, 2
        %v4666 = vmax.f32 %v4664, %v4665
        %v4667 = vrot.slane %v4666, 1
        %v4668 = vmax.f32 %v4666, %v4667
        %v4669 = vsub.f32 %v3976, %v4578
        %v4670 = vsub.f32 %v3978, %v4584
        %v4671 = vsub.f32 %v4059, %v4590
        %v4672 = vsub.f32 %v4061, %v4596
        %v4673 = vsub.f32 %v4142, %v4602
        %v4674 = vsub.f32 %v4144, %v4608
        %v4675 = vsub.f32 %v4225, %v4614
        %v4676 = vsub.f32 %v4227, %v4620
        %v4677 = vsub.f32 %v4308, %v4626
        %v4678 = vsub.f32 %v4310, %v4632
        %v4679 = vsub.f32 %v4391, %v4638
        %v4680 = vsub.f32 %v4393, %v4644
        %v4681 = vsub.f32 %v4474, %v4650
        %v4682 = vsub.f32 %v4476, %v4656
        %v4683 = vsub.f32 %v4557, %v4662
        %v4684 = vsub.f32 %v4559, %v4668
        %v4685 = vmul.f32 %v4669, 1.442695
        %v4686 = vpow.pop %v4685
        %v4687 = vmul.f32 %v4670, 1.442695
        %v4688 = vpow.pop %v4687
        %v4689 = vmul.f32 %v4671, 1.442695
        %v4690 = vpow.pop %v4689
        %v4691 = vmul.f32 %v4672, 1.442695
        %v4692 = vpow.pop %v4691
        %v4693 = vmul.f32 %v4673, 1.442695
        %v4694 = vpow.pop %v4693
        %v4695 = vmul.f32 %v4674, 1.442695
        %v4696 = vpow.pop %v4695
        %v4697 = vmul.f32 %v4675, 1.442695
        %v4698 = vpow.pop %v4697
        %v4699 = vmul.f32 %v4676, 1.442695
        %v4700 = vpow.pop %v4699
        %v4701 = vmul.f32 %v4677, 1.442695
        %v4702 = vpow.pop %v4701
        %v4703 = vmul.f32 %v4678, 1.442695
        %v4704 = vpow.pop %v4703
        %v4705 = vmul.f32 %v4679, 1.442695
        %v4706 = vpow.pop %v4705
        %v4707 = vmul.f32 %v4680, 1.442695
        %v4708 = vpow.pop %v4707
        %v4709 = vmul.f32 %v4681, 1.442695
        %v4710 = vpow.pop %v4709
        %v4711 = vmul.f32 %v4682, 1.442695
        %v4712 = vpow.pop %v4711
        %v4713 = vmul.f32 %v4683, 1.442695
        %v4714 = vpow.pop %v4713
        %v4715 = vmul.f32 %v4684, 1.442695
        %v4716 = vpow.pop %v4715
        %v4717 = vrot.slane %v4686, 4
        %v4718 = vadd.f32 %v4686, %v4717
        %v4719 = vrot.slane %v4718, 2
        %v4720 = vadd.f32 %v4718, %v4719
        %v4721 = vrot.slane %v4720, 1
        %v4722 = vadd.f32 %v4720, %v4721
        %v4723 = vrot.slane %v4688, 4
        %v4724 = vadd.f32 %v4688, %v4723
        %v4725 = vrot.slane %v4724, 2
        %v4726 = vadd.f32 %v4724, %v4725
        %v4727 = vrot.slane %v4726, 1
        %v4728 = vadd.f32 %v4726, %v4727
        %v4729 = vrot.slane %v4690, 4
        %v4730 = vadd.f32 %v4690, %v4729
        %v4731 = vrot.slane %v4730, 2
        %v4732 = vadd.f32 %v4730, %v4731
        %v4733 = vrot.slane %v4732, 1
        %v4734 = vadd.f32 %v4732, %v4733
        %v4735 = vrot.slane %v4692, 4
        %v4736 = vadd.f32 %v4692, %v4735
        %v4737 = vrot.slane %v4736, 2
        %v4738 = vadd.f32 %v4736, %v4737
        %v4739 = vrot.slane %v4738, 1
        %v4740 = vadd.f32 %v4738, %v4739
        %v4741 = vrot.slane %v4694, 4
        %v4742 = vadd.f32 %v4694, %v4741
        %v4743 = vrot.slane %v4742, 2
        %v4744 = vadd.f32 %v4742, %v4743
        %v4745 = vrot.slane %v4744, 1
        %v4746 = vadd.f32 %v4744, %v4745
        %v4747 = vrot.slane %v4696, 4
        %v4748 = vadd.f32 %v4696, %v4747
        %v4749 = vrot.slane %v4748, 2
        %v4750 = vadd.f32 %v4748, %v4749
        %v4751 = vrot.slane %v4750, 1
        %v4752 = vadd.f32 %v4750, %v4751
        %v4753 = vrot.slane %v4698, 4
        %v4754 = vadd.f32 %v4698, %v4753
        %v4755 = vrot.slane %v4754, 2
        %v4756 = vadd.f32 %v4754, %v4755
        %v4757 = vrot.slane %v4756, 1
        %v4758 = vadd.f32 %v4756, %v4757
        %v4759 = vrot.slane %v4700, 4
        %v4760 = vadd.f32 %v4700, %v4759
        %v4761 = vrot.slane %v4760, 2
        %v4762 = vadd.f32 %v4760, %v4761
        %v4763 = vrot.slane %v4762, 1
        %v4764 = vadd.f32 %v4762, %v4763
        %v4765 = vrot.slane %v4702, 4
        %v4766 = vadd.f32 %v4702, %v4765
        %v4767 = vrot.slane %v4766, 2
        %v4768 = vadd.f32 %v4766, %v4767
        %v4769 = vrot.slane %v4768, 1
        %v4770 = vadd.f32 %v4768, %v4769
        %v4771 = vrot.slane %v4704, 4
        %v4772 = vadd.f32 %v4704, %v4771
        %v4773 = vrot.slane %v4772, 2
        %v4774 = vadd.f32 %v4772, %v4773
        %v4775 = vrot.slane %v4774, 1
        %v4776 = vadd.f32 %v4774, %v4775
        %v4777 = vrot.slane %v4706, 4
        %v4778 = vadd.f32 %v4706, %v4777
        %v4779 = vrot.slane %v4778, 2
        %v4780 = vadd.f32 %v4778, %v4779
        %v4781 = vrot.slane %v4780, 1
        %v4782 = vadd.f32 %v4780, %v4781
        %v4783 = vrot.slane %v4708, 4
        %v4784 = vadd.f32 %v4708, %v4783
        %v4785 = vrot.slane %v4784, 2
        %v4786 = vadd.f32 %v4784, %v4785
        %v4787 = vrot.slane %v4786, 1
        %v4788 = vadd.f32 %v4786, %v4787
        %v4789 = vrot.slane %v4710, 4
        %v4790 = vadd.f32 %v4710, %v4789
        %v4791 = vrot.slane %v4790, 2
        %v4792 = vadd.f32 %v4790, %v4791
        %v4793 = vrot.slane %v4792, 1
        %v4794 = vadd.f32 %v4792, %v4793
        %v4795 = vrot.slane %v4712, 4
        %v4796 = vadd.f32 %v4712, %v4795
        %v4797 = vrot.slane %v4796, 2
        %v4798 = vadd.f32 %v4796, %v4797
        %v4799 = vrot.slane %v4798, 1
        %v4800 = vadd.f32 %v4798, %v4799
        %v4801 = vrot.slane %v4714, 4
        %v4802 = vadd.f32 %v4714, %v4801
        %v4803 = vrot.slane %v4802, 2
        %v4804 = vadd.f32 %v4802, %v4803
        %v4805 = vrot.slane %v4804, 1
        %v4806 = vadd.f32 %v4804, %v4805
        %v4807 = vrot.slane %v4716, 4
        %v4808 = vadd.f32 %v4716, %v4807
        %v4809 = vrot.slane %v4808, 2
        %v4810 = vadd.f32 %v4808, %v4809
        %v4811 = vrot.slane %v4810, 1
        %v4812 = vadd.f32 %v4810, %v4811
        %v4813 = vrcp.pop %v4722
        %v4814 = vmul.f32 1.0, %v4813
        %v4815 = vrcp.pop %v4728
        %v4816 = vmul.f32 1.0, %v4815
        %v4817 = vrcp.pop %v4734
        %v4818 = vmul.f32 1.0, %v4817
        %v4819 = vrcp.pop %v4740
        %v4820 = vmul.f32 1.0, %v4819
        %v4821 = vrcp.pop %v4746
        %v4822 = vmul.f32 1.0, %v4821
        %v4823 = vrcp.pop %v4752
        %v4824 = vmul.f32 1.0, %v4823
        %v4825 = vrcp.pop %v4758
        %v4826 = vmul.f32 1.0, %v4825
        %v4827 = vrcp.pop %v4764
        %v4828 = vmul.f32 1.0, %v4827
        %v4829 = vrcp.pop %v4770
        %v4830 = vmul.f32 1.0, %v4829
        %v4831 = vrcp.pop %v4776
        %v4832 = vmul.f32 1.0, %v4831
        %v4833 = vrcp.pop %v4782
        %v4834 = vmul.f32 1.0, %v4833
        %v4835 = vrcp.pop %v4788
        %v4836 = vmul.f32 1.0, %v4835
        %v4837 = vrcp.pop %v4794
        %v4838 = vmul.f32 1.0, %v4837
        %v4839 = vrcp.pop %v4800
        %v4840 = vmul.f32 1.0, %v4839
        %v4841 = vrcp.pop %v4806
        %v4842 = vmul.f32 1.0, %v4841
        %v4843 = vrcp.pop %v4812
        %v4844 = vmul.f32 1.0, %v4843
        %v4845 = vmul.f32 %v4686, %v4814
        %v4846 = vmul.f32 %v4688, %v4816
        %v4847 = vmul.f32 %v4690, %v4818
        %v4848 = vmul.f32 %v4692, %v4820
        %v4849 = vmul.f32 %v4694, %v4822
        %v4850 = vmul.f32 %v4696, %v4824
        %v4851 = vmul.f32 %v4698, %v4826
        %v4852 = vmul.f32 %v4700, %v4828
        %v4853 = vmul.f32 %v4702, %v4830
        %v4854 = vmul.f32 %v4704, %v4832
        %v4855 = vmul.f32 %v4706, %v4834
        %v4856 = vmul.f32 %v4708, %v4836
        %v4857 = vmul.f32 %v4710, %v4838
        %v4858 = vmul.f32 %v4712, %v4840
        %v4859 = vmul.f32 %v4714, %v4842
        %v4860 = vmul.f32 %v4716, %v4844
        %v4861 = vmul.f32 %v3982, %v3982
        %v4862 = vmul.f32 %v3984, %v3984
        %v4863 = vmul.f32 %v4065, %v4065
        %v4864 = vmul.f32 %v4067, %v4067
        %v4865 = vmul.f32 %v4148, %v4148
        %v4866 = vmul.f32 %v4150, %v4150
        %v4867 = vmul.f32 %v4231, %v4231
        %v4868 = vmul.f32 %v4233, %v4233
        %v4869 = vmul.f32 %v4314, %v4314
        %v4870 = vmul.f32 %v4316, %v4316
        %v4871 = vmul.f32 %v4397, %v4397
        %v4872 = vmul.f32 %v4399, %v4399
        %v4873 = vmul.f32 %v4480, %v4480
        %v4874 = vmul.f32 %v4482, %v4482
        %v4875 = vmul.f32 %v4563, %v4563
        %v4876 = vmul.f32 %v4565, %v4565
        %v4877 = vmul.f32 %v3988, %v3988
        %v4878 = vmul.f32 %v3990, %v3990
        %v4879 = vmul.f32 %v4071, %v4071
        %v4880 = vmul.f32 %v4073, %v4073
        %v4881 = vmul.f32 %v4154, %v4154
        %v4882 = vmul.f32 %v4156, %v4156
        %v4883 = vmul.f32 %v4237, %v4237
        %v4884 = vmul.f32 %v4239, %v4239
        %v4885 = vmul.f32 %v4320, %v4320
        %v4886 = vmul.f32 %v4322, %v4322
        %v4887 = vmul.f32 %v4403, %v4403
        %v4888 = vmul.f32 %v4405, %v4405
        %v4889 = vmul.f32 %v4486, %v4486
        %v4890 = vmul.f32 %v4488, %v4488
        %v4891 = vmul.f32 %v4569, %v4569
        %v4892 = vmul.f32 %v4571, %v4571
        %v4893 = vadd.f32 %v4861, %v4877
        %v4894 = vadd.f32 %v4862, %v4878
        %v4895 = vadd.f32 %v4863, %v4879
        %v4896 = vadd.f32 %v4864, %v4880
        %v4897 = vadd.f32 %v4865, %v4881
        %v4898 = vadd.f32 %v4866, %v4882
        %v4899 = vadd.f32 %v4867, %v4883
        %v4900 = vadd.f32 %v4868, %v4884
        %v4901 = vadd.f32 %v4869, %v4885
        %v4902 = vadd.f32 %v4870, %v4886
        %v4903 = vadd.f32 %v4871, %v4887
        %v4904 = vadd.f32 %v4872, %v4888
        %v4905 = vadd.f32 %v4873, %v4889
        %v4906 = vadd.f32 %v4874, %v4890
        %v4907 = vadd.f32 %v4875, %v4891
        %v4908 = vadd.f32 %v4876, %v4892
        %v4909 = vrsqrt.pop %v4893
        %v4910 = vmul.f32 %v4893, %v4909
        %vm4911 = vcmp.eq.f32.partialorder %v4893, inf
        %v4912 = vsel %vm4911, %v4893, %v4910
        %vm4913 = vcmp.eq.f32.partialorder %v4893, 0.0
        %v4914 = vand.u32 %v4893, 2147483648
        %v4915 = vsel %vm4913, %v4914, %v4912
        %v4916 = vrsqrt.pop %v4894
        %v4917 = vmul.f32 %v4894, %v4916
        %vm4918 = vcmp.eq.f32.partialorder %v4894, inf
        %v4919 = vsel %vm4918, %v4894, %v4917
        %vm4920 = vcmp.eq.f32.partialorder %v4894, 0.0
        %v4921 = vand.u32 %v4894, 2147483648
        %v4922 = vsel %vm4920, %v4921, %v4919
        %v4923 = vrsqrt.pop %v4895
        %v4924 = vmul.f32 %v4895, %v4923
        %vm4925 = vcmp.eq.f32.partialorder %v4895, inf
        %v4926 = vsel %vm4925, %v4895, %v4924
        %vm4927 = vcmp.eq.f32.partialorder %v4895, 0.0
        %v4928 = vand.u32 %v4895, 2147483648
        %v4929 = vsel %vm4927, %v4928, %v4926
        %v4930 = vrsqrt.pop %v4896
        %v4931 = vmul.f32 %v4896, %v4930
        %vm4932 = vcmp.eq.f32.partialorder %v4896, inf
        %v4933 = vsel %vm4932, %v4896, %v4931
        %vm4934 = vcmp.eq.f32.partialorder %v4896, 0.0
        %v4935 = vand.u32 %v4896, 2147483648
        %v4936 = vsel %vm4934, %v4935, %v4933
        %v4937 = vrsqrt.pop %v4897
        %v4938 = vmul.f32 %v4897, %v4937
        %vm4939 = vcmp.eq.f32.partialorder %v4897, inf
        %v4940 = vsel %vm4939, %v4897, %v4938
        %vm4941 = vcmp.eq.f32.partialorder %v4897, 0.0
        %v4942 = vand.u32 %v4897, 2147483648
        %v4943 = vsel %vm4941, %v4942, %v4940
        %v4944 = vrsqrt.pop %v4898
        %v4945 = vmul.f32 %v4898, %v4944
        %vm4946 = vcmp.eq.f32.partialorder %v4898, inf
        %v4947 = vsel %vm4946, %v4898, %v4945
        %vm4948 = vcmp.eq.f32.partialorder %v4898, 0.0
        %v4949 = vand.u32 %v4898, 2147483648
        %v4950 = vsel %vm4948, %v4949, %v4947
        %v4951 = vrsqrt.pop %v4899
        %v4952 = vmul.f32 %v4899, %v4951
        %vm4953 = vcmp.eq.f32.partialorder %v4899, inf
        %v4954 = vsel %vm4953, %v4899, %v4952
        %vm4955 = vcmp.eq.f32.partialorder %v4899, 0.0
        %v4956 = vand.u32 %v4899, 2147483648
        %v4957 = vsel %vm4955, %v4956, %v4954
        %v4958 = vrsqrt.pop %v4900
        %v4959 = vmul.f32 %v4900, %v4958
        %vm4960 = vcmp.eq.f32.partialorder %v4900, inf
        %v4961 = vsel %vm4960, %v4900, %v4959
        %vm4962 = vcmp.eq.f32.partialorder %v4900, 0.0
        %v4963 = vand.u32 %v4900, 2147483648
        %v4964 = vsel %vm4962, %v4963, %v4961
        %v4965 = vrsqrt.pop %v4901
        %v4966 = vmul.f32 %v4901, %v4965
        %vm4967 = vcmp.eq.f32.partialorder %v4901, inf
        %v4968 = vsel %vm4967, %v4901, %v4966
        %vm4969 = vcmp.eq.f32.partialorder %v4901, 0.0
        %v4970 = vand.u32 %v4901, 2147483648
        %v4971 = vsel %vm4969, %v4970, %v4968
        %v4972 = vrsqrt.pop %v4902
        %v4973 = vmul.f32 %v4902, %v4972
        %vm4974 = vcmp.eq.f32.partialorder %v4902, inf
        %v4975 = vsel %vm4974, %v4902, %v4973
        %vm4976 = vcmp.eq.f32.partialorder %v4902, 0.0
        %v4977 = vand.u32 %v4902, 2147483648
        %v4978 = vsel %vm4976, %v4977, %v4975
        %v4979 = vrsqrt.pop %v4903
        %v4980 = vmul.f32 %v4903, %v4979
        %vm4981 = vcmp.eq.f32.partialorder %v4903, inf
        %v4982 = vsel %vm4981, %v4903, %v4980
        %vm4983 = vcmp.eq.f32.partialorder %v4903, 0.0
        %v4984 = vand.u32 %v4903, 2147483648
        %v4985 = vsel %vm4983, %v4984, %v4982
        %v4986 = vrsqrt.pop %v4904
        %v4987 = vmul.f32 %v4904, %v4986
        %vm4988 = vcmp.eq.f32.partialorder %v4904, inf
        %v4989 = vsel %vm4988, %v4904, %v4987
        %vm4990 = vcmp.eq.f32.partialorder %v4904, 0.0
        %v4991 = vand.u32 %v4904, 2147483648
        %v4992 = vsel %vm4990, %v4991, %v4989
        %v4993 = vrsqrt.pop %v4905
        %v4994 = vmul.f32 %v4905, %v4993
        %vm4995 = vcmp.eq.f32.partialorder %v4905, inf
        %v4996 = vsel %vm4995, %v4905, %v4994
        %vm4997 = vcmp.eq.f32.partialorder %v4905, 0.0
        %v4998 = vand.u32 %v4905, 2147483648
        %v4999 = vsel %vm4997, %v4998, %v4996
        %v5000 = vrsqrt.pop %v4906
        %v5001 = vmul.f32 %v4906, %v5000
        %vm5002 = vcmp.eq.f32.partialorder %v4906, inf
        %v5003 = vsel %vm5002, %v4906, %v5001
        %vm5004 = vcmp.eq.f32.partialorder %v4906, 0.0
        %v5005 = vand.u32 %v4906, 2147483648
        %v5006 = vsel %vm5004, %v5005, %v5003
        %v5007 = vrsqrt.pop %v4907
        %v5008 = vmul.f32 %v4907, %v5007
        %vm5009 = vcmp.eq.f32.partialorder %v4907, inf
        %v5010 = vsel %vm5009, %v4907, %v5008
        %vm5011 = vcmp.eq.f32.partialorder %v4907, 0.0
        %v5012 = vand.u32 %v4907, 2147483648
        %v5013 = vsel %vm5011, %v5012, %v5010
        %v5014 = vrsqrt.pop %v4908
        %v5015 = vmul.f32 %v4908, %v5014
        %vm5016 = vcmp.eq.f32.partialorder %v4908, inf
        %v5017 = vsel %vm5016, %v4908, %v5015
        %vm5018 = vcmp.eq.f32.partialorder %v4908, 0.0
        %v5019 = vand.u32 %v4908, 2147483648
        %v5020 = vsel %vm5018, %v5019, %v5017
        %v5021 = vadd.f32 %v4915, 1.0
        %v5022 = vadd.f32 %v4922, 1.0
        %v5023 = vadd.f32 %v4929, 1.0
        %v5024 = vadd.f32 %v4936, 1.0
        %v5025 = vadd.f32 %v4943, 1.0
        %v5026 = vadd.f32 %v4950, 1.0
        %v5027 = vadd.f32 %v4957, 1.0
        %v5028 = vadd.f32 %v4964, 1.0
        %v5029 = vadd.f32 %v4971, 1.0
        %v5030 = vadd.f32 %v4978, 1.0
        %v5031 = vadd.f32 %v4985, 1.0
        %v5032 = vadd.f32 %v4992, 1.0
        %v5033 = vadd.f32 %v4999, 1.0
        %v5034 = vadd.f32 %v5006, 1.0
        %v5035 = vadd.f32 %v5013, 1.0
        %v5036 = vadd.f32 %v5020, 1.0
        %v5037 = vrcp.pop %v5021
        %v5038 = vrcp.pop %v5022
        %v5039 = vrcp.pop %v5023
        %v5040 = vrcp.pop %v5024
        %v5041 = vrcp.pop %v5025
        %v5042 = vrcp.pop %v5026
        %v5043 = vrcp.pop %v5027
        %v5044 = vrcp.pop %v5028
        %v5045 = vrcp.pop %v5029
        %v5046 = vrcp.pop %v5030
        %v5047 = vrcp.pop %v5031
        %v5048 = vrcp.pop %v5032
        %v5049 = vrcp.pop %v5033
        %v5050 = vrcp.pop %v5034
        %v5051 = vrcp.pop %v5035
        %v5052 = vrcp.pop %v5036
        %v5053 = vmul.f32 %v5021, %v5037
        %v5054 = vmul.f32 %v5022, %v5038
        %v5055 = vmul.f32 %v5023, %v5039
        %v5056 = vmul.f32 %v5024, %v5040
        %v5057 = vmul.f32 %v5025, %v5041
        %v5058 = vmul.f32 %v5026, %v5042
        %v5059 = vmul.f32 %v5027, %v5043
        %v5060 = vmul.f32 %v5028, %v5044
        %v5061 = vmul.f32 %v5029, %v5045
        %v5062 = vmul.f32 %v5030, %v5046
        %v5063 = vmul.f32 %v5031, %v5047
        %v5064 = vmul.f32 %v5032, %v5048
        %v5065 = vmul.f32 %v5033, %v5049
        %v5066 = vmul.f32 %v5034, %v5050
        %v5067 = vmul.f32 %v5035, %v5051
        %v5068 = vmul.f32 %v5036, %v5052
        %v5069 = vsub.f32 2.0, %v5053
        %v5070 = vsub.f32 2.0, %v5054
        %v5071 = vsub.f32 2.0, %v5055
        %v5072 = vsub.f32 2.0, %v5056
        %v5073 = vsub.f32 2.0, %v5057
        %v5074 = vsub.f32 2.0, %v5058
        %v5075 = vsub.f32 2.0, %v5059
        %v5076 = vsub.f32 2.0, %v5060
        %v5077 = vsub.f32 2.0, %v5061
        %v5078 = vsub.f32 2.0, %v5062
        %v5079 = vsub.f32 2.0, %v5063
        %v5080 = vsub.f32 2.0, %v5064
        %v5081 = vsub.f32 2.0, %v5065
        %v5082 = vsub.f32 2.0, %v5066
        %v5083 = vsub.f32 2.0, %v5067
        %v5084 = vsub.f32 2.0, %v5068
        %v5085 = vmul.f32 %v5037, %v5069
        %v5086 = vmul.f32 %v5038, %v5070
        %v5087 = vmul.f32 %v5039, %v5071
        %v5088 = vmul.f32 %v5040, %v5072
        %v5089 = vmul.f32 %v5041, %v5073
        %v5090 = vmul.f32 %v5042, %v5074
        %v5091 = vmul.f32 %v5043, %v5075
        %v5092 = vmul.f32 %v5044, %v5076
        %v5093 = vmul.f32 %v5045, %v5077
        %v5094 = vmul.f32 %v5046, %v5078
        %v5095 = vmul.f32 %v5047, %v5079
        %v5096 = vmul.f32 %v5048, %v5080
        %v5097 = vmul.f32 %v5049, %v5081
        %v5098 = vmul.f32 %v5050, %v5082
        %v5099 = vmul.f32 %v5051, %v5083
        %v5100 = vmul.f32 %v5052, %v5084
        %v5101 = vmul.f32 %v5085, 0.99
        %v5102 = vmul.f32 %v5086, 0.99
        %v5103 = vmul.f32 %v5087, 0.99
        %v5104 = vmul.f32 %v5088, 0.99
        %v5105 = vmul.f32 %v5089, 0.99
        %v5106 = vmul.f32 %v5090, 0.99
        %v5107 = vmul.f32 %v5091, 0.99
        %v5108 = vmul.f32 %v5092, 0.99
        %v5109 = vmul.f32 %v5093, 0.99
        %v5110 = vmul.f32 %v5094, 0.99
        %v5111 = vmul.f32 %v5095, 0.99
        %v5112 = vmul.f32 %v5096, 0.99
        %v5113 = vmul.f32 %v5097, 0.99
        %v5114 = vmul.f32 %v5098, 0.99
        %v5115 = vmul.f32 %v5099, 0.99
        %v5116 = vmul.f32 %v5100, 0.99
        %v5117 = vmul.f32 %v5101, %v3982
        %v5118 = vmul.f32 %v5102, %v3984
        %v5119 = vmul.f32 %v5103, %v4065
        %v5120 = vmul.f32 %v5104, %v4067
        %v5121 = vmul.f32 %v5105, %v4148
        %v5122 = vmul.f32 %v5106, %v4150
        %v5123 = vmul.f32 %v5107, %v4231
        %v5124 = vmul.f32 %v5108, %v4233
        %v5125 = vmul.f32 %v5109, %v4314
        %v5126 = vmul.f32 %v5110, %v4316
        %v5127 = vmul.f32 %v5111, %v4397
        %v5128 = vmul.f32 %v5112, %v4399
        %v5129 = vmul.f32 %v5113, %v4480
        %v5130 = vmul.f32 %v5114, %v4482
        %v5131 = vmul.f32 %v5115, %v4563
        %v5132 = vmul.f32 %v5116, %v4565
        %v5133 = vmul.f32 %v5101, %v3988
        %v5134 = vmul.f32 %v5102, %v3990
        %v5135 = vmul.f32 %v5103, %v4071
        %v5136 = vmul.f32 %v5104, %v4073
        %v5137 = vmul.f32 %v5105, %v4154
        %v5138 = vmul.f32 %v5106, %v4156
        %v5139 = vmul.f32 %v5107, %v4237
        %v5140 = vmul.f32 %v5108, %v4239
        %v5141 = vmul.f32 %v5109, %v4320
        %v5142 = vmul.f32 %v5110, %v4322
        %v5143 = vmul.f32 %v5111, %v4403
        %v5144 = vmul.f32 %v5112, %v4405
        %v5145 = vmul.f32 %v5113, %v4486
        %v5146 = vmul.f32 %v5114, %v4488
        %v5147 = vmul.f32 %v5115, %v4569
        %v5148 = vmul.f32 %v5116, %v4571
        %v5149 = vmul.f32 %v5117, %v5117
        %v5150 = vmul.f32 %v5118, %v5118
        %v5151 = vmul.f32 %v5119, %v5119
        %v5152 = vmul.f32 %v5120, %v5120
        %v5153 = vmul.f32 %v5121, %v5121
        %v5154 = vmul.f32 %v5122, %v5122
        %v5155 = vmul.f32 %v5123, %v5123
        %v5156 = vmul.f32 %v5124, %v5124
        %v5157 = vmul.f32 %v5125, %v5125
        %v5158 = vmul.f32 %v5126, %v5126
        %v5159 = vmul.f32 %v5127, %v5127
        %v5160 = vmul.f32 %v5128, %v5128
        %v5161 = vmul.f32 %v5129, %v5129
        %v5162 = vmul.f32 %v5130, %v5130
        %v5163 = vmul.f32 %v5131, %v5131
        %v5164 = vmul.f32 %v5132, %v5132
        %v5165 = vmul.f32 %v5133, %v5133
        %v5166 = vmul.f32 %v5134, %v5134
        %v5167 = vmul.f32 %v5135, %v5135
        %v5168 = vmul.f32 %v5136, %v5136
        %v5169 = vmul.f32 %v5137, %v5137
        %v5170 = vmul.f32 %v5138, %v5138
        %v5171 = vmul.f32 %v5139, %v5139
        %v5172 = vmul.f32 %v5140, %v5140
        %v5173 = vmul.f32 %v5141, %v5141
        %v5174 = vmul.f32 %v5142, %v5142
        %v5175 = vmul.f32 %v5143, %v5143
        %v5176 = vmul.f32 %v5144, %v5144
        %v5177 = vmul.f32 %v5145, %v5145
        %v5178 = vmul.f32 %v5146, %v5146
        %v5179 = vmul.f32 %v5147, %v5147
        %v5180 = vmul.f32 %v5148, %v5148
        %v5181 = vadd.f32 %v5149, %v5165
        %v5182 = vadd.f32 %v5150, %v5166
        %v5183 = vadd.f32 %v5151, %v5167
        %v5184 = vadd.f32 %v5152, %v5168
        %v5185 = vadd.f32 %v5153, %v5169
        %v5186 = vadd.f32 %v5154, %v5170
        %v5187 = vadd.f32 %v5155, %v5171
        %v5188 = vadd.f32 %v5156, %v5172
        %v5189 = vadd.f32 %v5157, %v5173
        %v5190 = vadd.f32 %v5158, %v5174
        %v5191 = vadd.f32 %v5159, %v5175
        %v5192 = vadd.f32 %v5160, %v5176
        %v5193 = vadd.f32 %v5161, %v5177
        %v5194 = vadd.f32 %v5162, %v5178
        %v5195 = vadd.f32 %v5163, %v5179
        %v5196 = vadd.f32 %v5164, %v5180
        %v5197 = vsub.f32 1.0, %v5181
        %v5198 = vsub.f32 1.0, %v5182
        %v5199 = vsub.f32 1.0, %v5183
        %v5200 = vsub.f32 1.0, %v5184
        %v5201 = vsub.f32 1.0, %v5185
        %v5202 = vsub.f32 1.0, %v5186
        %v5203 = vsub.f32 1.0, %v5187
        %v5204 = vsub.f32 1.0, %v5188
        %v5205 = vsub.f32 1.0, %v5189
        %v5206 = vsub.f32 1.0, %v5190
        %v5207 = vsub.f32 1.0, %v5191
        %v5208 = vsub.f32 1.0, %v5192
        %v5209 = vsub.f32 1.0, %v5193
        %v5210 = vsub.f32 1.0, %v5194
        %v5211 = vsub.f32 1.0, %v5195
        %v5212 = vsub.f32 1.0, %v5196
        %v5213 = vsub.f32 1.0, %v5117
        %v5214 = vsub.f32 1.0, %v5118
        %v5215 = vsub.f32 1.0, %v5119
        %v5216 = vsub.f32 1.0, %v5120
        %v5217 = vsub.f32 1.0, %v5121
        %v5218 = vsub.f32 1.0, %v5122
        %v5219 = vsub.f32 1.0, %v5123
        %v5220 = vsub.f32 1.0, %v5124
        %v5221 = vsub.f32 1.0, %v5125
        %v5222 = vsub.f32 1.0, %v5126
        %v5223 = vsub.f32 1.0, %v5127
        %v5224 = vsub.f32 1.0, %v5128
        %v5225 = vsub.f32 1.0, %v5129
        %v5226 = vsub.f32 1.0, %v5130
        %v5227 = vsub.f32 1.0, %v5131
        %v5228 = vsub.f32 1.0, %v5132
        %v5229 = vsub.f32 0.0, %v5133
        %v5230 = vsub.f32 0.0, %v5134
        %v5231 = vsub.f32 0.0, %v5135
        %v5232 = vsub.f32 0.0, %v5136
        %v5233 = vsub.f32 0.0, %v5137
        %v5234 = vsub.f32 0.0, %v5138
        %v5235 = vsub.f32 0.0, %v5139
        %v5236 = vsub.f32 0.0, %v5140
        %v5237 = vsub.f32 0.0, %v5141
        %v5238 = vsub.f32 0.0, %v5142
        %v5239 = vsub.f32 0.0, %v5143
        %v5240 = vsub.f32 0.0, %v5144
        %v5241 = vsub.f32 0.0, %v5145
        %v5242 = vsub.f32 0.0, %v5146
        %v5243 = vsub.f32 0.0, %v5147
        %v5244 = vsub.f32 0.0, %v5148
        %v5245 = vmul.f32 %v5213, %v5213
        %v5246 = vmul.f32 %v5214, %v5214
        %v5247 = vmul.f32 %v5215, %v5215
        %v5248 = vmul.f32 %v5216, %v5216
        %v5249 = vmul.f32 %v5217, %v5217
        %v5250 = vmul.f32 %v5218, %v5218
        %v5251 = vmul.f32 %v5219, %v5219
        %v5252 = vmul.f32 %v5220, %v5220
        %v5253 = vmul.f32 %v5221, %v5221
        %v5254 = vmul.f32 %v5222, %v5222
        %v5255 = vmul.f32 %v5223, %v5223
        %v5256 = vmul.f32 %v5224, %v5224
        %v5257 = vmul.f32 %v5225, %v5225
        %v5258 = vmul.f32 %v5226, %v5226
        %v5259 = vmul.f32 %v5227, %v5227
        %v5260 = vmul.f32 %v5228, %v5228
        %v5261 = vmul.f32 %v5229, %v5229
        %v5262 = vmul.f32 %v5230, %v5230
        %v5263 = vmul.f32 %v5231, %v5231
        %v5264 = vmul.f32 %v5232, %v5232
        %v5265 = vmul.f32 %v5233, %v5233
        %v5266 = vmul.f32 %v5234, %v5234
        %v5267 = vmul.f32 %v5235, %v5235
        %v5268 = vmul.f32 %v5236, %v5236
        %v5269 = vmul.f32 %v5237, %v5237
        %v5270 = vmul.f32 %v5238, %v5238
        %v5271 = vmul.f32 %v5239, %v5239
        %v5272 = vmul.f32 %v5240, %v5240
        %v5273 = vmul.f32 %v5241, %v5241
        %v5274 = vmul.f32 %v5242, %v5242
        %v5275 = vmul.f32 %v5243, %v5243
        %v5276 = vmul.f32 %v5244, %v5244
        %v5277 = vadd.f32 %v5245, %v5261
        %v5278 = vadd.f32 %v5246, %v5262
        %v5279 = vadd.f32 %v5247, %v5263
        %v5280 = vadd.f32 %v5248, %v5264
        %v5281 = vadd.f32 %v5249, %v5265
        %v5282 = vadd.f32 %v5250, %v5266
        %v5283 = vadd.f32 %v5251, %v5267
        %v5284 = vadd.f32 %v5252, %v5268
        %v5285 = vadd.f32 %v5253, %v5269
        %v5286 = vadd.f32 %v5254, %v5270
        %v5287 = vadd.f32 %v5255, %v5271
        %v5288 = vadd.f32 %v5256, %v5272
        %v5289 = vadd.f32 %v5257, %v5273
        %v5290 = vadd.f32 %v5258, %v5274
        %v5291 = vadd.f32 %v5259, %v5275
        %v5292 = vadd.f32 %v5260, %v5276
        %v5293 = vrcp.pop %v5277
        %v5294 = vrcp.pop %v5278
        %v5295 = vrcp.pop %v5279
        %v5296 = vrcp.pop %v5280
        %v5297 = vrcp.pop %v5281
        %v5298 = vrcp.pop %v5282
        %v5299 = vrcp.pop %v5283
        %v5300 = vrcp.pop %v5284
        %v5301 = vrcp.pop %v5285
        %v5302 = vrcp.pop %v5286
        %v5303 = vrcp.pop %v5287
        %v5304 = vrcp.pop %v5288
        %v5305 = vrcp.pop %v5289
        %v5306 = vrcp.pop %v5290
        %v5307 = vrcp.pop %v5291
        %v5308 = vrcp.pop %v5292
        %v5309 = vmul.f32 %v5277, %v5293
        %v5310 = vmul.f32 %v5278, %v5294
        %v5311 = vmul.f32 %v5279, %v5295
        %v5312 = vmul.f32 %v5280, %v5296
        %v5313 = vmul.f32 %v5281, %v5297
        %v5314 = vmul.f32 %v5282, %v5298
        %v5315 = vmul.f32 %v5283, %v5299
        %v5316 = vmul.f32 %v5284, %v5300
        %v5317 = vmul.f32 %v5285, %v5301
        %v5318 = vmul.f32 %v5286, %v5302
        %v5319 = vmul.f32 %v5287, %v5303
        %v5320 = vmul.f32 %v5288, %v5304
        %v5321 = vmul.f32 %v5289, %v5305
        %v5322 = vmul.f32 %v5290, %v5306
        %v5323 = vmul.f32 %v5291, %v5307
        %v5324 = vmul.f32 %v5292, %v5308
        %v5325 = vsub.f32 2.0, %v5309
        %v5326 = vsub.f32 2.0, %v5310
        %v5327 = vsub.f32 2.0, %v5311
        %v5328 = vsub.f32 2.0, %v5312
        %v5329 = vsub.f32 2.0, %v5313
        %v5330 = vsub.f32 2.0, %v5314
        %v5331 = vsub.f32 2.0, %v5315
        %v5332 = vsub.f32 2.0, %v5316
        %v5333 = vsub.f32 2.0, %v5317
        %v5334 = vsub.f32 2.0, %v5318
        %v5335 = vsub.f32 2.0, %v5319
        %v5336 = vsub.f32 2.0, %v5320
        %v5337 = vsub.f32 2.0, %v5321
        %v5338 = vsub.f32 2.0, %v5322
        %v5339 = vsub.f32 2.0, %v5323
        %v5340 = vsub.f32 2.0, %v5324
        %v5341 = vmul.f32 %v5293, %v5325
        %v5342 = vmul.f32 %v5294, %v5326
        %v5343 = vmul.f32 %v5295, %v5327
        %v5344 = vmul.f32 %v5296, %v5328
        %v5345 = vmul.f32 %v5297, %v5329
        %v5346 = vmul.f32 %v5298, %v5330
        %v5347 = vmul.f32 %v5299, %v5331
        %v5348 = vmul.f32 %v5300, %v5332
        %v5349 = vmul.f32 %v5301, %v5333
        %v5350 = vmul.f32 %v5302, %v5334
        %v5351 = vmul.f32 %v5303, %v5335
        %v5352 = vmul.f32 %v5304, %v5336
        %v5353 = vmul.f32 %v5305, %v5337
        %v5354 = vmul.f32 %v5306, %v5338
        %v5355 = vmul.f32 %v5307, %v5339
        %v5356 = vmul.f32 %v5308, %v5340
        %v5357 = vmul.f32 %v5197, %v5341
        %v5358 = vmul.f32 %v5198, %v5342
        %v5359 = vmul.f32 %v5199, %v5343
        %v5360 = vmul.f32 %v5200, %v5344
        %v5361 = vmul.f32 %v5201, %v5345
        %v5362 = vmul.f32 %v5202, %v5346
        %v5363 = vmul.f32 %v5203, %v5347
        %v5364 = vmul.f32 %v5204, %v5348
        %v5365 = vmul.f32 %v5205, %v5349
        %v5366 = vmul.f32 %v5206, %v5350
        %v5367 = vmul.f32 %v5207, %v5351
        %v5368 = vmul.f32 %v5208, %v5352
        %v5369 = vmul.f32 %v5209, %v5353
        %v5370 = vmul.f32 %v5210, %v5354
        %v5371 = vmul.f32 %v5211, %v5355
        %v5372 = vmul.f32 %v5212, %v5356
        %v5373 = vmul.f32 %v5357, %v5213
        %v5374 = vmul.f32 %v5358, %v5214
        %v5375 = vmul.f32 %v5359, %v5215
        %v5376 = vmul.f32 %v5360, %v5216
        %v5377 = vmul.f32 %v5361, %v5217
        %v5378 = vmul.f32 %v5362, %v5218
        %v5379 = vmul.f32 %v5363, %v5219
        %v5380 = vmul.f32 %v5364, %v5220
        %v5381 = vmul.f32 %v5365, %v5221
        %v5382 = vmul.f32 %v5366, %v5222
        %v5383 = vmul.f32 %v5367, %v5223
        %v5384 = vmul.f32 %v5368, %v5224
        %v5385 = vmul.f32 %v5369, %v5225
        %v5386 = vmul.f32 %v5370, %v5226
        %v5387 = vmul.f32 %v5371, %v5227
        %v5388 = vmul.f32 %v5372, %v5228
        %v5389 = vsub.f32 %v5373, %v5117
        %v5390 = vsub.f32 %v5374, %v5118
        %v5391 = vsub.f32 %v5375, %v5119
        %v5392 = vsub.f32 %v5376, %v5120
        %v5393 = vsub.f32 %v5377, %v5121
        %v5394 = vsub.f32 %v5378, %v5122
        %v5395 = vsub.f32 %v5379, %v5123
        %v5396 = vsub.f32 %v5380, %v5124
        %v5397 = vsub.f32 %v5381, %v5125
        %v5398 = vsub.f32 %v5382, %v5126
        %v5399 = vsub.f32 %v5383, %v5127
        %v5400 = vsub.f32 %v5384, %v5128
        %v5401 = vsub.f32 %v5385, %v5129
        %v5402 = vsub.f32 %v5386, %v5130
        %v5403 = vsub.f32 %v5387, %v5131
        %v5404 = vsub.f32 %v5388, %v5132
        %v5405 = vmul.f32 %v5357, %v5229
        %v5406 = vmul.f32 %v5358, %v5230
        %v5407 = vmul.f32 %v5359, %v5231
        %v5408 = vmul.f32 %v5360, %v5232
        %v5409 = vmul.f32 %v5361, %v5233
        %v5410 = vmul.f32 %v5362, %v5234
        %v5411 = vmul.f32 %v5363, %v5235
        %v5412 = vmul.f32 %v5364, %v5236
        %v5413 = vmul.f32 %v5365, %v5237
        %v5414 = vmul.f32 %v5366, %v5238
        %v5415 = vmul.f32 %v5367, %v5239
        %v5416 = vmul.f32 %v5368, %v5240
        %v5417 = vmul.f32 %v5369, %v5241
        %v5418 = vmul.f32 %v5370, %v5242
        %v5419 = vmul.f32 %v5371, %v5243
        %v5420 = vmul.f32 %v5372, %v5244
        %v5421 = vsub.f32 %v5405, %v5133
        %v5422 = vsub.f32 %v5406, %v5134
        %v5423 = vsub.f32 %v5407, %v5135
        %v5424 = vsub.f32 %v5408, %v5136
        %v5425 = vsub.f32 %v5409, %v5137
        %v5426 = vsub.f32 %v5410, %v5138
        %v5427 = vsub.f32 %v5411, %v5139
        %v5428 = vsub.f32 %v5412, %v5140
        %v5429 = vsub.f32 %v5413, %v5141
        %v5430 = vsub.f32 %v5414, %v5142
        %v5431 = vsub.f32 %v5415, %v5143
        %v5432 = vsub.f32 %v5416, %v5144
        %v5433 = vsub.f32 %v5417, %v5145
        %v5434 = vsub.f32 %v5418, %v5146
        %v5435 = vsub.f32 %v5419, %v5147
        %v5436 = vsub.f32 %v5420, %v5148
        %v5445 = vlaneseq
        %v5446 = vshrl.u32 %v5445, 7
        %v5447 = vsub.s32 0, %v5446
        %v5448 = vrot.slane %v334, %v5447
        %v5449 = vlaneseq
        %v5450 = vshrl.u32 %v5449, 7
        %v5451 = vsub.s32 4, %v5450
        %v5452 = vrot.slane %v334, %v5451
        %v5453 = vlaneseq
        %v5454 = vshrl.u32 %v5453, 7
        %v5455 = vsub.s32 0, %v5454
        %v5456 = vrot.slane %v335, %v5455
        %v5457 = vlaneseq
        %v5458 = vshrl.u32 %v5457, 7
        %v5459 = vsub.s32 4, %v5458
        %v5460 = vrot.slane %v335, %v5459
        %v5461 = vlaneseq
        %v5462 = vshrl.u32 %v5461, 7
        %v5463 = vsub.s32 0, %v5462
        %v5464 = vrot.slane %v336, %v5463
        %v5465 = vlaneseq
        %v5466 = vshrl.u32 %v5465, 7
        %v5467 = vsub.s32 4, %v5466
        %v5468 = vrot.slane %v336, %v5467
        %v5469 = vlaneseq
        %v5470 = vshrl.u32 %v5469, 7
        %v5471 = vsub.s32 0, %v5470
        %v5472 = vrot.slane %v337, %v5471
        %v5473 = vlaneseq
        %v5474 = vshrl.u32 %v5473, 7
        %v5475 = vsub.s32 4, %v5474
        %v5476 = vrot.slane %v337, %v5475
        %v5477 = vlaneseq
        %v5478 = vshrl.u32 %v5477, 7
        %v5479 = vsub.s32 0, %v5478
        %v5480 = vrot.slane %v338, %v5479
        %v5481 = vlaneseq
        %v5482 = vshrl.u32 %v5481, 7
        %v5483 = vsub.s32 4, %v5482
        %v5484 = vrot.slane %v338, %v5483
        %v5485 = vlaneseq
        %v5486 = vshrl.u32 %v5485, 7
        %v5487 = vsub.s32 0, %v5486
        %v5488 = vrot.slane %v339, %v5487
        %v5489 = vlaneseq
        %v5490 = vshrl.u32 %v5489, 7
        %v5491 = vsub.s32 4, %v5490
        %v5492 = vrot.slane %v339, %v5491
        %v5493 = vlaneseq
        %v5494 = vshrl.u32 %v5493, 7
        %v5495 = vsub.s32 0, %v5494
        %v5496 = vrot.slane %v340, %v5495
        %v5497 = vlaneseq
        %v5498 = vshrl.u32 %v5497, 7
        %v5499 = vsub.s32 4, %v5498
        %v5500 = vrot.slane %v340, %v5499
        %v5501 = vlaneseq
        %v5502 = vshrl.u32 %v5501, 7
        %v5503 = vsub.s32 0, %v5502
        %v5504 = vrot.slane %v341, %v5503
        %v5505 = vlaneseq
        %v5506 = vshrl.u32 %v5505, 7
        %v5507 = vsub.s32 4, %v5506
        %v5508 = vrot.slane %v341, %v5507
        %v5525 = vlaneseq
        %v5526 = vshrl.u32 %v5525, 7
        %v5527 = vsub.s32 0, %v5526
        %v5528 = vrot.slane %v5448, %v5527
        %v5529 = vlaneseq
        %v5530 = vshrl.u32 %v5529, 7
        %v5531 = vsub.s32 0, %v5530
        %v5532 = vrot.slane %v5452, %v5531
        %v5533 = vlaneseq
        %v5534 = vshrl.u32 %v5533, 7
        %v5535 = vsub.s32 0, %v5534
        %v5536 = vrot.slane %v5456, %v5535
        %v5537 = vlaneseq
        %v5538 = vshrl.u32 %v5537, 7
        %v5539 = vsub.s32 0, %v5538
        %v5540 = vrot.slane %v5460, %v5539
        %v5541 = vlaneseq
        %v5542 = vshrl.u32 %v5541, 7
        %v5543 = vsub.s32 0, %v5542
        %v5544 = vrot.slane %v5464, %v5543
        %v5545 = vlaneseq
        %v5546 = vshrl.u32 %v5545, 7
        %v5547 = vsub.s32 0, %v5546
        %v5548 = vrot.slane %v5468, %v5547
        %v5549 = vlaneseq
        %v5550 = vshrl.u32 %v5549, 7
        %v5551 = vsub.s32 0, %v5550
        %v5552 = vrot.slane %v5472, %v5551
        %v5553 = vlaneseq
        %v5554 = vshrl.u32 %v5553, 7
        %v5555 = vsub.s32 0, %v5554
        %v5556 = vrot.slane %v5476, %v5555
        %v5557 = vlaneseq
        %v5558 = vshrl.u32 %v5557, 7
        %v5559 = vsub.s32 0, %v5558
        %v5560 = vrot.slane %v5480, %v5559
        %v5561 = vlaneseq
        %v5562 = vshrl.u32 %v5561, 7
        %v5563 = vsub.s32 0, %v5562
        %v5564 = vrot.slane %v5484, %v5563
        %v5565 = vlaneseq
        %v5566 = vshrl.u32 %v5565, 7
        %v5567 = vsub.s32 0, %v5566
        %v5568 = vrot.slane %v5488, %v5567
        %v5569 = vlaneseq
        %v5570 = vshrl.u32 %v5569, 7
        %v5571 = vsub.s32 0, %v5570
        %v5572 = vrot.slane %v5492, %v5571
        %v5573 = vlaneseq
        %v5574 = vshrl.u32 %v5573, 7
        %v5575 = vsub.s32 0, %v5574
        %v5576 = vrot.slane %v5496, %v5575
        %v5577 = vlaneseq
        %v5578 = vshrl.u32 %v5577, 7
        %v5579 = vsub.s32 0, %v5578
        %v5580 = vrot.slane %v5500, %v5579
        %v5581 = vlaneseq
        %v5582 = vshrl.u32 %v5581, 7
        %v5583 = vsub.s32 0, %v5582
        %v5584 = vrot.slane %v5504, %v5583
        %v5585 = vlaneseq
        %v5586 = vshrl.u32 %v5585, 7
        %v5587 = vsub.s32 0, %v5586
        %v5588 = vrot.slane %v5508, %v5587
        %v5589 = vsub.f32 %v5528, %v5117
        %v5590 = vsub.f32 %v5532, %v5118
        %v5591 = vsub.f32 %v5536, %v5119
        %v5592 = vsub.f32 %v5540, %v5120
        %v5593 = vsub.f32 %v5544, %v5121
        %v5594 = vsub.f32 %v5548, %v5122
        %v5595 = vsub.f32 %v5552, %v5123
        %v5596 = vsub.f32 %v5556, %v5124
        %v5597 = vsub.f32 %v5560, %v5125
        %v5598 = vsub.f32 %v5564, %v5126
        %v5599 = vsub.f32 %v5568, %v5127
        %v5600 = vsub.f32 %v5572, %v5128
        %v5601 = vsub.f32 %v5576, %v5129
        %v5602 = vsub.f32 %v5580, %v5130
        %v5603 = vsub.f32 %v5584, %v5131
        %v5604 = vsub.f32 %v5588, %v5132
        %v5613 = vlaneseq
        %v5614 = vshrl.u32 %v5613, 7
        %v5615 = vsub.s32 1, %v5614
        %v5616 = vrot.slane %v366, %v5615
        %v5617 = vlaneseq
        %v5618 = vshrl.u32 %v5617, 7
        %v5619 = vsub.s32 5, %v5618
        %v5620 = vrot.slane %v366, %v5619
        %v5621 = vlaneseq
        %v5622 = vshrl.u32 %v5621, 7
        %v5623 = vsub.s32 1, %v5622
        %v5624 = vrot.slane %v367, %v5623
        %v5625 = vlaneseq
        %v5626 = vshrl.u32 %v5625, 7
        %v5627 = vsub.s32 5, %v5626
        %v5628 = vrot.slane %v367, %v5627
        %v5629 = vlaneseq
        %v5630 = vshrl.u32 %v5629, 7
        %v5631 = vsub.s32 1, %v5630
        %v5632 = vrot.slane %v368, %v5631
        %v5633 = vlaneseq
        %v5634 = vshrl.u32 %v5633, 7
        %v5635 = vsub.s32 5, %v5634
        %v5636 = vrot.slane %v368, %v5635
        %v5637 = vlaneseq
        %v5638 = vshrl.u32 %v5637, 7
        %v5639 = vsub.s32 1, %v5638
        %v5640 = vrot.slane %v369, %v5639
        %v5641 = vlaneseq
        %v5642 = vshrl.u32 %v5641, 7
        %v5643 = vsub.s32 5, %v5642
        %v5644 = vrot.slane %v369, %v5643
        %v5645 = vlaneseq
        %v5646 = vshrl.u32 %v5645, 7
        %v5647 = vsub.s32 1, %v5646
        %v5648 = vrot.slane %v370, %v5647
        %v5649 = vlaneseq
        %v5650 = vshrl.u32 %v5649, 7
        %v5651 = vsub.s32 5, %v5650
        %v5652 = vrot.slane %v370, %v5651
        %v5653 = vlaneseq
        %v5654 = vshrl.u32 %v5653, 7
        %v5655 = vsub.s32 1, %v5654
        %v5656 = vrot.slane %v371, %v5655
        %v5657 = vlaneseq
        %v5658 = vshrl.u32 %v5657, 7
        %v5659 = vsub.s32 5, %v5658
        %v5660 = vrot.slane %v371, %v5659
        %v5661 = vlaneseq
        %v5662 = vshrl.u32 %v5661, 7
        %v5663 = vsub.s32 1, %v5662
        %v5664 = vrot.slane %v372, %v5663
        %v5665 = vlaneseq
        %v5666 = vshrl.u32 %v5665, 7
        %v5667 = vsub.s32 5, %v5666
        %v5668 = vrot.slane %v372, %v5667
        %v5669 = vlaneseq
        %v5670 = vshrl.u32 %v5669, 7
        %v5671 = vsub.s32 1, %v5670
        %v5672 = vrot.slane %v373, %v5671
        %v5673 = vlaneseq
        %v5674 = vshrl.u32 %v5673, 7
        %v5675 = vsub.s32 5, %v5674
        %v5676 = vrot.slane %v373, %v5675
        %v5693 = vlaneseq
        %v5694 = vshrl.u32 %v5693, 7
        %v5695 = vsub.s32 1, %v5694
        %v5696 = vrot.slane %v5616, %v5695
        %v5697 = vlaneseq
        %v5698 = vshrl.u32 %v5697, 7
        %v5699 = vsub.s32 1, %v5698
        %v5700 = vrot.slane %v5620, %v5699
        %v5701 = vlaneseq
        %v5702 = vshrl.u32 %v5701, 7
        %v5703 = vsub.s32 1, %v5702
        %v5704 = vrot.slane %v5624, %v5703
        %v5705 = vlaneseq
        %v5706 = vshrl.u32 %v5705, 7
        %v5707 = vsub.s32 1, %v5706
        %v5708 = vrot.slane %v5628, %v5707
        %v5709 = vlaneseq
        %v5710 = vshrl.u32 %v5709, 7
        %v5711 = vsub.s32 1, %v5710
        %v5712 = vrot.slane %v5632, %v5711
        %v5713 = vlaneseq
        %v5714 = vshrl.u32 %v5713, 7
        %v5715 = vsub.s32 1, %v5714
        %v5716 = vrot.slane %v5636, %v5715
        %v5717 = vlaneseq
        %v5718 = vshrl.u32 %v5717, 7
        %v5719 = vsub.s32 1, %v5718
        %v5720 = vrot.slane %v5640, %v5719
        %v5721 = vlaneseq
        %v5722 = vshrl.u32 %v5721, 7
        %v5723 = vsub.s32 1, %v5722
        %v5724 = vrot.slane %v5644, %v5723
        %v5725 = vlaneseq
        %v5726 = vshrl.u32 %v5725, 7
        %v5727 = vsub.s32 1, %v5726
        %v5728 = vrot.slane %v5648, %v5727
        %v5729 = vlaneseq
        %v5730 = vshrl.u32 %v5729, 7
        %v5731 = vsub.s32 1, %v5730
        %v5732 = vrot.slane %v5652, %v5731
        %v5733 = vlaneseq
        %v5734 = vshrl.u32 %v5733, 7
        %v5735 = vsub.s32 1, %v5734
        %v5736 = vrot.slane %v5656, %v5735
        %v5737 = vlaneseq
        %v5738 = vshrl.u32 %v5737, 7
        %v5739 = vsub.s32 1, %v5738
        %v5740 = vrot.slane %v5660, %v5739
        %v5741 = vlaneseq
        %v5742 = vshrl.u32 %v5741, 7
        %v5743 = vsub.s32 1, %v5742
        %v5744 = vrot.slane %v5664, %v5743
        %v5745 = vlaneseq
        %v5746 = vshrl.u32 %v5745, 7
        %v5747 = vsub.s32 1, %v5746
        %v5748 = vrot.slane %v5668, %v5747
        %v5749 = vlaneseq
        %v5750 = vshrl.u32 %v5749, 7
        %v5751 = vsub.s32 1, %v5750
        %v5752 = vrot.slane %v5672, %v5751
        %v5753 = vlaneseq
        %v5754 = vshrl.u32 %v5753, 7
        %v5755 = vsub.s32 1, %v5754
        %v5756 = vrot.slane %v5676, %v5755
        %v5757 = vsub.f32 %v5696, %v5133
        %v5758 = vsub.f32 %v5700, %v5134
        %v5759 = vsub.f32 %v5704, %v5135
        %v5760 = vsub.f32 %v5708, %v5136
        %v5761 = vsub.f32 %v5712, %v5137
        %v5762 = vsub.f32 %v5716, %v5138
        %v5763 = vsub.f32 %v5720, %v5139
        %v5764 = vsub.f32 %v5724, %v5140
        %v5765 = vsub.f32 %v5728, %v5141
        %v5766 = vsub.f32 %v5732, %v5142
        %v5767 = vsub.f32 %v5736, %v5143
        %v5768 = vsub.f32 %v5740, %v5144
        %v5769 = vsub.f32 %v5744, %v5145
        %v5770 = vsub.f32 %v5748, %v5146
        %v5771 = vsub.f32 %v5752, %v5147
        %v5772 = vsub.f32 %v5756, %v5148
        %v5773 = vmul.f32 %v5589, %v5589
        %v5774 = vmul.f32 %v5590, %v5590
        %v5775 = vmul.f32 %v5591, %v5591
        %v5776 = vmul.f32 %v5592, %v5592
        %v5777 = vmul.f32 %v5593, %v5593
        %v5778 = vmul.f32 %v5594, %v5594
        %v5779 = vmul.f32 %v5595, %v5595
        %v5780 = vmul.f32 %v5596, %v5596
        %v5781 = vmul.f32 %v5597, %v5597
        %v5782 = vmul.f32 %v5598, %v5598
        %v5783 = vmul.f32 %v5599, %v5599
        %v5784 = vmul.f32 %v5600, %v5600
        %v5785 = vmul.f32 %v5601, %v5601
        %v5786 = vmul.f32 %v5602, %v5602
        %v5787 = vmul.f32 %v5603, %v5603
        %v5788 = vmul.f32 %v5604, %v5604
        %v5789 = vmul.f32 %v5757, %v5757
        %v5790 = vmul.f32 %v5758, %v5758
        %v5791 = vmul.f32 %v5759, %v5759
        %v5792 = vmul.f32 %v5760, %v5760
        %v5793 = vmul.f32 %v5761, %v5761
        %v5794 = vmul.f32 %v5762, %v5762
        %v5795 = vmul.f32 %v5763, %v5763
        %v5796 = vmul.f32 %v5764, %v5764
        %v5797 = vmul.f32 %v5765, %v5765
        %v5798 = vmul.f32 %v5766, %v5766
        %v5799 = vmul.f32 %v5767, %v5767
        %v5800 = vmul.f32 %v5768, %v5768
        %v5801 = vmul.f32 %v5769, %v5769
        %v5802 = vmul.f32 %v5770, %v5770
        %v5803 = vmul.f32 %v5771, %v5771
        %v5804 = vmul.f32 %v5772, %v5772
        %v5805 = vadd.f32 %v5773, %v5789
        %v5806 = vadd.f32 %v5774, %v5790
        %v5807 = vadd.f32 %v5775, %v5791
        %v5808 = vadd.f32 %v5776, %v5792
        %v5809 = vadd.f32 %v5777, %v5793
        %v5810 = vadd.f32 %v5778, %v5794
        %v5811 = vadd.f32 %v5779, %v5795
        %v5812 = vadd.f32 %v5780, %v5796
        %v5813 = vadd.f32 %v5781, %v5797
        %v5814 = vadd.f32 %v5782, %v5798
        %v5815 = vadd.f32 %v5783, %v5799
        %v5816 = vadd.f32 %v5784, %v5800
        %v5817 = vadd.f32 %v5785, %v5801
        %v5818 = vadd.f32 %v5786, %v5802
        %v5819 = vadd.f32 %v5787, %v5803
        %v5820 = vadd.f32 %v5788, %v5804
        %v5821 = vrcp.pop %v5805
        %v5822 = vrcp.pop %v5806
        %v5823 = vrcp.pop %v5807
        %v5824 = vrcp.pop %v5808
        %v5825 = vrcp.pop %v5809
        %v5826 = vrcp.pop %v5810
        %v5827 = vrcp.pop %v5811
        %v5828 = vrcp.pop %v5812
        %v5829 = vrcp.pop %v5813
        %v5830 = vrcp.pop %v5814
        %v5831 = vrcp.pop %v5815
        %v5832 = vrcp.pop %v5816
        %v5833 = vrcp.pop %v5817
        %v5834 = vrcp.pop %v5818
        %v5835 = vrcp.pop %v5819
        %v5836 = vrcp.pop %v5820
        %v5837 = vmul.f32 %v5805, %v5821
        %v5838 = vmul.f32 %v5806, %v5822
        %v5839 = vmul.f32 %v5807, %v5823
        %v5840 = vmul.f32 %v5808, %v5824
        %v5841 = vmul.f32 %v5809, %v5825
        %v5842 = vmul.f32 %v5810, %v5826
        %v5843 = vmul.f32 %v5811, %v5827
        %v5844 = vmul.f32 %v5812, %v5828
        %v5845 = vmul.f32 %v5813, %v5829
        %v5846 = vmul.f32 %v5814, %v5830
        %v5847 = vmul.f32 %v5815, %v5831
        %v5848 = vmul.f32 %v5816, %v5832
        %v5849 = vmul.f32 %v5817, %v5833
        %v5850 = vmul.f32 %v5818, %v5834
        %v5851 = vmul.f32 %v5819, %v5835
        %v5852 = vmul.f32 %v5820, %v5836
        %v5853 = vsub.f32 2.0, %v5837
        %v5854 = vsub.f32 2.0, %v5838
        %v5855 = vsub.f32 2.0, %v5839
        %v5856 = vsub.f32 2.0, %v5840
        %v5857 = vsub.f32 2.0, %v5841
        %v5858 = vsub.f32 2.0, %v5842
        %v5859 = vsub.f32 2.0, %v5843
        %v5860 = vsub.f32 2.0, %v5844
        %v5861 = vsub.f32 2.0, %v5845
        %v5862 = vsub.f32 2.0, %v5846
        %v5863 = vsub.f32 2.0, %v5847
        %v5864 = vsub.f32 2.0, %v5848
        %v5865 = vsub.f32 2.0, %v5849
        %v5866 = vsub.f32 2.0, %v5850
        %v5867 = vsub.f32 2.0, %v5851
        %v5868 = vsub.f32 2.0, %v5852
        %v5869 = vmul.f32 %v5821, %v5853
        %v5870 = vmul.f32 %v5822, %v5854
        %v5871 = vmul.f32 %v5823, %v5855
        %v5872 = vmul.f32 %v5824, %v5856
        %v5873 = vmul.f32 %v5825, %v5857
        %v5874 = vmul.f32 %v5826, %v5858
        %v5875 = vmul.f32 %v5827, %v5859
        %v5876 = vmul.f32 %v5828, %v5860
        %v5877 = vmul.f32 %v5829, %v5861
        %v5878 = vmul.f32 %v5830, %v5862
        %v5879 = vmul.f32 %v5831, %v5863
        %v5880 = vmul.f32 %v5832, %v5864
        %v5881 = vmul.f32 %v5833, %v5865
        %v5882 = vmul.f32 %v5834, %v5866
        %v5883 = vmul.f32 %v5835, %v5867
        %v5884 = vmul.f32 %v5836, %v5868
        %v5885 = vmul.f32 %v5197, %v5869
        %v5886 = vmul.f32 %v5198, %v5870
        %v5887 = vmul.f32 %v5199, %v5871
        %v5888 = vmul.f32 %v5200, %v5872
        %v5889 = vmul.f32 %v5201, %v5873
        %v5890 = vmul.f32 %v5202, %v5874
        %v5891 = vmul.f32 %v5203, %v5875
        %v5892 = vmul.f32 %v5204, %v5876
        %v5893 = vmul.f32 %v5205, %v5877
        %v5894 = vmul.f32 %v5206, %v5878
        %v5895 = vmul.f32 %v5207, %v5879
        %v5896 = vmul.f32 %v5208, %v5880
        %v5897 = vmul.f32 %v5209, %v5881
        %v5898 = vmul.f32 %v5210, %v5882
        %v5899 = vmul.f32 %v5211, %v5883
        %v5900 = vmul.f32 %v5212, %v5884
        %v5901 = vmul.f32 %v5885, %v5589
        %v5902 = vmul.f32 %v5886, %v5590
        %v5903 = vmul.f32 %v5887, %v5591
        %v5904 = vmul.f32 %v5888, %v5592
        %v5905 = vmul.f32 %v5889, %v5593
        %v5906 = vmul.f32 %v5890, %v5594
        %v5907 = vmul.f32 %v5891, %v5595
        %v5908 = vmul.f32 %v5892, %v5596
        %v5909 = vmul.f32 %v5893, %v5597
        %v5910 = vmul.f32 %v5894, %v5598
        %v5911 = vmul.f32 %v5895, %v5599
        %v5912 = vmul.f32 %v5896, %v5600
        %v5913 = vmul.f32 %v5897, %v5601
        %v5914 = vmul.f32 %v5898, %v5602
        %v5915 = vmul.f32 %v5899, %v5603
        %v5916 = vmul.f32 %v5900, %v5604
        %v5917 = vsub.f32 %v5901, %v5117
        %v5918 = vsub.f32 %v5902, %v5118
        %v5919 = vsub.f32 %v5903, %v5119
        %v5920 = vsub.f32 %v5904, %v5120
        %v5921 = vsub.f32 %v5905, %v5121
        %v5922 = vsub.f32 %v5906, %v5122
        %v5923 = vsub.f32 %v5907, %v5123
        %v5924 = vsub.f32 %v5908, %v5124
        %v5925 = vsub.f32 %v5909, %v5125
        %v5926 = vsub.f32 %v5910, %v5126
        %v5927 = vsub.f32 %v5911, %v5127
        %v5928 = vsub.f32 %v5912, %v5128
        %v5929 = vsub.f32 %v5913, %v5129
        %v5930 = vsub.f32 %v5914, %v5130
        %v5931 = vsub.f32 %v5915, %v5131
        %v5932 = vsub.f32 %v5916, %v5132
        %v5933 = vmul.f32 %v5885, %v5757
        %v5934 = vmul.f32 %v5886, %v5758
        %v5935 = vmul.f32 %v5887, %v5759
        %v5936 = vmul.f32 %v5888, %v5760
        %v5937 = vmul.f32 %v5889, %v5761
        %v5938 = vmul.f32 %v5890, %v5762
        %v5939 = vmul.f32 %v5891, %v5763
        %v5940 = vmul.f32 %v5892, %v5764
        %v5941 = vmul.f32 %v5893, %v5765
        %v5942 = vmul.f32 %v5894, %v5766
        %v5943 = vmul.f32 %v5895, %v5767
        %v5944 = vmul.f32 %v5896, %v5768
        %v5945 = vmul.f32 %v5897, %v5769
        %v5946 = vmul.f32 %v5898, %v5770
        %v5947 = vmul.f32 %v5899, %v5771
        %v5948 = vmul.f32 %v5900, %v5772
        %v5949 = vsub.f32 %v5933, %v5133
        %v5950 = vsub.f32 %v5934, %v5134
        %v5951 = vsub.f32 %v5935, %v5135
        %v5952 = vsub.f32 %v5936, %v5136
        %v5953 = vsub.f32 %v5937, %v5137
        %v5954 = vsub.f32 %v5938, %v5138
        %v5955 = vsub.f32 %v5939, %v5139
        %v5956 = vsub.f32 %v5940, %v5140
        %v5957 = vsub.f32 %v5941, %v5141
        %v5958 = vsub.f32 %v5942, %v5142
        %v5959 = vsub.f32 %v5943, %v5143
        %v5960 = vsub.f32 %v5944, %v5144
        %v5961 = vsub.f32 %v5945, %v5145
        %v5962 = vsub.f32 %v5946, %v5146
        %v5963 = vsub.f32 %v5947, %v5147
        %v5964 = vsub.f32 %v5948, %v5148
        %v5965 = vmul.f32 %v5949, %v5389
        %v5966 = vmul.f32 %v5950, %v5390
        %v5967 = vmul.f32 %v5951, %v5391
        %v5968 = vmul.f32 %v5952, %v5392
        %v5969 = vmul.f32 %v5953, %v5393
        %v5970 = vmul.f32 %v5954, %v5394
        %v5971 = vmul.f32 %v5955, %v5395
        %v5972 = vmul.f32 %v5956, %v5396
        %v5973 = vmul.f32 %v5957, %v5397
        %v5974 = vmul.f32 %v5958, %v5398
        %v5975 = vmul.f32 %v5959, %v5399
        %v5976 = vmul.f32 %v5960, %v5400
        %v5977 = vmul.f32 %v5961, %v5401
        %v5978 = vmul.f32 %v5962, %v5402
        %v5979 = vmul.f32 %v5963, %v5403
        %v5980 = vmul.f32 %v5964, %v5404
        %v5981 = vmul.f32 %v5917, %v5421
        %v5982 = vmul.f32 %v5918, %v5422
        %v5983 = vmul.f32 %v5919, %v5423
        %v5984 = vmul.f32 %v5920, %v5424
        %v5985 = vmul.f32 %v5921, %v5425
        %v5986 = vmul.f32 %v5922, %v5426
        %v5987 = vmul.f32 %v5923, %v5427
        %v5988 = vmul.f32 %v5924, %v5428
        %v5989 = vmul.f32 %v5925, %v5429
        %v5990 = vmul.f32 %v5926, %v5430
        %v5991 = vmul.f32 %v5927, %v5431
        %v5992 = vmul.f32 %v5928, %v5432
        %v5993 = vmul.f32 %v5929, %v5433
        %v5994 = vmul.f32 %v5930, %v5434
        %v5995 = vmul.f32 %v5931, %v5435
        %v5996 = vmul.f32 %v5932, %v5436
        %v5997 = vsub.f32 %v5965, %v5981
        %v5998 = vsub.f32 %v5966, %v5982
        %v5999 = vsub.f32 %v5967, %v5983
        %v6000 = vsub.f32 %v5968, %v5984
        %v6001 = vsub.f32 %v5969, %v5985
        %v6002 = vsub.f32 %v5970, %v5986
        %v6003 = vsub.f32 %v5971, %v5987
        %v6004 = vsub.f32 %v5972, %v5988
        %v6005 = vsub.f32 %v5973, %v5989
        %v6006 = vsub.f32 %v5974, %v5990
        %v6007 = vsub.f32 %v5975, %v5991
        %v6008 = vsub.f32 %v5976, %v5992
        %v6009 = vsub.f32 %v5977, %v5993
        %v6010 = vsub.f32 %v5978, %v5994
        %v6011 = vsub.f32 %v5979, %v5995
        %v6012 = vsub.f32 %v5980, %v5996
        %v6013 = vmul.f32 %v5917, %v5389
        %v6014 = vmul.f32 %v5918, %v5390
        %v6015 = vmul.f32 %v5919, %v5391
        %v6016 = vmul.f32 %v5920, %v5392
        %v6017 = vmul.f32 %v5921, %v5393
        %v6018 = vmul.f32 %v5922, %v5394
        %v6019 = vmul.f32 %v5923, %v5395
        %v6020 = vmul.f32 %v5924, %v5396
        %v6021 = vmul.f32 %v5925, %v5397
        %v6022 = vmul.f32 %v5926, %v5398
        %v6023 = vmul.f32 %v5927, %v5399
        %v6024 = vmul.f32 %v5928, %v5400
        %v6025 = vmul.f32 %v5929, %v5401
        %v6026 = vmul.f32 %v5930, %v5402
        %v6027 = vmul.f32 %v5931, %v5403
        %v6028 = vmul.f32 %v5932, %v5404
        %v6029 = vmul.f32 %v5949, %v5421
        %v6030 = vmul.f32 %v5950, %v5422
        %v6031 = vmul.f32 %v5951, %v5423
        %v6032 = vmul.f32 %v5952, %v5424
        %v6033 = vmul.f32 %v5953, %v5425
        %v6034 = vmul.f32 %v5954, %v5426
        %v6035 = vmul.f32 %v5955, %v5427
        %v6036 = vmul.f32 %v5956, %v5428
        %v6037 = vmul.f32 %v5957, %v5429
        %v6038 = vmul.f32 %v5958, %v5430
        %v6039 = vmul.f32 %v5959, %v5431
        %v6040 = vmul.f32 %v5960, %v5432
        %v6041 = vmul.f32 %v5961, %v5433
        %v6042 = vmul.f32 %v5962, %v5434
        %v6043 = vmul.f32 %v5963, %v5435
        %v6044 = vmul.f32 %v5964, %v5436
        %v6045 = vadd.f32 %v6013, %v6029
        %v6046 = vadd.f32 %v6014, %v6030
        %v6047 = vadd.f32 %v6015, %v6031
        %v6048 = vadd.f32 %v6016, %v6032
        %v6049 = vadd.f32 %v6017, %v6033
        %v6050 = vadd.f32 %v6018, %v6034
        %v6051 = vadd.f32 %v6019, %v6035
        %v6052 = vadd.f32 %v6020, %v6036
        %v6053 = vadd.f32 %v6021, %v6037
        %v6054 = vadd.f32 %v6022, %v6038
        %v6055 = vadd.f32 %v6023, %v6039
        %v6056 = vadd.f32 %v6024, %v6040
        %v6057 = vadd.f32 %v6025, %v6041
        %v6058 = vadd.f32 %v6026, %v6042
        %v6059 = vadd.f32 %v6027, %v6043
        %v6060 = vadd.f32 %v6028, %v6044
        %v6061 = vand.u32 2147483647, %v6045
        %v6062 = vand.u32 2147483647, %v5997
        %v6063 = vmin.f32 %v6061, %v6062
        %v6064 = vmax.f32 %v6061, %v6062
        %v6065 = vrcp.pop %v6064
        %v6066 = vmul.f32 %v6063, %v6065
        %v6067 = vmul.f32 %v6066, %v6066
        %v6068 = vmul.f32 0.002785687, %v6067
        %v6069 = vadd.f32 %v6068, -0.015866
        %v6070 = vmul.f32 %v6069, %v6067
        %v6071 = vadd.f32 %v6070, 0.04247222
        %v6072 = vmul.f32 %v6071, %v6067
        %v6073 = vadd.f32 %v6072, -0.074975304
        %v6074 = vmul.f32 %v6073, %v6067
        %v6075 = vadd.f32 %v6074, 0.1064488
        %v6076 = vmul.f32 %v6075, %v6067
        %v6077 = vadd.f32 %v6076, -0.14207031
        %v6078 = vmul.f32 %v6077, %v6067
        %v6079 = vadd.f32 %v6078, 0.19993454
        %v6080 = vmul.f32 %v6079, %v6067
        %v6081 = vadd.f32 %v6080, -0.33333147
        %v6082 = vmul.f32 %v6081, %v6067
        %v6083 = vmul.f32 %v6082, %v6066
        %v6084 = vadd.f32 %v6083, %v6066
        %vm6085 = vcmp.gt.f32.partialorder %v6062, %v6061
        %v6086 = vsub.f32 1.5707964, %v6084
        %v6087 = vsel %vm6085, %v6086, %v6084
        %vm6088 = vcmp.lt.f32.partialorder %v6045, 0.0
        %v6089 = vsub.f32 3.1415927, %v6087
        %v6090 = vsel %vm6088, %v6089, %v6087
        %vm6091 = vcmp.lt.s32.totalorder %v6045, 0
        %v6092 = vsel %vm6091, 3.1415927, 0.0
        %vm6093 = vcmp.eq.f32.partialorder %v5997, 0.0
        %v6094 = vsel %vm6093, %v6092, %v6090
        %vm6095 = vcmp.ne.f32.partialorder %v6045, %v6045
        %vm6096 = vcmp.ne.f32.partialorder %v5997, %v5997
        %vm6097 = vmor %vm6095, %vm6096
        %v6098 = vsel %vm6097, nan, %v6094
        %vm6099 = vcmp.lt.f32.partialorder %v6045, 0.0
        %v6100 = vsel %vm6099, 2.3561945, 0.7853982
        %vm6101 = vcmp.eq.s32.totalorder %v6061, inf
        %vm6102 = vcmp.eq.s32.totalorder %v6062, inf
        %vm6103 = vmand %vm6101, %vm6102
        %v6104 = vsel %vm6103, %v6100, %v6098
        %v6105 = vand.u32 2147483647, %v6104
        %v6106 = vand.u32 %v5997, 2147483648
        %v6107 = vor.u32 %v6105, %v6106
        %v6108 = vand.u32 2147483647, %v6046
        %v6109 = vand.u32 2147483647, %v5998
        %v6110 = vmin.f32 %v6108, %v6109
        %v6111 = vmax.f32 %v6108, %v6109
        %v6112 = vrcp.pop %v6111
        %v6113 = vmul.f32 %v6110, %v6112
        %v6114 = vmul.f32 %v6113, %v6113
        %v6115 = vmul.f32 0.002785687, %v6114
        %v6116 = vadd.f32 %v6115, -0.015866
        %v6117 = vmul.f32 %v6116, %v6114
        %v6118 = vadd.f32 %v6117, 0.04247222
        %v6119 = vmul.f32 %v6118, %v6114
        %v6120 = vadd.f32 %v6119, -0.074975304
        %v6121 = vmul.f32 %v6120, %v6114
        %v6122 = vadd.f32 %v6121, 0.1064488
        %v6123 = vmul.f32 %v6122, %v6114
        %v6124 = vadd.f32 %v6123, -0.14207031
        %v6125 = vmul.f32 %v6124, %v6114
        %v6126 = vadd.f32 %v6125, 0.19993454
        %v6127 = vmul.f32 %v6126, %v6114
        %v6128 = vadd.f32 %v6127, -0.33333147
        %v6129 = vmul.f32 %v6128, %v6114
        %v6130 = vmul.f32 %v6129, %v6113
        %v6131 = vadd.f32 %v6130, %v6113
        %vm6132 = vcmp.gt.f32.partialorder %v6109, %v6108
        %v6133 = vsub.f32 1.5707964, %v6131
        %v6134 = vsel %vm6132, %v6133, %v6131
        %vm6135 = vcmp.lt.f32.partialorder %v6046, 0.0
        %v6136 = vsub.f32 3.1415927, %v6134
        %v6137 = vsel %vm6135, %v6136, %v6134
        %vm6138 = vcmp.lt.s32.totalorder %v6046, 0
        %v6139 = vsel %vm6138, 3.1415927, 0.0
        %vm6140 = vcmp.eq.f32.partialorder %v5998, 0.0
        %v6141 = vsel %vm6140, %v6139, %v6137
        %vm6142 = vcmp.ne.f32.partialorder %v6046, %v6046
        %vm6143 = vcmp.ne.f32.partialorder %v5998, %v5998
        %vm6144 = vmor %vm6142, %vm6143
        %v6145 = vsel %vm6144, nan, %v6141
        %vm6146 = vcmp.lt.f32.partialorder %v6046, 0.0
        %v6147 = vsel %vm6146, 2.3561945, 0.7853982
        %vm6148 = vcmp.eq.s32.totalorder %v6108, inf
        %vm6149 = vcmp.eq.s32.totalorder %v6109, inf
        %vm6150 = vmand %vm6148, %vm6149
        %v6151 = vsel %vm6150, %v6147, %v6145
        %v6152 = vand.u32 2147483647, %v6151
        %v6153 = vand.u32 %v5998, 2147483648
        %v6154 = vor.u32 %v6152, %v6153
        %v6155 = vand.u32 2147483647, %v6047
        %v6156 = vand.u32 2147483647, %v5999
        %v6157 = vmin.f32 %v6155, %v6156
        %v6158 = vmax.f32 %v6155, %v6156
        %v6159 = vrcp.pop %v6158
        %v6160 = vmul.f32 %v6157, %v6159
        %v6161 = vmul.f32 %v6160, %v6160
        %v6162 = vmul.f32 0.002785687, %v6161
        %v6163 = vadd.f32 %v6162, -0.015866
        %v6164 = vmul.f32 %v6163, %v6161
        %v6165 = vadd.f32 %v6164, 0.04247222
        %v6166 = vmul.f32 %v6165, %v6161
        %v6167 = vadd.f32 %v6166, -0.074975304
        %v6168 = vmul.f32 %v6167, %v6161
        %v6169 = vadd.f32 %v6168, 0.1064488
        %v6170 = vmul.f32 %v6169, %v6161
        %v6171 = vadd.f32 %v6170, -0.14207031
        %v6172 = vmul.f32 %v6171, %v6161
        %v6173 = vadd.f32 %v6172, 0.19993454
        %v6174 = vmul.f32 %v6173, %v6161
        %v6175 = vadd.f32 %v6174, -0.33333147
        %v6176 = vmul.f32 %v6175, %v6161
        %v6177 = vmul.f32 %v6176, %v6160
        %v6178 = vadd.f32 %v6177, %v6160
        %vm6179 = vcmp.gt.f32.partialorder %v6156, %v6155
        %v6180 = vsub.f32 1.5707964, %v6178
        %v6181 = vsel %vm6179, %v6180, %v6178
        %vm6182 = vcmp.lt.f32.partialorder %v6047, 0.0
        %v6183 = vsub.f32 3.1415927, %v6181
        %v6184 = vsel %vm6182, %v6183, %v6181
        %vm6185 = vcmp.lt.s32.totalorder %v6047, 0
        %v6186 = vsel %vm6185, 3.1415927, 0.0
        %vm6187 = vcmp.eq.f32.partialorder %v5999, 0.0
        %v6188 = vsel %vm6187, %v6186, %v6184
        %vm6189 = vcmp.ne.f32.partialorder %v6047, %v6047
        %vm6190 = vcmp.ne.f32.partialorder %v5999, %v5999
        %vm6191 = vmor %vm6189, %vm6190
        %v6192 = vsel %vm6191, nan, %v6188
        %vm6193 = vcmp.lt.f32.partialorder %v6047, 0.0
        %v6194 = vsel %vm6193, 2.3561945, 0.7853982
        %vm6195 = vcmp.eq.s32.totalorder %v6155, inf
        %vm6196 = vcmp.eq.s32.totalorder %v6156, inf
        %vm6197 = vmand %vm6195, %vm6196
        %v6198 = vsel %vm6197, %v6194, %v6192
        %v6199 = vand.u32 2147483647, %v6198
        %v6200 = vand.u32 %v5999, 2147483648
        %v6201 = vor.u32 %v6199, %v6200
        %v6202 = vand.u32 2147483647, %v6048
        %v6203 = vand.u32 2147483647, %v6000
        %v6204 = vmin.f32 %v6202, %v6203
        %v6205 = vmax.f32 %v6202, %v6203
        %v6206 = vrcp.pop %v6205
        %v6207 = vmul.f32 %v6204, %v6206
        %v6208 = vmul.f32 %v6207, %v6207
        %v6209 = vmul.f32 0.002785687, %v6208
        %v6210 = vadd.f32 %v6209, -0.015866
        %v6211 = vmul.f32 %v6210, %v6208
        %v6212 = vadd.f32 %v6211, 0.04247222
        %v6213 = vmul.f32 %v6212, %v6208
        %v6214 = vadd.f32 %v6213, -0.074975304
        %v6215 = vmul.f32 %v6214, %v6208
        %v6216 = vadd.f32 %v6215, 0.1064488
        %v6217 = vmul.f32 %v6216, %v6208
        %v6218 = vadd.f32 %v6217, -0.14207031
        %v6219 = vmul.f32 %v6218, %v6208
        %v6220 = vadd.f32 %v6219, 0.19993454
        %v6221 = vmul.f32 %v6220, %v6208
        %v6222 = vadd.f32 %v6221, -0.33333147
        %v6223 = vmul.f32 %v6222, %v6208
        %v6224 = vmul.f32 %v6223, %v6207
        %v6225 = vadd.f32 %v6224, %v6207
        %vm6226 = vcmp.gt.f32.partialorder %v6203, %v6202
        %v6227 = vsub.f32 1.5707964, %v6225
        %v6228 = vsel %vm6226, %v6227, %v6225
        %vm6229 = vcmp.lt.f32.partialorder %v6048, 0.0
        %v6230 = vsub.f32 3.1415927, %v6228
        %v6231 = vsel %vm6229, %v6230, %v6228
        %vm6232 = vcmp.lt.s32.totalorder %v6048, 0
        %v6233 = vsel %vm6232, 3.1415927, 0.0
        %vm6234 = vcmp.eq.f32.partialorder %v6000, 0.0
        %v6235 = vsel %vm6234, %v6233, %v6231
        %vm6236 = vcmp.ne.f32.partialorder %v6048, %v6048
        %vm6237 = vcmp.ne.f32.partialorder %v6000, %v6000
        %vm6238 = vmor %vm6236, %vm6237
        %v6239 = vsel %vm6238, nan, %v6235
        %vm6240 = vcmp.lt.f32.partialorder %v6048, 0.0
        %v6241 = vsel %vm6240, 2.3561945, 0.7853982
        %vm6242 = vcmp.eq.s32.totalorder %v6202, inf
        %vm6243 = vcmp.eq.s32.totalorder %v6203, inf
        %vm6244 = vmand %vm6242, %vm6243
        %v6245 = vsel %vm6244, %v6241, %v6239
        %v6246 = vand.u32 2147483647, %v6245
        %v6247 = vand.u32 %v6000, 2147483648
        %v6248 = vor.u32 %v6246, %v6247
        %v6249 = vand.u32 2147483647, %v6049
        %v6250 = vand.u32 2147483647, %v6001
        %v6251 = vmin.f32 %v6249, %v6250
        %v6252 = vmax.f32 %v6249, %v6250
        %v6253 = vrcp.pop %v6252
        %v6254 = vmul.f32 %v6251, %v6253
        %v6255 = vmul.f32 %v6254, %v6254
        %v6256 = vmul.f32 0.002785687, %v6255
        %v6257 = vadd.f32 %v6256, -0.015866
        %v6258 = vmul.f32 %v6257, %v6255
        %v6259 = vadd.f32 %v6258, 0.04247222
        %v6260 = vmul.f32 %v6259, %v6255
        %v6261 = vadd.f32 %v6260, -0.074975304
        %v6262 = vmul.f32 %v6261, %v6255
        %v6263 = vadd.f32 %v6262, 0.1064488
        %v6264 = vmul.f32 %v6263, %v6255
        %v6265 = vadd.f32 %v6264, -0.14207031
        %v6266 = vmul.f32 %v6265, %v6255
        %v6267 = vadd.f32 %v6266, 0.19993454
        %v6268 = vmul.f32 %v6267, %v6255
        %v6269 = vadd.f32 %v6268, -0.33333147
        %v6270 = vmul.f32 %v6269, %v6255
        %v6271 = vmul.f32 %v6270, %v6254
        %v6272 = vadd.f32 %v6271, %v6254
        %vm6273 = vcmp.gt.f32.partialorder %v6250, %v6249
        %v6274 = vsub.f32 1.5707964, %v6272
        %v6275 = vsel %vm6273, %v6274, %v6272
        %vm6276 = vcmp.lt.f32.partialorder %v6049, 0.0
        %v6277 = vsub.f32 3.1415927, %v6275
        %v6278 = vsel %vm6276, %v6277, %v6275
        %vm6279 = vcmp.lt.s32.totalorder %v6049, 0
        %v6280 = vsel %vm6279, 3.1415927, 0.0
        %vm6281 = vcmp.eq.f32.partialorder %v6001, 0.0
        %v6282 = vsel %vm6281, %v6280, %v6278
        %vm6283 = vcmp.ne.f32.partialorder %v6049, %v6049
        %vm6284 = vcmp.ne.f32.partialorder %v6001, %v6001
        %vm6285 = vmor %vm6283, %vm6284
        %v6286 = vsel %vm6285, nan, %v6282
        %vm6287 = vcmp.lt.f32.partialorder %v6049, 0.0
        %v6288 = vsel %vm6287, 2.3561945, 0.7853982
        %vm6289 = vcmp.eq.s32.totalorder %v6249, inf
        %vm6290 = vcmp.eq.s32.totalorder %v6250, inf
        %vm6291 = vmand %vm6289, %vm6290
        %v6292 = vsel %vm6291, %v6288, %v6286
        %v6293 = vand.u32 2147483647, %v6292
        %v6294 = vand.u32 %v6001, 2147483648
        %v6295 = vor.u32 %v6293, %v6294
        %v6296 = vand.u32 2147483647, %v6050
        %v6297 = vand.u32 2147483647, %v6002
        %v6298 = vmin.f32 %v6296, %v6297
        %v6299 = vmax.f32 %v6296, %v6297
        %v6300 = vrcp.pop %v6299
        %v6301 = vmul.f32 %v6298, %v6300
        %v6302 = vmul.f32 %v6301, %v6301
        %v6303 = vmul.f32 0.002785687, %v6302
        %v6304 = vadd.f32 %v6303, -0.015866
        %v6305 = vmul.f32 %v6304, %v6302
        %v6306 = vadd.f32 %v6305, 0.04247222
        %v6307 = vmul.f32 %v6306, %v6302
        %v6308 = vadd.f32 %v6307, -0.074975304
        %v6309 = vmul.f32 %v6308, %v6302
        %v6310 = vadd.f32 %v6309, 0.1064488
        %v6311 = vmul.f32 %v6310, %v6302
        %v6312 = vadd.f32 %v6311, -0.14207031
        %v6313 = vmul.f32 %v6312, %v6302
        %v6314 = vadd.f32 %v6313, 0.19993454
        %v6315 = vmul.f32 %v6314, %v6302
        %v6316 = vadd.f32 %v6315, -0.33333147
        %v6317 = vmul.f32 %v6316, %v6302
        %v6318 = vmul.f32 %v6317, %v6301
        %v6319 = vadd.f32 %v6318, %v6301
        %vm6320 = vcmp.gt.f32.partialorder %v6297, %v6296
        %v6321 = vsub.f32 1.5707964, %v6319
        %v6322 = vsel %vm6320, %v6321, %v6319
        %vm6323 = vcmp.lt.f32.partialorder %v6050, 0.0
        %v6324 = vsub.f32 3.1415927, %v6322
        %v6325 = vsel %vm6323, %v6324, %v6322
        %vm6326 = vcmp.lt.s32.totalorder %v6050, 0
        %v6327 = vsel %vm6326, 3.1415927, 0.0
        %vm6328 = vcmp.eq.f32.partialorder %v6002, 0.0
        %v6329 = vsel %vm6328, %v6327, %v6325
        %vm6330 = vcmp.ne.f32.partialorder %v6050, %v6050
        %vm6331 = vcmp.ne.f32.partialorder %v6002, %v6002
        %vm6332 = vmor %vm6330, %vm6331
        %v6333 = vsel %vm6332, nan, %v6329
        %vm6334 = vcmp.lt.f32.partialorder %v6050, 0.0
        %v6335 = vsel %vm6334, 2.3561945, 0.7853982
        %vm6336 = vcmp.eq.s32.totalorder %v6296, inf
        %vm6337 = vcmp.eq.s32.totalorder %v6297, inf
        %vm6338 = vmand %vm6336, %vm6337
        %v6339 = vsel %vm6338, %v6335, %v6333
        %v6340 = vand.u32 2147483647, %v6339
        %v6341 = vand.u32 %v6002, 2147483648
        %v6342 = vor.u32 %v6340, %v6341
        %v6343 = vand.u32 2147483647, %v6051
        %v6344 = vand.u32 2147483647, %v6003
        %v6345 = vmin.f32 %v6343, %v6344
        %v6346 = vmax.f32 %v6343, %v6344
        %v6347 = vrcp.pop %v6346
        %v6348 = vmul.f32 %v6345, %v6347
        %v6349 = vmul.f32 %v6348, %v6348
        %v6350 = vmul.f32 0.002785687, %v6349
        %v6351 = vadd.f32 %v6350, -0.015866
        %v6352 = vmul.f32 %v6351, %v6349
        %v6353 = vadd.f32 %v6352, 0.04247222
        %v6354 = vmul.f32 %v6353, %v6349
        %v6355 = vadd.f32 %v6354, -0.074975304
        %v6356 = vmul.f32 %v6355, %v6349
        %v6357 = vadd.f32 %v6356, 0.1064488
        %v6358 = vmul.f32 %v6357, %v6349
        %v6359 = vadd.f32 %v6358, -0.14207031
        %v6360 = vmul.f32 %v6359, %v6349
        %v6361 = vadd.f32 %v6360, 0.19993454
        %v6362 = vmul.f32 %v6361, %v6349
        %v6363 = vadd.f32 %v6362, -0.33333147
        %v6364 = vmul.f32 %v6363, %v6349
        %v6365 = vmul.f32 %v6364, %v6348
        %v6366 = vadd.f32 %v6365, %v6348
        %vm6367 = vcmp.gt.f32.partialorder %v6344, %v6343
        %v6368 = vsub.f32 1.5707964, %v6366
        %v6369 = vsel %vm6367, %v6368, %v6366
        %vm6370 = vcmp.lt.f32.partialorder %v6051, 0.0
        %v6371 = vsub.f32 3.1415927, %v6369
        %v6372 = vsel %vm6370, %v6371, %v6369
        %vm6373 = vcmp.lt.s32.totalorder %v6051, 0
        %v6374 = vsel %vm6373, 3.1415927, 0.0
        %vm6375 = vcmp.eq.f32.partialorder %v6003, 0.0
        %v6376 = vsel %vm6375, %v6374, %v6372
        %vm6377 = vcmp.ne.f32.partialorder %v6051, %v6051
        %vm6378 = vcmp.ne.f32.partialorder %v6003, %v6003
        %vm6379 = vmor %vm6377, %vm6378
        %v6380 = vsel %vm6379, nan, %v6376
        %vm6381 = vcmp.lt.f32.partialorder %v6051, 0.0
        %v6382 = vsel %vm6381, 2.3561945, 0.7853982
        %vm6383 = vcmp.eq.s32.totalorder %v6343, inf
        %vm6384 = vcmp.eq.s32.totalorder %v6344, inf
        %vm6385 = vmand %vm6383, %vm6384
        %v6386 = vsel %vm6385, %v6382, %v6380
        %v6387 = vand.u32 2147483647, %v6386
        %v6388 = vand.u32 %v6003, 2147483648
        %v6389 = vor.u32 %v6387, %v6388
        %v6390 = vand.u32 2147483647, %v6052
        %v6391 = vand.u32 2147483647, %v6004
        %v6392 = vmin.f32 %v6390, %v6391
        %v6393 = vmax.f32 %v6390, %v6391
        %v6394 = vrcp.pop %v6393
        %v6395 = vmul.f32 %v6392, %v6394
        %v6396 = vmul.f32 %v6395, %v6395
        %v6397 = vmul.f32 0.002785687, %v6396
        %v6398 = vadd.f32 %v6397, -0.015866
        %v6399 = vmul.f32 %v6398, %v6396
        %v6400 = vadd.f32 %v6399, 0.04247222
        %v6401 = vmul.f32 %v6400, %v6396
        %v6402 = vadd.f32 %v6401, -0.074975304
        %v6403 = vmul.f32 %v6402, %v6396
        %v6404 = vadd.f32 %v6403, 0.1064488
        %v6405 = vmul.f32 %v6404, %v6396
        %v6406 = vadd.f32 %v6405, -0.14207031
        %v6407 = vmul.f32 %v6406, %v6396
        %v6408 = vadd.f32 %v6407, 0.19993454
        %v6409 = vmul.f32 %v6408, %v6396
        %v6410 = vadd.f32 %v6409, -0.33333147
        %v6411 = vmul.f32 %v6410, %v6396
        %v6412 = vmul.f32 %v6411, %v6395
        %v6413 = vadd.f32 %v6412, %v6395
        %vm6414 = vcmp.gt.f32.partialorder %v6391, %v6390
        %v6415 = vsub.f32 1.5707964, %v6413
        %v6416 = vsel %vm6414, %v6415, %v6413
        %vm6417 = vcmp.lt.f32.partialorder %v6052, 0.0
        %v6418 = vsub.f32 3.1415927, %v6416
        %v6419 = vsel %vm6417, %v6418, %v6416
        %vm6420 = vcmp.lt.s32.totalorder %v6052, 0
        %v6421 = vsel %vm6420, 3.1415927, 0.0
        %vm6422 = vcmp.eq.f32.partialorder %v6004, 0.0
        %v6423 = vsel %vm6422, %v6421, %v6419
        %vm6424 = vcmp.ne.f32.partialorder %v6052, %v6052
        %vm6425 = vcmp.ne.f32.partialorder %v6004, %v6004
        %vm6426 = vmor %vm6424, %vm6425
        %v6427 = vsel %vm6426, nan, %v6423
        %vm6428 = vcmp.lt.f32.partialorder %v6052, 0.0
        %v6429 = vsel %vm6428, 2.3561945, 0.7853982
        %vm6430 = vcmp.eq.s32.totalorder %v6390, inf
        %vm6431 = vcmp.eq.s32.totalorder %v6391, inf
        %vm6432 = vmand %vm6430, %vm6431
        %v6433 = vsel %vm6432, %v6429, %v6427
        %v6434 = vand.u32 2147483647, %v6433
        %v6435 = vand.u32 %v6004, 2147483648
        %v6436 = vor.u32 %v6434, %v6435
        %v6437 = vand.u32 2147483647, %v6053
        %v6438 = vand.u32 2147483647, %v6005
        %v6439 = vmin.f32 %v6437, %v6438
        %v6440 = vmax.f32 %v6437, %v6438
        %v6441 = vrcp.pop %v6440
        %v6442 = vmul.f32 %v6439, %v6441
        %v6443 = vmul.f32 %v6442, %v6442
        %v6444 = vmul.f32 0.002785687, %v6443
        %v6445 = vadd.f32 %v6444, -0.015866
        %v6446 = vmul.f32 %v6445, %v6443
        %v6447 = vadd.f32 %v6446, 0.04247222
        %v6448 = vmul.f32 %v6447, %v6443
        %v6449 = vadd.f32 %v6448, -0.074975304
        %v6450 = vmul.f32 %v6449, %v6443
        %v6451 = vadd.f32 %v6450, 0.1064488
        %v6452 = vmul.f32 %v6451, %v6443
        %v6453 = vadd.f32 %v6452, -0.14207031
        %v6454 = vmul.f32 %v6453, %v6443
        %v6455 = vadd.f32 %v6454, 0.19993454
        %v6456 = vmul.f32 %v6455, %v6443
        %v6457 = vadd.f32 %v6456, -0.33333147
        %v6458 = vmul.f32 %v6457, %v6443
        %v6459 = vmul.f32 %v6458, %v6442
        %v6460 = vadd.f32 %v6459, %v6442
        %vm6461 = vcmp.gt.f32.partialorder %v6438, %v6437
        %v6462 = vsub.f32 1.5707964, %v6460
        %v6463 = vsel %vm6461, %v6462, %v6460
        %vm6464 = vcmp.lt.f32.partialorder %v6053, 0.0
        %v6465 = vsub.f32 3.1415927, %v6463
        %v6466 = vsel %vm6464, %v6465, %v6463
        %vm6467 = vcmp.lt.s32.totalorder %v6053, 0
        %v6468 = vsel %vm6467, 3.1415927, 0.0
        %vm6469 = vcmp.eq.f32.partialorder %v6005, 0.0
        %v6470 = vsel %vm6469, %v6468, %v6466
        %vm6471 = vcmp.ne.f32.partialorder %v6053, %v6053
        %vm6472 = vcmp.ne.f32.partialorder %v6005, %v6005
        %vm6473 = vmor %vm6471, %vm6472
        %v6474 = vsel %vm6473, nan, %v6470
        %vm6475 = vcmp.lt.f32.partialorder %v6053, 0.0
        %v6476 = vsel %vm6475, 2.3561945, 0.7853982
        %vm6477 = vcmp.eq.s32.totalorder %v6437, inf
        %vm6478 = vcmp.eq.s32.totalorder %v6438, inf
        %vm6479 = vmand %vm6477, %vm6478
        %v6480 = vsel %vm6479, %v6476, %v6474
        %v6481 = vand.u32 2147483647, %v6480
        %v6482 = vand.u32 %v6005, 2147483648
        %v6483 = vor.u32 %v6481, %v6482
        %v6484 = vand.u32 2147483647, %v6054
        %v6485 = vand.u32 2147483647, %v6006
        %v6486 = vmin.f32 %v6484, %v6485
        %v6487 = vmax.f32 %v6484, %v6485
        %v6488 = vrcp.pop %v6487
        %v6489 = vmul.f32 %v6486, %v6488
        %v6490 = vmul.f32 %v6489, %v6489
        %v6491 = vmul.f32 0.002785687, %v6490
        %v6492 = vadd.f32 %v6491, -0.015866
        %v6493 = vmul.f32 %v6492, %v6490
        %v6494 = vadd.f32 %v6493, 0.04247222
        %v6495 = vmul.f32 %v6494, %v6490
        %v6496 = vadd.f32 %v6495, -0.074975304
        %v6497 = vmul.f32 %v6496, %v6490
        %v6498 = vadd.f32 %v6497, 0.1064488
        %v6499 = vmul.f32 %v6498, %v6490
        %v6500 = vadd.f32 %v6499, -0.14207031
        %v6501 = vmul.f32 %v6500, %v6490
        %v6502 = vadd.f32 %v6501, 0.19993454
        %v6503 = vmul.f32 %v6502, %v6490
        %v6504 = vadd.f32 %v6503, -0.33333147
        %v6505 = vmul.f32 %v6504, %v6490
        %v6506 = vmul.f32 %v6505, %v6489
        %v6507 = vadd.f32 %v6506, %v6489
        %vm6508 = vcmp.gt.f32.partialorder %v6485, %v6484
        %v6509 = vsub.f32 1.5707964, %v6507
        %v6510 = vsel %vm6508, %v6509, %v6507
        %vm6511 = vcmp.lt.f32.partialorder %v6054, 0.0
        %v6512 = vsub.f32 3.1415927, %v6510
        %v6513 = vsel %vm6511, %v6512, %v6510
        %vm6514 = vcmp.lt.s32.totalorder %v6054, 0
        %v6515 = vsel %vm6514, 3.1415927, 0.0
        %vm6516 = vcmp.eq.f32.partialorder %v6006, 0.0
        %v6517 = vsel %vm6516, %v6515, %v6513
        %vm6518 = vcmp.ne.f32.partialorder %v6054, %v6054
        %vm6519 = vcmp.ne.f32.partialorder %v6006, %v6006
        %vm6520 = vmor %vm6518, %vm6519
        %v6521 = vsel %vm6520, nan, %v6517
        %vm6522 = vcmp.lt.f32.partialorder %v6054, 0.0
        %v6523 = vsel %vm6522, 2.3561945, 0.7853982
        %vm6524 = vcmp.eq.s32.totalorder %v6484, inf
        %vm6525 = vcmp.eq.s32.totalorder %v6485, inf
        %vm6526 = vmand %vm6524, %vm6525
        %v6527 = vsel %vm6526, %v6523, %v6521
        %v6528 = vand.u32 2147483647, %v6527
        %v6529 = vand.u32 %v6006, 2147483648
        %v6530 = vor.u32 %v6528, %v6529
        %v6531 = vand.u32 2147483647, %v6055
        %v6532 = vand.u32 2147483647, %v6007
        %v6533 = vmin.f32 %v6531, %v6532
        %v6534 = vmax.f32 %v6531, %v6532
        %v6535 = vrcp.pop %v6534
        %v6536 = vmul.f32 %v6533, %v6535
        %v6537 = vmul.f32 %v6536, %v6536
        %v6538 = vmul.f32 0.002785687, %v6537
        %v6539 = vadd.f32 %v6538, -0.015866
        %v6540 = vmul.f32 %v6539, %v6537
        %v6541 = vadd.f32 %v6540, 0.04247222
        %v6542 = vmul.f32 %v6541, %v6537
        %v6543 = vadd.f32 %v6542, -0.074975304
        %v6544 = vmul.f32 %v6543, %v6537
        %v6545 = vadd.f32 %v6544, 0.1064488
        %v6546 = vmul.f32 %v6545, %v6537
        %v6547 = vadd.f32 %v6546, -0.14207031
        %v6548 = vmul.f32 %v6547, %v6537
        %v6549 = vadd.f32 %v6548, 0.19993454
        %v6550 = vmul.f32 %v6549, %v6537
        %v6551 = vadd.f32 %v6550, -0.33333147
        %v6552 = vmul.f32 %v6551, %v6537
        %v6553 = vmul.f32 %v6552, %v6536
        %v6554 = vadd.f32 %v6553, %v6536
        %vm6555 = vcmp.gt.f32.partialorder %v6532, %v6531
        %v6556 = vsub.f32 1.5707964, %v6554
        %v6557 = vsel %vm6555, %v6556, %v6554
        %vm6558 = vcmp.lt.f32.partialorder %v6055, 0.0
        %v6559 = vsub.f32 3.1415927, %v6557
        %v6560 = vsel %vm6558, %v6559, %v6557
        %vm6561 = vcmp.lt.s32.totalorder %v6055, 0
        %v6562 = vsel %vm6561, 3.1415927, 0.0
        %vm6563 = vcmp.eq.f32.partialorder %v6007, 0.0
        %v6564 = vsel %vm6563, %v6562, %v6560
        %vm6565 = vcmp.ne.f32.partialorder %v6055, %v6055
        %vm6566 = vcmp.ne.f32.partialorder %v6007, %v6007
        %vm6567 = vmor %vm6565, %vm6566
        %v6568 = vsel %vm6567, nan, %v6564
        %vm6569 = vcmp.lt.f32.partialorder %v6055, 0.0
        %v6570 = vsel %vm6569, 2.3561945, 0.7853982
        %vm6571 = vcmp.eq.s32.totalorder %v6531, inf
        %vm6572 = vcmp.eq.s32.totalorder %v6532, inf
        %vm6573 = vmand %vm6571, %vm6572
        %v6574 = vsel %vm6573, %v6570, %v6568
        %v6575 = vand.u32 2147483647, %v6574
        %v6576 = vand.u32 %v6007, 2147483648
        %v6577 = vor.u32 %v6575, %v6576
        %v6578 = vand.u32 2147483647, %v6056
        %v6579 = vand.u32 2147483647, %v6008
        %v6580 = vmin.f32 %v6578, %v6579
        %v6581 = vmax.f32 %v6578, %v6579
        %v6582 = vrcp.pop %v6581
        %v6583 = vmul.f32 %v6580, %v6582
        %v6584 = vmul.f32 %v6583, %v6583
        %v6585 = vmul.f32 0.002785687, %v6584
        %v6586 = vadd.f32 %v6585, -0.015866
        %v6587 = vmul.f32 %v6586, %v6584
        %v6588 = vadd.f32 %v6587, 0.04247222
        %v6589 = vmul.f32 %v6588, %v6584
        %v6590 = vadd.f32 %v6589, -0.074975304
        %v6591 = vmul.f32 %v6590, %v6584
        %v6592 = vadd.f32 %v6591, 0.1064488
        %v6593 = vmul.f32 %v6592, %v6584
        %v6594 = vadd.f32 %v6593, -0.14207031
        %v6595 = vmul.f32 %v6594, %v6584
        %v6596 = vadd.f32 %v6595, 0.19993454
        %v6597 = vmul.f32 %v6596, %v6584
        %v6598 = vadd.f32 %v6597, -0.33333147
        %v6599 = vmul.f32 %v6598, %v6584
        %v6600 = vmul.f32 %v6599, %v6583
        %v6601 = vadd.f32 %v6600, %v6583
        %vm6602 = vcmp.gt.f32.partialorder %v6579, %v6578
        %v6603 = vsub.f32 1.5707964, %v6601
        %v6604 = vsel %vm6602, %v6603, %v6601
        %vm6605 = vcmp.lt.f32.partialorder %v6056, 0.0
        %v6606 = vsub.f32 3.1415927, %v6604
        %v6607 = vsel %vm6605, %v6606, %v6604
        %vm6608 = vcmp.lt.s32.totalorder %v6056, 0
        %v6609 = vsel %vm6608, 3.1415927, 0.0
        %vm6610 = vcmp.eq.f32.partialorder %v6008, 0.0
        %v6611 = vsel %vm6610, %v6609, %v6607
        %vm6612 = vcmp.ne.f32.partialorder %v6056, %v6056
        %vm6613 = vcmp.ne.f32.partialorder %v6008, %v6008
        %vm6614 = vmor %vm6612, %vm6613
        %v6615 = vsel %vm6614, nan, %v6611
        %vm6616 = vcmp.lt.f32.partialorder %v6056, 0.0
        %v6617 = vsel %vm6616, 2.3561945, 0.7853982
        %vm6618 = vcmp.eq.s32.totalorder %v6578, inf
        %vm6619 = vcmp.eq.s32.totalorder %v6579, inf
        %vm6620 = vmand %vm6618, %vm6619
        %v6621 = vsel %vm6620, %v6617, %v6615
        %v6622 = vand.u32 2147483647, %v6621
        %v6623 = vand.u32 %v6008, 2147483648
        %v6624 = vor.u32 %v6622, %v6623
        %v6625 = vand.u32 2147483647, %v6057
        %v6626 = vand.u32 2147483647, %v6009
        %v6627 = vmin.f32 %v6625, %v6626
        %v6628 = vmax.f32 %v6625, %v6626
        %v6629 = vrcp.pop %v6628
        %v6630 = vmul.f32 %v6627, %v6629
        %v6631 = vmul.f32 %v6630, %v6630
        %v6632 = vmul.f32 0.002785687, %v6631
        %v6633 = vadd.f32 %v6632, -0.015866
        %v6634 = vmul.f32 %v6633, %v6631
        %v6635 = vadd.f32 %v6634, 0.04247222
        %v6636 = vmul.f32 %v6635, %v6631
        %v6637 = vadd.f32 %v6636, -0.074975304
        %v6638 = vmul.f32 %v6637, %v6631
        %v6639 = vadd.f32 %v6638, 0.1064488
        %v6640 = vmul.f32 %v6639, %v6631
        %v6641 = vadd.f32 %v6640, -0.14207031
        %v6642 = vmul.f32 %v6641, %v6631
        %v6643 = vadd.f32 %v6642, 0.19993454
        %v6644 = vmul.f32 %v6643, %v6631
        %v6645 = vadd.f32 %v6644, -0.33333147
        %v6646 = vmul.f32 %v6645, %v6631
        %v6647 = vmul.f32 %v6646, %v6630
        %v6648 = vadd.f32 %v6647, %v6630
        %vm6649 = vcmp.gt.f32.partialorder %v6626, %v6625
        %v6650 = vsub.f32 1.5707964, %v6648
        %v6651 = vsel %vm6649, %v6650, %v6648
        %vm6652 = vcmp.lt.f32.partialorder %v6057, 0.0
        %v6653 = vsub.f32 3.1415927, %v6651
        %v6654 = vsel %vm6652, %v6653, %v6651
        %vm6655 = vcmp.lt.s32.totalorder %v6057, 0
        %v6656 = vsel %vm6655, 3.1415927, 0.0
        %vm6657 = vcmp.eq.f32.partialorder %v6009, 0.0
        %v6658 = vsel %vm6657, %v6656, %v6654
        %vm6659 = vcmp.ne.f32.partialorder %v6057, %v6057
        %vm6660 = vcmp.ne.f32.partialorder %v6009, %v6009
        %vm6661 = vmor %vm6659, %vm6660
        %v6662 = vsel %vm6661, nan, %v6658
        %vm6663 = vcmp.lt.f32.partialorder %v6057, 0.0
        %v6664 = vsel %vm6663, 2.3561945, 0.7853982
        %vm6665 = vcmp.eq.s32.totalorder %v6625, inf
        %vm6666 = vcmp.eq.s32.totalorder %v6626, inf
        %vm6667 = vmand %vm6665, %vm6666
        %v6668 = vsel %vm6667, %v6664, %v6662
        %v6669 = vand.u32 2147483647, %v6668
        %v6670 = vand.u32 %v6009, 2147483648
        %v6671 = vor.u32 %v6669, %v6670
        %v6672 = vand.u32 2147483647, %v6058
        %v6673 = vand.u32 2147483647, %v6010
        %v6674 = vmin.f32 %v6672, %v6673
        %v6675 = vmax.f32 %v6672, %v6673
        %v6676 = vrcp.pop %v6675
        %v6677 = vmul.f32 %v6674, %v6676
        %v6678 = vmul.f32 %v6677, %v6677
        %v6679 = vmul.f32 0.002785687, %v6678
        %v6680 = vadd.f32 %v6679, -0.015866
        %v6681 = vmul.f32 %v6680, %v6678
        %v6682 = vadd.f32 %v6681, 0.04247222
        %v6683 = vmul.f32 %v6682, %v6678
        %v6684 = vadd.f32 %v6683, -0.074975304
        %v6685 = vmul.f32 %v6684, %v6678
        %v6686 = vadd.f32 %v6685, 0.1064488
        %v6687 = vmul.f32 %v6686, %v6678
        %v6688 = vadd.f32 %v6687, -0.14207031
        %v6689 = vmul.f32 %v6688, %v6678
        %v6690 = vadd.f32 %v6689, 0.19993454
        %v6691 = vmul.f32 %v6690, %v6678
        %v6692 = vadd.f32 %v6691, -0.33333147
        %v6693 = vmul.f32 %v6692, %v6678
        %v6694 = vmul.f32 %v6693, %v6677
        %v6695 = vadd.f32 %v6694, %v6677
        %vm6696 = vcmp.gt.f32.partialorder %v6673, %v6672
        %v6697 = vsub.f32 1.5707964, %v6695
        %v6698 = vsel %vm6696, %v6697, %v6695
        %vm6699 = vcmp.lt.f32.partialorder %v6058, 0.0
        %v6700 = vsub.f32 3.1415927, %v6698
        %v6701 = vsel %vm6699, %v6700, %v6698
        %vm6702 = vcmp.lt.s32.totalorder %v6058, 0
        %v6703 = vsel %vm6702, 3.1415927, 0.0
        %vm6704 = vcmp.eq.f32.partialorder %v6010, 0.0
        %v6705 = vsel %vm6704, %v6703, %v6701
        %vm6706 = vcmp.ne.f32.partialorder %v6058, %v6058
        %vm6707 = vcmp.ne.f32.partialorder %v6010, %v6010
        %vm6708 = vmor %vm6706, %vm6707
        %v6709 = vsel %vm6708, nan, %v6705
        %vm6710 = vcmp.lt.f32.partialorder %v6058, 0.0
        %v6711 = vsel %vm6710, 2.3561945, 0.7853982
        %vm6712 = vcmp.eq.s32.totalorder %v6672, inf
        %vm6713 = vcmp.eq.s32.totalorder %v6673, inf
        %vm6714 = vmand %vm6712, %vm6713
        %v6715 = vsel %vm6714, %v6711, %v6709
        %v6716 = vand.u32 2147483647, %v6715
        %v6717 = vand.u32 %v6010, 2147483648
        %v6718 = vor.u32 %v6716, %v6717
        %v6719 = vand.u32 2147483647, %v6059
        %v6720 = vand.u32 2147483647, %v6011
        %v6721 = vmin.f32 %v6719, %v6720
        %v6722 = vmax.f32 %v6719, %v6720
        %v6723 = vrcp.pop %v6722
        %v6724 = vmul.f32 %v6721, %v6723
        %v6725 = vmul.f32 %v6724, %v6724
        %v6726 = vmul.f32 0.002785687, %v6725
        %v6727 = vadd.f32 %v6726, -0.015866
        %v6728 = vmul.f32 %v6727, %v6725
        %v6729 = vadd.f32 %v6728, 0.04247222
        %v6730 = vmul.f32 %v6729, %v6725
        %v6731 = vadd.f32 %v6730, -0.074975304
        %v6732 = vmul.f32 %v6731, %v6725
        %v6733 = vadd.f32 %v6732, 0.1064488
        %v6734 = vmul.f32 %v6733, %v6725
        %v6735 = vadd.f32 %v6734, -0.14207031
        %v6736 = vmul.f32 %v6735, %v6725
        %v6737 = vadd.f32 %v6736, 0.19993454
        %v6738 = vmul.f32 %v6737, %v6725
        %v6739 = vadd.f32 %v6738, -0.33333147
        %v6740 = vmul.f32 %v6739, %v6725
        %v6741 = vmul.f32 %v6740, %v6724
        %v6742 = vadd.f32 %v6741, %v6724
        %vm6743 = vcmp.gt.f32.partialorder %v6720, %v6719
        %v6744 = vsub.f32 1.5707964, %v6742
        %v6745 = vsel %vm6743, %v6744, %v6742
        %vm6746 = vcmp.lt.f32.partialorder %v6059, 0.0
        %v6747 = vsub.f32 3.1415927, %v6745
        %v6748 = vsel %vm6746, %v6747, %v6745
        %vm6749 = vcmp.lt.s32.totalorder %v6059, 0
        %v6750 = vsel %vm6749, 3.1415927, 0.0
        %vm6751 = vcmp.eq.f32.partialorder %v6011, 0.0
        %v6752 = vsel %vm6751, %v6750, %v6748
        %vm6753 = vcmp.ne.f32.partialorder %v6059, %v6059
        %vm6754 = vcmp.ne.f32.partialorder %v6011, %v6011
        %vm6755 = vmor %vm6753, %vm6754
        %v6756 = vsel %vm6755, nan, %v6752
        %vm6757 = vcmp.lt.f32.partialorder %v6059, 0.0
        %v6758 = vsel %vm6757, 2.3561945, 0.7853982
        %vm6759 = vcmp.eq.s32.totalorder %v6719, inf
        %vm6760 = vcmp.eq.s32.totalorder %v6720, inf
        %vm6761 = vmand %vm6759, %vm6760
        %v6762 = vsel %vm6761, %v6758, %v6756
        %v6763 = vand.u32 2147483647, %v6762
        %v6764 = vand.u32 %v6011, 2147483648
        %v6765 = vor.u32 %v6763, %v6764
        %v6766 = vand.u32 2147483647, %v6060
        %v6767 = vand.u32 2147483647, %v6012
        %v6768 = vmin.f32 %v6766, %v6767
        %v6769 = vmax.f32 %v6766, %v6767
        %v6770 = vrcp.pop %v6769
        %v6771 = vmul.f32 %v6768, %v6770
        %v6772 = vmul.f32 %v6771, %v6771
        %v6773 = vmul.f32 0.002785687, %v6772
        %v6774 = vadd.f32 %v6773, -0.015866
        %v6775 = vmul.f32 %v6774, %v6772
        %v6776 = vadd.f32 %v6775, 0.04247222
        %v6777 = vmul.f32 %v6776, %v6772
        %v6778 = vadd.f32 %v6777, -0.074975304
        %v6779 = vmul.f32 %v6778, %v6772
        %v6780 = vadd.f32 %v6779, 0.1064488
        %v6781 = vmul.f32 %v6780, %v6772
        %v6782 = vadd.f32 %v6781, -0.14207031
        %v6783 = vmul.f32 %v6782, %v6772
        %v6784 = vadd.f32 %v6783, 0.19993454
        %v6785 = vmul.f32 %v6784, %v6772
        %v6786 = vadd.f32 %v6785, -0.33333147
        %v6787 = vmul.f32 %v6786, %v6772
        %v6788 = vmul.f32 %v6787, %v6771
        %v6789 = vadd.f32 %v6788, %v6771
        %vm6790 = vcmp.gt.f32.partialorder %v6767, %v6766
        %v6791 = vsub.f32 1.5707964, %v6789
        %v6792 = vsel %vm6790, %v6791, %v6789
        %vm6793 = vcmp.lt.f32.partialorder %v6060, 0.0
        %v6794 = vsub.f32 3.1415927, %v6792
        %v6795 = vsel %vm6793, %v6794, %v6792
        %vm6796 = vcmp.lt.s32.totalorder %v6060, 0
        %v6797 = vsel %vm6796, 3.1415927, 0.0
        %vm6798 = vcmp.eq.f32.partialorder %v6012, 0.0
        %v6799 = vsel %vm6798, %v6797, %v6795
        %vm6800 = vcmp.ne.f32.partialorder %v6060, %v6060
        %vm6801 = vcmp.ne.f32.partialorder %v6012, %v6012
        %vm6802 = vmor %vm6800, %vm6801
        %v6803 = vsel %vm6802, nan, %v6799
        %vm6804 = vcmp.lt.f32.partialorder %v6060, 0.0
        %v6805 = vsel %vm6804, 2.3561945, 0.7853982
        %vm6806 = vcmp.eq.s32.totalorder %v6766, inf
        %vm6807 = vcmp.eq.s32.totalorder %v6767, inf
        %vm6808 = vmand %vm6806, %vm6807
        %v6809 = vsel %vm6808, %v6805, %v6803
        %v6810 = vand.u32 2147483647, %v6809
        %v6811 = vand.u32 %v6012, 2147483648
        %v6812 = vor.u32 %v6810, %v6811
        %vm6813 = vcmp.ge.f32.partialorder %v6107, 0.0
        %vm6814 = vcmp.ge.f32.partialorder %v6154, 0.0
        %vm6815 = vcmp.ge.f32.partialorder %v6201, 0.0
        %vm6816 = vcmp.ge.f32.partialorder %v6248, 0.0
        %vm6817 = vcmp.ge.f32.partialorder %v6295, 0.0
        %vm6818 = vcmp.ge.f32.partialorder %v6342, 0.0
        %vm6819 = vcmp.ge.f32.partialorder %v6389, 0.0
        %vm6820 = vcmp.ge.f32.partialorder %v6436, 0.0
        %vm6821 = vcmp.ge.f32.partialorder %v6483, 0.0
        %vm6822 = vcmp.ge.f32.partialorder %v6530, 0.0
        %vm6823 = vcmp.ge.f32.partialorder %v6577, 0.0
        %vm6824 = vcmp.ge.f32.partialorder %v6624, 0.0
        %vm6825 = vcmp.ge.f32.partialorder %v6671, 0.0
        %vm6826 = vcmp.ge.f32.partialorder %v6718, 0.0
        %vm6827 = vcmp.ge.f32.partialorder %v6765, 0.0
        %vm6828 = vcmp.ge.f32.partialorder %v6812, 0.0
        %v6829 = vadd.f32 %v6107, 6.2831855
        %v6830 = vadd.f32 %v6154, 6.2831855
        %v6831 = vadd.f32 %v6201, 6.2831855
        %v6832 = vadd.f32 %v6248, 6.2831855
        %v6833 = vadd.f32 %v6295, 6.2831855
        %v6834 = vadd.f32 %v6342, 6.2831855
        %v6835 = vadd.f32 %v6389, 6.2831855
        %v6836 = vadd.f32 %v6436, 6.2831855
        %v6837 = vadd.f32 %v6483, 6.2831855
        %v6838 = vadd.f32 %v6530, 6.2831855
        %v6839 = vadd.f32 %v6577, 6.2831855
        %v6840 = vadd.f32 %v6624, 6.2831855
        %v6841 = vadd.f32 %v6671, 6.2831855
        %v6842 = vadd.f32 %v6718, 6.2831855
        %v6843 = vadd.f32 %v6765, 6.2831855
        %v6844 = vadd.f32 %v6812, 6.2831855
        %v6845 = vsel %vm6813, %v6107, %v6829
        %v6846 = vsel %vm6814, %v6154, %v6830
        %v6847 = vsel %vm6815, %v6201, %v6831
        %v6848 = vsel %vm6816, %v6248, %v6832
        %v6849 = vsel %vm6817, %v6295, %v6833
        %v6850 = vsel %vm6818, %v6342, %v6834
        %v6851 = vsel %vm6819, %v6389, %v6835
        %v6852 = vsel %vm6820, %v6436, %v6836
        %v6853 = vsel %vm6821, %v6483, %v6837
        %v6854 = vsel %vm6822, %v6530, %v6838
        %v6855 = vsel %vm6823, %v6577, %v6839
        %v6856 = vsel %vm6824, %v6624, %v6840
        %v6857 = vsel %vm6825, %v6671, %v6841
        %v6858 = vsel %vm6826, %v6718, %v6842
        %v6859 = vsel %vm6827, %v6765, %v6843
        %v6860 = vsel %vm6828, %v6812, %v6844
        %v6861 = vmul.f32 %v4845, %v6845
        %v6862 = vmul.f32 %v4846, %v6846
        %v6863 = vmul.f32 %v4847, %v6847
        %v6864 = vmul.f32 %v4848, %v6848
        %v6865 = vmul.f32 %v4849, %v6849
        %v6866 = vmul.f32 %v4850, %v6850
        %v6867 = vmul.f32 %v4851, %v6851
        %v6868 = vmul.f32 %v4852, %v6852
        %v6869 = vmul.f32 %v4853, %v6853
        %v6870 = vmul.f32 %v4854, %v6854
        %v6871 = vmul.f32 %v4855, %v6855
        %v6872 = vmul.f32 %v4856, %v6856
        %v6873 = vmul.f32 %v4857, %v6857
        %v6874 = vmul.f32 %v4858, %v6858
        %v6875 = vmul.f32 %v4859, %v6859
        %v6876 = vmul.f32 %v4860, %v6860
        %v6877 = vrot.slane %v6861, 4
        %v6878 = vadd.f32 %v6861, %v6877
        %v6879 = vrot.slane %v6878, 2
        %v6880 = vadd.f32 %v6878, %v6879
        %v6881 = vrot.slane %v6880, 1
        %v6882 = vadd.f32 %v6880, %v6881
        %v6883 = vrot.slane %v6862, 4
        %v6884 = vadd.f32 %v6862, %v6883
        %v6885 = vrot.slane %v6884, 2
        %v6886 = vadd.f32 %v6884, %v6885
        %v6887 = vrot.slane %v6886, 1
        %v6888 = vadd.f32 %v6886, %v6887
        %v6889 = vrot.slane %v6863, 4
        %v6890 = vadd.f32 %v6863, %v6889
        %v6891 = vrot.slane %v6890, 2
        %v6892 = vadd.f32 %v6890, %v6891
        %v6893 = vrot.slane %v6892, 1
        %v6894 = vadd.f32 %v6892, %v6893
        %v6895 = vrot.slane %v6864, 4
        %v6896 = vadd.f32 %v6864, %v6895
        %v6897 = vrot.slane %v6896, 2
        %v6898 = vadd.f32 %v6896, %v6897
        %v6899 = vrot.slane %v6898, 1
        %v6900 = vadd.f32 %v6898, %v6899
        %v6901 = vrot.slane %v6865, 4
        %v6902 = vadd.f32 %v6865, %v6901
        %v6903 = vrot.slane %v6902, 2
        %v6904 = vadd.f32 %v6902, %v6903
        %v6905 = vrot.slane %v6904, 1
        %v6906 = vadd.f32 %v6904, %v6905
        %v6907 = vrot.slane %v6866, 4
        %v6908 = vadd.f32 %v6866, %v6907
        %v6909 = vrot.slane %v6908, 2
        %v6910 = vadd.f32 %v6908, %v6909
        %v6911 = vrot.slane %v6910, 1
        %v6912 = vadd.f32 %v6910, %v6911
        %v6913 = vrot.slane %v6867, 4
        %v6914 = vadd.f32 %v6867, %v6913
        %v6915 = vrot.slane %v6914, 2
        %v6916 = vadd.f32 %v6914, %v6915
        %v6917 = vrot.slane %v6916, 1
        %v6918 = vadd.f32 %v6916, %v6917
        %v6919 = vrot.slane %v6868, 4
        %v6920 = vadd.f32 %v6868, %v6919
        %v6921 = vrot.slane %v6920, 2
        %v6922 = vadd.f32 %v6920, %v6921
        %v6923 = vrot.slane %v6922, 1
        %v6924 = vadd.f32 %v6922, %v6923
        %v6925 = vrot.slane %v6869, 4
        %v6926 = vadd.f32 %v6869, %v6925
        %v6927 = vrot.slane %v6926, 2
        %v6928 = vadd.f32 %v6926, %v6927
        %v6929 = vrot.slane %v6928, 1
        %v6930 = vadd.f32 %v6928, %v6929
        %v6931 = vrot.slane %v6870, 4
        %v6932 = vadd.f32 %v6870, %v6931
        %v6933 = vrot.slane %v6932, 2
        %v6934 = vadd.f32 %v6932, %v6933
        %v6935 = vrot.slane %v6934, 1
        %v6936 = vadd.f32 %v6934, %v6935
        %v6937 = vrot.slane %v6871, 4
        %v6938 = vadd.f32 %v6871, %v6937
        %v6939 = vrot.slane %v6938, 2
        %v6940 = vadd.f32 %v6938, %v6939
        %v6941 = vrot.slane %v6940, 1
        %v6942 = vadd.f32 %v6940, %v6941
        %v6943 = vrot.slane %v6872, 4
        %v6944 = vadd.f32 %v6872, %v6943
        %v6945 = vrot.slane %v6944, 2
        %v6946 = vadd.f32 %v6944, %v6945
        %v6947 = vrot.slane %v6946, 1
        %v6948 = vadd.f32 %v6946, %v6947
        %v6949 = vrot.slane %v6873, 4
        %v6950 = vadd.f32 %v6873, %v6949
        %v6951 = vrot.slane %v6950, 2
        %v6952 = vadd.f32 %v6950, %v6951
        %v6953 = vrot.slane %v6952, 1
        %v6954 = vadd.f32 %v6952, %v6953
        %v6955 = vrot.slane %v6874, 4
        %v6956 = vadd.f32 %v6874, %v6955
        %v6957 = vrot.slane %v6956, 2
        %v6958 = vadd.f32 %v6956, %v6957
        %v6959 = vrot.slane %v6958, 1
        %v6960 = vadd.f32 %v6958, %v6959
        %v6961 = vrot.slane %v6875, 4
        %v6962 = vadd.f32 %v6875, %v6961
        %v6963 = vrot.slane %v6962, 2
        %v6964 = vadd.f32 %v6962, %v6963
        %v6965 = vrot.slane %v6964, 1
        %v6966 = vadd.f32 %v6964, %v6965
        %v6967 = vrot.slane %v6876, 4
        %v6968 = vadd.f32 %v6876, %v6967
        %v6969 = vrot.slane %v6968, 2
        %v6970 = vadd.f32 %v6968, %v6969
        %v6971 = vrot.slane %v6970, 1
        %v6972 = vadd.f32 %v6970, %v6971
        %v6973 = vmul.f32 %v5885, %v4845
        %v6974 = vmul.f32 %v5886, %v4846
        %v6975 = vmul.f32 %v5887, %v4847
        %v6976 = vmul.f32 %v5888, %v4848
        %v6977 = vmul.f32 %v5889, %v4849
        %v6978 = vmul.f32 %v5890, %v4850
        %v6979 = vmul.f32 %v5891, %v4851
        %v6980 = vmul.f32 %v5892, %v4852
        %v6981 = vmul.f32 %v5893, %v4853
        %v6982 = vmul.f32 %v5894, %v4854
        %v6983 = vmul.f32 %v5895, %v4855
        %v6984 = vmul.f32 %v5896, %v4856
        %v6985 = vmul.f32 %v5897, %v4857
        %v6986 = vmul.f32 %v5898, %v4858
        %v6987 = vmul.f32 %v5899, %v4859
        %v6988 = vmul.f32 %v5900, %v4860
        %v6989 = vrot.slane %v6973, 4
        %v6990 = vadd.f32 %v6973, %v6989
        %v6991 = vrot.slane %v6990, 2
        %v6992 = vadd.f32 %v6990, %v6991
        %v6993 = vrot.slane %v6992, 1
        %v6994 = vadd.f32 %v6992, %v6993
        %v6995 = vrot.slane %v6974, 4
        %v6996 = vadd.f32 %v6974, %v6995
        %v6997 = vrot.slane %v6996, 2
        %v6998 = vadd.f32 %v6996, %v6997
        %v6999 = vrot.slane %v6998, 1
        %v7000 = vadd.f32 %v6998, %v6999
        %v7001 = vrot.slane %v6975, 4
        %v7002 = vadd.f32 %v6975, %v7001
        %v7003 = vrot.slane %v7002, 2
        %v7004 = vadd.f32 %v7002, %v7003
        %v7005 = vrot.slane %v7004, 1
        %v7006 = vadd.f32 %v7004, %v7005
        %v7007 = vrot.slane %v6976, 4
        %v7008 = vadd.f32 %v6976, %v7007
        %v7009 = vrot.slane %v7008, 2
        %v7010 = vadd.f32 %v7008, %v7009
        %v7011 = vrot.slane %v7010, 1
        %v7012 = vadd.f32 %v7010, %v7011
        %v7013 = vrot.slane %v6977, 4
        %v7014 = vadd.f32 %v6977, %v7013
        %v7015 = vrot.slane %v7014, 2
        %v7016 = vadd.f32 %v7014, %v7015
        %v7017 = vrot.slane %v7016, 1
        %v7018 = vadd.f32 %v7016, %v7017
        %v7019 = vrot.slane %v6978, 4
        %v7020 = vadd.f32 %v6978, %v7019
        %v7021 = vrot.slane %v7020, 2
        %v7022 = vadd.f32 %v7020, %v7021
        %v7023 = vrot.slane %v7022, 1
        %v7024 = vadd.f32 %v7022, %v7023
        %v7025 = vrot.slane %v6979, 4
        %v7026 = vadd.f32 %v6979, %v7025
        %v7027 = vrot.slane %v7026, 2
        %v7028 = vadd.f32 %v7026, %v7027
        %v7029 = vrot.slane %v7028, 1
        %v7030 = vadd.f32 %v7028, %v7029
        %v7031 = vrot.slane %v6980, 4
        %v7032 = vadd.f32 %v6980, %v7031
        %v7033 = vrot.slane %v7032, 2
        %v7034 = vadd.f32 %v7032, %v7033
        %v7035 = vrot.slane %v7034, 1
        %v7036 = vadd.f32 %v7034, %v7035
        %v7037 = vrot.slane %v6981, 4
        %v7038 = vadd.f32 %v6981, %v7037
        %v7039 = vrot.slane %v7038, 2
        %v7040 = vadd.f32 %v7038, %v7039
        %v7041 = vrot.slane %v7040, 1
        %v7042 = vadd.f32 %v7040, %v7041
        %v7043 = vrot.slane %v6982, 4
        %v7044 = vadd.f32 %v6982, %v7043
        %v7045 = vrot.slane %v7044, 2
        %v7046 = vadd.f32 %v7044, %v7045
        %v7047 = vrot.slane %v7046, 1
        %v7048 = vadd.f32 %v7046, %v7047
        %v7049 = vrot.slane %v6983, 4
        %v7050 = vadd.f32 %v6983, %v7049
        %v7051 = vrot.slane %v7050, 2
        %v7052 = vadd.f32 %v7050, %v7051
        %v7053 = vrot.slane %v7052, 1
        %v7054 = vadd.f32 %v7052, %v7053
        %v7055 = vrot.slane %v6984, 4
        %v7056 = vadd.f32 %v6984, %v7055
        %v7057 = vrot.slane %v7056, 2
        %v7058 = vadd.f32 %v7056, %v7057
        %v7059 = vrot.slane %v7058, 1
        %v7060 = vadd.f32 %v7058, %v7059
        %v7061 = vrot.slane %v6985, 4
        %v7062 = vadd.f32 %v6985, %v7061
        %v7063 = vrot.slane %v7062, 2
        %v7064 = vadd.f32 %v7062, %v7063
        %v7065 = vrot.slane %v7064, 1
        %v7066 = vadd.f32 %v7064, %v7065
        %v7067 = vrot.slane %v6986, 4
        %v7068 = vadd.f32 %v6986, %v7067
        %v7069 = vrot.slane %v7068, 2
        %v7070 = vadd.f32 %v7068, %v7069
        %v7071 = vrot.slane %v7070, 1
        %v7072 = vadd.f32 %v7070, %v7071
        %v7073 = vrot.slane %v6987, 4
        %v7074 = vadd.f32 %v6987, %v7073
        %v7075 = vrot.slane %v7074, 2
        %v7076 = vadd.f32 %v7074, %v7075
        %v7077 = vrot.slane %v7076, 1
        %v7078 = vadd.f32 %v7076, %v7077
        %v7079 = vrot.slane %v6988, 4
        %v7080 = vadd.f32 %v6988, %v7079
        %v7081 = vrot.slane %v7080, 2
        %v7082 = vadd.f32 %v7080, %v7081
        %v7083 = vrot.slane %v7082, 1
        %v7084 = vadd.f32 %v7082, %v7083
        %v7085 = vmul.f32 %v1918, %v1918
        %v7086 = vmul.f32 %v1919, %v1919
        %v7087 = vmul.f32 %v1920, %v1920
        %v7088 = vmul.f32 %v1921, %v1921
        %v7089 = vmul.f32 %v1922, %v1922
        %v7090 = vmul.f32 %v1923, %v1923
        %v7091 = vmul.f32 %v1924, %v1924
        %v7092 = vmul.f32 %v1925, %v1925
        %v7093 = vmul.f32 %v1926, %v1926
        %v7094 = vmul.f32 %v1927, %v1927
        %v7095 = vmul.f32 %v1928, %v1928
        %v7096 = vmul.f32 %v1929, %v1929
        %v7097 = vmul.f32 %v1930, %v1930
        %v7098 = vmul.f32 %v1931, %v1931
        %v7099 = vmul.f32 %v1932, %v1932
        %v7100 = vmul.f32 %v1933, %v1933
        %v7101 = vsub.f32 1.0, %v7085
        %v7102 = vsub.f32 1.0, %v7086
        %v7103 = vsub.f32 1.0, %v7087
        %v7104 = vsub.f32 1.0, %v7088
        %v7105 = vsub.f32 1.0, %v7089
        %v7106 = vsub.f32 1.0, %v7090
        %v7107 = vsub.f32 1.0, %v7091
        %v7108 = vsub.f32 1.0, %v7092
        %v7109 = vsub.f32 1.0, %v7093
        %v7110 = vsub.f32 1.0, %v7094
        %v7111 = vsub.f32 1.0, %v7095
        %v7112 = vsub.f32 1.0, %v7096
        %v7113 = vsub.f32 1.0, %v7097
        %v7114 = vsub.f32 1.0, %v7098
        %v7115 = vsub.f32 1.0, %v7099
        %v7116 = vsub.f32 1.0, %v7100
        %v7117 = vmax.f32 %v7101, 0.0
        %v7118 = vmax.f32 %v7102, 0.0
        %v7119 = vmax.f32 %v7103, 0.0
        %v7120 = vmax.f32 %v7104, 0.0
        %v7121 = vmax.f32 %v7105, 0.0
        %v7122 = vmax.f32 %v7106, 0.0
        %v7123 = vmax.f32 %v7107, 0.0
        %v7124 = vmax.f32 %v7108, 0.0
        %v7125 = vmax.f32 %v7109, 0.0
        %v7126 = vmax.f32 %v7110, 0.0
        %v7127 = vmax.f32 %v7111, 0.0
        %v7128 = vmax.f32 %v7112, 0.0
        %v7129 = vmax.f32 %v7113, 0.0
        %v7130 = vmax.f32 %v7114, 0.0
        %v7131 = vmax.f32 %v7115, 0.0
        %v7132 = vmax.f32 %v7116, 0.0
        %v7133 = vrsqrt.pop %v7117
        %v7134 = vmul.f32 %v7117, %v7133
        %vm7135 = vcmp.eq.f32.partialorder %v7117, inf
        %v7136 = vsel %vm7135, %v7117, %v7134
        %vm7137 = vcmp.eq.f32.partialorder %v7117, 0.0
        %v7138 = vand.u32 %v7117, 2147483648
        %v7139 = vsel %vm7137, %v7138, %v7136
        %v7140 = vrsqrt.pop %v7118
        %v7141 = vmul.f32 %v7118, %v7140
        %vm7142 = vcmp.eq.f32.partialorder %v7118, inf
        %v7143 = vsel %vm7142, %v7118, %v7141
        %vm7144 = vcmp.eq.f32.partialorder %v7118, 0.0
        %v7145 = vand.u32 %v7118, 2147483648
        %v7146 = vsel %vm7144, %v7145, %v7143
        %v7147 = vrsqrt.pop %v7119
        %v7148 = vmul.f32 %v7119, %v7147
        %vm7149 = vcmp.eq.f32.partialorder %v7119, inf
        %v7150 = vsel %vm7149, %v7119, %v7148
        %vm7151 = vcmp.eq.f32.partialorder %v7119, 0.0
        %v7152 = vand.u32 %v7119, 2147483648
        %v7153 = vsel %vm7151, %v7152, %v7150
        %v7154 = vrsqrt.pop %v7120
        %v7155 = vmul.f32 %v7120, %v7154
        %vm7156 = vcmp.eq.f32.partialorder %v7120, inf
        %v7157 = vsel %vm7156, %v7120, %v7155
        %vm7158 = vcmp.eq.f32.partialorder %v7120, 0.0
        %v7159 = vand.u32 %v7120, 2147483648
        %v7160 = vsel %vm7158, %v7159, %v7157
        %v7161 = vrsqrt.pop %v7121
        %v7162 = vmul.f32 %v7121, %v7161
        %vm7163 = vcmp.eq.f32.partialorder %v7121, inf
        %v7164 = vsel %vm7163, %v7121, %v7162
        %vm7165 = vcmp.eq.f32.partialorder %v7121, 0.0
        %v7166 = vand.u32 %v7121, 2147483648
        %v7167 = vsel %vm7165, %v7166, %v7164
        %v7168 = vrsqrt.pop %v7122
        %v7169 = vmul.f32 %v7122, %v7168
        %vm7170 = vcmp.eq.f32.partialorder %v7122, inf
        %v7171 = vsel %vm7170, %v7122, %v7169
        %vm7172 = vcmp.eq.f32.partialorder %v7122, 0.0
        %v7173 = vand.u32 %v7122, 2147483648
        %v7174 = vsel %vm7172, %v7173, %v7171
        %v7175 = vrsqrt.pop %v7123
        %v7176 = vmul.f32 %v7123, %v7175
        %vm7177 = vcmp.eq.f32.partialorder %v7123, inf
        %v7178 = vsel %vm7177, %v7123, %v7176
        %vm7179 = vcmp.eq.f32.partialorder %v7123, 0.0
        %v7180 = vand.u32 %v7123, 2147483648
        %v7181 = vsel %vm7179, %v7180, %v7178
        %v7182 = vrsqrt.pop %v7124
        %v7183 = vmul.f32 %v7124, %v7182
        %vm7184 = vcmp.eq.f32.partialorder %v7124, inf
        %v7185 = vsel %vm7184, %v7124, %v7183
        %vm7186 = vcmp.eq.f32.partialorder %v7124, 0.0
        %v7187 = vand.u32 %v7124, 2147483648
        %v7188 = vsel %vm7186, %v7187, %v7185
        %v7189 = vrsqrt.pop %v7125
        %v7190 = vmul.f32 %v7125, %v7189
        %vm7191 = vcmp.eq.f32.partialorder %v7125, inf
        %v7192 = vsel %vm7191, %v7125, %v7190
        %vm7193 = vcmp.eq.f32.partialorder %v7125, 0.0
        %v7194 = vand.u32 %v7125, 2147483648
        %v7195 = vsel %vm7193, %v7194, %v7192
        %v7196 = vrsqrt.pop %v7126
        %v7197 = vmul.f32 %v7126, %v7196
        %vm7198 = vcmp.eq.f32.partialorder %v7126, inf
        %v7199 = vsel %vm7198, %v7126, %v7197
        %vm7200 = vcmp.eq.f32.partialorder %v7126, 0.0
        %v7201 = vand.u32 %v7126, 2147483648
        %v7202 = vsel %vm7200, %v7201, %v7199
        %v7203 = vrsqrt.pop %v7127
        %v7204 = vmul.f32 %v7127, %v7203
        %vm7205 = vcmp.eq.f32.partialorder %v7127, inf
        %v7206 = vsel %vm7205, %v7127, %v7204
        %vm7207 = vcmp.eq.f32.partialorder %v7127, 0.0
        %v7208 = vand.u32 %v7127, 2147483648
        %v7209 = vsel %vm7207, %v7208, %v7206
        %v7210 = vrsqrt.pop %v7128
        %v7211 = vmul.f32 %v7128, %v7210
        %vm7212 = vcmp.eq.f32.partialorder %v7128, inf
        %v7213 = vsel %vm7212, %v7128, %v7211
        %vm7214 = vcmp.eq.f32.partialorder %v7128, 0.0
        %v7215 = vand.u32 %v7128, 2147483648
        %v7216 = vsel %vm7214, %v7215, %v7213
        %v7217 = vrsqrt.pop %v7129
        %v7218 = vmul.f32 %v7129, %v7217
        %vm7219 = vcmp.eq.f32.partialorder %v7129, inf
        %v7220 = vsel %vm7219, %v7129, %v7218
        %vm7221 = vcmp.eq.f32.partialorder %v7129, 0.0
        %v7222 = vand.u32 %v7129, 2147483648
        %v7223 = vsel %vm7221, %v7222, %v7220
        %v7224 = vrsqrt.pop %v7130
        %v7225 = vmul.f32 %v7130, %v7224
        %vm7226 = vcmp.eq.f32.partialorder %v7130, inf
        %v7227 = vsel %vm7226, %v7130, %v7225
        %vm7228 = vcmp.eq.f32.partialorder %v7130, 0.0
        %v7229 = vand.u32 %v7130, 2147483648
        %v7230 = vsel %vm7228, %v7229, %v7227
        %v7231 = vrsqrt.pop %v7131
        %v7232 = vmul.f32 %v7131, %v7231
        %vm7233 = vcmp.eq.f32.partialorder %v7131, inf
        %v7234 = vsel %vm7233, %v7131, %v7232
        %vm7235 = vcmp.eq.f32.partialorder %v7131, 0.0
        %v7236 = vand.u32 %v7131, 2147483648
        %v7237 = vsel %vm7235, %v7236, %v7234
        %v7238 = vrsqrt.pop %v7132
        %v7239 = vmul.f32 %v7132, %v7238
        %vm7240 = vcmp.eq.f32.partialorder %v7132, inf
        %v7241 = vsel %vm7240, %v7132, %v7239
        %vm7242 = vcmp.eq.f32.partialorder %v7132, 0.0
        %v7243 = vand.u32 %v7132, 2147483648
        %v7244 = vsel %vm7242, %v7243, %v7241
        %v7245 = vand.u32 2147483647, %v6882
        %vm7246 = vcmp.le.f32.partialorder %v7245, 0.7853982
        %vm7247 = vcmp.lt.s32.totalorder %v6882, 0
        %v7248 = vand.u32 %v6882, 2139095040
        %v7249 = vshrl.u32 %v7248, 23
        %v7250 = vsub.s32 %v7249, 127
        %v7251 = vand.u32 2147483647, %v6882
        %v7252 = vand.u32 %v7251, 8388607
        %v7253 = vor.u32 %v7252, 8388608
        %v7254 = vsub.s32 0, %v7253
        %v7255 = vadd.s32 %v7250, 1
        %vm7256 = vcmp.gt.s32.totalorder %v7255, 0
        %v7257 = vsel %vm7256, %v7255, 0
        %v7258 = vshrl.u32 %v7257, 5
        %v7259 = vand.u32 %v7257, 31
        %v7260 = vsub.s32 32, %v7259
        %v7261 = vshrl.u32 683565275, %v7260
        %v7262 = vshll.u32 683565275, %v7259
        %v7263 = vshrl.u32 2475754826, %v7260
        %v7264 = vor.u32 %v7262, %v7263
        %v7265 = vshll.u32 2475754826, %v7259
        %v7266 = vshrl.u32 2131351028, %v7260
        %v7267 = vor.u32 %v7265, %v7266
        %v7268 = vshll.u32 2131351028, %v7259
        %v7269 = vshrl.u32 2102212464, %v7260
        %v7270 = vor.u32 %v7268, %v7269
        %v7271 = vshll.u32 2102212464, %v7259
        %v7272 = vshrl.u32 920167782, %v7260
        %v7273 = vor.u32 %v7271, %v7272
        %v7274 = vshll.u32 920167782, %v7259
        %v7275 = vshrl.u32 1326507024, %v7260
        %v7276 = vor.u32 %v7274, %v7275
        %vm7277 = vcmp.lt.s32.totalorder %v7258, 1
        %vm7278 = vcmp.lt.s32.totalorder %v7258, 2
        %vm7279 = vcmp.lt.s32.totalorder %v7258, 3
        %vm7280 = vcmp.lt.s32.totalorder %v7258, 4
        %v7281 = vsel %vm7277, %v7261, %v7264
        %v7282 = vsel %vm7280, %v7270, 2102212464
        %v7283 = vsel %vm7279, %v7267, %v7282
        %v7284 = vsel %vm7278, %v7281, %v7283
        %v7285 = vsel %vm7277, %v7264, %v7267
        %v7286 = vsel %vm7280, %v7273, 920167782
        %v7287 = vsel %vm7279, %v7270, %v7286
        %v7288 = vsel %vm7278, %v7285, %v7287
        %v7289 = vsel %vm7277, %v7267, %v7270
        %v7290 = vsel %vm7280, %v7276, 1326507024
        %v7291 = vsel %vm7279, %v7273, %v7290
        %v7292 = vsel %vm7278, %v7289, %v7291
        %v7293 = vshll.u32 %v7253, 8
        %v7294 = vmul.u32.u64.compose %v7293, %v7292
        %v7295 = vextract.low.u32 %v7294
        %v7296 = vextract.high.u32 %v7294
        %v7297 = vmul.u32.u64.compose %v7293, %v7288
        %v7298 = vextract.low.u32 %v7297
        %v7299 = vextract.high.u32 %v7297
        %v7300 = vmul.u32 %v7293, %v7284
        %v7301 = vadd.s32 %v7296, %v7298
        %vm7302 = vc.u32 %v7296, %v7298
        %v7303 = vadd.s32 %v7299, 1
        %v7304 = vsel %vm7302, %v7303, %v7299
        %v7305 = vadd.s32 %v7300, %v7304
        %v7306 = vadd.s32 %v7305, 536870912
        %v7307 = vshrl.u32 %v7306, 30
        %v7308 = vshll.u32 %v7307, 30
        %v7309 = vsub.s32 %v7305, %v7308
        %vm7310 = vcmp.lt.s32.totalorder %v7309, 0
        %v7311 = vsub.s32 0, %v7309
        %v7312 = vsel %vm7310, %v7311, %v7309
        %v7313 = vclz %v7312
        %v7314 = vsub.s32 %v7313, 2
        %vm7315 = vcmp.gt.s32.totalorder 0, %v7314
        %v7316 = vsel %vm7315, 0, %v7314
        %v7317 = vsub.s32 32, %v7316
        %v7318 = vshll.u32 %v7309, %v7316
        %v7319 = vshrl.u32 %v7301, %v7317
        %v7320 = vor.u32 %v7318, %v7319
        %v7321 = vsub.s32 4294967266, %v7316
        %v7322 = vadd.s32 %v7321, 127
        %v7323 = vshll.u32 %v7322, 23
        %v7324 = vor.u32 4788187, %v7323
        %v7325 = vand.u32 2147483647, %v7324
        %v7327 = vcvt.s32.f32 %v7320
        %v7328 = vmul.f32 %v7327, %v7325
        %v7329 = vxor.u32 %v7328, 2147483648
        %v7330 = vsel %vm7247, %v7329, %v7328
        %v7331 = vsub.s32 4, %v7307
        %v7332 = vsel %vm7247, %v7331, %v7307
        %v7333 = vsel %vm7246, %v6882, %v7330
        %v7334 = vsel %vm7246, 0, %v7332
        %v7335 = vcosq.f32.pop %v7333
        %v7336 = vsinq.f32.pop %v7333
        %vm7337 = vweird.f32 %v6882
        %v7338 = vand.u32 %v7334, 3
        %vm7339 = vcmp.lt.s32.totalorder %v7338, 2
        %vm7340 = vcmp.eq.s32.totalorder %v7338, 0
        %v7341 = vxor.u32 %v7336, 2147483648
        %v7342 = vsel %vm7340, %v7335, %v7341
        %vm7343 = vcmp.eq.s32.totalorder %v7338, 2
        %v7344 = vxor.u32 %v7335, 2147483648
        %v7345 = vsel %vm7343, %v7344, %v7336
        %v7346 = vsel %vm7339, %v7342, %v7345
        %v7347 = vsel %vm7337, nan, %v7346
        %v7348 = vand.u32 2147483647, %v6888
        %vm7349 = vcmp.le.f32.partialorder %v7348, 0.7853982
        %vm7350 = vcmp.lt.s32.totalorder %v6888, 0
        %v7351 = vand.u32 %v6888, 2139095040
        %v7352 = vshrl.u32 %v7351, 23
        %v7353 = vsub.s32 %v7352, 127
        %v7354 = vand.u32 2147483647, %v6888
        %v7355 = vand.u32 %v7354, 8388607
        %v7356 = vor.u32 %v7355, 8388608
        %v7357 = vsub.s32 0, %v7356
        %v7358 = vadd.s32 %v7353, 1
        %vm7359 = vcmp.gt.s32.totalorder %v7358, 0
        %v7360 = vsel %vm7359, %v7358, 0
        %v7361 = vshrl.u32 %v7360, 5
        %v7362 = vand.u32 %v7360, 31
        %v7363 = vsub.s32 32, %v7362
        %v7364 = vshrl.u32 683565275, %v7363
        %v7365 = vshll.u32 683565275, %v7362
        %v7366 = vshrl.u32 2475754826, %v7363
        %v7367 = vor.u32 %v7365, %v7366
        %v7368 = vshll.u32 2475754826, %v7362
        %v7369 = vshrl.u32 2131351028, %v7363
        %v7370 = vor.u32 %v7368, %v7369
        %v7371 = vshll.u32 2131351028, %v7362
        %v7372 = vshrl.u32 2102212464, %v7363
        %v7373 = vor.u32 %v7371, %v7372
        %v7374 = vshll.u32 2102212464, %v7362
        %v7375 = vshrl.u32 920167782, %v7363
        %v7376 = vor.u32 %v7374, %v7375
        %v7377 = vshll.u32 920167782, %v7362
        %v7378 = vshrl.u32 1326507024, %v7363
        %v7379 = vor.u32 %v7377, %v7378
        %vm7380 = vcmp.lt.s32.totalorder %v7361, 1
        %vm7381 = vcmp.lt.s32.totalorder %v7361, 2
        %vm7382 = vcmp.lt.s32.totalorder %v7361, 3
        %vm7383 = vcmp.lt.s32.totalorder %v7361, 4
        %v7384 = vsel %vm7380, %v7364, %v7367
        %v7385 = vsel %vm7383, %v7373, 2102212464
        %v7386 = vsel %vm7382, %v7370, %v7385
        %v7387 = vsel %vm7381, %v7384, %v7386
        %v7388 = vsel %vm7380, %v7367, %v7370
        %v7389 = vsel %vm7383, %v7376, 920167782
        %v7390 = vsel %vm7382, %v7373, %v7389
        %v7391 = vsel %vm7381, %v7388, %v7390
        %v7392 = vsel %vm7380, %v7370, %v7373
        %v7393 = vsel %vm7383, %v7379, 1326507024
        %v7394 = vsel %vm7382, %v7376, %v7393
        %v7395 = vsel %vm7381, %v7392, %v7394
        %v7396 = vshll.u32 %v7356, 8
        %v7397 = vmul.u32.u64.compose %v7396, %v7395
        %v7398 = vextract.low.u32 %v7397
        %v7399 = vextract.high.u32 %v7397
        %v7400 = vmul.u32.u64.compose %v7396, %v7391
        %v7401 = vextract.low.u32 %v7400
        %v7402 = vextract.high.u32 %v7400
        %v7403 = vmul.u32 %v7396, %v7387
        %v7404 = vadd.s32 %v7399, %v7401
        %vm7405 = vc.u32 %v7399, %v7401
        %v7406 = vadd.s32 %v7402, 1
        %v7407 = vsel %vm7405, %v7406, %v7402
        %v7408 = vadd.s32 %v7403, %v7407
        %v7409 = vadd.s32 %v7408, 536870912
        %v7410 = vshrl.u32 %v7409, 30
        %v7411 = vshll.u32 %v7410, 30
        %v7412 = vsub.s32 %v7408, %v7411
        %vm7413 = vcmp.lt.s32.totalorder %v7412, 0
        %v7414 = vsub.s32 0, %v7412
        %v7415 = vsel %vm7413, %v7414, %v7412
        %v7416 = vclz %v7415
        %v7417 = vsub.s32 %v7416, 2
        %vm7418 = vcmp.gt.s32.totalorder 0, %v7417
        %v7419 = vsel %vm7418, 0, %v7417
        %v7420 = vsub.s32 32, %v7419
        %v7421 = vshll.u32 %v7412, %v7419
        %v7422 = vshrl.u32 %v7404, %v7420
        %v7423 = vor.u32 %v7421, %v7422
        %v7424 = vsub.s32 4294967266, %v7419
        %v7425 = vadd.s32 %v7424, 127
        %v7426 = vshll.u32 %v7425, 23
        %v7427 = vor.u32 4788187, %v7426
        %v7428 = vand.u32 2147483647, %v7427
        %v7430 = vcvt.s32.f32 %v7423
        %v7431 = vmul.f32 %v7430, %v7428
        %v7432 = vxor.u32 %v7431, 2147483648
        %v7433 = vsel %vm7350, %v7432, %v7431
        %v7434 = vsub.s32 4, %v7410
        %v7435 = vsel %vm7350, %v7434, %v7410
        %v7436 = vsel %vm7349, %v6888, %v7433
        %v7437 = vsel %vm7349, 0, %v7435
        %v7438 = vcosq.f32.pop %v7436
        %v7439 = vsinq.f32.pop %v7436
        %vm7440 = vweird.f32 %v6888
        %v7441 = vand.u32 %v7437, 3
        %vm7442 = vcmp.lt.s32.totalorder %v7441, 2
        %vm7443 = vcmp.eq.s32.totalorder %v7441, 0
        %v7444 = vxor.u32 %v7439, 2147483648
        %v7445 = vsel %vm7443, %v7438, %v7444
        %vm7446 = vcmp.eq.s32.totalorder %v7441, 2
        %v7447 = vxor.u32 %v7438, 2147483648
        %v7448 = vsel %vm7446, %v7447, %v7439
        %v7449 = vsel %vm7442, %v7445, %v7448
        %v7450 = vsel %vm7440, nan, %v7449
        %v7451 = vand.u32 2147483647, %v6894
        %vm7452 = vcmp.le.f32.partialorder %v7451, 0.7853982
        %vm7453 = vcmp.lt.s32.totalorder %v6894, 0
        %v7454 = vand.u32 %v6894, 2139095040
        %v7455 = vshrl.u32 %v7454, 23
        %v7456 = vsub.s32 %v7455, 127
        %v7457 = vand.u32 2147483647, %v6894
        %v7458 = vand.u32 %v7457, 8388607
        %v7459 = vor.u32 %v7458, 8388608
        %v7460 = vsub.s32 0, %v7459
        %v7461 = vadd.s32 %v7456, 1
        %vm7462 = vcmp.gt.s32.totalorder %v7461, 0
        %v7463 = vsel %vm7462, %v7461, 0
        %v7464 = vshrl.u32 %v7463, 5
        %v7465 = vand.u32 %v7463, 31
        %v7466 = vsub.s32 32, %v7465
        %v7467 = vshrl.u32 683565275, %v7466
        %v7468 = vshll.u32 683565275, %v7465
        %v7469 = vshrl.u32 2475754826, %v7466
        %v7470 = vor.u32 %v7468, %v7469
        %v7471 = vshll.u32 2475754826, %v7465
        %v7472 = vshrl.u32 2131351028, %v7466
        %v7473 = vor.u32 %v7471, %v7472
        %v7474 = vshll.u32 2131351028, %v7465
        %v7475 = vshrl.u32 2102212464, %v7466
        %v7476 = vor.u32 %v7474, %v7475
        %v7477 = vshll.u32 2102212464, %v7465
        %v7478 = vshrl.u32 920167782, %v7466
        %v7479 = vor.u32 %v7477, %v7478
        %v7480 = vshll.u32 920167782, %v7465
        %v7481 = vshrl.u32 1326507024, %v7466
        %v7482 = vor.u32 %v7480, %v7481
        %vm7483 = vcmp.lt.s32.totalorder %v7464, 1
        %vm7484 = vcmp.lt.s32.totalorder %v7464, 2
        %vm7485 = vcmp.lt.s32.totalorder %v7464, 3
        %vm7486 = vcmp.lt.s32.totalorder %v7464, 4
        %v7487 = vsel %vm7483, %v7467, %v7470
        %v7488 = vsel %vm7486, %v7476, 2102212464
        %v7489 = vsel %vm7485, %v7473, %v7488
        %v7490 = vsel %vm7484, %v7487, %v7489
        %v7491 = vsel %vm7483, %v7470, %v7473
        %v7492 = vsel %vm7486, %v7479, 920167782
        %v7493 = vsel %vm7485, %v7476, %v7492
        %v7494 = vsel %vm7484, %v7491, %v7493
        %v7495 = vsel %vm7483, %v7473, %v7476
        %v7496 = vsel %vm7486, %v7482, 1326507024
        %v7497 = vsel %vm7485, %v7479, %v7496
        %v7498 = vsel %vm7484, %v7495, %v7497
        %v7499 = vshll.u32 %v7459, 8
        %v7500 = vmul.u32.u64.compose %v7499, %v7498
        %v7501 = vextract.low.u32 %v7500
        %v7502 = vextract.high.u32 %v7500
        %v7503 = vmul.u32.u64.compose %v7499, %v7494
        %v7504 = vextract.low.u32 %v7503
        %v7505 = vextract.high.u32 %v7503
        %v7506 = vmul.u32 %v7499, %v7490
        %v7507 = vadd.s32 %v7502, %v7504
        %vm7508 = vc.u32 %v7502, %v7504
        %v7509 = vadd.s32 %v7505, 1
        %v7510 = vsel %vm7508, %v7509, %v7505
        %v7511 = vadd.s32 %v7506, %v7510
        %v7512 = vadd.s32 %v7511, 536870912
        %v7513 = vshrl.u32 %v7512, 30
        %v7514 = vshll.u32 %v7513, 30
        %v7515 = vsub.s32 %v7511, %v7514
        %vm7516 = vcmp.lt.s32.totalorder %v7515, 0
        %v7517 = vsub.s32 0, %v7515
        %v7518 = vsel %vm7516, %v7517, %v7515
        %v7519 = vclz %v7518
        %v7520 = vsub.s32 %v7519, 2
        %vm7521 = vcmp.gt.s32.totalorder 0, %v7520
        %v7522 = vsel %vm7521, 0, %v7520
        %v7523 = vsub.s32 32, %v7522
        %v7524 = vshll.u32 %v7515, %v7522
        %v7525 = vshrl.u32 %v7507, %v7523
        %v7526 = vor.u32 %v7524, %v7525
        %v7527 = vsub.s32 4294967266, %v7522
        %v7528 = vadd.s32 %v7527, 127
        %v7529 = vshll.u32 %v7528, 23
        %v7530 = vor.u32 4788187, %v7529
        %v7531 = vand.u32 2147483647, %v7530
        %v7533 = vcvt.s32.f32 %v7526
        %v7534 = vmul.f32 %v7533, %v7531
        %v7535 = vxor.u32 %v7534, 2147483648
        %v7536 = vsel %vm7453, %v7535, %v7534
        %v7537 = vsub.s32 4, %v7513
        %v7538 = vsel %vm7453, %v7537, %v7513
        %v7539 = vsel %vm7452, %v6894, %v7536
        %v7540 = vsel %vm7452, 0, %v7538
        %v7541 = vcosq.f32.pop %v7539
        %v7542 = vsinq.f32.pop %v7539
        %vm7543 = vweird.f32 %v6894
        %v7544 = vand.u32 %v7540, 3
        %vm7545 = vcmp.lt.s32.totalorder %v7544, 2
        %vm7546 = vcmp.eq.s32.totalorder %v7544, 0
        %v7547 = vxor.u32 %v7542, 2147483648
        %v7548 = vsel %vm7546, %v7541, %v7547
        %vm7549 = vcmp.eq.s32.totalorder %v7544, 2
        %v7550 = vxor.u32 %v7541, 2147483648
        %v7551 = vsel %vm7549, %v7550, %v7542
        %v7552 = vsel %vm7545, %v7548, %v7551
        %v7553 = vsel %vm7543, nan, %v7552
        %v7554 = vand.u32 2147483647, %v6900
        %vm7555 = vcmp.le.f32.partialorder %v7554, 0.7853982
        %vm7556 = vcmp.lt.s32.totalorder %v6900, 0
        %v7557 = vand.u32 %v6900, 2139095040
        %v7558 = vshrl.u32 %v7557, 23
        %v7559 = vsub.s32 %v7558, 127
        %v7560 = vand.u32 2147483647, %v6900
        %v7561 = vand.u32 %v7560, 8388607
        %v7562 = vor.u32 %v7561, 8388608
        %v7563 = vsub.s32 0, %v7562
        %v7564 = vadd.s32 %v7559, 1
        %vm7565 = vcmp.gt.s32.totalorder %v7564, 0
        %v7566 = vsel %vm7565, %v7564, 0
        %v7567 = vshrl.u32 %v7566, 5
        %v7568 = vand.u32 %v7566, 31
        %v7569 = vsub.s32 32, %v7568
        %v7570 = vshrl.u32 683565275, %v7569
        %v7571 = vshll.u32 683565275, %v7568
        %v7572 = vshrl.u32 2475754826, %v7569
        %v7573 = vor.u32 %v7571, %v7572
        %v7574 = vshll.u32 2475754826, %v7568
        %v7575 = vshrl.u32 2131351028, %v7569
        %v7576 = vor.u32 %v7574, %v7575
        %v7577 = vshll.u32 2131351028, %v7568
        %v7578 = vshrl.u32 2102212464, %v7569
        %v7579 = vor.u32 %v7577, %v7578
        %v7580 = vshll.u32 2102212464, %v7568
        %v7581 = vshrl.u32 920167782, %v7569
        %v7582 = vor.u32 %v7580, %v7581
        %v7583 = vshll.u32 920167782, %v7568
        %v7584 = vshrl.u32 1326507024, %v7569
        %v7585 = vor.u32 %v7583, %v7584
        %vm7586 = vcmp.lt.s32.totalorder %v7567, 1
        %vm7587 = vcmp.lt.s32.totalorder %v7567, 2
        %vm7588 = vcmp.lt.s32.totalorder %v7567, 3
        %vm7589 = vcmp.lt.s32.totalorder %v7567, 4
        %v7590 = vsel %vm7586, %v7570, %v7573
        %v7591 = vsel %vm7589, %v7579, 2102212464
        %v7592 = vsel %vm7588, %v7576, %v7591
        %v7593 = vsel %vm7587, %v7590, %v7592
        %v7594 = vsel %vm7586, %v7573, %v7576
        %v7595 = vsel %vm7589, %v7582, 920167782
        %v7596 = vsel %vm7588, %v7579, %v7595
        %v7597 = vsel %vm7587, %v7594, %v7596
        %v7598 = vsel %vm7586, %v7576, %v7579
        %v7599 = vsel %vm7589, %v7585, 1326507024
        %v7600 = vsel %vm7588, %v7582, %v7599
        %v7601 = vsel %vm7587, %v7598, %v7600
        %v7602 = vshll.u32 %v7562, 8
        %v7603 = vmul.u32.u64.compose %v7602, %v7601
        %v7604 = vextract.low.u32 %v7603
        %v7605 = vextract.high.u32 %v7603
        %v7606 = vmul.u32.u64.compose %v7602, %v7597
        %v7607 = vextract.low.u32 %v7606
        %v7608 = vextract.high.u32 %v7606
        %v7609 = vmul.u32 %v7602, %v7593
        %v7610 = vadd.s32 %v7605, %v7607
        %vm7611 = vc.u32 %v7605, %v7607
        %v7612 = vadd.s32 %v7608, 1
        %v7613 = vsel %vm7611, %v7612, %v7608
        %v7614 = vadd.s32 %v7609, %v7613
        %v7615 = vadd.s32 %v7614, 536870912
        %v7616 = vshrl.u32 %v7615, 30
        %v7617 = vshll.u32 %v7616, 30
        %v7618 = vsub.s32 %v7614, %v7617
        %vm7619 = vcmp.lt.s32.totalorder %v7618, 0
        %v7620 = vsub.s32 0, %v7618
        %v7621 = vsel %vm7619, %v7620, %v7618
        %v7622 = vclz %v7621
        %v7623 = vsub.s32 %v7622, 2
        %vm7624 = vcmp.gt.s32.totalorder 0, %v7623
        %v7625 = vsel %vm7624, 0, %v7623
        %v7626 = vsub.s32 32, %v7625
        %v7627 = vshll.u32 %v7618, %v7625
        %v7628 = vshrl.u32 %v7610, %v7626
        %v7629 = vor.u32 %v7627, %v7628
        %v7630 = vsub.s32 4294967266, %v7625
        %v7631 = vadd.s32 %v7630, 127
        %v7632 = vshll.u32 %v7631, 23
        %v7633 = vor.u32 4788187, %v7632
        %v7634 = vand.u32 2147483647, %v7633
        %v7636 = vcvt.s32.f32 %v7629
        %v7637 = vmul.f32 %v7636, %v7634
        %v7638 = vxor.u32 %v7637, 2147483648
        %v7639 = vsel %vm7556, %v7638, %v7637
        %v7640 = vsub.s32 4, %v7616
        %v7641 = vsel %vm7556, %v7640, %v7616
        %v7642 = vsel %vm7555, %v6900, %v7639
        %v7643 = vsel %vm7555, 0, %v7641
        %v7644 = vcosq.f32.pop %v7642
        %v7645 = vsinq.f32.pop %v7642
        %vm7646 = vweird.f32 %v6900
        %v7647 = vand.u32 %v7643, 3
        %vm7648 = vcmp.lt.s32.totalorder %v7647, 2
        %vm7649 = vcmp.eq.s32.totalorder %v7647, 0
        %v7650 = vxor.u32 %v7645, 2147483648
        %v7651 = vsel %vm7649, %v7644, %v7650
        %vm7652 = vcmp.eq.s32.totalorder %v7647, 2
        %v7653 = vxor.u32 %v7644, 2147483648
        %v7654 = vsel %vm7652, %v7653, %v7645
        %v7655 = vsel %vm7648, %v7651, %v7654
        %v7656 = vsel %vm7646, nan, %v7655
        %v7657 = vand.u32 2147483647, %v6906
        %vm7658 = vcmp.le.f32.partialorder %v7657, 0.7853982
        %vm7659 = vcmp.lt.s32.totalorder %v6906, 0
        %v7660 = vand.u32 %v6906, 2139095040
        %v7661 = vshrl.u32 %v7660, 23
        %v7662 = vsub.s32 %v7661, 127
        %v7663 = vand.u32 2147483647, %v6906
        %v7664 = vand.u32 %v7663, 8388607
        %v7665 = vor.u32 %v7664, 8388608
        %v7666 = vsub.s32 0, %v7665
        %v7667 = vadd.s32 %v7662, 1
        %vm7668 = vcmp.gt.s32.totalorder %v7667, 0
        %v7669 = vsel %vm7668, %v7667, 0
        %v7670 = vshrl.u32 %v7669, 5
        %v7671 = vand.u32 %v7669, 31
        %v7672 = vsub.s32 32, %v7671
        %v7673 = vshrl.u32 683565275, %v7672
        %v7674 = vshll.u32 683565275, %v7671
        %v7675 = vshrl.u32 2475754826, %v7672
        %v7676 = vor.u32 %v7674, %v7675
        %v7677 = vshll.u32 2475754826, %v7671
        %v7678 = vshrl.u32 2131351028, %v7672
        %v7679 = vor.u32 %v7677, %v7678
        %v7680 = vshll.u32 2131351028, %v7671
        %v7681 = vshrl.u32 2102212464, %v7672
        %v7682 = vor.u32 %v7680, %v7681
        %v7683 = vshll.u32 2102212464, %v7671
        %v7684 = vshrl.u32 920167782, %v7672
        %v7685 = vor.u32 %v7683, %v7684
        %v7686 = vshll.u32 920167782, %v7671
        %v7687 = vshrl.u32 1326507024, %v7672
        %v7688 = vor.u32 %v7686, %v7687
        %vm7689 = vcmp.lt.s32.totalorder %v7670, 1
        %vm7690 = vcmp.lt.s32.totalorder %v7670, 2
        %vm7691 = vcmp.lt.s32.totalorder %v7670, 3
        %vm7692 = vcmp.lt.s32.totalorder %v7670, 4
        %v7693 = vsel %vm7689, %v7673, %v7676
        %v7694 = vsel %vm7692, %v7682, 2102212464
        %v7695 = vsel %vm7691, %v7679, %v7694
        %v7696 = vsel %vm7690, %v7693, %v7695
        %v7697 = vsel %vm7689, %v7676, %v7679
        %v7698 = vsel %vm7692, %v7685, 920167782
        %v7699 = vsel %vm7691, %v7682, %v7698
        %v7700 = vsel %vm7690, %v7697, %v7699
        %v7701 = vsel %vm7689, %v7679, %v7682
        %v7702 = vsel %vm7692, %v7688, 1326507024
        %v7703 = vsel %vm7691, %v7685, %v7702
        %v7704 = vsel %vm7690, %v7701, %v7703
        %v7705 = vshll.u32 %v7665, 8
        %v7706 = vmul.u32.u64.compose %v7705, %v7704
        %v7707 = vextract.low.u32 %v7706
        %v7708 = vextract.high.u32 %v7706
        %v7709 = vmul.u32.u64.compose %v7705, %v7700
        %v7710 = vextract.low.u32 %v7709
        %v7711 = vextract.high.u32 %v7709
        %v7712 = vmul.u32 %v7705, %v7696
        %v7713 = vadd.s32 %v7708, %v7710
        %vm7714 = vc.u32 %v7708, %v7710
        %v7715 = vadd.s32 %v7711, 1
        %v7716 = vsel %vm7714, %v7715, %v7711
        %v7717 = vadd.s32 %v7712, %v7716
        %v7718 = vadd.s32 %v7717, 536870912
        %v7719 = vshrl.u32 %v7718, 30
        %v7720 = vshll.u32 %v7719, 30
        %v7721 = vsub.s32 %v7717, %v7720
        %vm7722 = vcmp.lt.s32.totalorder %v7721, 0
        %v7723 = vsub.s32 0, %v7721
        %v7724 = vsel %vm7722, %v7723, %v7721
        %v7725 = vclz %v7724
        %v7726 = vsub.s32 %v7725, 2
        %vm7727 = vcmp.gt.s32.totalorder 0, %v7726
        %v7728 = vsel %vm7727, 0, %v7726
        %v7729 = vsub.s32 32, %v7728
        %v7730 = vshll.u32 %v7721, %v7728
        %v7731 = vshrl.u32 %v7713, %v7729
        %v7732 = vor.u32 %v7730, %v7731
        %v7733 = vsub.s32 4294967266, %v7728
        %v7734 = vadd.s32 %v7733, 127
        %v7735 = vshll.u32 %v7734, 23
        %v7736 = vor.u32 4788187, %v7735
        %v7737 = vand.u32 2147483647, %v7736
        %v7739 = vcvt.s32.f32 %v7732
        %v7740 = vmul.f32 %v7739, %v7737
        %v7741 = vxor.u32 %v7740, 2147483648
        %v7742 = vsel %vm7659, %v7741, %v7740
        %v7743 = vsub.s32 4, %v7719
        %v7744 = vsel %vm7659, %v7743, %v7719
        %v7745 = vsel %vm7658, %v6906, %v7742
        %v7746 = vsel %vm7658, 0, %v7744
        %v7747 = vcosq.f32.pop %v7745
        %v7748 = vsinq.f32.pop %v7745
        %vm7749 = vweird.f32 %v6906
        %v7750 = vand.u32 %v7746, 3
        %vm7751 = vcmp.lt.s32.totalorder %v7750, 2
        %vm7752 = vcmp.eq.s32.totalorder %v7750, 0
        %v7753 = vxor.u32 %v7748, 2147483648
        %v7754 = vsel %vm7752, %v7747, %v7753
        %vm7755 = vcmp.eq.s32.totalorder %v7750, 2
        %v7756 = vxor.u32 %v7747, 2147483648
        %v7757 = vsel %vm7755, %v7756, %v7748
        %v7758 = vsel %vm7751, %v7754, %v7757
        %v7759 = vsel %vm7749, nan, %v7758
        %v7760 = vand.u32 2147483647, %v6912
        %vm7761 = vcmp.le.f32.partialorder %v7760, 0.7853982
        %vm7762 = vcmp.lt.s32.totalorder %v6912, 0
        %v7763 = vand.u32 %v6912, 2139095040
        %v7764 = vshrl.u32 %v7763, 23
        %v7765 = vsub.s32 %v7764, 127
        %v7766 = vand.u32 2147483647, %v6912
        %v7767 = vand.u32 %v7766, 8388607
        %v7768 = vor.u32 %v7767, 8388608
        %v7769 = vsub.s32 0, %v7768
        %v7770 = vadd.s32 %v7765, 1
        %vm7771 = vcmp.gt.s32.totalorder %v7770, 0
        %v7772 = vsel %vm7771, %v7770, 0
        %v7773 = vshrl.u32 %v7772, 5
        %v7774 = vand.u32 %v7772, 31
        %v7775 = vsub.s32 32, %v7774
        %v7776 = vshrl.u32 683565275, %v7775
        %v7777 = vshll.u32 683565275, %v7774
        %v7778 = vshrl.u32 2475754826, %v7775
        %v7779 = vor.u32 %v7777, %v7778
        %v7780 = vshll.u32 2475754826, %v7774
        %v7781 = vshrl.u32 2131351028, %v7775
        %v7782 = vor.u32 %v7780, %v7781
        %v7783 = vshll.u32 2131351028, %v7774
        %v7784 = vshrl.u32 2102212464, %v7775
        %v7785 = vor.u32 %v7783, %v7784
        %v7786 = vshll.u32 2102212464, %v7774
        %v7787 = vshrl.u32 920167782, %v7775
        %v7788 = vor.u32 %v7786, %v7787
        %v7789 = vshll.u32 920167782, %v7774
        %v7790 = vshrl.u32 1326507024, %v7775
        %v7791 = vor.u32 %v7789, %v7790
        %vm7792 = vcmp.lt.s32.totalorder %v7773, 1
        %vm7793 = vcmp.lt.s32.totalorder %v7773, 2
        %vm7794 = vcmp.lt.s32.totalorder %v7773, 3
        %vm7795 = vcmp.lt.s32.totalorder %v7773, 4
        %v7796 = vsel %vm7792, %v7776, %v7779
        %v7797 = vsel %vm7795, %v7785, 2102212464
        %v7798 = vsel %vm7794, %v7782, %v7797
        %v7799 = vsel %vm7793, %v7796, %v7798
        %v7800 = vsel %vm7792, %v7779, %v7782
        %v7801 = vsel %vm7795, %v7788, 920167782
        %v7802 = vsel %vm7794, %v7785, %v7801
        %v7803 = vsel %vm7793, %v7800, %v7802
        %v7804 = vsel %vm7792, %v7782, %v7785
        %v7805 = vsel %vm7795, %v7791, 1326507024
        %v7806 = vsel %vm7794, %v7788, %v7805
        %v7807 = vsel %vm7793, %v7804, %v7806
        %v7808 = vshll.u32 %v7768, 8
        %v7809 = vmul.u32.u64.compose %v7808, %v7807
        %v7810 = vextract.low.u32 %v7809
        %v7811 = vextract.high.u32 %v7809
        %v7812 = vmul.u32.u64.compose %v7808, %v7803
        %v7813 = vextract.low.u32 %v7812
        %v7814 = vextract.high.u32 %v7812
        %v7815 = vmul.u32 %v7808, %v7799
        %v7816 = vadd.s32 %v7811, %v7813
        %vm7817 = vc.u32 %v7811, %v7813
        %v7818 = vadd.s32 %v7814, 1
        %v7819 = vsel %vm7817, %v7818, %v7814
        %v7820 = vadd.s32 %v7815, %v7819
        %v7821 = vadd.s32 %v7820, 536870912
        %v7822 = vshrl.u32 %v7821, 30
        %v7823 = vshll.u32 %v7822, 30
        %v7824 = vsub.s32 %v7820, %v7823
        %vm7825 = vcmp.lt.s32.totalorder %v7824, 0
        %v7826 = vsub.s32 0, %v7824
        %v7827 = vsel %vm7825, %v7826, %v7824
        %v7828 = vclz %v7827
        %v7829 = vsub.s32 %v7828, 2
        %vm7830 = vcmp.gt.s32.totalorder 0, %v7829
        %v7831 = vsel %vm7830, 0, %v7829
        %v7832 = vsub.s32 32, %v7831
        %v7833 = vshll.u32 %v7824, %v7831
        %v7834 = vshrl.u32 %v7816, %v7832
        %v7835 = vor.u32 %v7833, %v7834
        %v7836 = vsub.s32 4294967266, %v7831
        %v7837 = vadd.s32 %v7836, 127
        %v7838 = vshll.u32 %v7837, 23
        %v7839 = vor.u32 4788187, %v7838
        %v7840 = vand.u32 2147483647, %v7839
        %v7842 = vcvt.s32.f32 %v7835
        %v7843 = vmul.f32 %v7842, %v7840
        %v7844 = vxor.u32 %v7843, 2147483648
        %v7845 = vsel %vm7762, %v7844, %v7843
        %v7846 = vsub.s32 4, %v7822
        %v7847 = vsel %vm7762, %v7846, %v7822
        %v7848 = vsel %vm7761, %v6912, %v7845
        %v7849 = vsel %vm7761, 0, %v7847
        %v7850 = vcosq.f32.pop %v7848
        %v7851 = vsinq.f32.pop %v7848
        %vm7852 = vweird.f32 %v6912
        %v7853 = vand.u32 %v7849, 3
        %vm7854 = vcmp.lt.s32.totalorder %v7853, 2
        %vm7855 = vcmp.eq.s32.totalorder %v7853, 0
        %v7856 = vxor.u32 %v7851, 2147483648
        %v7857 = vsel %vm7855, %v7850, %v7856
        %vm7858 = vcmp.eq.s32.totalorder %v7853, 2
        %v7859 = vxor.u32 %v7850, 2147483648
        %v7860 = vsel %vm7858, %v7859, %v7851
        %v7861 = vsel %vm7854, %v7857, %v7860
        %v7862 = vsel %vm7852, nan, %v7861
        %v7863 = vand.u32 2147483647, %v6918
        %vm7864 = vcmp.le.f32.partialorder %v7863, 0.7853982
        %vm7865 = vcmp.lt.s32.totalorder %v6918, 0
        %v7866 = vand.u32 %v6918, 2139095040
        %v7867 = vshrl.u32 %v7866, 23
        %v7868 = vsub.s32 %v7867, 127
        %v7869 = vand.u32 2147483647, %v6918
        %v7870 = vand.u32 %v7869, 8388607
        %v7871 = vor.u32 %v7870, 8388608
        %v7872 = vsub.s32 0, %v7871
        %v7873 = vadd.s32 %v7868, 1
        %vm7874 = vcmp.gt.s32.totalorder %v7873, 0
        %v7875 = vsel %vm7874, %v7873, 0
        %v7876 = vshrl.u32 %v7875, 5
        %v7877 = vand.u32 %v7875, 31
        %v7878 = vsub.s32 32, %v7877
        %v7879 = vshrl.u32 683565275, %v7878
        %v7880 = vshll.u32 683565275, %v7877
        %v7881 = vshrl.u32 2475754826, %v7878
        %v7882 = vor.u32 %v7880, %v7881
        %v7883 = vshll.u32 2475754826, %v7877
        %v7884 = vshrl.u32 2131351028, %v7878
        %v7885 = vor.u32 %v7883, %v7884
        %v7886 = vshll.u32 2131351028, %v7877
        %v7887 = vshrl.u32 2102212464, %v7878
        %v7888 = vor.u32 %v7886, %v7887
        %v7889 = vshll.u32 2102212464, %v7877
        %v7890 = vshrl.u32 920167782, %v7878
        %v7891 = vor.u32 %v7889, %v7890
        %v7892 = vshll.u32 920167782, %v7877
        %v7893 = vshrl.u32 1326507024, %v7878
        %v7894 = vor.u32 %v7892, %v7893
        %vm7895 = vcmp.lt.s32.totalorder %v7876, 1
        %vm7896 = vcmp.lt.s32.totalorder %v7876, 2
        %vm7897 = vcmp.lt.s32.totalorder %v7876, 3
        %vm7898 = vcmp.lt.s32.totalorder %v7876, 4
        %v7899 = vsel %vm7895, %v7879, %v7882
        %v7900 = vsel %vm7898, %v7888, 2102212464
        %v7901 = vsel %vm7897, %v7885, %v7900
        %v7902 = vsel %vm7896, %v7899, %v7901
        %v7903 = vsel %vm7895, %v7882, %v7885
        %v7904 = vsel %vm7898, %v7891, 920167782
        %v7905 = vsel %vm7897, %v7888, %v7904
        %v7906 = vsel %vm7896, %v7903, %v7905
        %v7907 = vsel %vm7895, %v7885, %v7888
        %v7908 = vsel %vm7898, %v7894, 1326507024
        %v7909 = vsel %vm7897, %v7891, %v7908
        %v7910 = vsel %vm7896, %v7907, %v7909
        %v7911 = vshll.u32 %v7871, 8
        %v7912 = vmul.u32.u64.compose %v7911, %v7910
        %v7913 = vextract.low.u32 %v7912
        %v7914 = vextract.high.u32 %v7912
        %v7915 = vmul.u32.u64.compose %v7911, %v7906
        %v7916 = vextract.low.u32 %v7915
        %v7917 = vextract.high.u32 %v7915
        %v7918 = vmul.u32 %v7911, %v7902
        %v7919 = vadd.s32 %v7914, %v7916
        %vm7920 = vc.u32 %v7914, %v7916
        %v7921 = vadd.s32 %v7917, 1
        %v7922 = vsel %vm7920, %v7921, %v7917
        %v7923 = vadd.s32 %v7918, %v7922
        %v7924 = vadd.s32 %v7923, 536870912
        %v7925 = vshrl.u32 %v7924, 30
        %v7926 = vshll.u32 %v7925, 30
        %v7927 = vsub.s32 %v7923, %v7926
        %vm7928 = vcmp.lt.s32.totalorder %v7927, 0
        %v7929 = vsub.s32 0, %v7927
        %v7930 = vsel %vm7928, %v7929, %v7927
        %v7931 = vclz %v7930
        %v7932 = vsub.s32 %v7931, 2
        %vm7933 = vcmp.gt.s32.totalorder 0, %v7932
        %v7934 = vsel %vm7933, 0, %v7932
        %v7935 = vsub.s32 32, %v7934
        %v7936 = vshll.u32 %v7927, %v7934
        %v7937 = vshrl.u32 %v7919, %v7935
        %v7938 = vor.u32 %v7936, %v7937
        %v7939 = vsub.s32 4294967266, %v7934
        %v7940 = vadd.s32 %v7939, 127
        %v7941 = vshll.u32 %v7940, 23
        %v7942 = vor.u32 4788187, %v7941
        %v7943 = vand.u32 2147483647, %v7942
        %v7945 = vcvt.s32.f32 %v7938
        %v7946 = vmul.f32 %v7945, %v7943
        %v7947 = vxor.u32 %v7946, 2147483648
        %v7948 = vsel %vm7865, %v7947, %v7946
        %v7949 = vsub.s32 4, %v7925
        %v7950 = vsel %vm7865, %v7949, %v7925
        %v7951 = vsel %vm7864, %v6918, %v7948
        %v7952 = vsel %vm7864, 0, %v7950
        %v7953 = vcosq.f32.pop %v7951
        %v7954 = vsinq.f32.pop %v7951
        %vm7955 = vweird.f32 %v6918
        %v7956 = vand.u32 %v7952, 3
        %vm7957 = vcmp.lt.s32.totalorder %v7956, 2
        %vm7958 = vcmp.eq.s32.totalorder %v7956, 0
        %v7959 = vxor.u32 %v7954, 2147483648
        %v7960 = vsel %vm7958, %v7953, %v7959
        %vm7961 = vcmp.eq.s32.totalorder %v7956, 2
        %v7962 = vxor.u32 %v7953, 2147483648
        %v7963 = vsel %vm7961, %v7962, %v7954
        %v7964 = vsel %vm7957, %v7960, %v7963
        %v7965 = vsel %vm7955, nan, %v7964
        %v7966 = vand.u32 2147483647, %v6924
        %vm7967 = vcmp.le.f32.partialorder %v7966, 0.7853982
        %vm7968 = vcmp.lt.s32.totalorder %v6924, 0
        %v7969 = vand.u32 %v6924, 2139095040
        %v7970 = vshrl.u32 %v7969, 23
        %v7971 = vsub.s32 %v7970, 127
        %v7972 = vand.u32 2147483647, %v6924
        %v7973 = vand.u32 %v7972, 8388607
        %v7974 = vor.u32 %v7973, 8388608
        %v7975 = vsub.s32 0, %v7974
        %v7976 = vadd.s32 %v7971, 1
        %vm7977 = vcmp.gt.s32.totalorder %v7976, 0
        %v7978 = vsel %vm7977, %v7976, 0
        %v7979 = vshrl.u32 %v7978, 5
        %v7980 = vand.u32 %v7978, 31
        %v7981 = vsub.s32 32, %v7980
        %v7982 = vshrl.u32 683565275, %v7981
        %v7983 = vshll.u32 683565275, %v7980
        %v7984 = vshrl.u32 2475754826, %v7981
        %v7985 = vor.u32 %v7983, %v7984
        %v7986 = vshll.u32 2475754826, %v7980
        %v7987 = vshrl.u32 2131351028, %v7981
        %v7988 = vor.u32 %v7986, %v7987
        %v7989 = vshll.u32 2131351028, %v7980
        %v7990 = vshrl.u32 2102212464, %v7981
        %v7991 = vor.u32 %v7989, %v7990
        %v7992 = vshll.u32 2102212464, %v7980
        %v7993 = vshrl.u32 920167782, %v7981
        %v7994 = vor.u32 %v7992, %v7993
        %v7995 = vshll.u32 920167782, %v7980
        %v7996 = vshrl.u32 1326507024, %v7981
        %v7997 = vor.u32 %v7995, %v7996
        %vm7998 = vcmp.lt.s32.totalorder %v7979, 1
        %vm7999 = vcmp.lt.s32.totalorder %v7979, 2
        %vm8000 = vcmp.lt.s32.totalorder %v7979, 3
        %vm8001 = vcmp.lt.s32.totalorder %v7979, 4
        %v8002 = vsel %vm7998, %v7982, %v7985
        %v8003 = vsel %vm8001, %v7991, 2102212464
        %v8004 = vsel %vm8000, %v7988, %v8003
        %v8005 = vsel %vm7999, %v8002, %v8004
        %v8006 = vsel %vm7998, %v7985, %v7988
        %v8007 = vsel %vm8001, %v7994, 920167782
        %v8008 = vsel %vm8000, %v7991, %v8007
        %v8009 = vsel %vm7999, %v8006, %v8008
        %v8010 = vsel %vm7998, %v7988, %v7991
        %v8011 = vsel %vm8001, %v7997, 1326507024
        %v8012 = vsel %vm8000, %v7994, %v8011
        %v8013 = vsel %vm7999, %v8010, %v8012
        %v8014 = vshll.u32 %v7974, 8
        %v8015 = vmul.u32.u64.compose %v8014, %v8013
        %v8016 = vextract.low.u32 %v8015
        %v8017 = vextract.high.u32 %v8015
        %v8018 = vmul.u32.u64.compose %v8014, %v8009
        %v8019 = vextract.low.u32 %v8018
        %v8020 = vextract.high.u32 %v8018
        %v8021 = vmul.u32 %v8014, %v8005
        %v8022 = vadd.s32 %v8017, %v8019
        %vm8023 = vc.u32 %v8017, %v8019
        %v8024 = vadd.s32 %v8020, 1
        %v8025 = vsel %vm8023, %v8024, %v8020
        %v8026 = vadd.s32 %v8021, %v8025
        %v8027 = vadd.s32 %v8026, 536870912
        %v8028 = vshrl.u32 %v8027, 30
        %v8029 = vshll.u32 %v8028, 30
        %v8030 = vsub.s32 %v8026, %v8029
        %vm8031 = vcmp.lt.s32.totalorder %v8030, 0
        %v8032 = vsub.s32 0, %v8030
        %v8033 = vsel %vm8031, %v8032, %v8030
        %v8034 = vclz %v8033
        %v8035 = vsub.s32 %v8034, 2
        %vm8036 = vcmp.gt.s32.totalorder 0, %v8035
        %v8037 = vsel %vm8036, 0, %v8035
        %v8038 = vsub.s32 32, %v8037
        %v8039 = vshll.u32 %v8030, %v8037
        %v8040 = vshrl.u32 %v8022, %v8038
        %v8041 = vor.u32 %v8039, %v8040
        %v8042 = vsub.s32 4294967266, %v8037
        %v8043 = vadd.s32 %v8042, 127
        %v8044 = vshll.u32 %v8043, 23
        %v8045 = vor.u32 4788187, %v8044
        %v8046 = vand.u32 2147483647, %v8045
        %v8048 = vcvt.s32.f32 %v8041
        %v8049 = vmul.f32 %v8048, %v8046
        %v8050 = vxor.u32 %v8049, 2147483648
        %v8051 = vsel %vm7968, %v8050, %v8049
        %v8052 = vsub.s32 4, %v8028
        %v8053 = vsel %vm7968, %v8052, %v8028
        %v8054 = vsel %vm7967, %v6924, %v8051
        %v8055 = vsel %vm7967, 0, %v8053
        %v8056 = vcosq.f32.pop %v8054
        %v8057 = vsinq.f32.pop %v8054
        %vm8058 = vweird.f32 %v6924
        %v8059 = vand.u32 %v8055, 3
        %vm8060 = vcmp.lt.s32.totalorder %v8059, 2
        %vm8061 = vcmp.eq.s32.totalorder %v8059, 0
        %v8062 = vxor.u32 %v8057, 2147483648
        %v8063 = vsel %vm8061, %v8056, %v8062
        %vm8064 = vcmp.eq.s32.totalorder %v8059, 2
        %v8065 = vxor.u32 %v8056, 2147483648
        %v8066 = vsel %vm8064, %v8065, %v8057
        %v8067 = vsel %vm8060, %v8063, %v8066
        %v8068 = vsel %vm8058, nan, %v8067
        %v8069 = vand.u32 2147483647, %v6930
        %vm8070 = vcmp.le.f32.partialorder %v8069, 0.7853982
        %vm8071 = vcmp.lt.s32.totalorder %v6930, 0
        %v8072 = vand.u32 %v6930, 2139095040
        %v8073 = vshrl.u32 %v8072, 23
        %v8074 = vsub.s32 %v8073, 127
        %v8075 = vand.u32 2147483647, %v6930
        %v8076 = vand.u32 %v8075, 8388607
        %v8077 = vor.u32 %v8076, 8388608
        %v8078 = vsub.s32 0, %v8077
        %v8079 = vadd.s32 %v8074, 1
        %vm8080 = vcmp.gt.s32.totalorder %v8079, 0
        %v8081 = vsel %vm8080, %v8079, 0
        %v8082 = vshrl.u32 %v8081, 5
        %v8083 = vand.u32 %v8081, 31
        %v8084 = vsub.s32 32, %v8083
        %v8085 = vshrl.u32 683565275, %v8084
        %v8086 = vshll.u32 683565275, %v8083
        %v8087 = vshrl.u32 2475754826, %v8084
        %v8088 = vor.u32 %v8086, %v8087
        %v8089 = vshll.u32 2475754826, %v8083
        %v8090 = vshrl.u32 2131351028, %v8084
        %v8091 = vor.u32 %v8089, %v8090
        %v8092 = vshll.u32 2131351028, %v8083
        %v8093 = vshrl.u32 2102212464, %v8084
        %v8094 = vor.u32 %v8092, %v8093
        %v8095 = vshll.u32 2102212464, %v8083
        %v8096 = vshrl.u32 920167782, %v8084
        %v8097 = vor.u32 %v8095, %v8096
        %v8098 = vshll.u32 920167782, %v8083
        %v8099 = vshrl.u32 1326507024, %v8084
        %v8100 = vor.u32 %v8098, %v8099
        %vm8101 = vcmp.lt.s32.totalorder %v8082, 1
        %vm8102 = vcmp.lt.s32.totalorder %v8082, 2
        %vm8103 = vcmp.lt.s32.totalorder %v8082, 3
        %vm8104 = vcmp.lt.s32.totalorder %v8082, 4
        %v8105 = vsel %vm8101, %v8085, %v8088
        %v8106 = vsel %vm8104, %v8094, 2102212464
        %v8107 = vsel %vm8103, %v8091, %v8106
        %v8108 = vsel %vm8102, %v8105, %v8107
        %v8109 = vsel %vm8101, %v8088, %v8091
        %v8110 = vsel %vm8104, %v8097, 920167782
        %v8111 = vsel %vm8103, %v8094, %v8110
        %v8112 = vsel %vm8102, %v8109, %v8111
        %v8113 = vsel %vm8101, %v8091, %v8094
        %v8114 = vsel %vm8104, %v8100, 1326507024
        %v8115 = vsel %vm8103, %v8097, %v8114
        %v8116 = vsel %vm8102, %v8113, %v8115
        %v8117 = vshll.u32 %v8077, 8
        %v8118 = vmul.u32.u64.compose %v8117, %v8116
        %v8119 = vextract.low.u32 %v8118
        %v8120 = vextract.high.u32 %v8118
        %v8121 = vmul.u32.u64.compose %v8117, %v8112
        %v8122 = vextract.low.u32 %v8121
        %v8123 = vextract.high.u32 %v8121
        %v8124 = vmul.u32 %v8117, %v8108
        %v8125 = vadd.s32 %v8120, %v8122
        %vm8126 = vc.u32 %v8120, %v8122
        %v8127 = vadd.s32 %v8123, 1
        %v8128 = vsel %vm8126, %v8127, %v8123
        %v8129 = vadd.s32 %v8124, %v8128
        %v8130 = vadd.s32 %v8129, 536870912
        %v8131 = vshrl.u32 %v8130, 30
        %v8132 = vshll.u32 %v8131, 30
        %v8133 = vsub.s32 %v8129, %v8132
        %vm8134 = vcmp.lt.s32.totalorder %v8133, 0
        %v8135 = vsub.s32 0, %v8133
        %v8136 = vsel %vm8134, %v8135, %v8133
        %v8137 = vclz %v8136
        %v8138 = vsub.s32 %v8137, 2
        %vm8139 = vcmp.gt.s32.totalorder 0, %v8138
        %v8140 = vsel %vm8139, 0, %v8138
        %v8141 = vsub.s32 32, %v8140
        %v8142 = vshll.u32 %v8133, %v8140
        %v8143 = vshrl.u32 %v8125, %v8141
        %v8144 = vor.u32 %v8142, %v8143
        %v8145 = vsub.s32 4294967266, %v8140
        %v8146 = vadd.s32 %v8145, 127
        %v8147 = vshll.u32 %v8146, 23
        %v8148 = vor.u32 4788187, %v8147
        %v8149 = vand.u32 2147483647, %v8148
        %v8151 = vcvt.s32.f32 %v8144
        %v8152 = vmul.f32 %v8151, %v8149
        %v8153 = vxor.u32 %v8152, 2147483648
        %v8154 = vsel %vm8071, %v8153, %v8152
        %v8155 = vsub.s32 4, %v8131
        %v8156 = vsel %vm8071, %v8155, %v8131
        %v8157 = vsel %vm8070, %v6930, %v8154
        %v8158 = vsel %vm8070, 0, %v8156
        %v8159 = vcosq.f32.pop %v8157
        %v8160 = vsinq.f32.pop %v8157
        %vm8161 = vweird.f32 %v6930
        %v8162 = vand.u32 %v8158, 3
        %vm8163 = vcmp.lt.s32.totalorder %v8162, 2
        %vm8164 = vcmp.eq.s32.totalorder %v8162, 0
        %v8165 = vxor.u32 %v8160, 2147483648
        %v8166 = vsel %vm8164, %v8159, %v8165
        %vm8167 = vcmp.eq.s32.totalorder %v8162, 2
        %v8168 = vxor.u32 %v8159, 2147483648
        %v8169 = vsel %vm8167, %v8168, %v8160
        %v8170 = vsel %vm8163, %v8166, %v8169
        %v8171 = vsel %vm8161, nan, %v8170
        %v8172 = vand.u32 2147483647, %v6936
        %vm8173 = vcmp.le.f32.partialorder %v8172, 0.7853982
        %vm8174 = vcmp.lt.s32.totalorder %v6936, 0
        %v8175 = vand.u32 %v6936, 2139095040
        %v8176 = vshrl.u32 %v8175, 23
        %v8177 = vsub.s32 %v8176, 127
        %v8178 = vand.u32 2147483647, %v6936
        %v8179 = vand.u32 %v8178, 8388607
        %v8180 = vor.u32 %v8179, 8388608
        %v8181 = vsub.s32 0, %v8180
        %v8182 = vadd.s32 %v8177, 1
        %vm8183 = vcmp.gt.s32.totalorder %v8182, 0
        %v8184 = vsel %vm8183, %v8182, 0
        %v8185 = vshrl.u32 %v8184, 5
        %v8186 = vand.u32 %v8184, 31
        %v8187 = vsub.s32 32, %v8186
        %v8188 = vshrl.u32 683565275, %v8187
        %v8189 = vshll.u32 683565275, %v8186
        %v8190 = vshrl.u32 2475754826, %v8187
        %v8191 = vor.u32 %v8189, %v8190
        %v8192 = vshll.u32 2475754826, %v8186
        %v8193 = vshrl.u32 2131351028, %v8187
        %v8194 = vor.u32 %v8192, %v8193
        %v8195 = vshll.u32 2131351028, %v8186
        %v8196 = vshrl.u32 2102212464, %v8187
        %v8197 = vor.u32 %v8195, %v8196
        %v8198 = vshll.u32 2102212464, %v8186
        %v8199 = vshrl.u32 920167782, %v8187
        %v8200 = vor.u32 %v8198, %v8199
        %v8201 = vshll.u32 920167782, %v8186
        %v8202 = vshrl.u32 1326507024, %v8187
        %v8203 = vor.u32 %v8201, %v8202
        %vm8204 = vcmp.lt.s32.totalorder %v8185, 1
        %vm8205 = vcmp.lt.s32.totalorder %v8185, 2
        %vm8206 = vcmp.lt.s32.totalorder %v8185, 3
        %vm8207 = vcmp.lt.s32.totalorder %v8185, 4
        %v8208 = vsel %vm8204, %v8188, %v8191
        %v8209 = vsel %vm8207, %v8197, 2102212464
        %v8210 = vsel %vm8206, %v8194, %v8209
        %v8211 = vsel %vm8205, %v8208, %v8210
        %v8212 = vsel %vm8204, %v8191, %v8194
        %v8213 = vsel %vm8207, %v8200, 920167782
        %v8214 = vsel %vm8206, %v8197, %v8213
        %v8215 = vsel %vm8205, %v8212, %v8214
        %v8216 = vsel %vm8204, %v8194, %v8197
        %v8217 = vsel %vm8207, %v8203, 1326507024
        %v8218 = vsel %vm8206, %v8200, %v8217
        %v8219 = vsel %vm8205, %v8216, %v8218
        %v8220 = vshll.u32 %v8180, 8
        %v8221 = vmul.u32.u64.compose %v8220, %v8219
        %v8222 = vextract.low.u32 %v8221
        %v8223 = vextract.high.u32 %v8221
        %v8224 = vmul.u32.u64.compose %v8220, %v8215
        %v8225 = vextract.low.u32 %v8224
        %v8226 = vextract.high.u32 %v8224
        %v8227 = vmul.u32 %v8220, %v8211
        %v8228 = vadd.s32 %v8223, %v8225
        %vm8229 = vc.u32 %v8223, %v8225
        %v8230 = vadd.s32 %v8226, 1
        %v8231 = vsel %vm8229, %v8230, %v8226
        %v8232 = vadd.s32 %v8227, %v8231
        %v8233 = vadd.s32 %v8232, 536870912
        %v8234 = vshrl.u32 %v8233, 30
        %v8235 = vshll.u32 %v8234, 30
        %v8236 = vsub.s32 %v8232, %v8235
        %vm8237 = vcmp.lt.s32.totalorder %v8236, 0
        %v8238 = vsub.s32 0, %v8236
        %v8239 = vsel %vm8237, %v8238, %v8236
        %v8240 = vclz %v8239
        %v8241 = vsub.s32 %v8240, 2
        %vm8242 = vcmp.gt.s32.totalorder 0, %v8241
        %v8243 = vsel %vm8242, 0, %v8241
        %v8244 = vsub.s32 32, %v8243
        %v8245 = vshll.u32 %v8236, %v8243
        %v8246 = vshrl.u32 %v8228, %v8244
        %v8247 = vor.u32 %v8245, %v8246
        %v8248 = vsub.s32 4294967266, %v8243
        %v8249 = vadd.s32 %v8248, 127
        %v8250 = vshll.u32 %v8249, 23
        %v8251 = vor.u32 4788187, %v8250
        %v8252 = vand.u32 2147483647, %v8251
        %v8254 = vcvt.s32.f32 %v8247
        %v8255 = vmul.f32 %v8254, %v8252
        %v8256 = vxor.u32 %v8255, 2147483648
        %v8257 = vsel %vm8174, %v8256, %v8255
        %v8258 = vsub.s32 4, %v8234
        %v8259 = vsel %vm8174, %v8258, %v8234
        %v8260 = vsel %vm8173, %v6936, %v8257
        %v8261 = vsel %vm8173, 0, %v8259
        %v8262 = vcosq.f32.pop %v8260
        %v8263 = vsinq.f32.pop %v8260
        %vm8264 = vweird.f32 %v6936
        %v8265 = vand.u32 %v8261, 3
        %vm8266 = vcmp.lt.s32.totalorder %v8265, 2
        %vm8267 = vcmp.eq.s32.totalorder %v8265, 0
        %v8268 = vxor.u32 %v8263, 2147483648
        %v8269 = vsel %vm8267, %v8262, %v8268
        %vm8270 = vcmp.eq.s32.totalorder %v8265, 2
        %v8271 = vxor.u32 %v8262, 2147483648
        %v8272 = vsel %vm8270, %v8271, %v8263
        %v8273 = vsel %vm8266, %v8269, %v8272
        %v8274 = vsel %vm8264, nan, %v8273
        %v8275 = vand.u32 2147483647, %v6942
        %vm8276 = vcmp.le.f32.partialorder %v8275, 0.7853982
        %vm8277 = vcmp.lt.s32.totalorder %v6942, 0
        %v8278 = vand.u32 %v6942, 2139095040
        %v8279 = vshrl.u32 %v8278, 23
        %v8280 = vsub.s32 %v8279, 127
        %v8281 = vand.u32 2147483647, %v6942
        %v8282 = vand.u32 %v8281, 8388607
        %v8283 = vor.u32 %v8282, 8388608
        %v8284 = vsub.s32 0, %v8283
        %v8285 = vadd.s32 %v8280, 1
        %vm8286 = vcmp.gt.s32.totalorder %v8285, 0
        %v8287 = vsel %vm8286, %v8285, 0
        %v8288 = vshrl.u32 %v8287, 5
        %v8289 = vand.u32 %v8287, 31
        %v8290 = vsub.s32 32, %v8289
        %v8291 = vshrl.u32 683565275, %v8290
        %v8292 = vshll.u32 683565275, %v8289
        %v8293 = vshrl.u32 2475754826, %v8290
        %v8294 = vor.u32 %v8292, %v8293
        %v8295 = vshll.u32 2475754826, %v8289
        %v8296 = vshrl.u32 2131351028, %v8290
        %v8297 = vor.u32 %v8295, %v8296
        %v8298 = vshll.u32 2131351028, %v8289
        %v8299 = vshrl.u32 2102212464, %v8290
        %v8300 = vor.u32 %v8298, %v8299
        %v8301 = vshll.u32 2102212464, %v8289
        %v8302 = vshrl.u32 920167782, %v8290
        %v8303 = vor.u32 %v8301, %v8302
        %v8304 = vshll.u32 920167782, %v8289
        %v8305 = vshrl.u32 1326507024, %v8290
        %v8306 = vor.u32 %v8304, %v8305
        %vm8307 = vcmp.lt.s32.totalorder %v8288, 1
        %vm8308 = vcmp.lt.s32.totalorder %v8288, 2
        %vm8309 = vcmp.lt.s32.totalorder %v8288, 3
        %vm8310 = vcmp.lt.s32.totalorder %v8288, 4
        %v8311 = vsel %vm8307, %v8291, %v8294
        %v8312 = vsel %vm8310, %v8300, 2102212464
        %v8313 = vsel %vm8309, %v8297, %v8312
        %v8314 = vsel %vm8308, %v8311, %v8313
        %v8315 = vsel %vm8307, %v8294, %v8297
        %v8316 = vsel %vm8310, %v8303, 920167782
        %v8317 = vsel %vm8309, %v8300, %v8316
        %v8318 = vsel %vm8308, %v8315, %v8317
        %v8319 = vsel %vm8307, %v8297, %v8300
        %v8320 = vsel %vm8310, %v8306, 1326507024
        %v8321 = vsel %vm8309, %v8303, %v8320
        %v8322 = vsel %vm8308, %v8319, %v8321
        %v8323 = vshll.u32 %v8283, 8
        %v8324 = vmul.u32.u64.compose %v8323, %v8322
        %v8325 = vextract.low.u32 %v8324
        %v8326 = vextract.high.u32 %v8324
        %v8327 = vmul.u32.u64.compose %v8323, %v8318
        %v8328 = vextract.low.u32 %v8327
        %v8329 = vextract.high.u32 %v8327
        %v8330 = vmul.u32 %v8323, %v8314
        %v8331 = vadd.s32 %v8326, %v8328
        %vm8332 = vc.u32 %v8326, %v8328
        %v8333 = vadd.s32 %v8329, 1
        %v8334 = vsel %vm8332, %v8333, %v8329
        %v8335 = vadd.s32 %v8330, %v8334
        %v8336 = vadd.s32 %v8335, 536870912
        %v8337 = vshrl.u32 %v8336, 30
        %v8338 = vshll.u32 %v8337, 30
        %v8339 = vsub.s32 %v8335, %v8338
        %vm8340 = vcmp.lt.s32.totalorder %v8339, 0
        %v8341 = vsub.s32 0, %v8339
        %v8342 = vsel %vm8340, %v8341, %v8339
        %v8343 = vclz %v8342
        %v8344 = vsub.s32 %v8343, 2
        %vm8345 = vcmp.gt.s32.totalorder 0, %v8344
        %v8346 = vsel %vm8345, 0, %v8344
        %v8347 = vsub.s32 32, %v8346
        %v8348 = vshll.u32 %v8339, %v8346
        %v8349 = vshrl.u32 %v8331, %v8347
        %v8350 = vor.u32 %v8348, %v8349
        %v8351 = vsub.s32 4294967266, %v8346
        %v8352 = vadd.s32 %v8351, 127
        %v8353 = vshll.u32 %v8352, 23
        %v8354 = vor.u32 4788187, %v8353
        %v8355 = vand.u32 2147483647, %v8354
        %v8357 = vcvt.s32.f32 %v8350
        %v8358 = vmul.f32 %v8357, %v8355
        %v8359 = vxor.u32 %v8358, 2147483648
        %v8360 = vsel %vm8277, %v8359, %v8358
        %v8361 = vsub.s32 4, %v8337
        %v8362 = vsel %vm8277, %v8361, %v8337
        %v8363 = vsel %vm8276, %v6942, %v8360
        %v8364 = vsel %vm8276, 0, %v8362
        %v8365 = vcosq.f32.pop %v8363
        %v8366 = vsinq.f32.pop %v8363
        %vm8367 = vweird.f32 %v6942
        %v8368 = vand.u32 %v8364, 3
        %vm8369 = vcmp.lt.s32.totalorder %v8368, 2
        %vm8370 = vcmp.eq.s32.totalorder %v8368, 0
        %v8371 = vxor.u32 %v8366, 2147483648
        %v8372 = vsel %vm8370, %v8365, %v8371
        %vm8373 = vcmp.eq.s32.totalorder %v8368, 2
        %v8374 = vxor.u32 %v8365, 2147483648
        %v8375 = vsel %vm8373, %v8374, %v8366
        %v8376 = vsel %vm8369, %v8372, %v8375
        %v8377 = vsel %vm8367, nan, %v8376
        %v8378 = vand.u32 2147483647, %v6948
        %vm8379 = vcmp.le.f32.partialorder %v8378, 0.7853982
        %vm8380 = vcmp.lt.s32.totalorder %v6948, 0
        %v8381 = vand.u32 %v6948, 2139095040
        %v8382 = vshrl.u32 %v8381, 23
        %v8383 = vsub.s32 %v8382, 127
        %v8384 = vand.u32 2147483647, %v6948
        %v8385 = vand.u32 %v8384, 8388607
        %v8386 = vor.u32 %v8385, 8388608
        %v8387 = vsub.s32 0, %v8386
        %v8388 = vadd.s32 %v8383, 1
        %vm8389 = vcmp.gt.s32.totalorder %v8388, 0
        %v8390 = vsel %vm8389, %v8388, 0
        %v8391 = vshrl.u32 %v8390, 5
        %v8392 = vand.u32 %v8390, 31
        %v8393 = vsub.s32 32, %v8392
        %v8394 = vshrl.u32 683565275, %v8393
        %v8395 = vshll.u32 683565275, %v8392
        %v8396 = vshrl.u32 2475754826, %v8393
        %v8397 = vor.u32 %v8395, %v8396
        %v8398 = vshll.u32 2475754826, %v8392
        %v8399 = vshrl.u32 2131351028, %v8393
        %v8400 = vor.u32 %v8398, %v8399
        %v8401 = vshll.u32 2131351028, %v8392
        %v8402 = vshrl.u32 2102212464, %v8393
        %v8403 = vor.u32 %v8401, %v8402
        %v8404 = vshll.u32 2102212464, %v8392
        %v8405 = vshrl.u32 920167782, %v8393
        %v8406 = vor.u32 %v8404, %v8405
        %v8407 = vshll.u32 920167782, %v8392
        %v8408 = vshrl.u32 1326507024, %v8393
        %v8409 = vor.u32 %v8407, %v8408
        %vm8410 = vcmp.lt.s32.totalorder %v8391, 1
        %vm8411 = vcmp.lt.s32.totalorder %v8391, 2
        %vm8412 = vcmp.lt.s32.totalorder %v8391, 3
        %vm8413 = vcmp.lt.s32.totalorder %v8391, 4
        %v8414 = vsel %vm8410, %v8394, %v8397
        %v8415 = vsel %vm8413, %v8403, 2102212464
        %v8416 = vsel %vm8412, %v8400, %v8415
        %v8417 = vsel %vm8411, %v8414, %v8416
        %v8418 = vsel %vm8410, %v8397, %v8400
        %v8419 = vsel %vm8413, %v8406, 920167782
        %v8420 = vsel %vm8412, %v8403, %v8419
        %v8421 = vsel %vm8411, %v8418, %v8420
        %v8422 = vsel %vm8410, %v8400, %v8403
        %v8423 = vsel %vm8413, %v8409, 1326507024
        %v8424 = vsel %vm8412, %v8406, %v8423
        %v8425 = vsel %vm8411, %v8422, %v8424
        %v8426 = vshll.u32 %v8386, 8
        %v8427 = vmul.u32.u64.compose %v8426, %v8425
        %v8428 = vextract.low.u32 %v8427
        %v8429 = vextract.high.u32 %v8427
        %v8430 = vmul.u32.u64.compose %v8426, %v8421
        %v8431 = vextract.low.u32 %v8430
        %v8432 = vextract.high.u32 %v8430
        %v8433 = vmul.u32 %v8426, %v8417
        %v8434 = vadd.s32 %v8429, %v8431
        %vm8435 = vc.u32 %v8429, %v8431
        %v8436 = vadd.s32 %v8432, 1
        %v8437 = vsel %vm8435, %v8436, %v8432
        %v8438 = vadd.s32 %v8433, %v8437
        %v8439 = vadd.s32 %v8438, 536870912
        %v8440 = vshrl.u32 %v8439, 30
        %v8441 = vshll.u32 %v8440, 30
        %v8442 = vsub.s32 %v8438, %v8441
        %vm8443 = vcmp.lt.s32.totalorder %v8442, 0
        %v8444 = vsub.s32 0, %v8442
        %v8445 = vsel %vm8443, %v8444, %v8442
        %v8446 = vclz %v8445
        %v8447 = vsub.s32 %v8446, 2
        %vm8448 = vcmp.gt.s32.totalorder 0, %v8447
        %v8449 = vsel %vm8448, 0, %v8447
        %v8450 = vsub.s32 32, %v8449
        %v8451 = vshll.u32 %v8442, %v8449
        %v8452 = vshrl.u32 %v8434, %v8450
        %v8453 = vor.u32 %v8451, %v8452
        %v8454 = vsub.s32 4294967266, %v8449
        %v8455 = vadd.s32 %v8454, 127
        %v8456 = vshll.u32 %v8455, 23
        %v8457 = vor.u32 4788187, %v8456
        %v8458 = vand.u32 2147483647, %v8457
        %v8460 = vcvt.s32.f32 %v8453
        %v8461 = vmul.f32 %v8460, %v8458
        %v8462 = vxor.u32 %v8461, 2147483648
        %v8463 = vsel %vm8380, %v8462, %v8461
        %v8464 = vsub.s32 4, %v8440
        %v8465 = vsel %vm8380, %v8464, %v8440
        %v8466 = vsel %vm8379, %v6948, %v8463
        %v8467 = vsel %vm8379, 0, %v8465
        %v8468 = vcosq.f32.pop %v8466
        %v8469 = vsinq.f32.pop %v8466
        %vm8470 = vweird.f32 %v6948
        %v8471 = vand.u32 %v8467, 3
        %vm8472 = vcmp.lt.s32.totalorder %v8471, 2
        %vm8473 = vcmp.eq.s32.totalorder %v8471, 0
        %v8474 = vxor.u32 %v8469, 2147483648
        %v8475 = vsel %vm8473, %v8468, %v8474
        %vm8476 = vcmp.eq.s32.totalorder %v8471, 2
        %v8477 = vxor.u32 %v8468, 2147483648
        %v8478 = vsel %vm8476, %v8477, %v8469
        %v8479 = vsel %vm8472, %v8475, %v8478
        %v8480 = vsel %vm8470, nan, %v8479
        %v8481 = vand.u32 2147483647, %v6954
        %vm8482 = vcmp.le.f32.partialorder %v8481, 0.7853982
        %vm8483 = vcmp.lt.s32.totalorder %v6954, 0
        %v8484 = vand.u32 %v6954, 2139095040
        %v8485 = vshrl.u32 %v8484, 23
        %v8486 = vsub.s32 %v8485, 127
        %v8487 = vand.u32 2147483647, %v6954
        %v8488 = vand.u32 %v8487, 8388607
        %v8489 = vor.u32 %v8488, 8388608
        %v8490 = vsub.s32 0, %v8489
        %v8491 = vadd.s32 %v8486, 1
        %vm8492 = vcmp.gt.s32.totalorder %v8491, 0
        %v8493 = vsel %vm8492, %v8491, 0
        %v8494 = vshrl.u32 %v8493, 5
        %v8495 = vand.u32 %v8493, 31
        %v8496 = vsub.s32 32, %v8495
        %v8497 = vshrl.u32 683565275, %v8496
        %v8498 = vshll.u32 683565275, %v8495
        %v8499 = vshrl.u32 2475754826, %v8496
        %v8500 = vor.u32 %v8498, %v8499
        %v8501 = vshll.u32 2475754826, %v8495
        %v8502 = vshrl.u32 2131351028, %v8496
        %v8503 = vor.u32 %v8501, %v8502
        %v8504 = vshll.u32 2131351028, %v8495
        %v8505 = vshrl.u32 2102212464, %v8496
        %v8506 = vor.u32 %v8504, %v8505
        %v8507 = vshll.u32 2102212464, %v8495
        %v8508 = vshrl.u32 920167782, %v8496
        %v8509 = vor.u32 %v8507, %v8508
        %v8510 = vshll.u32 920167782, %v8495
        %v8511 = vshrl.u32 1326507024, %v8496
        %v8512 = vor.u32 %v8510, %v8511
        %vm8513 = vcmp.lt.s32.totalorder %v8494, 1
        %vm8514 = vcmp.lt.s32.totalorder %v8494, 2
        %vm8515 = vcmp.lt.s32.totalorder %v8494, 3
        %vm8516 = vcmp.lt.s32.totalorder %v8494, 4
        %v8517 = vsel %vm8513, %v8497, %v8500
        %v8518 = vsel %vm8516, %v8506, 2102212464
        %v8519 = vsel %vm8515, %v8503, %v8518
        %v8520 = vsel %vm8514, %v8517, %v8519
        %v8521 = vsel %vm8513, %v8500, %v8503
        %v8522 = vsel %vm8516, %v8509, 920167782
        %v8523 = vsel %vm8515, %v8506, %v8522
        %v8524 = vsel %vm8514, %v8521, %v8523
        %v8525 = vsel %vm8513, %v8503, %v8506
        %v8526 = vsel %vm8516, %v8512, 1326507024
        %v8527 = vsel %vm8515, %v8509, %v8526
        %v8528 = vsel %vm8514, %v8525, %v8527
        %v8529 = vshll.u32 %v8489, 8
        %v8530 = vmul.u32.u64.compose %v8529, %v8528
        %v8531 = vextract.low.u32 %v8530
        %v8532 = vextract.high.u32 %v8530
        %v8533 = vmul.u32.u64.compose %v8529, %v8524
        %v8534 = vextract.low.u32 %v8533
        %v8535 = vextract.high.u32 %v8533
        %v8536 = vmul.u32 %v8529, %v8520
        %v8537 = vadd.s32 %v8532, %v8534
        %vm8538 = vc.u32 %v8532, %v8534
        %v8539 = vadd.s32 %v8535, 1
        %v8540 = vsel %vm8538, %v8539, %v8535
        %v8541 = vadd.s32 %v8536, %v8540
        %v8542 = vadd.s32 %v8541, 536870912
        %v8543 = vshrl.u32 %v8542, 30
        %v8544 = vshll.u32 %v8543, 30
        %v8545 = vsub.s32 %v8541, %v8544
        %vm8546 = vcmp.lt.s32.totalorder %v8545, 0
        %v8547 = vsub.s32 0, %v8545
        %v8548 = vsel %vm8546, %v8547, %v8545
        %v8549 = vclz %v8548
        %v8550 = vsub.s32 %v8549, 2
        %vm8551 = vcmp.gt.s32.totalorder 0, %v8550
        %v8552 = vsel %vm8551, 0, %v8550
        %v8553 = vsub.s32 32, %v8552
        %v8554 = vshll.u32 %v8545, %v8552
        %v8555 = vshrl.u32 %v8537, %v8553
        %v8556 = vor.u32 %v8554, %v8555
        %v8557 = vsub.s32 4294967266, %v8552
        %v8558 = vadd.s32 %v8557, 127
        %v8559 = vshll.u32 %v8558, 23
        %v8560 = vor.u32 4788187, %v8559
        %v8561 = vand.u32 2147483647, %v8560
        %v8563 = vcvt.s32.f32 %v8556
        %v8564 = vmul.f32 %v8563, %v8561
        %v8565 = vxor.u32 %v8564, 2147483648
        %v8566 = vsel %vm8483, %v8565, %v8564
        %v8567 = vsub.s32 4, %v8543
        %v8568 = vsel %vm8483, %v8567, %v8543
        %v8569 = vsel %vm8482, %v6954, %v8566
        %v8570 = vsel %vm8482, 0, %v8568
        %v8571 = vcosq.f32.pop %v8569
        %v8572 = vsinq.f32.pop %v8569
        %vm8573 = vweird.f32 %v6954
        %v8574 = vand.u32 %v8570, 3
        %vm8575 = vcmp.lt.s32.totalorder %v8574, 2
        %vm8576 = vcmp.eq.s32.totalorder %v8574, 0
        %v8577 = vxor.u32 %v8572, 2147483648
        %v8578 = vsel %vm8576, %v8571, %v8577
        %vm8579 = vcmp.eq.s32.totalorder %v8574, 2
        %v8580 = vxor.u32 %v8571, 2147483648
        %v8581 = vsel %vm8579, %v8580, %v8572
        %v8582 = vsel %vm8575, %v8578, %v8581
        %v8583 = vsel %vm8573, nan, %v8582
        %v8584 = vand.u32 2147483647, %v6960
        %vm8585 = vcmp.le.f32.partialorder %v8584, 0.7853982
        %vm8586 = vcmp.lt.s32.totalorder %v6960, 0
        %v8587 = vand.u32 %v6960, 2139095040
        %v8588 = vshrl.u32 %v8587, 23
        %v8589 = vsub.s32 %v8588, 127
        %v8590 = vand.u32 2147483647, %v6960
        %v8591 = vand.u32 %v8590, 8388607
        %v8592 = vor.u32 %v8591, 8388608
        %v8593 = vsub.s32 0, %v8592
        %v8594 = vadd.s32 %v8589, 1
        %vm8595 = vcmp.gt.s32.totalorder %v8594, 0
        %v8596 = vsel %vm8595, %v8594, 0
        %v8597 = vshrl.u32 %v8596, 5
        %v8598 = vand.u32 %v8596, 31
        %v8599 = vsub.s32 32, %v8598
        %v8600 = vshrl.u32 683565275, %v8599
        %v8601 = vshll.u32 683565275, %v8598
        %v8602 = vshrl.u32 2475754826, %v8599
        %v8603 = vor.u32 %v8601, %v8602
        %v8604 = vshll.u32 2475754826, %v8598
        %v8605 = vshrl.u32 2131351028, %v8599
        %v8606 = vor.u32 %v8604, %v8605
        %v8607 = vshll.u32 2131351028, %v8598
        %v8608 = vshrl.u32 2102212464, %v8599
        %v8609 = vor.u32 %v8607, %v8608
        %v8610 = vshll.u32 2102212464, %v8598
        %v8611 = vshrl.u32 920167782, %v8599
        %v8612 = vor.u32 %v8610, %v8611
        %v8613 = vshll.u32 920167782, %v8598
        %v8614 = vshrl.u32 1326507024, %v8599
        %v8615 = vor.u32 %v8613, %v8614
        %vm8616 = vcmp.lt.s32.totalorder %v8597, 1
        %vm8617 = vcmp.lt.s32.totalorder %v8597, 2
        %vm8618 = vcmp.lt.s32.totalorder %v8597, 3
        %vm8619 = vcmp.lt.s32.totalorder %v8597, 4
        %v8620 = vsel %vm8616, %v8600, %v8603
        %v8621 = vsel %vm8619, %v8609, 2102212464
        %v8622 = vsel %vm8618, %v8606, %v8621
        %v8623 = vsel %vm8617, %v8620, %v8622
        %v8624 = vsel %vm8616, %v8603, %v8606
        %v8625 = vsel %vm8619, %v8612, 920167782
        %v8626 = vsel %vm8618, %v8609, %v8625
        %v8627 = vsel %vm8617, %v8624, %v8626
        %v8628 = vsel %vm8616, %v8606, %v8609
        %v8629 = vsel %vm8619, %v8615, 1326507024
        %v8630 = vsel %vm8618, %v8612, %v8629
        %v8631 = vsel %vm8617, %v8628, %v8630
        %v8632 = vshll.u32 %v8592, 8
        %v8633 = vmul.u32.u64.compose %v8632, %v8631
        %v8634 = vextract.low.u32 %v8633
        %v8635 = vextract.high.u32 %v8633
        %v8636 = vmul.u32.u64.compose %v8632, %v8627
        %v8637 = vextract.low.u32 %v8636
        %v8638 = vextract.high.u32 %v8636
        %v8639 = vmul.u32 %v8632, %v8623
        %v8640 = vadd.s32 %v8635, %v8637
        %vm8641 = vc.u32 %v8635, %v8637
        %v8642 = vadd.s32 %v8638, 1
        %v8643 = vsel %vm8641, %v8642, %v8638
        %v8644 = vadd.s32 %v8639, %v8643
        %v8645 = vadd.s32 %v8644, 536870912
        %v8646 = vshrl.u32 %v8645, 30
        %v8647 = vshll.u32 %v8646, 30
        %v8648 = vsub.s32 %v8644, %v8647
        %vm8649 = vcmp.lt.s32.totalorder %v8648, 0
        %v8650 = vsub.s32 0, %v8648
        %v8651 = vsel %vm8649, %v8650, %v8648
        %v8652 = vclz %v8651
        %v8653 = vsub.s32 %v8652, 2
        %vm8654 = vcmp.gt.s32.totalorder 0, %v8653
        %v8655 = vsel %vm8654, 0, %v8653
        %v8656 = vsub.s32 32, %v8655
        %v8657 = vshll.u32 %v8648, %v8655
        %v8658 = vshrl.u32 %v8640, %v8656
        %v8659 = vor.u32 %v8657, %v8658
        %v8660 = vsub.s32 4294967266, %v8655
        %v8661 = vadd.s32 %v8660, 127
        %v8662 = vshll.u32 %v8661, 23
        %v8663 = vor.u32 4788187, %v8662
        %v8664 = vand.u32 2147483647, %v8663
        %v8666 = vcvt.s32.f32 %v8659
        %v8667 = vmul.f32 %v8666, %v8664
        %v8668 = vxor.u32 %v8667, 2147483648
        %v8669 = vsel %vm8586, %v8668, %v8667
        %v8670 = vsub.s32 4, %v8646
        %v8671 = vsel %vm8586, %v8670, %v8646
        %v8672 = vsel %vm8585, %v6960, %v8669
        %v8673 = vsel %vm8585, 0, %v8671
        %v8674 = vcosq.f32.pop %v8672
        %v8675 = vsinq.f32.pop %v8672
        %vm8676 = vweird.f32 %v6960
        %v8677 = vand.u32 %v8673, 3
        %vm8678 = vcmp.lt.s32.totalorder %v8677, 2
        %vm8679 = vcmp.eq.s32.totalorder %v8677, 0
        %v8680 = vxor.u32 %v8675, 2147483648
        %v8681 = vsel %vm8679, %v8674, %v8680
        %vm8682 = vcmp.eq.s32.totalorder %v8677, 2
        %v8683 = vxor.u32 %v8674, 2147483648
        %v8684 = vsel %vm8682, %v8683, %v8675
        %v8685 = vsel %vm8678, %v8681, %v8684
        %v8686 = vsel %vm8676, nan, %v8685
        %v8687 = vand.u32 2147483647, %v6966
        %vm8688 = vcmp.le.f32.partialorder %v8687, 0.7853982
        %vm8689 = vcmp.lt.s32.totalorder %v6966, 0
        %v8690 = vand.u32 %v6966, 2139095040
        %v8691 = vshrl.u32 %v8690, 23
        %v8692 = vsub.s32 %v8691, 127
        %v8693 = vand.u32 2147483647, %v6966
        %v8694 = vand.u32 %v8693, 8388607
        %v8695 = vor.u32 %v8694, 8388608
        %v8696 = vsub.s32 0, %v8695
        %v8697 = vadd.s32 %v8692, 1
        %vm8698 = vcmp.gt.s32.totalorder %v8697, 0
        %v8699 = vsel %vm8698, %v8697, 0
        %v8700 = vshrl.u32 %v8699, 5
        %v8701 = vand.u32 %v8699, 31
        %v8702 = vsub.s32 32, %v8701
        %v8703 = vshrl.u32 683565275, %v8702
        %v8704 = vshll.u32 683565275, %v8701
        %v8705 = vshrl.u32 2475754826, %v8702
        %v8706 = vor.u32 %v8704, %v8705
        %v8707 = vshll.u32 2475754826, %v8701
        %v8708 = vshrl.u32 2131351028, %v8702
        %v8709 = vor.u32 %v8707, %v8708
        %v8710 = vshll.u32 2131351028, %v8701
        %v8711 = vshrl.u32 2102212464, %v8702
        %v8712 = vor.u32 %v8710, %v8711
        %v8713 = vshll.u32 2102212464, %v8701
        %v8714 = vshrl.u32 920167782, %v8702
        %v8715 = vor.u32 %v8713, %v8714
        %v8716 = vshll.u32 920167782, %v8701
        %v8717 = vshrl.u32 1326507024, %v8702
        %v8718 = vor.u32 %v8716, %v8717
        %vm8719 = vcmp.lt.s32.totalorder %v8700, 1
        %vm8720 = vcmp.lt.s32.totalorder %v8700, 2
        %vm8721 = vcmp.lt.s32.totalorder %v8700, 3
        %vm8722 = vcmp.lt.s32.totalorder %v8700, 4
        %v8723 = vsel %vm8719, %v8703, %v8706
        %v8724 = vsel %vm8722, %v8712, 2102212464
        %v8725 = vsel %vm8721, %v8709, %v8724
        %v8726 = vsel %vm8720, %v8723, %v8725
        %v8727 = vsel %vm8719, %v8706, %v8709
        %v8728 = vsel %vm8722, %v8715, 920167782
        %v8729 = vsel %vm8721, %v8712, %v8728
        %v8730 = vsel %vm8720, %v8727, %v8729
        %v8731 = vsel %vm8719, %v8709, %v8712
        %v8732 = vsel %vm8722, %v8718, 1326507024
        %v8733 = vsel %vm8721, %v8715, %v8732
        %v8734 = vsel %vm8720, %v8731, %v8733
        %v8735 = vshll.u32 %v8695, 8
        %v8736 = vmul.u32.u64.compose %v8735, %v8734
        %v8737 = vextract.low.u32 %v8736
        %v8738 = vextract.high.u32 %v8736
        %v8739 = vmul.u32.u64.compose %v8735, %v8730
        %v8740 = vextract.low.u32 %v8739
        %v8741 = vextract.high.u32 %v8739
        %v8742 = vmul.u32 %v8735, %v8726
        %v8743 = vadd.s32 %v8738, %v8740
        %vm8744 = vc.u32 %v8738, %v8740
        %v8745 = vadd.s32 %v8741, 1
        %v8746 = vsel %vm8744, %v8745, %v8741
        %v8747 = vadd.s32 %v8742, %v8746
        %v8748 = vadd.s32 %v8747, 536870912
        %v8749 = vshrl.u32 %v8748, 30
        %v8750 = vshll.u32 %v8749, 30
        %v8751 = vsub.s32 %v8747, %v8750
        %vm8752 = vcmp.lt.s32.totalorder %v8751, 0
        %v8753 = vsub.s32 0, %v8751
        %v8754 = vsel %vm8752, %v8753, %v8751
        %v8755 = vclz %v8754
        %v8756 = vsub.s32 %v8755, 2
        %vm8757 = vcmp.gt.s32.totalorder 0, %v8756
        %v8758 = vsel %vm8757, 0, %v8756
        %v8759 = vsub.s32 32, %v8758
        %v8760 = vshll.u32 %v8751, %v8758
        %v8761 = vshrl.u32 %v8743, %v8759
        %v8762 = vor.u32 %v8760, %v8761
        %v8763 = vsub.s32 4294967266, %v8758
        %v8764 = vadd.s32 %v8763, 127
        %v8765 = vshll.u32 %v8764, 23
        %v8766 = vor.u32 4788187, %v8765
        %v8767 = vand.u32 2147483647, %v8766
        %v8769 = vcvt.s32.f32 %v8762
        %v8770 = vmul.f32 %v8769, %v8767
        %v8771 = vxor.u32 %v8770, 2147483648
        %v8772 = vsel %vm8689, %v8771, %v8770
        %v8773 = vsub.s32 4, %v8749
        %v8774 = vsel %vm8689, %v8773, %v8749
        %v8775 = vsel %vm8688, %v6966, %v8772
        %v8776 = vsel %vm8688, 0, %v8774
        %v8777 = vcosq.f32.pop %v8775
        %v8778 = vsinq.f32.pop %v8775
        %vm8779 = vweird.f32 %v6966
        %v8780 = vand.u32 %v8776, 3
        %vm8781 = vcmp.lt.s32.totalorder %v8780, 2
        %vm8782 = vcmp.eq.s32.totalorder %v8780, 0
        %v8783 = vxor.u32 %v8778, 2147483648
        %v8784 = vsel %vm8782, %v8777, %v8783
        %vm8785 = vcmp.eq.s32.totalorder %v8780, 2
        %v8786 = vxor.u32 %v8777, 2147483648
        %v8787 = vsel %vm8785, %v8786, %v8778
        %v8788 = vsel %vm8781, %v8784, %v8787
        %v8789 = vsel %vm8779, nan, %v8788
        %v8790 = vand.u32 2147483647, %v6972
        %vm8791 = vcmp.le.f32.partialorder %v8790, 0.7853982
        %vm8792 = vcmp.lt.s32.totalorder %v6972, 0
        %v8793 = vand.u32 %v6972, 2139095040
        %v8794 = vshrl.u32 %v8793, 23
        %v8795 = vsub.s32 %v8794, 127
        %v8796 = vand.u32 2147483647, %v6972
        %v8797 = vand.u32 %v8796, 8388607
        %v8798 = vor.u32 %v8797, 8388608
        %v8799 = vsub.s32 0, %v8798
        %v8800 = vadd.s32 %v8795, 1
        %vm8801 = vcmp.gt.s32.totalorder %v8800, 0
        %v8802 = vsel %vm8801, %v8800, 0
        %v8803 = vshrl.u32 %v8802, 5
        %v8804 = vand.u32 %v8802, 31
        %v8805 = vsub.s32 32, %v8804
        %v8806 = vshrl.u32 683565275, %v8805
        %v8807 = vshll.u32 683565275, %v8804
        %v8808 = vshrl.u32 2475754826, %v8805
        %v8809 = vor.u32 %v8807, %v8808
        %v8810 = vshll.u32 2475754826, %v8804
        %v8811 = vshrl.u32 2131351028, %v8805
        %v8812 = vor.u32 %v8810, %v8811
        %v8813 = vshll.u32 2131351028, %v8804
        %v8814 = vshrl.u32 2102212464, %v8805
        %v8815 = vor.u32 %v8813, %v8814
        %v8816 = vshll.u32 2102212464, %v8804
        %v8817 = vshrl.u32 920167782, %v8805
        %v8818 = vor.u32 %v8816, %v8817
        %v8819 = vshll.u32 920167782, %v8804
        %v8820 = vshrl.u32 1326507024, %v8805
        %v8821 = vor.u32 %v8819, %v8820
        %vm8822 = vcmp.lt.s32.totalorder %v8803, 1
        %vm8823 = vcmp.lt.s32.totalorder %v8803, 2
        %vm8824 = vcmp.lt.s32.totalorder %v8803, 3
        %vm8825 = vcmp.lt.s32.totalorder %v8803, 4
        %v8826 = vsel %vm8822, %v8806, %v8809
        %v8827 = vsel %vm8825, %v8815, 2102212464
        %v8828 = vsel %vm8824, %v8812, %v8827
        %v8829 = vsel %vm8823, %v8826, %v8828
        %v8830 = vsel %vm8822, %v8809, %v8812
        %v8831 = vsel %vm8825, %v8818, 920167782
        %v8832 = vsel %vm8824, %v8815, %v8831
        %v8833 = vsel %vm8823, %v8830, %v8832
        %v8834 = vsel %vm8822, %v8812, %v8815
        %v8835 = vsel %vm8825, %v8821, 1326507024
        %v8836 = vsel %vm8824, %v8818, %v8835
        %v8837 = vsel %vm8823, %v8834, %v8836
        %v8838 = vshll.u32 %v8798, 8
        %v8839 = vmul.u32.u64.compose %v8838, %v8837
        %v8840 = vextract.low.u32 %v8839
        %v8841 = vextract.high.u32 %v8839
        %v8842 = vmul.u32.u64.compose %v8838, %v8833
        %v8843 = vextract.low.u32 %v8842
        %v8844 = vextract.high.u32 %v8842
        %v8845 = vmul.u32 %v8838, %v8829
        %v8846 = vadd.s32 %v8841, %v8843
        %vm8847 = vc.u32 %v8841, %v8843
        %v8848 = vadd.s32 %v8844, 1
        %v8849 = vsel %vm8847, %v8848, %v8844
        %v8850 = vadd.s32 %v8845, %v8849
        %v8851 = vadd.s32 %v8850, 536870912
        %v8852 = vshrl.u32 %v8851, 30
        %v8853 = vshll.u32 %v8852, 30
        %v8854 = vsub.s32 %v8850, %v8853
        %vm8855 = vcmp.lt.s32.totalorder %v8854, 0
        %v8856 = vsub.s32 0, %v8854
        %v8857 = vsel %vm8855, %v8856, %v8854
        %v8858 = vclz %v8857
        %v8859 = vsub.s32 %v8858, 2
        %vm8860 = vcmp.gt.s32.totalorder 0, %v8859
        %v8861 = vsel %vm8860, 0, %v8859
        %v8862 = vsub.s32 32, %v8861
        %v8863 = vshll.u32 %v8854, %v8861
        %v8864 = vshrl.u32 %v8846, %v8862
        %v8865 = vor.u32 %v8863, %v8864
        %v8866 = vsub.s32 4294967266, %v8861
        %v8867 = vadd.s32 %v8866, 127
        %v8868 = vshll.u32 %v8867, 23
        %v8869 = vor.u32 4788187, %v8868
        %v8870 = vand.u32 2147483647, %v8869
        %v8872 = vcvt.s32.f32 %v8865
        %v8873 = vmul.f32 %v8872, %v8870
        %v8874 = vxor.u32 %v8873, 2147483648
        %v8875 = vsel %vm8792, %v8874, %v8873
        %v8876 = vsub.s32 4, %v8852
        %v8877 = vsel %vm8792, %v8876, %v8852
        %v8878 = vsel %vm8791, %v6972, %v8875
        %v8879 = vsel %vm8791, 0, %v8877
        %v8880 = vcosq.f32.pop %v8878
        %v8881 = vsinq.f32.pop %v8878
        %vm8882 = vweird.f32 %v6972
        %v8883 = vand.u32 %v8879, 3
        %vm8884 = vcmp.lt.s32.totalorder %v8883, 2
        %vm8885 = vcmp.eq.s32.totalorder %v8883, 0
        %v8886 = vxor.u32 %v8881, 2147483648
        %v8887 = vsel %vm8885, %v8880, %v8886
        %vm8888 = vcmp.eq.s32.totalorder %v8883, 2
        %v8889 = vxor.u32 %v8880, 2147483648
        %v8890 = vsel %vm8888, %v8889, %v8881
        %v8891 = vsel %vm8884, %v8887, %v8890
        %v8892 = vsel %vm8882, nan, %v8891
        %v8893 = vmul.f32 %v7347, %v7139
        %v8894 = vmul.f32 %v7450, %v7146
        %v8895 = vmul.f32 %v7553, %v7153
        %v8896 = vmul.f32 %v7656, %v7160
        %v8897 = vmul.f32 %v7759, %v7167
        %v8898 = vmul.f32 %v7862, %v7174
        %v8899 = vmul.f32 %v7965, %v7181
        %v8900 = vmul.f32 %v8068, %v7188
        %v8901 = vmul.f32 %v8171, %v7195
        %v8902 = vmul.f32 %v8274, %v7202
        %v8903 = vmul.f32 %v8377, %v7209
        %v8904 = vmul.f32 %v8480, %v7216
        %v8905 = vmul.f32 %v8583, %v7223
        %v8906 = vmul.f32 %v8686, %v7230
        %v8907 = vmul.f32 %v8789, %v7237
        %v8908 = vmul.f32 %v8892, %v7244
        %v8925 = vcombine.low %v8893, %v8894
        %v8926 = vcombine.low %v8895, %v8896
        %v8927 = vcombine.low %v8897, %v8898
        %v8928 = vcombine.low %v8899, %v8900
        %v8930 = vunpack.c.l.s4 1966171168
        %v8931 = vunpack.c.0.s8 %v8930
        %v8932 = vlaneseq
        %v8933 = vshrl.u32 %v8932, 7
        %v8934 = vsub.s32 %v8931, %v8933
        %v8935 = vrot.slane %v8925, %v8934
        %v8937 = vunpack.c.l.s4 1966171168
        %v8938 = vunpack.c.0.s8 %v8937
        %v8939 = vlaneseq
        %v8940 = vshrl.u32 %v8939, 7
        %v8941 = vsub.s32 %v8938, %v8940
        %v8942 = vrot.slane %v8926, %v8941
        %v8944 = vunpack.c.l.s4 1966171168
        %v8945 = vunpack.c.0.s8 %v8944
        %v8946 = vlaneseq
        %v8947 = vshrl.u32 %v8946, 7
        %v8948 = vsub.s32 %v8945, %v8947
        %v8949 = vrot.slane %v8927, %v8948
        %v8951 = vunpack.c.l.s4 1966171168
        %v8952 = vunpack.c.0.s8 %v8951
        %v8953 = vlaneseq
        %v8954 = vshrl.u32 %v8953, 7
        %v8955 = vsub.s32 %v8952, %v8954
        %v8956 = vrot.slane %v8928, %v8955
        %v8957 = vcombine.low %v8935, %v8942
        %v8958 = vcombine.low %v8949, %v8956
        %v8960 = vunpack.c.l.s4 1966171168
        %v8961 = vunpack.c.0.s8 %v8960
        %v8962 = vlaneseq
        %v8963 = vshrl.u32 %v8962, 7
        %v8964 = vsub.s32 %v8961, %v8963
        %v8965 = vrot.slane %v8957, %v8964
        %v8967 = vunpack.c.l.s4 1966171168
        %v8968 = vunpack.c.0.s8 %v8967
        %v8969 = vlaneseq
        %v8970 = vshrl.u32 %v8969, 7
        %v8971 = vsub.s32 %v8968, %v8970
        %v8972 = vrot.slane %v8958, %v8971
        %v8973 = vcombine.low %v8965, %v8972
        %v8974 = vcombine.low %v8901, %v8902
        %v8975 = vcombine.low %v8903, %v8904
        %v8976 = vcombine.low %v8905, %v8906
        %v8977 = vcombine.low %v8907, %v8908
        %v8979 = vunpack.c.l.s4 1966171168
        %v8980 = vunpack.c.0.s8 %v8979
        %v8981 = vlaneseq
        %v8982 = vshrl.u32 %v8981, 7
        %v8983 = vsub.s32 %v8980, %v8982
        %v8984 = vrot.slane %v8974, %v8983
        %v8986 = vunpack.c.l.s4 1966171168
        %v8987 = vunpack.c.0.s8 %v8986
        %v8988 = vlaneseq
        %v8989 = vshrl.u32 %v8988, 7
        %v8990 = vsub.s32 %v8987, %v8989
        %v8991 = vrot.slane %v8975, %v8990
        %v8993 = vunpack.c.l.s4 1966171168
        %v8994 = vunpack.c.0.s8 %v8993
        %v8995 = vlaneseq
        %v8996 = vshrl.u32 %v8995, 7
        %v8997 = vsub.s32 %v8994, %v8996
        %v8998 = vrot.slane %v8976, %v8997
        %v9000 = vunpack.c.l.s4 1966171168
        %v9001 = vunpack.c.0.s8 %v9000
        %v9002 = vlaneseq
        %v9003 = vshrl.u32 %v9002, 7
        %v9004 = vsub.s32 %v9001, %v9003
        %v9005 = vrot.slane %v8977, %v9004
        %v9006 = vcombine.low %v8984, %v8991
        %v9007 = vcombine.low %v8998, %v9005
        %v9009 = vunpack.c.l.s4 1966171168
        %v9010 = vunpack.c.0.s8 %v9009
        %v9011 = vlaneseq
        %v9012 = vshrl.u32 %v9011, 7
        %v9013 = vsub.s32 %v9010, %v9012
        %v9014 = vrot.slane %v9006, %v9013
        %v9016 = vunpack.c.l.s4 1966171168
        %v9017 = vunpack.c.0.s8 %v9016
        %v9018 = vlaneseq
        %v9019 = vshrl.u32 %v9018, 7
        %v9020 = vsub.s32 %v9017, %v9019
        %v9021 = vrot.slane %v9007, %v9020
        %v9022 = vcombine.low %v9014, %v9021
        %9025 = vst [vmem:[%s267] ss:$4 sm:$0xff] %v8973
        %s9026 = scalar_lea.vmem %s267, 32 [#allocation5]
        %9027 = vst [vmem:[%s9026] ss:$4 sm:$0xff] %v9022
        %v9028 = vand.u32 2147483647, %v6882
        %vm9029 = vcmp.le.f32.partialorder %v9028, 0.7853982
        %vm9030 = vcmp.lt.s32.totalorder %v6882, 0
        %v9031 = vand.u32 %v6882, 2139095040
        %v9032 = vshrl.u32 %v9031, 23
        %v9033 = vsub.s32 %v9032, 127
        %v9034 = vand.u32 2147483647, %v6882
        %v9035 = vand.u32 %v9034, 8388607
        %v9036 = vor.u32 %v9035, 8388608
        %v9037 = vsub.s32 0, %v9036
        %v9038 = vadd.s32 %v9033, 1
        %vm9039 = vcmp.gt.s32.totalorder %v9038, 0
        %v9040 = vsel %vm9039, %v9038, 0
        %v9041 = vshrl.u32 %v9040, 5
        %v9042 = vand.u32 %v9040, 31
        %v9043 = vsub.s32 32, %v9042
        %v9044 = vshrl.u32 683565275, %v9043
        %v9045 = vshll.u32 683565275, %v9042
        %v9046 = vshrl.u32 2475754826, %v9043
        %v9047 = vor.u32 %v9045, %v9046
        %v9048 = vshll.u32 2475754826, %v9042
        %v9049 = vshrl.u32 2131351028, %v9043
        %v9050 = vor.u32 %v9048, %v9049
        %v9051 = vshll.u32 2131351028, %v9042
        %v9052 = vshrl.u32 2102212464, %v9043
        %v9053 = vor.u32 %v9051, %v9052
        %v9054 = vshll.u32 2102212464, %v9042
        %v9055 = vshrl.u32 920167782, %v9043
        %v9056 = vor.u32 %v9054, %v9055
        %v9057 = vshll.u32 920167782, %v9042
        %v9058 = vshrl.u32 1326507024, %v9043
        %v9059 = vor.u32 %v9057, %v9058
        %vm9060 = vcmp.lt.s32.totalorder %v9041, 1
        %vm9061 = vcmp.lt.s32.totalorder %v9041, 2
        %vm9062 = vcmp.lt.s32.totalorder %v9041, 3
        %vm9063 = vcmp.lt.s32.totalorder %v9041, 4
        %v9064 = vsel %vm9060, %v9044, %v9047
        %v9065 = vsel %vm9063, %v9053, 2102212464
        %v9066 = vsel %vm9062, %v9050, %v9065
        %v9067 = vsel %vm9061, %v9064, %v9066
        %v9068 = vsel %vm9060, %v9047, %v9050
        %v9069 = vsel %vm9063, %v9056, 920167782
        %v9070 = vsel %vm9062, %v9053, %v9069
        %v9071 = vsel %vm9061, %v9068, %v9070
        %v9072 = vsel %vm9060, %v9050, %v9053
        %v9073 = vsel %vm9063, %v9059, 1326507024
        %v9074 = vsel %vm9062, %v9056, %v9073
        %v9075 = vsel %vm9061, %v9072, %v9074
        %v9076 = vshll.u32 %v9036, 8
        %v9077 = vmul.u32.u64.compose %v9076, %v9075
        %v9078 = vextract.low.u32 %v9077
        %v9079 = vextract.high.u32 %v9077
        %v9080 = vmul.u32.u64.compose %v9076, %v9071
        %v9081 = vextract.low.u32 %v9080
        %v9082 = vextract.high.u32 %v9080
        %v9083 = vmul.u32 %v9076, %v9067
        %v9084 = vadd.s32 %v9079, %v9081
        %vm9085 = vc.u32 %v9079, %v9081
        %v9086 = vadd.s32 %v9082, 1
        %v9087 = vsel %vm9085, %v9086, %v9082
        %v9088 = vadd.s32 %v9083, %v9087
        %v9089 = vadd.s32 %v9088, 536870912
        %v9090 = vshrl.u32 %v9089, 30
        %v9091 = vshll.u32 %v9090, 30
        %v9092 = vsub.s32 %v9088, %v9091
        %vm9093 = vcmp.lt.s32.totalorder %v9092, 0
        %v9094 = vsub.s32 0, %v9092
        %v9095 = vsel %vm9093, %v9094, %v9092
        %v9096 = vclz %v9095
        %v9097 = vsub.s32 %v9096, 2
        %vm9098 = vcmp.gt.s32.totalorder 0, %v9097
        %v9099 = vsel %vm9098, 0, %v9097
        %v9100 = vsub.s32 32, %v9099
        %v9101 = vshll.u32 %v9092, %v9099
        %v9102 = vshrl.u32 %v9084, %v9100
        %v9103 = vor.u32 %v9101, %v9102
        %v9104 = vsub.s32 4294967266, %v9099
        %v9105 = vadd.s32 %v9104, 127
        %v9106 = vshll.u32 %v9105, 23
        %v9107 = vor.u32 4788187, %v9106
        %v9108 = vand.u32 2147483647, %v9107
        %v9110 = vcvt.s32.f32 %v9103
        %v9111 = vmul.f32 %v9110, %v9108
        %v9112 = vxor.u32 %v9111, 2147483648
        %v9113 = vsel %vm9030, %v9112, %v9111
        %v9114 = vsub.s32 4, %v9090
        %v9115 = vsel %vm9030, %v9114, %v9090
        %v9116 = vsel %vm9029, %v6882, %v9113
        %v9117 = vsel %vm9029, 0, %v9115
        %v9118 = vcosq.f32.pop %v9116
        %v9119 = vsinq.f32.pop %v9116
        %vm9120 = vweird.f32 %v6882
        %v9121 = vadd.s32 %v9117, 3
        %v9122 = vand.u32 %v9121, 3
        %vm9123 = vcmp.lt.s32.totalorder %v9122, 2
        %vm9124 = vcmp.eq.s32.totalorder %v9122, 0
        %v9125 = vxor.u32 %v9119, 2147483648
        %v9126 = vsel %vm9124, %v9118, %v9125
        %vm9127 = vcmp.eq.s32.totalorder %v9122, 2
        %v9128 = vxor.u32 %v9118, 2147483648
        %v9129 = vsel %vm9127, %v9128, %v9119
        %v9130 = vsel %vm9123, %v9126, %v9129
        %v9131 = vsel %vm9120, nan, %v9130
        %v9132 = vand.u32 2147483647, %v6888
        %vm9133 = vcmp.le.f32.partialorder %v9132, 0.7853982
        %vm9134 = vcmp.lt.s32.totalorder %v6888, 0
        %v9135 = vand.u32 %v6888, 2139095040
        %v9136 = vshrl.u32 %v9135, 23
        %v9137 = vsub.s32 %v9136, 127
        %v9138 = vand.u32 2147483647, %v6888
        %v9139 = vand.u32 %v9138, 8388607
        %v9140 = vor.u32 %v9139, 8388608
        %v9141 = vsub.s32 0, %v9140
        %v9142 = vadd.s32 %v9137, 1
        %vm9143 = vcmp.gt.s32.totalorder %v9142, 0
        %v9144 = vsel %vm9143, %v9142, 0
        %v9145 = vshrl.u32 %v9144, 5
        %v9146 = vand.u32 %v9144, 31
        %v9147 = vsub.s32 32, %v9146
        %v9148 = vshrl.u32 683565275, %v9147
        %v9149 = vshll.u32 683565275, %v9146
        %v9150 = vshrl.u32 2475754826, %v9147
        %v9151 = vor.u32 %v9149, %v9150
        %v9152 = vshll.u32 2475754826, %v9146
        %v9153 = vshrl.u32 2131351028, %v9147
        %v9154 = vor.u32 %v9152, %v9153
        %v9155 = vshll.u32 2131351028, %v9146
        %v9156 = vshrl.u32 2102212464, %v9147
        %v9157 = vor.u32 %v9155, %v9156
        %v9158 = vshll.u32 2102212464, %v9146
        %v9159 = vshrl.u32 920167782, %v9147
        %v9160 = vor.u32 %v9158, %v9159
        %v9161 = vshll.u32 920167782, %v9146
        %v9162 = vshrl.u32 1326507024, %v9147
        %v9163 = vor.u32 %v9161, %v9162
        %vm9164 = vcmp.lt.s32.totalorder %v9145, 1
        %vm9165 = vcmp.lt.s32.totalorder %v9145, 2
        %vm9166 = vcmp.lt.s32.totalorder %v9145, 3
        %vm9167 = vcmp.lt.s32.totalorder %v9145, 4
        %v9168 = vsel %vm9164, %v9148, %v9151
        %v9169 = vsel %vm9167, %v9157, 2102212464
        %v9170 = vsel %vm9166, %v9154, %v9169
        %v9171 = vsel %vm9165, %v9168, %v9170
        %v9172 = vsel %vm9164, %v9151, %v9154
        %v9173 = vsel %vm9167, %v9160, 920167782
        %v9174 = vsel %vm9166, %v9157, %v9173
        %v9175 = vsel %vm9165, %v9172, %v9174
        %v9176 = vsel %vm9164, %v9154, %v9157
        %v9177 = vsel %vm9167, %v9163, 1326507024
        %v9178 = vsel %vm9166, %v9160, %v9177
        %v9179 = vsel %vm9165, %v9176, %v9178
        %v9180 = vshll.u32 %v9140, 8
        %v9181 = vmul.u32.u64.compose %v9180, %v9179
        %v9182 = vextract.low.u32 %v9181
        %v9183 = vextract.high.u32 %v9181
        %v9184 = vmul.u32.u64.compose %v9180, %v9175
        %v9185 = vextract.low.u32 %v9184
        %v9186 = vextract.high.u32 %v9184
        %v9187 = vmul.u32 %v9180, %v9171
        %v9188 = vadd.s32 %v9183, %v9185
        %vm9189 = vc.u32 %v9183, %v9185
        %v9190 = vadd.s32 %v9186, 1
        %v9191 = vsel %vm9189, %v9190, %v9186
        %v9192 = vadd.s32 %v9187, %v9191
        %v9193 = vadd.s32 %v9192, 536870912
        %v9194 = vshrl.u32 %v9193, 30
        %v9195 = vshll.u32 %v9194, 30
        %v9196 = vsub.s32 %v9192, %v9195
        %vm9197 = vcmp.lt.s32.totalorder %v9196, 0
        %v9198 = vsub.s32 0, %v9196
        %v9199 = vsel %vm9197, %v9198, %v9196
        %v9200 = vclz %v9199
        %v9201 = vsub.s32 %v9200, 2
        %vm9202 = vcmp.gt.s32.totalorder 0, %v9201
        %v9203 = vsel %vm9202, 0, %v9201
        %v9204 = vsub.s32 32, %v9203
        %v9205 = vshll.u32 %v9196, %v9203
        %v9206 = vshrl.u32 %v9188, %v9204
        %v9207 = vor.u32 %v9205, %v9206
        %v9208 = vsub.s32 4294967266, %v9203
        %v9209 = vadd.s32 %v9208, 127
        %v9210 = vshll.u32 %v9209, 23
        %v9211 = vor.u32 4788187, %v9210
        %v9212 = vand.u32 2147483647, %v9211
        %v9214 = vcvt.s32.f32 %v9207
        %v9215 = vmul.f32 %v9214, %v9212
        %v9216 = vxor.u32 %v9215, 2147483648
        %v9217 = vsel %vm9134, %v9216, %v9215
        %v9218 = vsub.s32 4, %v9194
        %v9219 = vsel %vm9134, %v9218, %v9194
        %v9220 = vsel %vm9133, %v6888, %v9217
        %v9221 = vsel %vm9133, 0, %v9219
        %v9222 = vcosq.f32.pop %v9220
        %v9223 = vsinq.f32.pop %v9220
        %vm9224 = vweird.f32 %v6888
        %v9225 = vadd.s32 %v9221, 3
        %v9226 = vand.u32 %v9225, 3
        %vm9227 = vcmp.lt.s32.totalorder %v9226, 2
        %vm9228 = vcmp.eq.s32.totalorder %v9226, 0
        %v9229 = vxor.u32 %v9223, 2147483648
        %v9230 = vsel %vm9228, %v9222, %v9229
        %vm9231 = vcmp.eq.s32.totalorder %v9226, 2
        %v9232 = vxor.u32 %v9222, 2147483648
        %v9233 = vsel %vm9231, %v9232, %v9223
        %v9234 = vsel %vm9227, %v9230, %v9233
        %v9235 = vsel %vm9224, nan, %v9234
        %v9236 = vand.u32 2147483647, %v6894
        %vm9237 = vcmp.le.f32.partialorder %v9236, 0.7853982
        %vm9238 = vcmp.lt.s32.totalorder %v6894, 0
        %v9239 = vand.u32 %v6894, 2139095040
        %v9240 = vshrl.u32 %v9239, 23
        %v9241 = vsub.s32 %v9240, 127
        %v9242 = vand.u32 2147483647, %v6894
        %v9243 = vand.u32 %v9242, 8388607
        %v9244 = vor.u32 %v9243, 8388608
        %v9245 = vsub.s32 0, %v9244
        %v9246 = vadd.s32 %v9241, 1
        %vm9247 = vcmp.gt.s32.totalorder %v9246, 0
        %v9248 = vsel %vm9247, %v9246, 0
        %v9249 = vshrl.u32 %v9248, 5
        %v9250 = vand.u32 %v9248, 31
        %v9251 = vsub.s32 32, %v9250
        %v9252 = vshrl.u32 683565275, %v9251
        %v9253 = vshll.u32 683565275, %v9250
        %v9254 = vshrl.u32 2475754826, %v9251
        %v9255 = vor.u32 %v9253, %v9254
        %v9256 = vshll.u32 2475754826, %v9250
        %v9257 = vshrl.u32 2131351028, %v9251
        %v9258 = vor.u32 %v9256, %v9257
        %v9259 = vshll.u32 2131351028, %v9250
        %v9260 = vshrl.u32 2102212464, %v9251
        %v9261 = vor.u32 %v9259, %v9260
        %v9262 = vshll.u32 2102212464, %v9250
        %v9263 = vshrl.u32 920167782, %v9251
        %v9264 = vor.u32 %v9262, %v9263
        %v9265 = vshll.u32 920167782, %v9250
        %v9266 = vshrl.u32 1326507024, %v9251
        %v9267 = vor.u32 %v9265, %v9266
        %vm9268 = vcmp.lt.s32.totalorder %v9249, 1
        %vm9269 = vcmp.lt.s32.totalorder %v9249, 2
        %vm9270 = vcmp.lt.s32.totalorder %v9249, 3
        %vm9271 = vcmp.lt.s32.totalorder %v9249, 4
        %v9272 = vsel %vm9268, %v9252, %v9255
        %v9273 = vsel %vm9271, %v9261, 2102212464
        %v9274 = vsel %vm9270, %v9258, %v9273
        %v9275 = vsel %vm9269, %v9272, %v9274
        %v9276 = vsel %vm9268, %v9255, %v9258
        %v9277 = vsel %vm9271, %v9264, 920167782
        %v9278 = vsel %vm9270, %v9261, %v9277
        %v9279 = vsel %vm9269, %v9276, %v9278
        %v9280 = vsel %vm9268, %v9258, %v9261
        %v9281 = vsel %vm9271, %v9267, 1326507024
        %v9282 = vsel %vm9270, %v9264, %v9281
        %v9283 = vsel %vm9269, %v9280, %v9282
        %v9284 = vshll.u32 %v9244, 8
        %v9285 = vmul.u32.u64.compose %v9284, %v9283
        %v9286 = vextract.low.u32 %v9285
        %v9287 = vextract.high.u32 %v9285
        %v9288 = vmul.u32.u64.compose %v9284, %v9279
        %v9289 = vextract.low.u32 %v9288
        %v9290 = vextract.high.u32 %v9288
        %v9291 = vmul.u32 %v9284, %v9275
        %v9292 = vadd.s32 %v9287, %v9289
        %vm9293 = vc.u32 %v9287, %v9289
        %v9294 = vadd.s32 %v9290, 1
        %v9295 = vsel %vm9293, %v9294, %v9290
        %v9296 = vadd.s32 %v9291, %v9295
        %v9297 = vadd.s32 %v9296, 536870912
        %v9298 = vshrl.u32 %v9297, 30
        %v9299 = vshll.u32 %v9298, 30
        %v9300 = vsub.s32 %v9296, %v9299
        %vm9301 = vcmp.lt.s32.totalorder %v9300, 0
        %v9302 = vsub.s32 0, %v9300
        %v9303 = vsel %vm9301, %v9302, %v9300
        %v9304 = vclz %v9303
        %v9305 = vsub.s32 %v9304, 2
        %vm9306 = vcmp.gt.s32.totalorder 0, %v9305
        %v9307 = vsel %vm9306, 0, %v9305
        %v9308 = vsub.s32 32, %v9307
        %v9309 = vshll.u32 %v9300, %v9307
        %v9310 = vshrl.u32 %v9292, %v9308
        %v9311 = vor.u32 %v9309, %v9310
        %v9312 = vsub.s32 4294967266, %v9307
        %v9313 = vadd.s32 %v9312, 127
        %v9314 = vshll.u32 %v9313, 23
        %v9315 = vor.u32 4788187, %v9314
        %v9316 = vand.u32 2147483647, %v9315
        %v9318 = vcvt.s32.f32 %v9311
        %v9319 = vmul.f32 %v9318, %v9316
        %v9320 = vxor.u32 %v9319, 2147483648
        %v9321 = vsel %vm9238, %v9320, %v9319
        %v9322 = vsub.s32 4, %v9298
        %v9323 = vsel %vm9238, %v9322, %v9298
        %v9324 = vsel %vm9237, %v6894, %v9321
        %v9325 = vsel %vm9237, 0, %v9323
        %v9326 = vcosq.f32.pop %v9324
        %v9327 = vsinq.f32.pop %v9324
        %vm9328 = vweird.f32 %v6894
        %v9329 = vadd.s32 %v9325, 3
        %v9330 = vand.u32 %v9329, 3
        %vm9331 = vcmp.lt.s32.totalorder %v9330, 2
        %vm9332 = vcmp.eq.s32.totalorder %v9330, 0
        %v9333 = vxor.u32 %v9327, 2147483648
        %v9334 = vsel %vm9332, %v9326, %v9333
        %vm9335 = vcmp.eq.s32.totalorder %v9330, 2
        %v9336 = vxor.u32 %v9326, 2147483648
        %v9337 = vsel %vm9335, %v9336, %v9327
        %v9338 = vsel %vm9331, %v9334, %v9337
        %v9339 = vsel %vm9328, nan, %v9338
        %v9340 = vand.u32 2147483647, %v6900
        %vm9341 = vcmp.le.f32.partialorder %v9340, 0.7853982
        %vm9342 = vcmp.lt.s32.totalorder %v6900, 0
        %v9343 = vand.u32 %v6900, 2139095040
        %v9344 = vshrl.u32 %v9343, 23
        %v9345 = vsub.s32 %v9344, 127
        %v9346 = vand.u32 2147483647, %v6900
        %v9347 = vand.u32 %v9346, 8388607
        %v9348 = vor.u32 %v9347, 8388608
        %v9349 = vsub.s32 0, %v9348
        %v9350 = vadd.s32 %v9345, 1
        %vm9351 = vcmp.gt.s32.totalorder %v9350, 0
        %v9352 = vsel %vm9351, %v9350, 0
        %v9353 = vshrl.u32 %v9352, 5
        %v9354 = vand.u32 %v9352, 31
        %v9355 = vsub.s32 32, %v9354
        %v9356 = vshrl.u32 683565275, %v9355
        %v9357 = vshll.u32 683565275, %v9354
        %v9358 = vshrl.u32 2475754826, %v9355
        %v9359 = vor.u32 %v9357, %v9358
        %v9360 = vshll.u32 2475754826, %v9354
        %v9361 = vshrl.u32 2131351028, %v9355
        %v9362 = vor.u32 %v9360, %v9361
        %v9363 = vshll.u32 2131351028, %v9354
        %v9364 = vshrl.u32 2102212464, %v9355
        %v9365 = vor.u32 %v9363, %v9364
        %v9366 = vshll.u32 2102212464, %v9354
        %v9367 = vshrl.u32 920167782, %v9355
        %v9368 = vor.u32 %v9366, %v9367
        %v9369 = vshll.u32 920167782, %v9354
        %v9370 = vshrl.u32 1326507024, %v9355
        %v9371 = vor.u32 %v9369, %v9370
        %vm9372 = vcmp.lt.s32.totalorder %v9353, 1
        %vm9373 = vcmp.lt.s32.totalorder %v9353, 2
        %vm9374 = vcmp.lt.s32.totalorder %v9353, 3
        %vm9375 = vcmp.lt.s32.totalorder %v9353, 4
        %v9376 = vsel %vm9372, %v9356, %v9359
        %v9377 = vsel %vm9375, %v9365, 2102212464
        %v9378 = vsel %vm9374, %v9362, %v9377
        %v9379 = vsel %vm9373, %v9376, %v9378
        %v9380 = vsel %vm9372, %v9359, %v9362
        %v9381 = vsel %vm9375, %v9368, 920167782
        %v9382 = vsel %vm9374, %v9365, %v9381
        %v9383 = vsel %vm9373, %v9380, %v9382
        %v9384 = vsel %vm9372, %v9362, %v9365
        %v9385 = vsel %vm9375, %v9371, 1326507024
        %v9386 = vsel %vm9374, %v9368, %v9385
        %v9387 = vsel %vm9373, %v9384, %v9386
        %v9388 = vshll.u32 %v9348, 8
        %v9389 = vmul.u32.u64.compose %v9388, %v9387
        %v9390 = vextract.low.u32 %v9389
        %v9391 = vextract.high.u32 %v9389
        %v9392 = vmul.u32.u64.compose %v9388, %v9383
        %v9393 = vextract.low.u32 %v9392
        %v9394 = vextract.high.u32 %v9392
        %v9395 = vmul.u32 %v9388, %v9379
        %v9396 = vadd.s32 %v9391, %v9393
        %vm9397 = vc.u32 %v9391, %v9393
        %v9398 = vadd.s32 %v9394, 1
        %v9399 = vsel %vm9397, %v9398, %v9394
        %v9400 = vadd.s32 %v9395, %v9399
        %v9401 = vadd.s32 %v9400, 536870912
        %v9402 = vshrl.u32 %v9401, 30
        %v9403 = vshll.u32 %v9402, 30
        %v9404 = vsub.s32 %v9400, %v9403
        %vm9405 = vcmp.lt.s32.totalorder %v9404, 0
        %v9406 = vsub.s32 0, %v9404
        %v9407 = vsel %vm9405, %v9406, %v9404
        %v9408 = vclz %v9407
        %v9409 = vsub.s32 %v9408, 2
        %vm9410 = vcmp.gt.s32.totalorder 0, %v9409
        %v9411 = vsel %vm9410, 0, %v9409
        %v9412 = vsub.s32 32, %v9411
        %v9413 = vshll.u32 %v9404, %v9411
        %v9414 = vshrl.u32 %v9396, %v9412
        %v9415 = vor.u32 %v9413, %v9414
        %v9416 = vsub.s32 4294967266, %v9411
        %v9417 = vadd.s32 %v9416, 127
        %v9418 = vshll.u32 %v9417, 23
        %v9419 = vor.u32 4788187, %v9418
        %v9420 = vand.u32 2147483647, %v9419
        %v9422 = vcvt.s32.f32 %v9415
        %v9423 = vmul.f32 %v9422, %v9420
        %v9424 = vxor.u32 %v9423, 2147483648
        %v9425 = vsel %vm9342, %v9424, %v9423
        %v9426 = vsub.s32 4, %v9402
        %v9427 = vsel %vm9342, %v9426, %v9402
        %v9428 = vsel %vm9341, %v6900, %v9425
        %v9429 = vsel %vm9341, 0, %v9427
        %v9430 = vcosq.f32.pop %v9428
        %v9431 = vsinq.f32.pop %v9428
        %vm9432 = vweird.f32 %v6900
        %v9433 = vadd.s32 %v9429, 3
        %v9434 = vand.u32 %v9433, 3
        %vm9435 = vcmp.lt.s32.totalorder %v9434, 2
        %vm9436 = vcmp.eq.s32.totalorder %v9434, 0
        %v9437 = vxor.u32 %v9431, 2147483648
        %v9438 = vsel %vm9436, %v9430, %v9437
        %vm9439 = vcmp.eq.s32.totalorder %v9434, 2
        %v9440 = vxor.u32 %v9430, 2147483648
        %v9441 = vsel %vm9439, %v9440, %v9431
        %v9442 = vsel %vm9435, %v9438, %v9441
        %v9443 = vsel %vm9432, nan, %v9442
        %v9444 = vand.u32 2147483647, %v6906
        %vm9445 = vcmp.le.f32.partialorder %v9444, 0.7853982
        %vm9446 = vcmp.lt.s32.totalorder %v6906, 0
        %v9447 = vand.u32 %v6906, 2139095040
        %v9448 = vshrl.u32 %v9447, 23
        %v9449 = vsub.s32 %v9448, 127
        %v9450 = vand.u32 2147483647, %v6906
        %v9451 = vand.u32 %v9450, 8388607
        %v9452 = vor.u32 %v9451, 8388608
        %v9453 = vsub.s32 0, %v9452
        %v9454 = vadd.s32 %v9449, 1
        %vm9455 = vcmp.gt.s32.totalorder %v9454, 0
        %v9456 = vsel %vm9455, %v9454, 0
        %v9457 = vshrl.u32 %v9456, 5
        %v9458 = vand.u32 %v9456, 31
        %v9459 = vsub.s32 32, %v9458
        %v9460 = vshrl.u32 683565275, %v9459
        %v9461 = vshll.u32 683565275, %v9458
        %v9462 = vshrl.u32 2475754826, %v9459
        %v9463 = vor.u32 %v9461, %v9462
        %v9464 = vshll.u32 2475754826, %v9458
        %v9465 = vshrl.u32 2131351028, %v9459
        %v9466 = vor.u32 %v9464, %v9465
        %v9467 = vshll.u32 2131351028, %v9458
        %v9468 = vshrl.u32 2102212464, %v9459
        %v9469 = vor.u32 %v9467, %v9468
        %v9470 = vshll.u32 2102212464, %v9458
        %v9471 = vshrl.u32 920167782, %v9459
        %v9472 = vor.u32 %v9470, %v9471
        %v9473 = vshll.u32 920167782, %v9458
        %v9474 = vshrl.u32 1326507024, %v9459
        %v9475 = vor.u32 %v9473, %v9474
        %vm9476 = vcmp.lt.s32.totalorder %v9457, 1
        %vm9477 = vcmp.lt.s32.totalorder %v9457, 2
        %vm9478 = vcmp.lt.s32.totalorder %v9457, 3
        %vm9479 = vcmp.lt.s32.totalorder %v9457, 4
        %v9480 = vsel %vm9476, %v9460, %v9463
        %v9481 = vsel %vm9479, %v9469, 2102212464
        %v9482 = vsel %vm9478, %v9466, %v9481
        %v9483 = vsel %vm9477, %v9480, %v9482
        %v9484 = vsel %vm9476, %v9463, %v9466
        %v9485 = vsel %vm9479, %v9472, 920167782
        %v9486 = vsel %vm9478, %v9469, %v9485
        %v9487 = vsel %vm9477, %v9484, %v9486
        %v9488 = vsel %vm9476, %v9466, %v9469
        %v9489 = vsel %vm9479, %v9475, 1326507024
        %v9490 = vsel %vm9478, %v9472, %v9489
        %v9491 = vsel %vm9477, %v9488, %v9490
        %v9492 = vshll.u32 %v9452, 8
        %v9493 = vmul.u32.u64.compose %v9492, %v9491
        %v9494 = vextract.low.u32 %v9493
        %v9495 = vextract.high.u32 %v9493
        %v9496 = vmul.u32.u64.compose %v9492, %v9487
        %v9497 = vextract.low.u32 %v9496
        %v9498 = vextract.high.u32 %v9496
        %v9499 = vmul.u32 %v9492, %v9483
        %v9500 = vadd.s32 %v9495, %v9497
        %vm9501 = vc.u32 %v9495, %v9497
        %v9502 = vadd.s32 %v9498, 1
        %v9503 = vsel %vm9501, %v9502, %v9498
        %v9504 = vadd.s32 %v9499, %v9503
        %v9505 = vadd.s32 %v9504, 536870912
        %v9506 = vshrl.u32 %v9505, 30
        %v9507 = vshll.u32 %v9506, 30
        %v9508 = vsub.s32 %v9504, %v9507
        %vm9509 = vcmp.lt.s32.totalorder %v9508, 0
        %v9510 = vsub.s32 0, %v9508
        %v9511 = vsel %vm9509, %v9510, %v9508
        %v9512 = vclz %v9511
        %v9513 = vsub.s32 %v9512, 2
        %vm9514 = vcmp.gt.s32.totalorder 0, %v9513
        %v9515 = vsel %vm9514, 0, %v9513
        %v9516 = vsub.s32 32, %v9515
        %v9517 = vshll.u32 %v9508, %v9515
        %v9518 = vshrl.u32 %v9500, %v9516
        %v9519 = vor.u32 %v9517, %v9518
        %v9520 = vsub.s32 4294967266, %v9515
        %v9521 = vadd.s32 %v9520, 127
        %v9522 = vshll.u32 %v9521, 23
        %v9523 = vor.u32 4788187, %v9522
        %v9524 = vand.u32 2147483647, %v9523
        %v9526 = vcvt.s32.f32 %v9519
        %v9527 = vmul.f32 %v9526, %v9524
        %v9528 = vxor.u32 %v9527, 2147483648
        %v9529 = vsel %vm9446, %v9528, %v9527
        %v9530 = vsub.s32 4, %v9506
        %v9531 = vsel %vm9446, %v9530, %v9506
        %v9532 = vsel %vm9445, %v6906, %v9529
        %v9533 = vsel %vm9445, 0, %v9531
        %v9534 = vcosq.f32.pop %v9532
        %v9535 = vsinq.f32.pop %v9532
        %vm9536 = vweird.f32 %v6906
        %v9537 = vadd.s32 %v9533, 3
        %v9538 = vand.u32 %v9537, 3
        %vm9539 = vcmp.lt.s32.totalorder %v9538, 2
        %vm9540 = vcmp.eq.s32.totalorder %v9538, 0
        %v9541 = vxor.u32 %v9535, 2147483648
        %v9542 = vsel %vm9540, %v9534, %v9541
        %vm9543 = vcmp.eq.s32.totalorder %v9538, 2
        %v9544 = vxor.u32 %v9534, 2147483648
        %v9545 = vsel %vm9543, %v9544, %v9535
        %v9546 = vsel %vm9539, %v9542, %v9545
        %v9547 = vsel %vm9536, nan, %v9546
        %v9548 = vand.u32 2147483647, %v6912
        %vm9549 = vcmp.le.f32.partialorder %v9548, 0.7853982
        %vm9550 = vcmp.lt.s32.totalorder %v6912, 0
        %v9551 = vand.u32 %v6912, 2139095040
        %v9552 = vshrl.u32 %v9551, 23
        %v9553 = vsub.s32 %v9552, 127
        %v9554 = vand.u32 2147483647, %v6912
        %v9555 = vand.u32 %v9554, 8388607
        %v9556 = vor.u32 %v9555, 8388608
        %v9557 = vsub.s32 0, %v9556
        %v9558 = vadd.s32 %v9553, 1
        %vm9559 = vcmp.gt.s32.totalorder %v9558, 0
        %v9560 = vsel %vm9559, %v9558, 0
        %v9561 = vshrl.u32 %v9560, 5
        %v9562 = vand.u32 %v9560, 31
        %v9563 = vsub.s32 32, %v9562
        %v9564 = vshrl.u32 683565275, %v9563
        %v9565 = vshll.u32 683565275, %v9562
        %v9566 = vshrl.u32 2475754826, %v9563
        %v9567 = vor.u32 %v9565, %v9566
        %v9568 = vshll.u32 2475754826, %v9562
        %v9569 = vshrl.u32 2131351028, %v9563
        %v9570 = vor.u32 %v9568, %v9569
        %v9571 = vshll.u32 2131351028, %v9562
        %v9572 = vshrl.u32 2102212464, %v9563
        %v9573 = vor.u32 %v9571, %v9572
        %v9574 = vshll.u32 2102212464, %v9562
        %v9575 = vshrl.u32 920167782, %v9563
        %v9576 = vor.u32 %v9574, %v9575
        %v9577 = vshll.u32 920167782, %v9562
        %v9578 = vshrl.u32 1326507024, %v9563
        %v9579 = vor.u32 %v9577, %v9578
        %vm9580 = vcmp.lt.s32.totalorder %v9561, 1
        %vm9581 = vcmp.lt.s32.totalorder %v9561, 2
        %vm9582 = vcmp.lt.s32.totalorder %v9561, 3
        %vm9583 = vcmp.lt.s32.totalorder %v9561, 4
        %v9584 = vsel %vm9580, %v9564, %v9567
        %v9585 = vsel %vm9583, %v9573, 2102212464
        %v9586 = vsel %vm9582, %v9570, %v9585
        %v9587 = vsel %vm9581, %v9584, %v9586
        %v9588 = vsel %vm9580, %v9567, %v9570
        %v9589 = vsel %vm9583, %v9576, 920167782
        %v9590 = vsel %vm9582, %v9573, %v9589
        %v9591 = vsel %vm9581, %v9588, %v9590
        %v9592 = vsel %vm9580, %v9570, %v9573
        %v9593 = vsel %vm9583, %v9579, 1326507024
        %v9594 = vsel %vm9582, %v9576, %v9593
        %v9595 = vsel %vm9581, %v9592, %v9594
        %v9596 = vshll.u32 %v9556, 8
        %v9597 = vmul.u32.u64.compose %v9596, %v9595
        %v9598 = vextract.low.u32 %v9597
        %v9599 = vextract.high.u32 %v9597
        %v9600 = vmul.u32.u64.compose %v9596, %v9591
        %v9601 = vextract.low.u32 %v9600
        %v9602 = vextract.high.u32 %v9600
        %v9603 = vmul.u32 %v9596, %v9587
        %v9604 = vadd.s32 %v9599, %v9601
        %vm9605 = vc.u32 %v9599, %v9601
        %v9606 = vadd.s32 %v9602, 1
        %v9607 = vsel %vm9605, %v9606, %v9602
        %v9608 = vadd.s32 %v9603, %v9607
        %v9609 = vadd.s32 %v9608, 536870912
        %v9610 = vshrl.u32 %v9609, 30
        %v9611 = vshll.u32 %v9610, 30
        %v9612 = vsub.s32 %v9608, %v9611
        %vm9613 = vcmp.lt.s32.totalorder %v9612, 0
        %v9614 = vsub.s32 0, %v9612
        %v9615 = vsel %vm9613, %v9614, %v9612
        %v9616 = vclz %v9615
        %v9617 = vsub.s32 %v9616, 2
        %vm9618 = vcmp.gt.s32.totalorder 0, %v9617
        %v9619 = vsel %vm9618, 0, %v9617
        %v9620 = vsub.s32 32, %v9619
        %v9621 = vshll.u32 %v9612, %v9619
        %v9622 = vshrl.u32 %v9604, %v9620
        %v9623 = vor.u32 %v9621, %v9622
        %v9624 = vsub.s32 4294967266, %v9619
        %v9625 = vadd.s32 %v9624, 127
        %v9626 = vshll.u32 %v9625, 23
        %v9627 = vor.u32 4788187, %v9626
        %v9628 = vand.u32 2147483647, %v9627
        %v9630 = vcvt.s32.f32 %v9623
        %v9631 = vmul.f32 %v9630, %v9628
        %v9632 = vxor.u32 %v9631, 2147483648
        %v9633 = vsel %vm9550, %v9632, %v9631
        %v9634 = vsub.s32 4, %v9610
        %v9635 = vsel %vm9550, %v9634, %v9610
        %v9636 = vsel %vm9549, %v6912, %v9633
        %v9637 = vsel %vm9549, 0, %v9635
        %v9638 = vcosq.f32.pop %v9636
        %v9639 = vsinq.f32.pop %v9636
        %vm9640 = vweird.f32 %v6912
        %v9641 = vadd.s32 %v9637, 3
        %v9642 = vand.u32 %v9641, 3
        %vm9643 = vcmp.lt.s32.totalorder %v9642, 2
        %vm9644 = vcmp.eq.s32.totalorder %v9642, 0
        %v9645 = vxor.u32 %v9639, 2147483648
        %v9646 = vsel %vm9644, %v9638, %v9645
        %vm9647 = vcmp.eq.s32.totalorder %v9642, 2
        %v9648 = vxor.u32 %v9638, 2147483648
        %v9649 = vsel %vm9647, %v9648, %v9639
        %v9650 = vsel %vm9643, %v9646, %v9649
        %v9651 = vsel %vm9640, nan, %v9650
        %v9652 = vand.u32 2147483647, %v6918
        %vm9653 = vcmp.le.f32.partialorder %v9652, 0.7853982
        %vm9654 = vcmp.lt.s32.totalorder %v6918, 0
        %v9655 = vand.u32 %v6918, 2139095040
        %v9656 = vshrl.u32 %v9655, 23
        %v9657 = vsub.s32 %v9656, 127
        %v9658 = vand.u32 2147483647, %v6918
        %v9659 = vand.u32 %v9658, 8388607
        %v9660 = vor.u32 %v9659, 8388608
        %v9661 = vsub.s32 0, %v9660
        %v9662 = vadd.s32 %v9657, 1
        %vm9663 = vcmp.gt.s32.totalorder %v9662, 0
        %v9664 = vsel %vm9663, %v9662, 0
        %v9665 = vshrl.u32 %v9664, 5
        %v9666 = vand.u32 %v9664, 31
        %v9667 = vsub.s32 32, %v9666
        %v9668 = vshrl.u32 683565275, %v9667
        %v9669 = vshll.u32 683565275, %v9666
        %v9670 = vshrl.u32 2475754826, %v9667
        %v9671 = vor.u32 %v9669, %v9670
        %v9672 = vshll.u32 2475754826, %v9666
        %v9673 = vshrl.u32 2131351028, %v9667
        %v9674 = vor.u32 %v9672, %v9673
        %v9675 = vshll.u32 2131351028, %v9666
        %v9676 = vshrl.u32 2102212464, %v9667
        %v9677 = vor.u32 %v9675, %v9676
        %v9678 = vshll.u32 2102212464, %v9666
        %v9679 = vshrl.u32 920167782, %v9667
        %v9680 = vor.u32 %v9678, %v9679
        %v9681 = vshll.u32 920167782, %v9666
        %v9682 = vshrl.u32 1326507024, %v9667
        %v9683 = vor.u32 %v9681, %v9682
        %vm9684 = vcmp.lt.s32.totalorder %v9665, 1
        %vm9685 = vcmp.lt.s32.totalorder %v9665, 2
        %vm9686 = vcmp.lt.s32.totalorder %v9665, 3
        %vm9687 = vcmp.lt.s32.totalorder %v9665, 4
        %v9688 = vsel %vm9684, %v9668, %v9671
        %v9689 = vsel %vm9687, %v9677, 2102212464
        %v9690 = vsel %vm9686, %v9674, %v9689
        %v9691 = vsel %vm9685, %v9688, %v9690
        %v9692 = vsel %vm9684, %v9671, %v9674
        %v9693 = vsel %vm9687, %v9680, 920167782
        %v9694 = vsel %vm9686, %v9677, %v9693
        %v9695 = vsel %vm9685, %v9692, %v9694
        %v9696 = vsel %vm9684, %v9674, %v9677
        %v9697 = vsel %vm9687, %v9683, 1326507024
        %v9698 = vsel %vm9686, %v9680, %v9697
        %v9699 = vsel %vm9685, %v9696, %v9698
        %v9700 = vshll.u32 %v9660, 8
        %v9701 = vmul.u32.u64.compose %v9700, %v9699
        %v9702 = vextract.low.u32 %v9701
        %v9703 = vextract.high.u32 %v9701
        %v9704 = vmul.u32.u64.compose %v9700, %v9695
        %v9705 = vextract.low.u32 %v9704
        %v9706 = vextract.high.u32 %v9704
        %v9707 = vmul.u32 %v9700, %v9691
        %v9708 = vadd.s32 %v9703, %v9705
        %vm9709 = vc.u32 %v9703, %v9705
        %v9710 = vadd.s32 %v9706, 1
        %v9711 = vsel %vm9709, %v9710, %v9706
        %v9712 = vadd.s32 %v9707, %v9711
        %v9713 = vadd.s32 %v9712, 536870912
        %v9714 = vshrl.u32 %v9713, 30
        %v9715 = vshll.u32 %v9714, 30
        %v9716 = vsub.s32 %v9712, %v9715
        %vm9717 = vcmp.lt.s32.totalorder %v9716, 0
        %v9718 = vsub.s32 0, %v9716
        %v9719 = vsel %vm9717, %v9718, %v9716
        %v9720 = vclz %v9719
        %v9721 = vsub.s32 %v9720, 2
        %vm9722 = vcmp.gt.s32.totalorder 0, %v9721
        %v9723 = vsel %vm9722, 0, %v9721
        %v9724 = vsub.s32 32, %v9723
        %v9725 = vshll.u32 %v9716, %v9723
        %v9726 = vshrl.u32 %v9708, %v9724
        %v9727 = vor.u32 %v9725, %v9726
        %v9728 = vsub.s32 4294967266, %v9723
        %v9729 = vadd.s32 %v9728, 127
        %v9730 = vshll.u32 %v9729, 23
        %v9731 = vor.u32 4788187, %v9730
        %v9732 = vand.u32 2147483647, %v9731
        %v9734 = vcvt.s32.f32 %v9727
        %v9735 = vmul.f32 %v9734, %v9732
        %v9736 = vxor.u32 %v9735, 2147483648
        %v9737 = vsel %vm9654, %v9736, %v9735
        %v9738 = vsub.s32 4, %v9714
        %v9739 = vsel %vm9654, %v9738, %v9714
        %v9740 = vsel %vm9653, %v6918, %v9737
        %v9741 = vsel %vm9653, 0, %v9739
        %v9742 = vcosq.f32.pop %v9740
        %v9743 = vsinq.f32.pop %v9740
        %vm9744 = vweird.f32 %v6918
        %v9745 = vadd.s32 %v9741, 3
        %v9746 = vand.u32 %v9745, 3
        %vm9747 = vcmp.lt.s32.totalorder %v9746, 2
        %vm9748 = vcmp.eq.s32.totalorder %v9746, 0
        %v9749 = vxor.u32 %v9743, 2147483648
        %v9750 = vsel %vm9748, %v9742, %v9749
        %vm9751 = vcmp.eq.s32.totalorder %v9746, 2
        %v9752 = vxor.u32 %v9742, 2147483648
        %v9753 = vsel %vm9751, %v9752, %v9743
        %v9754 = vsel %vm9747, %v9750, %v9753
        %v9755 = vsel %vm9744, nan, %v9754
        %v9756 = vand.u32 2147483647, %v6924
        %vm9757 = vcmp.le.f32.partialorder %v9756, 0.7853982
        %vm9758 = vcmp.lt.s32.totalorder %v6924, 0
        %v9759 = vand.u32 %v6924, 2139095040
        %v9760 = vshrl.u32 %v9759, 23
        %v9761 = vsub.s32 %v9760, 127
        %v9762 = vand.u32 2147483647, %v6924
        %v9763 = vand.u32 %v9762, 8388607
        %v9764 = vor.u32 %v9763, 8388608
        %v9765 = vsub.s32 0, %v9764
        %v9766 = vadd.s32 %v9761, 1
        %vm9767 = vcmp.gt.s32.totalorder %v9766, 0
        %v9768 = vsel %vm9767, %v9766, 0
        %v9769 = vshrl.u32 %v9768, 5
        %v9770 = vand.u32 %v9768, 31
        %v9771 = vsub.s32 32, %v9770
        %v9772 = vshrl.u32 683565275, %v9771
        %v9773 = vshll.u32 683565275, %v9770
        %v9774 = vshrl.u32 2475754826, %v9771
        %v9775 = vor.u32 %v9773, %v9774
        %v9776 = vshll.u32 2475754826, %v9770
        %v9777 = vshrl.u32 2131351028, %v9771
        %v9778 = vor.u32 %v9776, %v9777
        %v9779 = vshll.u32 2131351028, %v9770
        %v9780 = vshrl.u32 2102212464, %v9771
        %v9781 = vor.u32 %v9779, %v9780
        %v9782 = vshll.u32 2102212464, %v9770
        %v9783 = vshrl.u32 920167782, %v9771
        %v9784 = vor.u32 %v9782, %v9783
        %v9785 = vshll.u32 920167782, %v9770
        %v9786 = vshrl.u32 1326507024, %v9771
        %v9787 = vor.u32 %v9785, %v9786
        %vm9788 = vcmp.lt.s32.totalorder %v9769, 1
        %vm9789 = vcmp.lt.s32.totalorder %v9769, 2
        %vm9790 = vcmp.lt.s32.totalorder %v9769, 3
        %vm9791 = vcmp.lt.s32.totalorder %v9769, 4
        %v9792 = vsel %vm9788, %v9772, %v9775
        %v9793 = vsel %vm9791, %v9781, 2102212464
        %v9794 = vsel %vm9790, %v9778, %v9793
        %v9795 = vsel %vm9789, %v9792, %v9794
        %v9796 = vsel %vm9788, %v9775, %v9778
        %v9797 = vsel %vm9791, %v9784, 920167782
        %v9798 = vsel %vm9790, %v9781, %v9797
        %v9799 = vsel %vm9789, %v9796, %v9798
        %v9800 = vsel %vm9788, %v9778, %v9781
        %v9801 = vsel %vm9791, %v9787, 1326507024
        %v9802 = vsel %vm9790, %v9784, %v9801
        %v9803 = vsel %vm9789, %v9800, %v9802
        %v9804 = vshll.u32 %v9764, 8
        %v9805 = vmul.u32.u64.compose %v9804, %v9803
        %v9806 = vextract.low.u32 %v9805
        %v9807 = vextract.high.u32 %v9805
        %v9808 = vmul.u32.u64.compose %v9804, %v9799
        %v9809 = vextract.low.u32 %v9808
        %v9810 = vextract.high.u32 %v9808
        %v9811 = vmul.u32 %v9804, %v9795
        %v9812 = vadd.s32 %v9807, %v9809
        %vm9813 = vc.u32 %v9807, %v9809
        %v9814 = vadd.s32 %v9810, 1
        %v9815 = vsel %vm9813, %v9814, %v9810
        %v9816 = vadd.s32 %v9811, %v9815
        %v9817 = vadd.s32 %v9816, 536870912
        %v9818 = vshrl.u32 %v9817, 30
        %v9819 = vshll.u32 %v9818, 30
        %v9820 = vsub.s32 %v9816, %v9819
        %vm9821 = vcmp.lt.s32.totalorder %v9820, 0
        %v9822 = vsub.s32 0, %v9820
        %v9823 = vsel %vm9821, %v9822, %v9820
        %v9824 = vclz %v9823
        %v9825 = vsub.s32 %v9824, 2
        %vm9826 = vcmp.gt.s32.totalorder 0, %v9825
        %v9827 = vsel %vm9826, 0, %v9825
        %v9828 = vsub.s32 32, %v9827
        %v9829 = vshll.u32 %v9820, %v9827
        %v9830 = vshrl.u32 %v9812, %v9828
        %v9831 = vor.u32 %v9829, %v9830
        %v9832 = vsub.s32 4294967266, %v9827
        %v9833 = vadd.s32 %v9832, 127
        %v9834 = vshll.u32 %v9833, 23
        %v9835 = vor.u32 4788187, %v9834
        %v9836 = vand.u32 2147483647, %v9835
        %v9838 = vcvt.s32.f32 %v9831
        %v9839 = vmul.f32 %v9838, %v9836
        %v9840 = vxor.u32 %v9839, 2147483648
        %v9841 = vsel %vm9758, %v9840, %v9839
        %v9842 = vsub.s32 4, %v9818
        %v9843 = vsel %vm9758, %v9842, %v9818
        %v9844 = vsel %vm9757, %v6924, %v9841
        %v9845 = vsel %vm9757, 0, %v9843
        %v9846 = vcosq.f32.pop %v9844
        %v9847 = vsinq.f32.pop %v9844
        %vm9848 = vweird.f32 %v6924
        %v9849 = vadd.s32 %v9845, 3
        %v9850 = vand.u32 %v9849, 3
        %vm9851 = vcmp.lt.s32.totalorder %v9850, 2
        %vm9852 = vcmp.eq.s32.totalorder %v9850, 0
        %v9853 = vxor.u32 %v9847, 2147483648
        %v9854 = vsel %vm9852, %v9846, %v9853
        %vm9855 = vcmp.eq.s32.totalorder %v9850, 2
        %v9856 = vxor.u32 %v9846, 2147483648
        %v9857 = vsel %vm9855, %v9856, %v9847
        %v9858 = vsel %vm9851, %v9854, %v9857
        %v9859 = vsel %vm9848, nan, %v9858
        %v9860 = vand.u32 2147483647, %v6930
        %vm9861 = vcmp.le.f32.partialorder %v9860, 0.7853982
        %vm9862 = vcmp.lt.s32.totalorder %v6930, 0
        %v9863 = vand.u32 %v6930, 2139095040
        %v9864 = vshrl.u32 %v9863, 23
        %v9865 = vsub.s32 %v9864, 127
        %v9866 = vand.u32 2147483647, %v6930
        %v9867 = vand.u32 %v9866, 8388607
        %v9868 = vor.u32 %v9867, 8388608
        %v9869 = vsub.s32 0, %v9868
        %v9870 = vadd.s32 %v9865, 1
        %vm9871 = vcmp.gt.s32.totalorder %v9870, 0
        %v9872 = vsel %vm9871, %v9870, 0
        %v9873 = vshrl.u32 %v9872, 5
        %v9874 = vand.u32 %v9872, 31
        %v9875 = vsub.s32 32, %v9874
        %v9876 = vshrl.u32 683565275, %v9875
        %v9877 = vshll.u32 683565275, %v9874
        %v9878 = vshrl.u32 2475754826, %v9875
        %v9879 = vor.u32 %v9877, %v9878
        %v9880 = vshll.u32 2475754826, %v9874
        %v9881 = vshrl.u32 2131351028, %v9875
        %v9882 = vor.u32 %v9880, %v9881
        %v9883 = vshll.u32 2131351028, %v9874
        %v9884 = vshrl.u32 2102212464, %v9875
        %v9885 = vor.u32 %v9883, %v9884
        %v9886 = vshll.u32 2102212464, %v9874
        %v9887 = vshrl.u32 920167782, %v9875
        %v9888 = vor.u32 %v9886, %v9887
        %v9889 = vshll.u32 920167782, %v9874
        %v9890 = vshrl.u32 1326507024, %v9875
        %v9891 = vor.u32 %v9889, %v9890
        %vm9892 = vcmp.lt.s32.totalorder %v9873, 1
        %vm9893 = vcmp.lt.s32.totalorder %v9873, 2
        %vm9894 = vcmp.lt.s32.totalorder %v9873, 3
        %vm9895 = vcmp.lt.s32.totalorder %v9873, 4
        %v9896 = vsel %vm9892, %v9876, %v9879
        %v9897 = vsel %vm9895, %v9885, 2102212464
        %v9898 = vsel %vm9894, %v9882, %v9897
        %v9899 = vsel %vm9893, %v9896, %v9898
        %v9900 = vsel %vm9892, %v9879, %v9882
        %v9901 = vsel %vm9895, %v9888, 920167782
        %v9902 = vsel %vm9894, %v9885, %v9901
        %v9903 = vsel %vm9893, %v9900, %v9902
        %v9904 = vsel %vm9892, %v9882, %v9885
        %v9905 = vsel %vm9895, %v9891, 1326507024
        %v9906 = vsel %vm9894, %v9888, %v9905
        %v9907 = vsel %vm9893, %v9904, %v9906
        %v9908 = vshll.u32 %v9868, 8
        %v9909 = vmul.u32.u64.compose %v9908, %v9907
        %v9910 = vextract.low.u32 %v9909
        %v9911 = vextract.high.u32 %v9909
        %v9912 = vmul.u32.u64.compose %v9908, %v9903
        %v9913 = vextract.low.u32 %v9912
        %v9914 = vextract.high.u32 %v9912
        %v9915 = vmul.u32 %v9908, %v9899
        %v9916 = vadd.s32 %v9911, %v9913
        %vm9917 = vc.u32 %v9911, %v9913
        %v9918 = vadd.s32 %v9914, 1
        %v9919 = vsel %vm9917, %v9918, %v9914
        %v9920 = vadd.s32 %v9915, %v9919
        %v9921 = vadd.s32 %v9920, 536870912
        %v9922 = vshrl.u32 %v9921, 30
        %v9923 = vshll.u32 %v9922, 30
        %v9924 = vsub.s32 %v9920, %v9923
        %vm9925 = vcmp.lt.s32.totalorder %v9924, 0
        %v9926 = vsub.s32 0, %v9924
        %v9927 = vsel %vm9925, %v9926, %v9924
        %v9928 = vclz %v9927
        %v9929 = vsub.s32 %v9928, 2
        %vm9930 = vcmp.gt.s32.totalorder 0, %v9929
        %v9931 = vsel %vm9930, 0, %v9929
        %v9932 = vsub.s32 32, %v9931
        %v9933 = vshll.u32 %v9924, %v9931
        %v9934 = vshrl.u32 %v9916, %v9932
        %v9935 = vor.u32 %v9933, %v9934
        %v9936 = vsub.s32 4294967266, %v9931
        %v9937 = vadd.s32 %v9936, 127
        %v9938 = vshll.u32 %v9937, 23
        %v9939 = vor.u32 4788187, %v9938
        %v9940 = vand.u32 2147483647, %v9939
        %v9942 = vcvt.s32.f32 %v9935
        %v9943 = vmul.f32 %v9942, %v9940
        %v9944 = vxor.u32 %v9943, 2147483648
        %v9945 = vsel %vm9862, %v9944, %v9943
        %v9946 = vsub.s32 4, %v9922
        %v9947 = vsel %vm9862, %v9946, %v9922
        %v9948 = vsel %vm9861, %v6930, %v9945
        %v9949 = vsel %vm9861, 0, %v9947
        %v9950 = vcosq.f32.pop %v9948
        %v9951 = vsinq.f32.pop %v9948
        %vm9952 = vweird.f32 %v6930
        %v9953 = vadd.s32 %v9949, 3
        %v9954 = vand.u32 %v9953, 3
        %vm9955 = vcmp.lt.s32.totalorder %v9954, 2
        %vm9956 = vcmp.eq.s32.totalorder %v9954, 0
        %v9957 = vxor.u32 %v9951, 2147483648
        %v9958 = vsel %vm9956, %v9950, %v9957
        %vm9959 = vcmp.eq.s32.totalorder %v9954, 2
        %v9960 = vxor.u32 %v9950, 2147483648
        %v9961 = vsel %vm9959, %v9960, %v9951
        %v9962 = vsel %vm9955, %v9958, %v9961
        %v9963 = vsel %vm9952, nan, %v9962
        %v9964 = vand.u32 2147483647, %v6936
        %vm9965 = vcmp.le.f32.partialorder %v9964, 0.7853982
        %vm9966 = vcmp.lt.s32.totalorder %v6936, 0
        %v9967 = vand.u32 %v6936, 2139095040
        %v9968 = vshrl.u32 %v9967, 23
        %v9969 = vsub.s32 %v9968, 127
        %v9970 = vand.u32 2147483647, %v6936
        %v9971 = vand.u32 %v9970, 8388607
        %v9972 = vor.u32 %v9971, 8388608
        %v9973 = vsub.s32 0, %v9972
        %v9974 = vadd.s32 %v9969, 1
        %vm9975 = vcmp.gt.s32.totalorder %v9974, 0
        %v9976 = vsel %vm9975, %v9974, 0
        %v9977 = vshrl.u32 %v9976, 5
        %v9978 = vand.u32 %v9976, 31
        %v9979 = vsub.s32 32, %v9978
        %v9980 = vshrl.u32 683565275, %v9979
        %v9981 = vshll.u32 683565275, %v9978
        %v9982 = vshrl.u32 2475754826, %v9979
        %v9983 = vor.u32 %v9981, %v9982
        %v9984 = vshll.u32 2475754826, %v9978
        %v9985 = vshrl.u32 2131351028, %v9979
        %v9986 = vor.u32 %v9984, %v9985
        %v9987 = vshll.u32 2131351028, %v9978
        %v9988 = vshrl.u32 2102212464, %v9979
        %v9989 = vor.u32 %v9987, %v9988
        %v9990 = vshll.u32 2102212464, %v9978
        %v9991 = vshrl.u32 920167782, %v9979
        %v9992 = vor.u32 %v9990, %v9991
        %v9993 = vshll.u32 920167782, %v9978
        %v9994 = vshrl.u32 1326507024, %v9979
        %v9995 = vor.u32 %v9993, %v9994
        %vm9996 = vcmp.lt.s32.totalorder %v9977, 1
        %vm9997 = vcmp.lt.s32.totalorder %v9977, 2
        %vm9998 = vcmp.lt.s32.totalorder %v9977, 3
        %vm9999 = vcmp.lt.s32.totalorder %v9977, 4
        %v10000 = vsel %vm9996, %v9980, %v9983
        %v10001 = vsel %vm9999, %v9989, 2102212464
        %v10002 = vsel %vm9998, %v9986, %v10001
        %v10003 = vsel %vm9997, %v10000, %v10002
        %v10004 = vsel %vm9996, %v9983, %v9986
        %v10005 = vsel %vm9999, %v9992, 920167782
        %v10006 = vsel %vm9998, %v9989, %v10005
        %v10007 = vsel %vm9997, %v10004, %v10006
        %v10008 = vsel %vm9996, %v9986, %v9989
        %v10009 = vsel %vm9999, %v9995, 1326507024
        %v10010 = vsel %vm9998, %v9992, %v10009
        %v10011 = vsel %vm9997, %v10008, %v10010
        %v10012 = vshll.u32 %v9972, 8
        %v10013 = vmul.u32.u64.compose %v10012, %v10011
        %v10014 = vextract.low.u32 %v10013
        %v10015 = vextract.high.u32 %v10013
        %v10016 = vmul.u32.u64.compose %v10012, %v10007
        %v10017 = vextract.low.u32 %v10016
        %v10018 = vextract.high.u32 %v10016
        %v10019 = vmul.u32 %v10012, %v10003
        %v10020 = vadd.s32 %v10015, %v10017
        %vm10021 = vc.u32 %v10015, %v10017
        %v10022 = vadd.s32 %v10018, 1
        %v10023 = vsel %vm10021, %v10022, %v10018
        %v10024 = vadd.s32 %v10019, %v10023
        %v10025 = vadd.s32 %v10024, 536870912
        %v10026 = vshrl.u32 %v10025, 30
        %v10027 = vshll.u32 %v10026, 30
        %v10028 = vsub.s32 %v10024, %v10027
        %vm10029 = vcmp.lt.s32.totalorder %v10028, 0
        %v10030 = vsub.s32 0, %v10028
        %v10031 = vsel %vm10029, %v10030, %v10028
        %v10032 = vclz %v10031
        %v10033 = vsub.s32 %v10032, 2
        %vm10034 = vcmp.gt.s32.totalorder 0, %v10033
        %v10035 = vsel %vm10034, 0, %v10033
        %v10036 = vsub.s32 32, %v10035
        %v10037 = vshll.u32 %v10028, %v10035
        %v10038 = vshrl.u32 %v10020, %v10036
        %v10039 = vor.u32 %v10037, %v10038
        %v10040 = vsub.s32 4294967266, %v10035
        %v10041 = vadd.s32 %v10040, 127
        %v10042 = vshll.u32 %v10041, 23
        %v10043 = vor.u32 4788187, %v10042
        %v10044 = vand.u32 2147483647, %v10043
        %v10046 = vcvt.s32.f32 %v10039
        %v10047 = vmul.f32 %v10046, %v10044
        %v10048 = vxor.u32 %v10047, 2147483648
        %v10049 = vsel %vm9966, %v10048, %v10047
        %v10050 = vsub.s32 4, %v10026
        %v10051 = vsel %vm9966, %v10050, %v10026
        %v10052 = vsel %vm9965, %v6936, %v10049
        %v10053 = vsel %vm9965, 0, %v10051
        %v10054 = vcosq.f32.pop %v10052
        %v10055 = vsinq.f32.pop %v10052
        %vm10056 = vweird.f32 %v6936
        %v10057 = vadd.s32 %v10053, 3
        %v10058 = vand.u32 %v10057, 3
        %vm10059 = vcmp.lt.s32.totalorder %v10058, 2
        %vm10060 = vcmp.eq.s32.totalorder %v10058, 0
        %v10061 = vxor.u32 %v10055, 2147483648
        %v10062 = vsel %vm10060, %v10054, %v10061
        %vm10063 = vcmp.eq.s32.totalorder %v10058, 2
        %v10064 = vxor.u32 %v10054, 2147483648
        %v10065 = vsel %vm10063, %v10064, %v10055
        %v10066 = vsel %vm10059, %v10062, %v10065
        %v10067 = vsel %vm10056, nan, %v10066
        %v10068 = vand.u32 2147483647, %v6942
        %vm10069 = vcmp.le.f32.partialorder %v10068, 0.7853982
        %vm10070 = vcmp.lt.s32.totalorder %v6942, 0
        %v10071 = vand.u32 %v6942, 2139095040
        %v10072 = vshrl.u32 %v10071, 23
        %v10073 = vsub.s32 %v10072, 127
        %v10074 = vand.u32 2147483647, %v6942
        %v10075 = vand.u32 %v10074, 8388607
        %v10076 = vor.u32 %v10075, 8388608
        %v10077 = vsub.s32 0, %v10076
        %v10078 = vadd.s32 %v10073, 1
        %vm10079 = vcmp.gt.s32.totalorder %v10078, 0
        %v10080 = vsel %vm10079, %v10078, 0
        %v10081 = vshrl.u32 %v10080, 5
        %v10082 = vand.u32 %v10080, 31
        %v10083 = vsub.s32 32, %v10082
        %v10084 = vshrl.u32 683565275, %v10083
        %v10085 = vshll.u32 683565275, %v10082
        %v10086 = vshrl.u32 2475754826, %v10083
        %v10087 = vor.u32 %v10085, %v10086
        %v10088 = vshll.u32 2475754826, %v10082
        %v10089 = vshrl.u32 2131351028, %v10083
        %v10090 = vor.u32 %v10088, %v10089
        %v10091 = vshll.u32 2131351028, %v10082
        %v10092 = vshrl.u32 2102212464, %v10083
        %v10093 = vor.u32 %v10091, %v10092
        %v10094 = vshll.u32 2102212464, %v10082
        %v10095 = vshrl.u32 920167782, %v10083
        %v10096 = vor.u32 %v10094, %v10095
        %v10097 = vshll.u32 920167782, %v10082
        %v10098 = vshrl.u32 1326507024, %v10083
        %v10099 = vor.u32 %v10097, %v10098
        %vm10100 = vcmp.lt.s32.totalorder %v10081, 1
        %vm10101 = vcmp.lt.s32.totalorder %v10081, 2
        %vm10102 = vcmp.lt.s32.totalorder %v10081, 3
        %vm10103 = vcmp.lt.s32.totalorder %v10081, 4
        %v10104 = vsel %vm10100, %v10084, %v10087
        %v10105 = vsel %vm10103, %v10093, 2102212464
        %v10106 = vsel %vm10102, %v10090, %v10105
        %v10107 = vsel %vm10101, %v10104, %v10106
        %v10108 = vsel %vm10100, %v10087, %v10090
        %v10109 = vsel %vm10103, %v10096, 920167782
        %v10110 = vsel %vm10102, %v10093, %v10109
        %v10111 = vsel %vm10101, %v10108, %v10110
        %v10112 = vsel %vm10100, %v10090, %v10093
        %v10113 = vsel %vm10103, %v10099, 1326507024
        %v10114 = vsel %vm10102, %v10096, %v10113
        %v10115 = vsel %vm10101, %v10112, %v10114
        %v10116 = vshll.u32 %v10076, 8
        %v10117 = vmul.u32.u64.compose %v10116, %v10115
        %v10118 = vextract.low.u32 %v10117
        %v10119 = vextract.high.u32 %v10117
        %v10120 = vmul.u32.u64.compose %v10116, %v10111
        %v10121 = vextract.low.u32 %v10120
        %v10122 = vextract.high.u32 %v10120
        %v10123 = vmul.u32 %v10116, %v10107
        %v10124 = vadd.s32 %v10119, %v10121
        %vm10125 = vc.u32 %v10119, %v10121
        %v10126 = vadd.s32 %v10122, 1
        %v10127 = vsel %vm10125, %v10126, %v10122
        %v10128 = vadd.s32 %v10123, %v10127
        %v10129 = vadd.s32 %v10128, 536870912
        %v10130 = vshrl.u32 %v10129, 30
        %v10131 = vshll.u32 %v10130, 30
        %v10132 = vsub.s32 %v10128, %v10131
        %vm10133 = vcmp.lt.s32.totalorder %v10132, 0
        %v10134 = vsub.s32 0, %v10132
        %v10135 = vsel %vm10133, %v10134, %v10132
        %v10136 = vclz %v10135
        %v10137 = vsub.s32 %v10136, 2
        %vm10138 = vcmp.gt.s32.totalorder 0, %v10137
        %v10139 = vsel %vm10138, 0, %v10137
        %v10140 = vsub.s32 32, %v10139
        %v10141 = vshll.u32 %v10132, %v10139
        %v10142 = vshrl.u32 %v10124, %v10140
        %v10143 = vor.u32 %v10141, %v10142
        %v10144 = vsub.s32 4294967266, %v10139
        %v10145 = vadd.s32 %v10144, 127
        %v10146 = vshll.u32 %v10145, 23
        %v10147 = vor.u32 4788187, %v10146
        %v10148 = vand.u32 2147483647, %v10147
        %v10150 = vcvt.s32.f32 %v10143
        %v10151 = vmul.f32 %v10150, %v10148
        %v10152 = vxor.u32 %v10151, 2147483648
        %v10153 = vsel %vm10070, %v10152, %v10151
        %v10154 = vsub.s32 4, %v10130
        %v10155 = vsel %vm10070, %v10154, %v10130
        %v10156 = vsel %vm10069, %v6942, %v10153
        %v10157 = vsel %vm10069, 0, %v10155
        %v10158 = vcosq.f32.pop %v10156
        %v10159 = vsinq.f32.pop %v10156
        %vm10160 = vweird.f32 %v6942
        %v10161 = vadd.s32 %v10157, 3
        %v10162 = vand.u32 %v10161, 3
        %vm10163 = vcmp.lt.s32.totalorder %v10162, 2
        %vm10164 = vcmp.eq.s32.totalorder %v10162, 0
        %v10165 = vxor.u32 %v10159, 2147483648
        %v10166 = vsel %vm10164, %v10158, %v10165
        %vm10167 = vcmp.eq.s32.totalorder %v10162, 2
        %v10168 = vxor.u32 %v10158, 2147483648
        %v10169 = vsel %vm10167, %v10168, %v10159
        %v10170 = vsel %vm10163, %v10166, %v10169
        %v10171 = vsel %vm10160, nan, %v10170
        %v10172 = vand.u32 2147483647, %v6948
        %vm10173 = vcmp.le.f32.partialorder %v10172, 0.7853982
        %vm10174 = vcmp.lt.s32.totalorder %v6948, 0
        %v10175 = vand.u32 %v6948, 2139095040
        %v10176 = vshrl.u32 %v10175, 23
        %v10177 = vsub.s32 %v10176, 127
        %v10178 = vand.u32 2147483647, %v6948
        %v10179 = vand.u32 %v10178, 8388607
        %v10180 = vor.u32 %v10179, 8388608
        %v10181 = vsub.s32 0, %v10180
        %v10182 = vadd.s32 %v10177, 1
        %vm10183 = vcmp.gt.s32.totalorder %v10182, 0
        %v10184 = vsel %vm10183, %v10182, 0
        %v10185 = vshrl.u32 %v10184, 5
        %v10186 = vand.u32 %v10184, 31
        %v10187 = vsub.s32 32, %v10186
        %v10188 = vshrl.u32 683565275, %v10187
        %v10189 = vshll.u32 683565275, %v10186
        %v10190 = vshrl.u32 2475754826, %v10187
        %v10191 = vor.u32 %v10189, %v10190
        %v10192 = vshll.u32 2475754826, %v10186
        %v10193 = vshrl.u32 2131351028, %v10187
        %v10194 = vor.u32 %v10192, %v10193
        %v10195 = vshll.u32 2131351028, %v10186
        %v10196 = vshrl.u32 2102212464, %v10187
        %v10197 = vor.u32 %v10195, %v10196
        %v10198 = vshll.u32 2102212464, %v10186
        %v10199 = vshrl.u32 920167782, %v10187
        %v10200 = vor.u32 %v10198, %v10199
        %v10201 = vshll.u32 920167782, %v10186
        %v10202 = vshrl.u32 1326507024, %v10187
        %v10203 = vor.u32 %v10201, %v10202
        %vm10204 = vcmp.lt.s32.totalorder %v10185, 1
        %vm10205 = vcmp.lt.s32.totalorder %v10185, 2
        %vm10206 = vcmp.lt.s32.totalorder %v10185, 3
        %vm10207 = vcmp.lt.s32.totalorder %v10185, 4
        %v10208 = vsel %vm10204, %v10188, %v10191
        %v10209 = vsel %vm10207, %v10197, 2102212464
        %v10210 = vsel %vm10206, %v10194, %v10209
        %v10211 = vsel %vm10205, %v10208, %v10210
        %v10212 = vsel %vm10204, %v10191, %v10194
        %v10213 = vsel %vm10207, %v10200, 920167782
        %v10214 = vsel %vm10206, %v10197, %v10213
        %v10215 = vsel %vm10205, %v10212, %v10214
        %v10216 = vsel %vm10204, %v10194, %v10197
        %v10217 = vsel %vm10207, %v10203, 1326507024
        %v10218 = vsel %vm10206, %v10200, %v10217
        %v10219 = vsel %vm10205, %v10216, %v10218
        %v10220 = vshll.u32 %v10180, 8
        %v10221 = vmul.u32.u64.compose %v10220, %v10219
        %v10222 = vextract.low.u32 %v10221
        %v10223 = vextract.high.u32 %v10221
        %v10224 = vmul.u32.u64.compose %v10220, %v10215
        %v10225 = vextract.low.u32 %v10224
        %v10226 = vextract.high.u32 %v10224
        %v10227 = vmul.u32 %v10220, %v10211
        %v10228 = vadd.s32 %v10223, %v10225
        %vm10229 = vc.u32 %v10223, %v10225
        %v10230 = vadd.s32 %v10226, 1
        %v10231 = vsel %vm10229, %v10230, %v10226
        %v10232 = vadd.s32 %v10227, %v10231
        %v10233 = vadd.s32 %v10232, 536870912
        %v10234 = vshrl.u32 %v10233, 30
        %v10235 = vshll.u32 %v10234, 30
        %v10236 = vsub.s32 %v10232, %v10235
        %vm10237 = vcmp.lt.s32.totalorder %v10236, 0
        %v10238 = vsub.s32 0, %v10236
        %v10239 = vsel %vm10237, %v10238, %v10236
        %v10240 = vclz %v10239
        %v10241 = vsub.s32 %v10240, 2
        %vm10242 = vcmp.gt.s32.totalorder 0, %v10241
        %v10243 = vsel %vm10242, 0, %v10241
        %v10244 = vsub.s32 32, %v10243
        %v10245 = vshll.u32 %v10236, %v10243
        %v10246 = vshrl.u32 %v10228, %v10244
        %v10247 = vor.u32 %v10245, %v10246
        %v10248 = vsub.s32 4294967266, %v10243
        %v10249 = vadd.s32 %v10248, 127
        %v10250 = vshll.u32 %v10249, 23
        %v10251 = vor.u32 4788187, %v10250
        %v10252 = vand.u32 2147483647, %v10251
        %v10254 = vcvt.s32.f32 %v10247
        %v10255 = vmul.f32 %v10254, %v10252
        %v10256 = vxor.u32 %v10255, 2147483648
        %v10257 = vsel %vm10174, %v10256, %v10255
        %v10258 = vsub.s32 4, %v10234
        %v10259 = vsel %vm10174, %v10258, %v10234
        %v10260 = vsel %vm10173, %v6948, %v10257
        %v10261 = vsel %vm10173, 0, %v10259
        %v10262 = vcosq.f32.pop %v10260
        %v10263 = vsinq.f32.pop %v10260
        %vm10264 = vweird.f32 %v6948
        %v10265 = vadd.s32 %v10261, 3
        %v10266 = vand.u32 %v10265, 3
        %vm10267 = vcmp.lt.s32.totalorder %v10266, 2
        %vm10268 = vcmp.eq.s32.totalorder %v10266, 0
        %v10269 = vxor.u32 %v10263, 2147483648
        %v10270 = vsel %vm10268, %v10262, %v10269
        %vm10271 = vcmp.eq.s32.totalorder %v10266, 2
        %v10272 = vxor.u32 %v10262, 2147483648
        %v10273 = vsel %vm10271, %v10272, %v10263
        %v10274 = vsel %vm10267, %v10270, %v10273
        %v10275 = vsel %vm10264, nan, %v10274
        %v10276 = vand.u32 2147483647, %v6954
        %vm10277 = vcmp.le.f32.partialorder %v10276, 0.7853982
        %vm10278 = vcmp.lt.s32.totalorder %v6954, 0
        %v10279 = vand.u32 %v6954, 2139095040
        %v10280 = vshrl.u32 %v10279, 23
        %v10281 = vsub.s32 %v10280, 127
        %v10282 = vand.u32 2147483647, %v6954
        %v10283 = vand.u32 %v10282, 8388607
        %v10284 = vor.u32 %v10283, 8388608
        %v10285 = vsub.s32 0, %v10284
        %v10286 = vadd.s32 %v10281, 1
        %vm10287 = vcmp.gt.s32.totalorder %v10286, 0
        %v10288 = vsel %vm10287, %v10286, 0
        %v10289 = vshrl.u32 %v10288, 5
        %v10290 = vand.u32 %v10288, 31
        %v10291 = vsub.s32 32, %v10290
        %v10292 = vshrl.u32 683565275, %v10291
        %v10293 = vshll.u32 683565275, %v10290
        %v10294 = vshrl.u32 2475754826, %v10291
        %v10295 = vor.u32 %v10293, %v10294
        %v10296 = vshll.u32 2475754826, %v10290
        %v10297 = vshrl.u32 2131351028, %v10291
        %v10298 = vor.u32 %v10296, %v10297
        %v10299 = vshll.u32 2131351028, %v10290
        %v10300 = vshrl.u32 2102212464, %v10291
        %v10301 = vor.u32 %v10299, %v10300
        %v10302 = vshll.u32 2102212464, %v10290
        %v10303 = vshrl.u32 920167782, %v10291
        %v10304 = vor.u32 %v10302, %v10303
        %v10305 = vshll.u32 920167782, %v10290
        %v10306 = vshrl.u32 1326507024, %v10291
        %v10307 = vor.u32 %v10305, %v10306
        %vm10308 = vcmp.lt.s32.totalorder %v10289, 1
        %vm10309 = vcmp.lt.s32.totalorder %v10289, 2
        %vm10310 = vcmp.lt.s32.totalorder %v10289, 3
        %vm10311 = vcmp.lt.s32.totalorder %v10289, 4
        %v10312 = vsel %vm10308, %v10292, %v10295
        %v10313 = vsel %vm10311, %v10301, 2102212464
        %v10314 = vsel %vm10310, %v10298, %v10313
        %v10315 = vsel %vm10309, %v10312, %v10314
        %v10316 = vsel %vm10308, %v10295, %v10298
        %v10317 = vsel %vm10311, %v10304, 920167782
        %v10318 = vsel %vm10310, %v10301, %v10317
        %v10319 = vsel %vm10309, %v10316, %v10318
        %v10320 = vsel %vm10308, %v10298, %v10301
        %v10321 = vsel %vm10311, %v10307, 1326507024
        %v10322 = vsel %vm10310, %v10304, %v10321
        %v10323 = vsel %vm10309, %v10320, %v10322
        %v10324 = vshll.u32 %v10284, 8
        %v10325 = vmul.u32.u64.compose %v10324, %v10323
        %v10326 = vextract.low.u32 %v10325
        %v10327 = vextract.high.u32 %v10325
        %v10328 = vmul.u32.u64.compose %v10324, %v10319
        %v10329 = vextract.low.u32 %v10328
        %v10330 = vextract.high.u32 %v10328
        %v10331 = vmul.u32 %v10324, %v10315
        %v10332 = vadd.s32 %v10327, %v10329
        %vm10333 = vc.u32 %v10327, %v10329
        %v10334 = vadd.s32 %v10330, 1
        %v10335 = vsel %vm10333, %v10334, %v10330
        %v10336 = vadd.s32 %v10331, %v10335
        %v10337 = vadd.s32 %v10336, 536870912
        %v10338 = vshrl.u32 %v10337, 30
        %v10339 = vshll.u32 %v10338, 30
        %v10340 = vsub.s32 %v10336, %v10339
        %vm10341 = vcmp.lt.s32.totalorder %v10340, 0
        %v10342 = vsub.s32 0, %v10340
        %v10343 = vsel %vm10341, %v10342, %v10340
        %v10344 = vclz %v10343
        %v10345 = vsub.s32 %v10344, 2
        %vm10346 = vcmp.gt.s32.totalorder 0, %v10345
        %v10347 = vsel %vm10346, 0, %v10345
        %v10348 = vsub.s32 32, %v10347
        %v10349 = vshll.u32 %v10340, %v10347
        %v10350 = vshrl.u32 %v10332, %v10348
        %v10351 = vor.u32 %v10349, %v10350
        %v10352 = vsub.s32 4294967266, %v10347
        %v10353 = vadd.s32 %v10352, 127
        %v10354 = vshll.u32 %v10353, 23
        %v10355 = vor.u32 4788187, %v10354
        %v10356 = vand.u32 2147483647, %v10355
        %v10358 = vcvt.s32.f32 %v10351
        %v10359 = vmul.f32 %v10358, %v10356
        %v10360 = vxor.u32 %v10359, 2147483648
        %v10361 = vsel %vm10278, %v10360, %v10359
        %v10362 = vsub.s32 4, %v10338
        %v10363 = vsel %vm10278, %v10362, %v10338
        %v10364 = vsel %vm10277, %v6954, %v10361
        %v10365 = vsel %vm10277, 0, %v10363
        %v10366 = vcosq.f32.pop %v10364
        %v10367 = vsinq.f32.pop %v10364
        %vm10368 = vweird.f32 %v6954
        %v10369 = vadd.s32 %v10365, 3
        %v10370 = vand.u32 %v10369, 3
        %vm10371 = vcmp.lt.s32.totalorder %v10370, 2
        %vm10372 = vcmp.eq.s32.totalorder %v10370, 0
        %v10373 = vxor.u32 %v10367, 2147483648
        %v10374 = vsel %vm10372, %v10366, %v10373
        %vm10375 = vcmp.eq.s32.totalorder %v10370, 2
        %v10376 = vxor.u32 %v10366, 2147483648
        %v10377 = vsel %vm10375, %v10376, %v10367
        %v10378 = vsel %vm10371, %v10374, %v10377
        %v10379 = vsel %vm10368, nan, %v10378
        %v10380 = vand.u32 2147483647, %v6960
        %vm10381 = vcmp.le.f32.partialorder %v10380, 0.7853982
        %vm10382 = vcmp.lt.s32.totalorder %v6960, 0
        %v10383 = vand.u32 %v6960, 2139095040
        %v10384 = vshrl.u32 %v10383, 23
        %v10385 = vsub.s32 %v10384, 127
        %v10386 = vand.u32 2147483647, %v6960
        %v10387 = vand.u32 %v10386, 8388607
        %v10388 = vor.u32 %v10387, 8388608
        %v10389 = vsub.s32 0, %v10388
        %v10390 = vadd.s32 %v10385, 1
        %vm10391 = vcmp.gt.s32.totalorder %v10390, 0
        %v10392 = vsel %vm10391, %v10390, 0
        %v10393 = vshrl.u32 %v10392, 5
        %v10394 = vand.u32 %v10392, 31
        %v10395 = vsub.s32 32, %v10394
        %v10396 = vshrl.u32 683565275, %v10395
        %v10397 = vshll.u32 683565275, %v10394
        %v10398 = vshrl.u32 2475754826, %v10395
        %v10399 = vor.u32 %v10397, %v10398
        %v10400 = vshll.u32 2475754826, %v10394
        %v10401 = vshrl.u32 2131351028, %v10395
        %v10402 = vor.u32 %v10400, %v10401
        %v10403 = vshll.u32 2131351028, %v10394
        %v10404 = vshrl.u32 2102212464, %v10395
        %v10405 = vor.u32 %v10403, %v10404
        %v10406 = vshll.u32 2102212464, %v10394
        %v10407 = vshrl.u32 920167782, %v10395
        %v10408 = vor.u32 %v10406, %v10407
        %v10409 = vshll.u32 920167782, %v10394
        %v10410 = vshrl.u32 1326507024, %v10395
        %v10411 = vor.u32 %v10409, %v10410
        %vm10412 = vcmp.lt.s32.totalorder %v10393, 1
        %vm10413 = vcmp.lt.s32.totalorder %v10393, 2
        %vm10414 = vcmp.lt.s32.totalorder %v10393, 3
        %vm10415 = vcmp.lt.s32.totalorder %v10393, 4
        %v10416 = vsel %vm10412, %v10396, %v10399
        %v10417 = vsel %vm10415, %v10405, 2102212464
        %v10418 = vsel %vm10414, %v10402, %v10417
        %v10419 = vsel %vm10413, %v10416, %v10418
        %v10420 = vsel %vm10412, %v10399, %v10402
        %v10421 = vsel %vm10415, %v10408, 920167782
        %v10422 = vsel %vm10414, %v10405, %v10421
        %v10423 = vsel %vm10413, %v10420, %v10422
        %v10424 = vsel %vm10412, %v10402, %v10405
        %v10425 = vsel %vm10415, %v10411, 1326507024
        %v10426 = vsel %vm10414, %v10408, %v10425
        %v10427 = vsel %vm10413, %v10424, %v10426
        %v10428 = vshll.u32 %v10388, 8
        %v10429 = vmul.u32.u64.compose %v10428, %v10427
        %v10430 = vextract.low.u32 %v10429
        %v10431 = vextract.high.u32 %v10429
        %v10432 = vmul.u32.u64.compose %v10428, %v10423
        %v10433 = vextract.low.u32 %v10432
        %v10434 = vextract.high.u32 %v10432
        %v10435 = vmul.u32 %v10428, %v10419
        %v10436 = vadd.s32 %v10431, %v10433
        %vm10437 = vc.u32 %v10431, %v10433
        %v10438 = vadd.s32 %v10434, 1
        %v10439 = vsel %vm10437, %v10438, %v10434
        %v10440 = vadd.s32 %v10435, %v10439
        %v10441 = vadd.s32 %v10440, 536870912
        %v10442 = vshrl.u32 %v10441, 30
        %v10443 = vshll.u32 %v10442, 30
        %v10444 = vsub.s32 %v10440, %v10443
        %vm10445 = vcmp.lt.s32.totalorder %v10444, 0
        %v10446 = vsub.s32 0, %v10444
        %v10447 = vsel %vm10445, %v10446, %v10444
        %v10448 = vclz %v10447
        %v10449 = vsub.s32 %v10448, 2
        %vm10450 = vcmp.gt.s32.totalorder 0, %v10449
        %v10451 = vsel %vm10450, 0, %v10449
        %v10452 = vsub.s32 32, %v10451
        %v10453 = vshll.u32 %v10444, %v10451
        %v10454 = vshrl.u32 %v10436, %v10452
        %v10455 = vor.u32 %v10453, %v10454
        %v10456 = vsub.s32 4294967266, %v10451
        %v10457 = vadd.s32 %v10456, 127
        %v10458 = vshll.u32 %v10457, 23
        %v10459 = vor.u32 4788187, %v10458
        %v10460 = vand.u32 2147483647, %v10459
        %v10462 = vcvt.s32.f32 %v10455
        %v10463 = vmul.f32 %v10462, %v10460
        %v10464 = vxor.u32 %v10463, 2147483648
        %v10465 = vsel %vm10382, %v10464, %v10463
        %v10466 = vsub.s32 4, %v10442
        %v10467 = vsel %vm10382, %v10466, %v10442
        %v10468 = vsel %vm10381, %v6960, %v10465
        %v10469 = vsel %vm10381, 0, %v10467
        %v10470 = vcosq.f32.pop %v10468
        %v10471 = vsinq.f32.pop %v10468
        %vm10472 = vweird.f32 %v6960
        %v10473 = vadd.s32 %v10469, 3
        %v10474 = vand.u32 %v10473, 3
        %vm10475 = vcmp.lt.s32.totalorder %v10474, 2
        %vm10476 = vcmp.eq.s32.totalorder %v10474, 0
        %v10477 = vxor.u32 %v10471, 2147483648
        %v10478 = vsel %vm10476, %v10470, %v10477
        %vm10479 = vcmp.eq.s32.totalorder %v10474, 2
        %v10480 = vxor.u32 %v10470, 2147483648
        %v10481 = vsel %vm10479, %v10480, %v10471
        %v10482 = vsel %vm10475, %v10478, %v10481
        %v10483 = vsel %vm10472, nan, %v10482
        %v10484 = vand.u32 2147483647, %v6966
        %vm10485 = vcmp.le.f32.partialorder %v10484, 0.7853982
        %vm10486 = vcmp.lt.s32.totalorder %v6966, 0
        %v10487 = vand.u32 %v6966, 2139095040
        %v10488 = vshrl.u32 %v10487, 23
        %v10489 = vsub.s32 %v10488, 127
        %v10490 = vand.u32 2147483647, %v6966
        %v10491 = vand.u32 %v10490, 8388607
        %v10492 = vor.u32 %v10491, 8388608
        %v10493 = vsub.s32 0, %v10492
        %v10494 = vadd.s32 %v10489, 1
        %vm10495 = vcmp.gt.s32.totalorder %v10494, 0
        %v10496 = vsel %vm10495, %v10494, 0
        %v10497 = vshrl.u32 %v10496, 5
        %v10498 = vand.u32 %v10496, 31
        %v10499 = vsub.s32 32, %v10498
        %v10500 = vshrl.u32 683565275, %v10499
        %v10501 = vshll.u32 683565275, %v10498
        %v10502 = vshrl.u32 2475754826, %v10499
        %v10503 = vor.u32 %v10501, %v10502
        %v10504 = vshll.u32 2475754826, %v10498
        %v10505 = vshrl.u32 2131351028, %v10499
        %v10506 = vor.u32 %v10504, %v10505
        %v10507 = vshll.u32 2131351028, %v10498
        %v10508 = vshrl.u32 2102212464, %v10499
        %v10509 = vor.u32 %v10507, %v10508
        %v10510 = vshll.u32 2102212464, %v10498
        %v10511 = vshrl.u32 920167782, %v10499
        %v10512 = vor.u32 %v10510, %v10511
        %v10513 = vshll.u32 920167782, %v10498
        %v10514 = vshrl.u32 1326507024, %v10499
        %v10515 = vor.u32 %v10513, %v10514
        %vm10516 = vcmp.lt.s32.totalorder %v10497, 1
        %vm10517 = vcmp.lt.s32.totalorder %v10497, 2
        %vm10518 = vcmp.lt.s32.totalorder %v10497, 3
        %vm10519 = vcmp.lt.s32.totalorder %v10497, 4
        %v10520 = vsel %vm10516, %v10500, %v10503
        %v10521 = vsel %vm10519, %v10509, 2102212464
        %v10522 = vsel %vm10518, %v10506, %v10521
        %v10523 = vsel %vm10517, %v10520, %v10522
        %v10524 = vsel %vm10516, %v10503, %v10506
        %v10525 = vsel %vm10519, %v10512, 920167782
        %v10526 = vsel %vm10518, %v10509, %v10525
        %v10527 = vsel %vm10517, %v10524, %v10526
        %v10528 = vsel %vm10516, %v10506, %v10509
        %v10529 = vsel %vm10519, %v10515, 1326507024
        %v10530 = vsel %vm10518, %v10512, %v10529
        %v10531 = vsel %vm10517, %v10528, %v10530
        %v10532 = vshll.u32 %v10492, 8
        %v10533 = vmul.u32.u64.compose %v10532, %v10531
        %v10534 = vextract.low.u32 %v10533
        %v10535 = vextract.high.u32 %v10533
        %v10536 = vmul.u32.u64.compose %v10532, %v10527
        %v10537 = vextract.low.u32 %v10536
        %v10538 = vextract.high.u32 %v10536
        %v10539 = vmul.u32 %v10532, %v10523
        %v10540 = vadd.s32 %v10535, %v10537
        %vm10541 = vc.u32 %v10535, %v10537
        %v10542 = vadd.s32 %v10538, 1
        %v10543 = vsel %vm10541, %v10542, %v10538
        %v10544 = vadd.s32 %v10539, %v10543
        %v10545 = vadd.s32 %v10544, 536870912
        %v10546 = vshrl.u32 %v10545, 30
        %v10547 = vshll.u32 %v10546, 30
        %v10548 = vsub.s32 %v10544, %v10547
        %vm10549 = vcmp.lt.s32.totalorder %v10548, 0
        %v10550 = vsub.s32 0, %v10548
        %v10551 = vsel %vm10549, %v10550, %v10548
        %v10552 = vclz %v10551
        %v10553 = vsub.s32 %v10552, 2
        %vm10554 = vcmp.gt.s32.totalorder 0, %v10553
        %v10555 = vsel %vm10554, 0, %v10553
        %v10556 = vsub.s32 32, %v10555
        %v10557 = vshll.u32 %v10548, %v10555
        %v10558 = vshrl.u32 %v10540, %v10556
        %v10559 = vor.u32 %v10557, %v10558
        %v10560 = vsub.s32 4294967266, %v10555
        %v10561 = vadd.s32 %v10560, 127
        %v10562 = vshll.u32 %v10561, 23
        %v10563 = vor.u32 4788187, %v10562
        %v10564 = vand.u32 2147483647, %v10563
        %v10566 = vcvt.s32.f32 %v10559
        %v10567 = vmul.f32 %v10566, %v10564
        %v10568 = vxor.u32 %v10567, 2147483648
        %v10569 = vsel %vm10486, %v10568, %v10567
        %v10570 = vsub.s32 4, %v10546
        %v10571 = vsel %vm10486, %v10570, %v10546
        %v10572 = vsel %vm10485, %v6966, %v10569
        %v10573 = vsel %vm10485, 0, %v10571
        %v10574 = vcosq.f32.pop %v10572
        %v10575 = vsinq.f32.pop %v10572
        %vm10576 = vweird.f32 %v6966
        %v10577 = vadd.s32 %v10573, 3
        %v10578 = vand.u32 %v10577, 3
        %vm10579 = vcmp.lt.s32.totalorder %v10578, 2
        %vm10580 = vcmp.eq.s32.totalorder %v10578, 0
        %v10581 = vxor.u32 %v10575, 2147483648
        %v10582 = vsel %vm10580, %v10574, %v10581
        %vm10583 = vcmp.eq.s32.totalorder %v10578, 2
        %v10584 = vxor.u32 %v10574, 2147483648
        %v10585 = vsel %vm10583, %v10584, %v10575
        %v10586 = vsel %vm10579, %v10582, %v10585
        %v10587 = vsel %vm10576, nan, %v10586
        %v10588 = vand.u32 2147483647, %v6972
        %vm10589 = vcmp.le.f32.partialorder %v10588, 0.7853982
        %vm10590 = vcmp.lt.s32.totalorder %v6972, 0
        %v10591 = vand.u32 %v6972, 2139095040
        %v10592 = vshrl.u32 %v10591, 23
        %v10593 = vsub.s32 %v10592, 127
        %v10594 = vand.u32 2147483647, %v6972
        %v10595 = vand.u32 %v10594, 8388607
        %v10596 = vor.u32 %v10595, 8388608
        %v10597 = vsub.s32 0, %v10596
        %v10598 = vadd.s32 %v10593, 1
        %vm10599 = vcmp.gt.s32.totalorder %v10598, 0
        %v10600 = vsel %vm10599, %v10598, 0
        %v10601 = vshrl.u32 %v10600, 5
        %v10602 = vand.u32 %v10600, 31
        %v10603 = vsub.s32 32, %v10602
        %v10604 = vshrl.u32 683565275, %v10603
        %v10605 = vshll.u32 683565275, %v10602
        %v10606 = vshrl.u32 2475754826, %v10603
        %v10607 = vor.u32 %v10605, %v10606
        %v10608 = vshll.u32 2475754826, %v10602
        %v10609 = vshrl.u32 2131351028, %v10603
        %v10610 = vor.u32 %v10608, %v10609
        %v10611 = vshll.u32 2131351028, %v10602
        %v10612 = vshrl.u32 2102212464, %v10603
        %v10613 = vor.u32 %v10611, %v10612
        %v10614 = vshll.u32 2102212464, %v10602
        %v10615 = vshrl.u32 920167782, %v10603
        %v10616 = vor.u32 %v10614, %v10615
        %v10617 = vshll.u32 920167782, %v10602
        %v10618 = vshrl.u32 1326507024, %v10603
        %v10619 = vor.u32 %v10617, %v10618
        %vm10620 = vcmp.lt.s32.totalorder %v10601, 1
        %vm10621 = vcmp.lt.s32.totalorder %v10601, 2
        %vm10622 = vcmp.lt.s32.totalorder %v10601, 3
        %vm10623 = vcmp.lt.s32.totalorder %v10601, 4
        %v10624 = vsel %vm10620, %v10604, %v10607
        %v10625 = vsel %vm10623, %v10613, 2102212464
        %v10626 = vsel %vm10622, %v10610, %v10625
        %v10627 = vsel %vm10621, %v10624, %v10626
        %v10628 = vsel %vm10620, %v10607, %v10610
        %v10629 = vsel %vm10623, %v10616, 920167782
        %v10630 = vsel %vm10622, %v10613, %v10629
        %v10631 = vsel %vm10621, %v10628, %v10630
        %v10632 = vsel %vm10620, %v10610, %v10613
        %v10633 = vsel %vm10623, %v10619, 1326507024
        %v10634 = vsel %vm10622, %v10616, %v10633
        %v10635 = vsel %vm10621, %v10632, %v10634
        %v10636 = vshll.u32 %v10596, 8
        %v10637 = vmul.u32.u64.compose %v10636, %v10635
        %v10638 = vextract.low.u32 %v10637
        %v10639 = vextract.high.u32 %v10637
        %v10640 = vmul.u32.u64.compose %v10636, %v10631
        %v10641 = vextract.low.u32 %v10640
        %v10642 = vextract.high.u32 %v10640
        %v10643 = vmul.u32 %v10636, %v10627
        %v10644 = vadd.s32 %v10639, %v10641
        %vm10645 = vc.u32 %v10639, %v10641
        %v10646 = vadd.s32 %v10642, 1
        %v10647 = vsel %vm10645, %v10646, %v10642
        %v10648 = vadd.s32 %v10643, %v10647
        %v10649 = vadd.s32 %v10648, 536870912
        %v10650 = vshrl.u32 %v10649, 30
        %v10651 = vshll.u32 %v10650, 30
        %v10652 = vsub.s32 %v10648, %v10651
        %vm10653 = vcmp.lt.s32.totalorder %v10652, 0
        %v10654 = vsub.s32 0, %v10652
        %v10655 = vsel %vm10653, %v10654, %v10652
        %v10656 = vclz %v10655
        %v10657 = vsub.s32 %v10656, 2
        %vm10658 = vcmp.gt.s32.totalorder 0, %v10657
        %v10659 = vsel %vm10658, 0, %v10657
        %v10660 = vsub.s32 32, %v10659
        %v10661 = vshll.u32 %v10652, %v10659
        %v10662 = vshrl.u32 %v10644, %v10660
        %v10663 = vor.u32 %v10661, %v10662
        %v10664 = vsub.s32 4294967266, %v10659
        %v10665 = vadd.s32 %v10664, 127
        %v10666 = vshll.u32 %v10665, 23
        %v10667 = vor.u32 4788187, %v10666
        %v10668 = vand.u32 2147483647, %v10667
        %v10670 = vcvt.s32.f32 %v10663
        %v10671 = vmul.f32 %v10670, %v10668
        %v10672 = vxor.u32 %v10671, 2147483648
        %v10673 = vsel %vm10590, %v10672, %v10671
        %v10674 = vsub.s32 4, %v10650
        %v10675 = vsel %vm10590, %v10674, %v10650
        %v10676 = vsel %vm10589, %v6972, %v10673
        %v10677 = vsel %vm10589, 0, %v10675
        %v10678 = vcosq.f32.pop %v10676
        %v10679 = vsinq.f32.pop %v10676
        %vm10680 = vweird.f32 %v6972
        %v10681 = vadd.s32 %v10677, 3
        %v10682 = vand.u32 %v10681, 3
        %vm10683 = vcmp.lt.s32.totalorder %v10682, 2
        %vm10684 = vcmp.eq.s32.totalorder %v10682, 0
        %v10685 = vxor.u32 %v10679, 2147483648
        %v10686 = vsel %vm10684, %v10678, %v10685
        %vm10687 = vcmp.eq.s32.totalorder %v10682, 2
        %v10688 = vxor.u32 %v10678, 2147483648
        %v10689 = vsel %vm10687, %v10688, %v10679
        %v10690 = vsel %vm10683, %v10686, %v10689
        %v10691 = vsel %vm10680, nan, %v10690
        %v10692 = vmul.f32 %v9131, %v7139
        %v10693 = vmul.f32 %v9235, %v7146
        %v10694 = vmul.f32 %v9339, %v7153
        %v10695 = vmul.f32 %v9443, %v7160
        %v10696 = vmul.f32 %v9547, %v7167
        %v10697 = vmul.f32 %v9651, %v7174
        %v10698 = vmul.f32 %v9755, %v7181
        %v10699 = vmul.f32 %v9859, %v7188
        %v10700 = vmul.f32 %v9963, %v7195
        %v10701 = vmul.f32 %v10067, %v7202
        %v10702 = vmul.f32 %v10171, %v7209
        %v10703 = vmul.f32 %v10275, %v7216
        %v10704 = vmul.f32 %v10379, %v7223
        %v10705 = vmul.f32 %v10483, %v7230
        %v10706 = vmul.f32 %v10587, %v7237
        %v10707 = vmul.f32 %v10691, %v7244
        %v10724 = vcombine.low %v10692, %v10693
        %v10725 = vcombine.low %v10694, %v10695
        %v10726 = vcombine.low %v10696, %v10697
        %v10727 = vcombine.low %v10698, %v10699
        %v10729 = vunpack.c.l.s4 1966171168
        %v10730 = vunpack.c.0.s8 %v10729
        %v10731 = vlaneseq
        %v10732 = vshrl.u32 %v10731, 7
        %v10733 = vsub.s32 %v10730, %v10732
        %v10734 = vrot.slane %v10724, %v10733
        %v10736 = vunpack.c.l.s4 1966171168
        %v10737 = vunpack.c.0.s8 %v10736
        %v10738 = vlaneseq
        %v10739 = vshrl.u32 %v10738, 7
        %v10740 = vsub.s32 %v10737, %v10739
        %v10741 = vrot.slane %v10725, %v10740
        %v10743 = vunpack.c.l.s4 1966171168
        %v10744 = vunpack.c.0.s8 %v10743
        %v10745 = vlaneseq
        %v10746 = vshrl.u32 %v10745, 7
        %v10747 = vsub.s32 %v10744, %v10746
        %v10748 = vrot.slane %v10726, %v10747
        %v10750 = vunpack.c.l.s4 1966171168
        %v10751 = vunpack.c.0.s8 %v10750
        %v10752 = vlaneseq
        %v10753 = vshrl.u32 %v10752, 7
        %v10754 = vsub.s32 %v10751, %v10753
        %v10755 = vrot.slane %v10727, %v10754
        %v10756 = vcombine.low %v10734, %v10741
        %v10757 = vcombine.low %v10748, %v10755
        %v10759 = vunpack.c.l.s4 1966171168
        %v10760 = vunpack.c.0.s8 %v10759
        %v10761 = vlaneseq
        %v10762 = vshrl.u32 %v10761, 7
        %v10763 = vsub.s32 %v10760, %v10762
        %v10764 = vrot.slane %v10756, %v10763
        %v10766 = vunpack.c.l.s4 1966171168
        %v10767 = vunpack.c.0.s8 %v10766
        %v10768 = vlaneseq
        %v10769 = vshrl.u32 %v10768, 7
        %v10770 = vsub.s32 %v10767, %v10769
        %v10771 = vrot.slane %v10757, %v10770
        %v10772 = vcombine.low %v10764, %v10771
        %v10773 = vcombine.low %v10700, %v10701
        %v10774 = vcombine.low %v10702, %v10703
        %v10775 = vcombine.low %v10704, %v10705
        %v10776 = vcombine.low %v10706, %v10707
        %v10778 = vunpack.c.l.s4 1966171168
        %v10779 = vunpack.c.0.s8 %v10778
        %v10780 = vlaneseq
        %v10781 = vshrl.u32 %v10780, 7
        %v10782 = vsub.s32 %v10779, %v10781
        %v10783 = vrot.slane %v10773, %v10782
        %v10785 = vunpack.c.l.s4 1966171168
        %v10786 = vunpack.c.0.s8 %v10785
        %v10787 = vlaneseq
        %v10788 = vshrl.u32 %v10787, 7
        %v10789 = vsub.s32 %v10786, %v10788
        %v10790 = vrot.slane %v10774, %v10789
        %v10792 = vunpack.c.l.s4 1966171168
        %v10793 = vunpack.c.0.s8 %v10792
        %v10794 = vlaneseq
        %v10795 = vshrl.u32 %v10794, 7
        %v10796 = vsub.s32 %v10793, %v10795
        %v10797 = vrot.slane %v10775, %v10796
        %v10799 = vunpack.c.l.s4 1966171168
        %v10800 = vunpack.c.0.s8 %v10799
        %v10801 = vlaneseq
        %v10802 = vshrl.u32 %v10801, 7
        %v10803 = vsub.s32 %v10800, %v10802
        %v10804 = vrot.slane %v10776, %v10803
        %v10805 = vcombine.low %v10783, %v10790
        %v10806 = vcombine.low %v10797, %v10804
        %v10808 = vunpack.c.l.s4 1966171168
        %v10809 = vunpack.c.0.s8 %v10808
        %v10810 = vlaneseq
        %v10811 = vshrl.u32 %v10810, 7
        %v10812 = vsub.s32 %v10809, %v10811
        %v10813 = vrot.slane %v10805, %v10812
        %v10815 = vunpack.c.l.s4 1966171168
        %v10816 = vunpack.c.0.s8 %v10815
        %v10817 = vlaneseq
        %v10818 = vshrl.u32 %v10817, 7
        %v10819 = vsub.s32 %v10816, %v10818
        %v10820 = vrot.slane %v10806, %v10819
        %v10821 = vcombine.low %v10813, %v10820
        %s10824 = scalar_lea.vmem %s267, 1 [#allocation5]
        %10825 = vst [vmem:[%s10824] ss:$4 sm:$0xff] %v10772
        %s10826 = scalar_lea.vmem %s267, 33 [#allocation5]
        %10827 = vst [vmem:[%s10826] ss:$4 sm:$0xff] %v10821
        %v10828 = vmul.f32 %v2182, %v6994
        %v10829 = vmul.f32 %v2183, %v7000
        %v10830 = vmul.f32 %v2184, %v7006
        %v10831 = vmul.f32 %v2185, %v7012
        %v10832 = vmul.f32 %v2186, %v7018
        %v10833 = vmul.f32 %v2187, %v7024
        %v10834 = vmul.f32 %v2188, %v7030
        %v10835 = vmul.f32 %v2189, %v7036
        %v10836 = vmul.f32 %v2190, %v7042
        %v10837 = vmul.f32 %v2191, %v7048
        %v10838 = vmul.f32 %v2192, %v7054
        %v10839 = vmul.f32 %v2193, %v7060
        %v10840 = vmul.f32 %v2194, %v7066
        %v10841 = vmul.f32 %v2195, %v7072
        %v10842 = vmul.f32 %v2196, %v7078
        %v10843 = vmul.f32 %v2197, %v7084
        %v10844 = vlog2.pop %v10828
        %v10845 = vmul.f32 %v10844, 0.6931472
        %v10846 = vlog2.pop %v10829
        %v10847 = vmul.f32 %v10846, 0.6931472
        %v10848 = vlog2.pop %v10830
        %v10849 = vmul.f32 %v10848, 0.6931472
        %v10850 = vlog2.pop %v10831
        %v10851 = vmul.f32 %v10850, 0.6931472
        %v10852 = vlog2.pop %v10832
        %v10853 = vmul.f32 %v10852, 0.6931472
        %v10854 = vlog2.pop %v10833
        %v10855 = vmul.f32 %v10854, 0.6931472
        %v10856 = vlog2.pop %v10834
        %v10857 = vmul.f32 %v10856, 0.6931472
        %v10858 = vlog2.pop %v10835
        %v10859 = vmul.f32 %v10858, 0.6931472
        %v10860 = vlog2.pop %v10836
        %v10861 = vmul.f32 %v10860, 0.6931472
        %v10862 = vlog2.pop %v10837
        %v10863 = vmul.f32 %v10862, 0.6931472
        %v10864 = vlog2.pop %v10838
        %v10865 = vmul.f32 %v10864, 0.6931472
        %v10866 = vlog2.pop %v10839
        %v10867 = vmul.f32 %v10866, 0.6931472
        %v10868 = vlog2.pop %v10840
        %v10869 = vmul.f32 %v10868, 0.6931472
        %v10870 = vlog2.pop %v10841
        %v10871 = vmul.f32 %v10870, 0.6931472
        %v10872 = vlog2.pop %v10842
        %v10873 = vmul.f32 %v10872, 0.6931472
        %v10874 = vlog2.pop %v10843
        %v10875 = vmul.f32 %v10874, 0.6931472
        %v10892 = vcombine.low %v10845, %v10847
        %v10893 = vcombine.low %v10849, %v10851
        %v10894 = vcombine.low %v10853, %v10855
        %v10895 = vcombine.low %v10857, %v10859
        %v10897 = vunpack.c.l.s4 1966171168
        %v10898 = vunpack.c.0.s8 %v10897
        %v10899 = vlaneseq
        %v10900 = vshrl.u32 %v10899, 7
        %v10901 = vsub.s32 %v10898, %v10900
        %v10902 = vrot.slane %v10892, %v10901
        %v10904 = vunpack.c.l.s4 1966171168
        %v10905 = vunpack.c.0.s8 %v10904
        %v10906 = vlaneseq
        %v10907 = vshrl.u32 %v10906, 7
        %v10908 = vsub.s32 %v10905, %v10907
        %v10909 = vrot.slane %v10893, %v10908
        %v10911 = vunpack.c.l.s4 1966171168
        %v10912 = vunpack.c.0.s8 %v10911
        %v10913 = vlaneseq
        %v10914 = vshrl.u32 %v10913, 7
        %v10915 = vsub.s32 %v10912, %v10914
        %v10916 = vrot.slane %v10894, %v10915
        %v10918 = vunpack.c.l.s4 1966171168
        %v10919 = vunpack.c.0.s8 %v10918
        %v10920 = vlaneseq
        %v10921 = vshrl.u32 %v10920, 7
        %v10922 = vsub.s32 %v10919, %v10921
        %v10923 = vrot.slane %v10895, %v10922
        %v10924 = vcombine.low %v10902, %v10909
        %v10925 = vcombine.low %v10916, %v10923
        %v10927 = vunpack.c.l.s4 1966171168
        %v10928 = vunpack.c.0.s8 %v10927
        %v10929 = vlaneseq
        %v10930 = vshrl.u32 %v10929, 7
        %v10931 = vsub.s32 %v10928, %v10930
        %v10932 = vrot.slane %v10924, %v10931
        %v10934 = vunpack.c.l.s4 1966171168
        %v10935 = vunpack.c.0.s8 %v10934
        %v10936 = vlaneseq
        %v10937 = vshrl.u32 %v10936, 7
        %v10938 = vsub.s32 %v10935, %v10937
        %v10939 = vrot.slane %v10925, %v10938
        %v10940 = vcombine.low %v10932, %v10939
        %v10941 = vcombine.low %v10861, %v10863
        %v10942 = vcombine.low %v10865, %v10867
        %v10943 = vcombine.low %v10869, %v10871
        %v10944 = vcombine.low %v10873, %v10875
        %v10946 = vunpack.c.l.s4 1966171168
        %v10947 = vunpack.c.0.s8 %v10946
        %v10948 = vlaneseq
        %v10949 = vshrl.u32 %v10948, 7
        %v10950 = vsub.s32 %v10947, %v10949
        %v10951 = vrot.slane %v10941, %v10950
        %v10953 = vunpack.c.l.s4 1966171168
        %v10954 = vunpack.c.0.s8 %v10953
        %v10955 = vlaneseq
        %v10956 = vshrl.u32 %v10955, 7
        %v10957 = vsub.s32 %v10954, %v10956
        %v10958 = vrot.slane %v10942, %v10957
        %v10960 = vunpack.c.l.s4 1966171168
        %v10961 = vunpack.c.0.s8 %v10960
        %v10962 = vlaneseq
        %v10963 = vshrl.u32 %v10962, 7
        %v10964 = vsub.s32 %v10961, %v10963
        %v10965 = vrot.slane %v10943, %v10964
        %v10967 = vunpack.c.l.s4 1966171168
        %v10968 = vunpack.c.0.s8 %v10967
        %v10969 = vlaneseq
        %v10970 = vshrl.u32 %v10969, 7
        %v10971 = vsub.s32 %v10968, %v10970
        %v10972 = vrot.slane %v10944, %v10971
        %v10973 = vcombine.low %v10951, %v10958
        %v10974 = vcombine.low %v10965, %v10972
        %v10976 = vunpack.c.l.s4 1966171168
        %v10977 = vunpack.c.0.s8 %v10976
        %v10978 = vlaneseq
        %v10979 = vshrl.u32 %v10978, 7
        %v10980 = vsub.s32 %v10977, %v10979
        %v10981 = vrot.slane %v10973, %v10980
        %v10983 = vunpack.c.l.s4 1966171168
        %v10984 = vunpack.c.0.s8 %v10983
        %v10985 = vlaneseq
        %v10986 = vshrl.u32 %v10985, 7
        %v10987 = vsub.s32 %v10984, %v10986
        %v10988 = vrot.slane %v10974, %v10987
        %v10989 = vcombine.low %v10981, %v10988
        %s10992 = scalar_lea.vmem %s267, 3 [#allocation5]
        %10993 = vst [vmem:[%s10992] ss:$4 sm:$0xff] %v10940
        %s10994 = scalar_lea.vmem %s267, 35 [#allocation5]
        %10995 = vst [vmem:[%s10994] ss:$4 sm:$0xff] %v10989
        %s10996 = sand.u32 %s162, 1
        %s10997 = scalar_lea.sflag [#allocation4], %s10996
        %s10998 = sand.u32 %s162, 1
        %s10999 = smul.addr %s10998, 64
        %s11000 = scalar_lea.vmem [#allocation5], %s10999
        // Predicated region
        $region49: #{tpu_custom_call.1} parent=43 // pred_check
          %p11001 = pneg %p172
        $region50: #{tpu_custom_call.1} parent=43 // pred_check_branch
          %11003 = sbr.rel (%p11001) target = $region52
        $region51: #{tpu_custom_call.1} parent=43 // pred_region
          %s11004 = smul.u32 16, %s23
          %s11006 = ssub.s32 1024, 1024
          %11007 = vsyncadd %s10997, %s11006
          %s11008 = smul.addr %s11004, 64
          %s11009 = scalar_lea.hbm %s6, %s11008
          %s11011 = sshll.u32 %s11000, 4
          %s11012 = int_to_ptr.vmem [resolvable:$true] %s11011
          %11014 = dma.vmem_to_hbm [thread:$0]  %s11012, 1024, %s11009, %s10997
        $region52: #{tpu_custom_call.1} parent=43 // pred_fallthru
          _
      $region44: #{tpu_custom_call.1} parent=5 // pred_fallthru
        _
      %p11015 = scmp.le.s32.totalorder 2, %s18
      // Predicated region
      $region53: #{tpu_custom_call.1} parent=5 // pred_check
        %p11016 = pneg %p11015
      $region54: #{tpu_custom_call.1} parent=5 // pred_check_branch
        %11018 = sbr.rel (%p11016) target = $region56
      $region55: #{tpu_custom_call.1} parent=5 // pred_region
        %s11019 = ssub.s32 %s18, 2
        // Predicated region
        $region57: #{tpu_custom_call.1} parent=55 // pred_check
          %p11020 = pneg %p178
        $region58: #{tpu_custom_call.1} parent=55 // pred_check_branch
          %11022 = sbr.rel (%p11020) target = $region60
        $region59: #{tpu_custom_call.1} parent=55 // pred_region
          %s11023 = sand.u32 %s163, 1
          %s11024 = scalar_lea.sflag [#allocation4], %s11023
          %s11025 = sand.u32 %s163, 1
          %s11026 = smul.addr %s11025, 64
          %s11027 = scalar_lea.vmem [#allocation5], %s11026
          %11028 = dma.done %s11024, 1024
        $region60: #{tpu_custom_call.1} parent=55 // pred_fallthru
          _
      $region56: #{tpu_custom_call.1} parent=5 // pred_fallthru
        _
    $region6: #{tpu_custom_call.1} parent=1 // loop_footer
      %s22 = sadd.s32 1, %s18
    $region7: #{tpu_custom_call.1} parent=1 // loop_footer_branch
      %17 = sbr.rel target = $region3
    $region8: #{tpu_custom_call.1} parent=1 // loop_exit
      _
    %11029 = vsyncpa [#allocation3], 1
    %s11030 = scalar_lea.sflag [#allocation3], 1
    %11031 = vsyncpa %s11030, 1
    %11032 = vsyncpa [#allocation4], 1
    %s11033 = scalar_lea.sflag [#allocation4], 1
    %11034 = vsyncpa %s11033, 1

</llo_original>
